<compile_context>
chip_gen: v5e
topology: v5e:2x2
jax: 0.10.0
libtpu: 0.0.40
codegen_flags: <defaults>
</compile_context>

<pallas_src>
import jax
import jax.numpy as jnp
from jax.experimental import pallas as pl
from jax.experimental.pallas import tpu as pltpu


def decaf_encode_kernel(idx_ref, w_ref, emb_hbm, out_ref, rows_buf, sems):
    # idx_ref : SMEM (B_pad*T,) int32     -- scalar-prefetched token indices
    # w_ref   : VMEM (TB, T)    f32       -- tf-idf weights for this batch tile
    # emb_hbm : HBM  (V, Dp)    f32       -- full table, left in place (pl.ANY)
    # out_ref : VMEM (TB, Dp)   f32       -- lane-dense document representation
    # rows_buf: VMEM (2, T, TB, Dp) f32   -- double-buffered gathered rows
    # sems    : DMA semaphores (2,)       -- one per buffer slot
    i = pl.program_id(0)
    n = pl.num_programs(0)
    tb, t_len = w_ref.shape

    def issue_gather(tile, slot):
        # One row DMA per (doc, token); token t of doc b lands at
        # rows_buf[slot, t, b, :].  All indexing is scalar-unit work.
        base = tile * (tb * t_len)
        for b in range(tb):
            for t in range(t_len):
                row = idx_ref[base + b * t_len + t]
                pltpu.make_async_copy(
                    emb_hbm.at[pl.ds(row, 1), :],
                    rows_buf.at[slot, t, pl.ds(b, 1), :],
                    sems.at[slot],
                ).start()

    # Prime slot 0 on the very first step.
    @pl.when(i == 0)
    def _():
        issue_gather(0, 0)

    # Prefetch the next tile's rows into the other slot while this tile runs.
    @pl.when(i + 1 < n)
    def _():
        issue_gather(i + 1, (i + 1) % 2)

    slot = i % 2

    # Single consolidated wait: the descriptor below covers T*TB rows of Dp
    # floats, exactly the combined size of the TB*T row copies signalled on
    # sems[slot] (DMA waits only care about the semaphore + transfer size).
    pltpu.make_async_copy(
        rows_buf.at[slot], rows_buf.at[slot], sems.at[slot]
    ).wait()

    # Weighted embedding bag on the VPU: out[b,:] = sum_t w[b,t] * row[b,t,:]
    # Static unrolled loop over tokens; each step is a contiguous (TB, Dp)
    # VMEM load + FMA.  (For very large T convert to lax.fori_loop.)
    w = w_ref[...]                                   # (TB, T)
    acc = rows_buf[slot, 0] * w[:, 0:1]
    for t in range(1, t_len):
        acc = acc + rows_buf[slot, t] * w[:, t:t + 1]
    out_ref[...] = acc.astype(out_ref.dtype)


def decaf_encode(x_idx, x_w, embedding, *, batch_tile=8):
    """out[b, :] = sum_t x_w[b, t] * embedding[x_idx[b, t], :]"""
    B, T = x_idx.shape
    V, D = embedding.shape

    embedding = embedding.astype(jnp.float32)

    # Lane-dense output: pad embedding_dims up to a multiple of 128 so stores
    # are full `vst`, not masked partial stores.
    Dp = ((D + 127) // 128) * 128
    if Dp != D:
        embedding = jnp.pad(embedding, ((0, 0), (0, Dp - D)))

    # Keep the (8, 128) sublane constraint on the output block.
    batch_tile = max(8, (batch_tile // 8) * 8)

    # Ragged batch: pad B up (padded docs use idx=0 with weight 0.0).
    Bp = pl.cdiv(B, batch_tile) * batch_tile
    if Bp != B:
        x_idx = jnp.pad(x_idx, ((0, Bp - B), (0, 0)))
        x_w = jnp.pad(x_w, ((0, Bp - B), (0, 0)))

    idx_flat = x_idx.reshape(-1).astype(jnp.int32)     # -> SMEM via prefetch
    x_w = x_w.astype(jnp.float32)

    out = pl.pallas_call(
        decaf_encode_kernel,
        out_shape=jax.ShapeDtypeStruct((Bp, Dp), jnp.float32),
        grid_spec=pltpu.PrefetchScalarGridSpec(
            num_scalar_prefetch=1,                      # idx_flat -> SMEM
            grid=(Bp // batch_tile,),
            in_specs=[
                pl.BlockSpec((batch_tile, T), lambda i, idx: (i, 0)),  # weights
                pl.BlockSpec(memory_space=pl.ANY),      # embedding stays in HBM
            ],
            out_specs=pl.BlockSpec((batch_tile, Dp), lambda i, idx: (i, 0)),
            scratch_shapes=[
                # double-buffered gathered rows: (slot, token, doc, dim)
                pltpu.VMEM((2, T, batch_tile, Dp), jnp.float32),
                pltpu.SemaphoreType.DMA((2,)),
            ],
        ),
        compiler_params=pltpu.CompilerParams(
            # gather buffers carry state across grid steps -> "arbitrary"
            dimension_semantics=("arbitrary",)),
    )(idx_flat, x_w, embedding)

    return out[:B, :D]


if __name__ == "__main__":
    # small synthetic config consistent with DECAFBase.__init__
    vocabulary_dims = 100            # params.vocabulary_dims
    V = vocabulary_dims + 1          # +1 padding row, as in the module
    embedding_dims = 64              # params.embedding_dims
    B, T = 16, 8                     # docs per batch, padded tokens per doc

    key = jax.random.PRNGKey(0)
    k_emb, k_idx, k_w = jax.random.split(key, 3)

    # deterministic embedding table; padding row explicitly zeroed
    embedding = jax.random.normal(k_emb, (V, embedding_dims), jnp.float32) * 0.1
    embedding = embedding.at[vocabulary_dims].set(0.0)

    # sparse document features: token indices + tf-idf weights
    x_idx = jax.random.randint(k_idx, (B, T), 0, V, dtype=jnp.int32)
    x_w = jax.random.uniform(k_w, (B, T), jnp.float32)
    x_w = jnp.where(x_idx == vocabulary_dims, 0.0, x_w)   # padded positions

    # batch_tile=8 gives a 2-step grid here (exercises prime + prefetch + tail);
    # raise it (e.g. 64/128) for realistic batch sizes to amortize per-step cost.
    out = decaf_encode(x_idx, x_w, embedding, batch_tile=8)
    out = jax.block_until_ready(out)

    # pure-JAX reference: weighted embedding bag
    ref = jnp.einsum("bt,btd->bd", x_w, embedding[x_idx])
    assert out.shape == (B, embedding_dims)
    assert jnp.allclose(out, ref, atol=1e-5, rtol=1e-5), "mismatch vs reference"

    print("KERNEL_OK")
</pallas_src>

<mosaic_0001>
module attributes {stable_mosaic.version = 11 : i64} {
  func.func @decaf_encode_kernel(%arg0: i32, %arg1: memref<128xi32, #tpu.memory_space<smem>>, %arg2: memref<8x8xf32, #tpu.memory_space<vmem>>, %arg3: memref<101x128xf32, #tpu.memory_space<any>>, %arg4: memref<8x128xf32, #tpu.memory_space<vmem>>, %arg5: memref<2x8x8x128xf32, #tpu.memory_space<vmem>>, %arg6: memref<2x!tpu.dma_semaphore, #tpu.memory_space<semaphore_mem>>) attributes {dimension_semantics = [#tpu.dimension_semantics<arbitrary>], iteration_bounds = array<i64: 2>, scalar_prefetch = 1 : i64, scratch_operands = 2 : i64, tpu.core_type = #tpu.core_type<tc>, window_params = [{transform_indices = @transform_0, window_bounds = array<i64: 8, 8>}, {}, {transform_indices = @transform_2, window_bounds = array<i64: 8, 128>}]} {
    %c0_i32 = arith.constant 0 : i32
    %0 = arith.cmpi eq, %arg0, %c0_i32 : i32
    %1 = arith.extui %0 : i1 to i32
    %c0_i32_0 = arith.constant 0 : i32
    %2 = arith.cmpi ne, %1, %c0_i32_0 : i32
    scf.if %2 {
      %c0_34 = arith.constant 0 : index
      %80 = memref.load %arg1[%c0_34] : memref<128xi32, #tpu.memory_space<smem>>
      %c0_i32_35 = arith.constant 0 : i32
      %c0_i32_36 = arith.constant 0 : i32
      %c0_i32_37 = arith.constant 0 : i32
      %c0_i32_38 = arith.constant 0 : i32
      %81 = tpu.memref_slice %arg3[%80, %c0_i32_38] : memref<101x128xf32, #tpu.memory_space<any>> -> memref<1x128xf32, #tpu.memory_space<any>>
      %c0_i32_39 = arith.constant 0 : i32
      %c0_i32_40 = arith.constant 0 : i32
      %82 = tpu.memref_slice %arg5[%c0_i32_35, %c0_i32_36, %c0_i32_39, %c0_i32_40] : memref<2x8x8x128xf32, #tpu.memory_space<vmem>> -> memref<1x1x1x128xf32, #tpu.memory_space<vmem>>
      %83 = tpu.memref_squeeze %82 : memref<1x1x1x128xf32, #tpu.memory_space<vmem>> -> memref<1x128xf32, #tpu.memory_space<vmem>>
      %84 = tpu.memref_slice %arg6[%c0_i32_37] : memref<2x!tpu.dma_semaphore, #tpu.memory_space<semaphore_mem>> -> memref<1x!tpu.dma_semaphore, #tpu.memory_space<semaphore_mem>>
      %85 = tpu.memref_squeeze %84 : memref<1x!tpu.dma_semaphore, #tpu.memory_space<semaphore_mem>> -> memref<!tpu.dma_semaphore, #tpu.memory_space<semaphore_mem>>
      tpu.enqueue_dma source(%81 : memref<1x128xf32, #tpu.memory_space<any>>) target(%83 : memref<1x128xf32, #tpu.memory_space<vmem>>) target_semaphore(%85 : memref<!tpu.dma_semaphore, #tpu.memory_space<semaphore_mem>>)
      %c1_41 = arith.constant 1 : index
      %86 = memref.load %arg1[%c1_41] : memref<128xi32, #tpu.memory_space<smem>>
      %c0_i32_42 = arith.constant 0 : i32
      %c1_i32_43 = arith.constant 1 : i32
      %c0_i32_44 = arith.constant 0 : i32
      %c0_i32_45 = arith.constant 0 : i32
      %87 = tpu.memref_slice %arg3[%86, %c0_i32_45] : memref<101x128xf32, #tpu.memory_space<any>> -> memref<1x128xf32, #tpu.memory_space<any>>
      %c0_i32_46 = arith.constant 0 : i32
      %c0_i32_47 = arith.constant 0 : i32
      %88 = tpu.memref_slice %arg5[%c0_i32_42, %c1_i32_43, %c0_i32_46, %c0_i32_47] : memref<2x8x8x128xf32, #tpu.memory_space<vmem>> -> memref<1x1x1x128xf32, #tpu.memory_space<vmem>>
      %89 = tpu.memref_squeeze %88 : memref<1x1x1x128xf32, #tpu.memory_space<vmem>> -> memref<1x128xf32, #tpu.memory_space<vmem>>
      %90 = tpu.memref_slice %arg6[%c0_i32_44] : memref<2x!tpu.dma_semaphore, #tpu.memory_space<semaphore_mem>> -> memref<1x!tpu.dma_semaphore, #tpu.memory_space<semaphore_mem>>
      %91 = tpu.memref_squeeze %90 : memref<1x!tpu.dma_semaphore, #tpu.memory_space<semaphore_mem>> -> memref<!tpu.dma_semaphore, #tpu.memory_space<semaphore_mem>>
      tpu.enqueue_dma source(%87 : memref<1x128xf32, #tpu.memory_space<any>>) target(%89 : memref<1x128xf32, #tpu.memory_space<vmem>>) target_semaphore(%91 : memref<!tpu.dma_semaphore, #tpu.memory_space<semaphore_mem>>)
      %c2_48 = arith.constant 2 : index
      %92 = memref.load %arg1[%c2_48] : memref<128xi32, #tpu.memory_space<smem>>
      %c0_i32_49 = arith.constant 0 : i32
      %c2_i32_50 = arith.constant 2 : i32
      %c0_i32_51 = arith.constant 0 : i32
      %c0_i32_52 = arith.constant 0 : i32
      %93 = tpu.memref_slice %arg3[%92, %c0_i32_52] : memref<101x128xf32, #tpu.memory_space<any>> -> memref<1x128xf32, #tpu.memory_space<any>>
      %c0_i32_53 = arith.constant 0 : i32
      %c0_i32_54 = arith.constant 0 : i32
      %94 = tpu.memref_slice %arg5[%c0_i32_49, %c2_i32_50, %c0_i32_53, %c0_i32_54] : memref<2x8x8x128xf32, #tpu.memory_space<vmem>> -> memref<1x1x1x128xf32, #tpu.memory_space<vmem>>
      %95 = tpu.memref_squeeze %94 : memref<1x1x1x128xf32, #tpu.memory_space<vmem>> -> memref<1x128xf32, #tpu.memory_space<vmem>>
      %96 = tpu.memref_slice %arg6[%c0_i32_51] : memref<2x!tpu.dma_semaphore, #tpu.memory_space<semaphore_mem>> -> memref<1x!tpu.dma_semaphore, #tpu.memory_space<semaphore_mem>>
      %97 = tpu.memref_squeeze %96 : memref<1x!tpu.dma_semaphore, #tpu.memory_space<semaphore_mem>> -> memref<!tpu.dma_semaphore, #tpu.memory_space<semaphore_mem>>
      tpu.enqueue_dma source(%93 : memref<1x128xf32, #tpu.memory_space<any>>) target(%95 : memref<1x128xf32, #tpu.memory_space<vmem>>) target_semaphore(%97 : memref<!tpu.dma_semaphore, #tpu.memory_space<semaphore_mem>>)
      %c3_55 = arith.constant 3 : index
      %98 = memref.load %arg1[%c3_55] : memref<128xi32, #tpu.memory_space<smem>>
      %c0_i32_56 = arith.constant 0 : i32
      %c3_i32 = arith.constant 3 : i32
      %c0_i32_57 = arith.constant 0 : i32
      %c0_i32_58 = arith.constant 0 : i32
      %99 = tpu.memref_slice %arg3[%98, %c0_i32_58] : memref<101x128xf32, #tpu.memory_space<any>> -> memref<1x128xf32, #tpu.memory_space<any>>
      %c0_i32_59 = arith.constant 0 : i32
      %c0_i32_60 = arith.constant 0 : i32
      %100 = tpu.memref_slice %arg5[%c0_i32_56, %c3_i32, %c0_i32_59, %c0_i32_60] : memref<2x8x8x128xf32, #tpu.memory_space<vmem>> -> memref<1x1x1x128xf32, #tpu.memory_space<vmem>>
      %101 = tpu.memref_squeeze %100 : memref<1x1x1x128xf32, #tpu.memory_space<vmem>> -> memref<1x128xf32, #tpu.memory_space<vmem>>
      %102 = tpu.memref_slice %arg6[%c0_i32_57] : memref<2x!tpu.dma_semaphore, #tpu.memory_space<semaphore_mem>> -> memref<1x!tpu.dma_semaphore, #tpu.memory_space<semaphore_mem>>
      %103 = tpu.memref_squeeze %102 : memref<1x!tpu.dma_semaphore, #tpu.memory_space<semaphore_mem>> -> memref<!tpu.dma_semaphore, #tpu.memory_space<semaphore_mem>>
      tpu.enqueue_dma source(%99 : memref<1x128xf32, #tpu.memory_space<any>>) target(%101 : memref<1x128xf32, #tpu.memory_space<vmem>>) target_semaphore(%103 : memref<!tpu.dma_semaphore, #tpu.memory_space<semaphore_mem>>)
      %c4_61 = arith.constant 4 : index
      %104 = memref.load %arg1[%c4_61] : memref<128xi32, #tpu.memory_space<smem>>
      %c0_i32_62 = arith.constant 0 : i32
      %c4_i32 = arith.constant 4 : i32
      %c0_i32_63 = arith.constant 0 : i32
      %c0_i32_64 = arith.constant 0 : i32
      %105 = tpu.memref_slice %arg3[%104, %c0_i32_64] : memref<101x128xf32, #tpu.memory_space<any>> -> memref<1x128xf32, #tpu.memory_space<any>>
      %c0_i32_65 = arith.constant 0 : i32
      %c0_i32_66 = arith.constant 0 : i32
      %106 = tpu.memref_slice %arg5[%c0_i32_62, %c4_i32, %c0_i32_65, %c0_i32_66] : memref<2x8x8x128xf32, #tpu.memory_space<vmem>> -> memref<1x1x1x128xf32, #tpu.memory_space<vmem>>
      %107 = tpu.memref_squeeze %106 : memref<1x1x1x128xf32, #tpu.memory_space<vmem>> -> memref<1x128xf32, #tpu.memory_space<vmem>>
      %108 = tpu.memref_slice %arg6[%c0_i32_63] : memref<2x!tpu.dma_semaphore, #tpu.memory_space<semaphore_mem>> -> memref<1x!tpu.dma_semaphore, #tpu.memory_space<semaphore_mem>>
      %109 = tpu.memref_squeeze %108 : memref<1x!tpu.dma_semaphore, #tpu.memory_space<semaphore_mem>> -> memref<!tpu.dma_semaphore, #tpu.memory_space<semaphore_mem>>
      tpu.enqueue_dma source(%105 : memref<1x128xf32, #tpu.memory_space<any>>) target(%107 : memref<1x128xf32, #tpu.memory_space<vmem>>) target_semaphore(%109 : memref<!tpu.dma_semaphore, #tpu.memory_space<semaphore_mem>>)
      %c5_67 = arith.constant 5 : index
      %110 = memref.load %arg1[%c5_67] : memref<128xi32, #tpu.memory_space<smem>>
      %c0_i32_68 = arith.constant 0 : i32
      %c5_i32 = arith.constant 5 : i32
      %c0_i32_69 = arith.constant 0 : i32
      %c0_i32_70 = arith.constant 0 : i32
      %111 = tpu.memref_slice %arg3[%110, %c0_i32_70] : memref<101x128xf32, #tpu.memory_space<any>> -> memref<1x128xf32, #tpu.memory_space<any>>
      %c0_i32_71 = arith.constant 0 : i32
      %c0_i32_72 = arith.constant 0 : i32
      %112 = tpu.memref_slice %arg5[%c0_i32_68, %c5_i32, %c0_i32_71, %c0_i32_72] : memref<2x8x8x128xf32, #tpu.memory_space<vmem>> -> memref<1x1x1x128xf32, #tpu.memory_space<vmem>>
      %113 = tpu.memref_squeeze %112 : memref<1x1x1x128xf32, #tpu.memory_space<vmem>> -> memref<1x128xf32, #tpu.memory_space<vmem>>
      %114 = tpu.memref_slice %arg6[%c0_i32_69] : memref<2x!tpu.dma_semaphore, #tpu.memory_space<semaphore_mem>> -> memref<1x!tpu.dma_semaphore, #tpu.memory_space<semaphore_mem>>
      %115 = tpu.memref_squeeze %114 : memref<1x!tpu.dma_semaphore, #tpu.memory_space<semaphore_mem>> -> memref<!tpu.dma_semaphore, #tpu.memory_space<semaphore_mem>>
      tpu.enqueue_dma source(%111 : memref<1x128xf32, #tpu.memory_space<any>>) target(%113 : memref<1x128xf32, #tpu.memory_space<vmem>>) target_semaphore(%115 : memref<!tpu.dma_semaphore, #tpu.memory_space<semaphore_mem>>)
      %c6_73 = arith.constant 6 : index
      %116 = memref.load %arg1[%c6_73] : memref<128xi32, #tpu.memory_space<smem>>
      %c0_i32_74 = arith.constant 0 : i32
      %c6_i32 = arith.constant 6 : i32
      %c0_i32_75 = arith.constant 0 : i32
      %c0_i32_76 = arith.constant 0 : i32
      %117 = tpu.memref_slice %arg3[%116, %c0_i32_76] : memref<101x128xf32, #tpu.memory_space<any>> -> memref<1x128xf32, #tpu.memory_space<any>>
      %c0_i32_77 = arith.constant 0 : i32
      %c0_i32_78 = arith.constant 0 : i32
      %118 = tpu.memref_slice %arg5[%c0_i32_74, %c6_i32, %c0_i32_77, %c0_i32_78] : memref<2x8x8x128xf32, #tpu.memory_space<vmem>> -> memref<1x1x1x128xf32, #tpu.memory_space<vmem>>
      %119 = tpu.memref_squeeze %118 : memref<1x1x1x128xf32, #tpu.memory_space<vmem>> -> memref<1x128xf32, #tpu.memory_space<vmem>>
      %120 = tpu.memref_slice %arg6[%c0_i32_75] : memref<2x!tpu.dma_semaphore, #tpu.memory_space<semaphore_mem>> -> memref<1x!tpu.dma_semaphore, #tpu.memory_space<semaphore_mem>>
      %121 = tpu.memref_squeeze %120 : memref<1x!tpu.dma_semaphore, #tpu.memory_space<semaphore_mem>> -> memref<!tpu.dma_semaphore, #tpu.memory_space<semaphore_mem>>
      tpu.enqueue_dma source(%117 : memref<1x128xf32, #tpu.memory_space<any>>) target(%119 : memref<1x128xf32, #tpu.memory_space<vmem>>) target_semaphore(%121 : memref<!tpu.dma_semaphore, #tpu.memory_space<semaphore_mem>>)
      %c7_79 = arith.constant 7 : index
      %122 = memref.load %arg1[%c7_79] : memref<128xi32, #tpu.memory_space<smem>>
      %c0_i32_80 = arith.constant 0 : i32
      %c7_i32 = arith.constant 7 : i32
      %c0_i32_81 = arith.constant 0 : i32
      %c0_i32_82 = arith.constant 0 : i32
      %123 = tpu.memref_slice %arg3[%122, %c0_i32_82] : memref<101x128xf32, #tpu.memory_space<any>> -> memref<1x128xf32, #tpu.memory_space<any>>
      %c0_i32_83 = arith.constant 0 : i32
      %c0_i32_84 = arith.constant 0 : i32
      %124 = tpu.memref_slice %arg5[%c0_i32_80, %c7_i32, %c0_i32_83, %c0_i32_84] : memref<2x8x8x128xf32, #tpu.memory_space<vmem>> -> memref<1x1x1x128xf32, #tpu.memory_space<vmem>>
      %125 = tpu.memref_squeeze %124 : memref<1x1x1x128xf32, #tpu.memory_space<vmem>> -> memref<1x128xf32, #tpu.memory_space<vmem>>
      %126 = tpu.memref_slice %arg6[%c0_i32_81] : memref<2x!tpu.dma_semaphore, #tpu.memory_space<semaphore_mem>> -> memref<1x!tpu.dma_semaphore, #tpu.memory_space<semaphore_mem>>
      %127 = tpu.memref_squeeze %126 : memref<1x!tpu.dma_semaphore, #tpu.memory_space<semaphore_mem>> -> memref<!tpu.dma_semaphore, #tpu.memory_space<semaphore_mem>>
      tpu.enqueue_dma source(%123 : memref<1x128xf32, #tpu.memory_space<any>>) target(%125 : memref<1x128xf32, #tpu.memory_space<vmem>>) target_semaphore(%127 : memref<!tpu.dma_semaphore, #tpu.memory_space<semaphore_mem>>)
      %c8 = arith.constant 8 : index
      %128 = memref.load %arg1[%c8] : memref<128xi32, #tpu.memory_space<smem>>
      %c0_i32_85 = arith.constant 0 : i32
      %c0_i32_86 = arith.constant 0 : i32
      %c0_i32_87 = arith.constant 0 : i32
      %c0_i32_88 = arith.constant 0 : i32
      %129 = tpu.memref_slice %arg3[%128, %c0_i32_88] : memref<101x128xf32, #tpu.memory_space<any>> -> memref<1x128xf32, #tpu.memory_space<any>>
      %c1_i32_89 = arith.constant 1 : i32
      %c0_i32_90 = arith.constant 0 : i32
      %130 = tpu.memref_slice %arg5[%c0_i32_85, %c0_i32_86, %c1_i32_89, %c0_i32_90] : memref<2x8x8x128xf32, #tpu.memory_space<vmem>> -> memref<1x1x1x128xf32, #tpu.memory_space<vmem>>
      %131 = tpu.memref_squeeze %130 : memref<1x1x1x128xf32, #tpu.memory_space<vmem>> -> memref<1x128xf32, #tpu.memory_space<vmem>>
      %132 = tpu.memref_slice %arg6[%c0_i32_87] : memref<2x!tpu.dma_semaphore, #tpu.memory_space<semaphore_mem>> -> memref<1x!tpu.dma_semaphore, #tpu.memory_space<semaphore_mem>>
      %133 = tpu.memref_squeeze %132 : memref<1x!tpu.dma_semaphore, #tpu.memory_space<semaphore_mem>> -> memref<!tpu.dma_semaphore, #tpu.memory_space<semaphore_mem>>
      tpu.enqueue_dma source(%129 : memref<1x128xf32, #tpu.memory_space<any>>) target(%131 : memref<1x128xf32, #tpu.memory_space<vmem>>) target_semaphore(%133 : memref<!tpu.dma_semaphore, #tpu.memory_space<semaphore_mem>>)
      %c9 = arith.constant 9 : index
      %134 = memref.load %arg1[%c9] : memref<128xi32, #tpu.memory_space<smem>>
      %c0_i32_91 = arith.constant 0 : i32
      %c1_i32_92 = arith.constant 1 : i32
      %c0_i32_93 = arith.constant 0 : i32
      %c0_i32_94 = arith.constant 0 : i32
      %135 = tpu.memref_slice %arg3[%134, %c0_i32_94] : memref<101x128xf32, #tpu.memory_space<any>> -> memref<1x128xf32, #tpu.memory_space<any>>
      %c1_i32_95 = arith.constant 1 : i32
      %c0_i32_96 = arith.constant 0 : i32
      %136 = tpu.memref_slice %arg5[%c0_i32_91, %c1_i32_92, %c1_i32_95, %c0_i32_96] : memref<2x8x8x128xf32, #tpu.memory_space<vmem>> -> memref<1x1x1x128xf32, #tpu.memory_space<vmem>>
      %137 = tpu.memref_squeeze %136 : memref<1x1x1x128xf32, #tpu.memory_space<vmem>> -> memref<1x128xf32, #tpu.memory_space<vmem>>
      %138 = tpu.memref_slice %arg6[%c0_i32_93] : memref<2x!tpu.dma_semaphore, #tpu.memory_space<semaphore_mem>> -> memref<1x!tpu.dma_semaphore, #tpu.memory_space<semaphore_mem>>
      %139 = tpu.memref_squeeze %138 : memref<1x!tpu.dma_semaphore, #tpu.memory_space<semaphore_mem>> -> memref<!tpu.dma_semaphore, #tpu.memory_space<semaphore_mem>>
      tpu.enqueue_dma source(%135 : memref<1x128xf32, #tpu.memory_space<any>>) target(%137 : memref<1x128xf32, #tpu.memory_space<vmem>>) target_semaphore(%139 : memref<!tpu.dma_semaphore, #tpu.memory_space<semaphore_mem>>)
      %c10 = arith.constant 10 : index
      %140 = memref.load %arg1[%c10] : memref<128xi32, #tpu.memory_space<smem>>
      %c0_i32_97 = arith.constant 0 : i32
      %c2_i32_98 = arith.constant 2 : i32
      %c0_i32_99 = arith.constant 0 : i32
      %c0_i32_100 = arith.constant 0 : i32
      %141 = tpu.memref_slice %arg3[%140, %c0_i32_100] : memref<101x128xf32, #tpu.memory_space<any>> -> memref<1x128xf32, #tpu.memory_space<any>>
      %c1_i32_101 = arith.constant 1 : i32
      %c0_i32_102 = arith.constant 0 : i32
      %142 = tpu.memref_slice %arg5[%c0_i32_97, %c2_i32_98, %c1_i32_101, %c0_i32_102] : memref<2x8x8x128xf32, #tpu.memory_space<vmem>> -> memref<1x1x1x128xf32, #tpu.memory_space<vmem>>
      %143 = tpu.memref_squeeze %142 : memref<1x1x1x128xf32, #tpu.memory_space<vmem>> -> memref<1x128xf32, #tpu.memory_space<vmem>>
      %144 = tpu.memref_slice %arg6[%c0_i32_99] : memref<2x!tpu.dma_semaphore, #tpu.memory_space<semaphore_mem>> -> memref<1x!tpu.dma_semaphore, #tpu.memory_space<semaphore_mem>>
      %145 = tpu.memref_squeeze %144 : memref<1x!tpu.dma_semaphore, #tpu.memory_space<semaphore_mem>> -> memref<!tpu.dma_semaphore, #tpu.memory_space<semaphore_mem>>
      tpu.enqueue_dma source(%141 : memref<1x128xf32, #tpu.memory_space<any>>) target(%143 : memref<1x128xf32, #tpu.memory_space<vmem>>) target_semaphore(%145 : memref<!tpu.dma_semaphore, #tpu.memory_space<semaphore_mem>>)
      %c11 = arith.constant 11 : index
      %146 = memref.load %arg1[%c11] : memref<128xi32, #tpu.memory_space<smem>>
      %c0_i32_103 = arith.constant 0 : i32
      %c3_i32_104 = arith.constant 3 : i32
      %c0_i32_105 = arith.constant 0 : i32
      %c0_i32_106 = arith.constant 0 : i32
      %147 = tpu.memref_slice %arg3[%146, %c0_i32_106] : memref<101x128xf32, #tpu.memory_space<any>> -> memref<1x128xf32, #tpu.memory_space<any>>
      %c1_i32_107 = arith.constant 1 : i32
      %c0_i32_108 = arith.constant 0 : i32
      %148 = tpu.memref_slice %arg5[%c0_i32_103, %c3_i32_104, %c1_i32_107, %c0_i32_108] : memref<2x8x8x128xf32, #tpu.memory_space<vmem>> -> memref<1x1x1x128xf32, #tpu.memory_space<vmem>>
      %149 = tpu.memref_squeeze %148 : memref<1x1x1x128xf32, #tpu.memory_space<vmem>> -> memref<1x128xf32, #tpu.memory_space<vmem>>
      %150 = tpu.memref_slice %arg6[%c0_i32_105] : memref<2x!tpu.dma_semaphore, #tpu.memory_space<semaphore_mem>> -> memref<1x!tpu.dma_semaphore, #tpu.memory_space<semaphore_mem>>
      %151 = tpu.memref_squeeze %150 : memref<1x!tpu.dma_semaphore, #tpu.memory_space<semaphore_mem>> -> memref<!tpu.dma_semaphore, #tpu.memory_space<semaphore_mem>>
      tpu.enqueue_dma source(%147 : memref<1x128xf32, #tpu.memory_space<any>>) target(%149 : memref<1x128xf32, #tpu.memory_space<vmem>>) target_semaphore(%151 : memref<!tpu.dma_semaphore, #tpu.memory_space<semaphore_mem>>)
      %c12 = arith.constant 12 : index
      %152 = memref.load %arg1[%c12] : memref<128xi32, #tpu.memory_space<smem>>
      %c0_i32_109 = arith.constant 0 : i32
      %c4_i32_110 = arith.constant 4 : i32
      %c0_i32_111 = arith.constant 0 : i32
      %c0_i32_112 = arith.constant 0 : i32
      %153 = tpu.memref_slice %arg3[%152, %c0_i32_112] : memref<101x128xf32, #tpu.memory_space<any>> -> memref<1x128xf32, #tpu.memory_space<any>>
      %c1_i32_113 = arith.constant 1 : i32
      %c0_i32_114 = arith.constant 0 : i32
      %154 = tpu.memref_slice %arg5[%c0_i32_109, %c4_i32_110, %c1_i32_113, %c0_i32_114] : memref<2x8x8x128xf32, #tpu.memory_space<vmem>> -> memref<1x1x1x128xf32, #tpu.memory_space<vmem>>
      %155 = tpu.memref_squeeze %154 : memref<1x1x1x128xf32, #tpu.memory_space<vmem>> -> memref<1x128xf32, #tpu.memory_space<vmem>>
      %156 = tpu.memref_slice %arg6[%c0_i32_111] : memref<2x!tpu.dma_semaphore, #tpu.memory_space<semaphore_mem>> -> memref<1x!tpu.dma_semaphore, #tpu.memory_space<semaphore_mem>>
      %157 = tpu.memref_squeeze %156 : memref<1x!tpu.dma_semaphore, #tpu.memory_space<semaphore_mem>> -> memref<!tpu.dma_semaphore, #tpu.memory_space<semaphore_mem>>
      tpu.enqueue_dma source(%153 : memref<1x128xf32, #tpu.memory_space<any>>) target(%155 : memref<1x128xf32, #tpu.memory_space<vmem>>) target_semaphore(%157 : memref<!tpu.dma_semaphore, #tpu.memory_space<semaphore_mem>>)
      %c13 = arith.constant 13 : index
      %158 = memref.load %arg1[%c13] : memref<128xi32, #tpu.memory_space<smem>>
      %c0_i32_115 = arith.constant 0 : i32
      %c5_i32_116 = arith.constant 5 : i32
      %c0_i32_117 = arith.constant 0 : i32
      %c0_i32_118 = arith.constant 0 : i32
      %159 = tpu.memref_slice %arg3[%158, %c0_i32_118] : memref<101x128xf32, #tpu.memory_space<any>> -> memref<1x128xf32, #tpu.memory_space<any>>
      %c1_i32_119 = arith.constant 1 : i32
      %c0_i32_120 = arith.constant 0 : i32
      %160 = tpu.memref_slice %arg5[%c0_i32_115, %c5_i32_116, %c1_i32_119, %c0_i32_120] : memref<2x8x8x128xf32, #tpu.memory_space<vmem>> -> memref<1x1x1x128xf32, #tpu.memory_space<vmem>>
      %161 = tpu.memref_squeeze %160 : memref<1x1x1x128xf32, #tpu.memory_space<vmem>> -> memref<1x128xf32, #tpu.memory_space<vmem>>
      %162 = tpu.memref_slice %arg6[%c0_i32_117] : memref<2x!tpu.dma_semaphore, #tpu.memory_space<semaphore_mem>> -> memref<1x!tpu.dma_semaphore, #tpu.memory_space<semaphore_mem>>
      %163 = tpu.memref_squeeze %162 : memref<1x!tpu.dma_semaphore, #tpu.memory_space<semaphore_mem>> -> memref<!tpu.dma_semaphore, #tpu.memory_space<semaphore_mem>>
      tpu.enqueue_dma source(%159 : memref<1x128xf32, #tpu.memory_space<any>>) target(%161 : memref<1x128xf32, #tpu.memory_space<vmem>>) target_semaphore(%163 : memref<!tpu.dma_semaphore, #tpu.memory_space<semaphore_mem>>)
      %c14 = arith.constant 14 : index
      %164 = memref.load %arg1[%c14] : memref<128xi32, #tpu.memory_space<smem>>
      %c0_i32_121 = arith.constant 0 : i32
      %c6_i32_122 = arith.constant 6 : i32
      %c0_i32_123 = arith.constant 0 : i32
      %c0_i32_124 = arith.constant 0 : i32
      %165 = tpu.memref_slice %arg3[%164, %c0_i32_124] : memref<101x128xf32, #tpu.memory_space<any>> -> memref<1x128xf32, #tpu.memory_space<any>>
      %c1_i32_125 = arith.constant 1 : i32
      %c0_i32_126 = arith.constant 0 : i32
      %166 = tpu.memref_slice %arg5[%c0_i32_121, %c6_i32_122, %c1_i32_125, %c0_i32_126] : memref<2x8x8x128xf32, #tpu.memory_space<vmem>> -> memref<1x1x1x128xf32, #tpu.memory_space<vmem>>
      %167 = tpu.memref_squeeze %166 : memref<1x1x1x128xf32, #tpu.memory_space<vmem>> -> memref<1x128xf32, #tpu.memory_space<vmem>>
      %168 = tpu.memref_slice %arg6[%c0_i32_123] : memref<2x!tpu.dma_semaphore, #tpu.memory_space<semaphore_mem>> -> memref<1x!tpu.dma_semaphore, #tpu.memory_space<semaphore_mem>>
      %169 = tpu.memref_squeeze %168 : memref<1x!tpu.dma_semaphore, #tpu.memory_space<semaphore_mem>> -> memref<!tpu.dma_semaphore, #tpu.memory_space<semaphore_mem>>
      tpu.enqueue_dma source(%165 : memref<1x128xf32, #tpu.memory_space<any>>) target(%167 : memref<1x128xf32, #tpu.memory_space<vmem>>) target_semaphore(%169 : memref<!tpu.dma_semaphore, #tpu.memory_space<semaphore_mem>>)
      %c15 = arith.constant 15 : index
      %170 = memref.load %arg1[%c15] : memref<128xi32, #tpu.memory_space<smem>>
      %c0_i32_127 = arith.constant 0 : i32
      %c7_i32_128 = arith.constant 7 : i32
      %c0_i32_129 = arith.constant 0 : i32
      %c0_i32_130 = arith.constant 0 : i32
      %171 = tpu.memref_slice %arg3[%170, %c0_i32_130] : memref<101x128xf32, #tpu.memory_space<any>> -> memref<1x128xf32, #tpu.memory_space<any>>
      %c1_i32_131 = arith.constant 1 : i32
      %c0_i32_132 = arith.constant 0 : i32
      %172 = tpu.memref_slice %arg5[%c0_i32_127, %c7_i32_128, %c1_i32_131, %c0_i32_132] : memref<2x8x8x128xf32, #tpu.memory_space<vmem>> -> memref<1x1x1x128xf32, #tpu.memory_space<vmem>>
      %173 = tpu.memref_squeeze %172 : memref<1x1x1x128xf32, #tpu.memory_space<vmem>> -> memref<1x128xf32, #tpu.memory_space<vmem>>
      %174 = tpu.memref_slice %arg6[%c0_i32_129] : memref<2x!tpu.dma_semaphore, #tpu.memory_space<semaphore_mem>> -> memref<1x!tpu.dma_semaphore, #tpu.memory_space<semaphore_mem>>
      %175 = tpu.memref_squeeze %174 : memref<1x!tpu.dma_semaphore, #tpu.memory_space<semaphore_mem>> -> memref<!tpu.dma_semaphore, #tpu.memory_space<semaphore_mem>>
      tpu.enqueue_dma source(%171 : memref<1x128xf32, #tpu.memory_space<any>>) target(%173 : memref<1x128xf32, #tpu.memory_space<vmem>>) target_semaphore(%175 : memref<!tpu.dma_semaphore, #tpu.memory_space<semaphore_mem>>)
      %c16 = arith.constant 16 : index
      %176 = memref.load %arg1[%c16] : memref<128xi32, #tpu.memory_space<smem>>
      %c0_i32_133 = arith.constant 0 : i32
      %c0_i32_134 = arith.constant 0 : i32
      %c0_i32_135 = arith.constant 0 : i32
      %c0_i32_136 = arith.constant 0 : i32
      %177 = tpu.memref_slice %arg3[%176, %c0_i32_136] : memref<101x128xf32, #tpu.memory_space<any>> -> memref<1x128xf32, #tpu.memory_space<any>>
      %c2_i32_137 = arith.constant 2 : i32
      %c0_i32_138 = arith.constant 0 : i32
      %178 = tpu.memref_slice %arg5[%c0_i32_133, %c0_i32_134, %c2_i32_137, %c0_i32_138] : memref<2x8x8x128xf32, #tpu.memory_space<vmem>> -> memref<1x1x1x128xf32, #tpu.memory_space<vmem>>
      %179 = tpu.memref_squeeze %178 : memref<1x1x1x128xf32, #tpu.memory_space<vmem>> -> memref<1x128xf32, #tpu.memory_space<vmem>>
      %180 = tpu.memref_slice %arg6[%c0_i32_135] : memref<2x!tpu.dma_semaphore, #tpu.memory_space<semaphore_mem>> -> memref<1x!tpu.dma_semaphore, #tpu.memory_space<semaphore_mem>>
      %181 = tpu.memref_squeeze %180 : memref<1x!tpu.dma_semaphore, #tpu.memory_space<semaphore_mem>> -> memref<!tpu.dma_semaphore, #tpu.memory_space<semaphore_mem>>
      tpu.enqueue_dma source(%177 : memref<1x128xf32, #tpu.memory_space<any>>) target(%179 : memref<1x128xf32, #tpu.memory_space<vmem>>) target_semaphore(%181 : memref<!tpu.dma_semaphore, #tpu.memory_space<semaphore_mem>>)
      %c17 = arith.constant 17 : index
      %182 = memref.load %arg1[%c17] : memref<128xi32, #tpu.memory_space<smem>>
      %c0_i32_139 = arith.constant 0 : i32
      %c1_i32_140 = arith.constant 1 : i32
      %c0_i32_141 = arith.constant 0 : i32
      %c0_i32_142 = arith.constant 0 : i32
      %183 = tpu.memref_slice %arg3[%182, %c0_i32_142] : memref<101x128xf32, #tpu.memory_space<any>> -> memref<1x128xf32, #tpu.memory_space<any>>
      %c2_i32_143 = arith.constant 2 : i32
      %c0_i32_144 = arith.constant 0 : i32
      %184 = tpu.memref_slice %arg5[%c0_i32_139, %c1_i32_140, %c2_i32_143, %c0_i32_144] : memref<2x8x8x128xf32, #tpu.memory_space<vmem>> -> memref<1x1x1x128xf32, #tpu.memory_space<vmem>>
      %185 = tpu.memref_squeeze %184 : memref<1x1x1x128xf32, #tpu.memory_space<vmem>> -> memref<1x128xf32, #tpu.memory_space<vmem>>
      %186 = tpu.memref_slice %arg6[%c0_i32_141] : memref<2x!tpu.dma_semaphore, #tpu.memory_space<semaphore_mem>> -> memref<1x!tpu.dma_semaphore, #tpu.memory_space<semaphore_mem>>
      %187 = tpu.memref_squeeze %186 : memref<1x!tpu.dma_semaphore, #tpu.memory_space<semaphore_mem>> -> memref<!tpu.dma_semaphore, #tpu.memory_space<semaphore_mem>>
      tpu.enqueue_dma source(%183 : memref<1x128xf32, #tpu.memory_space<any>>) target(%185 : memref<1x128xf32, #tpu.memory_space<vmem>>) target_semaphore(%187 : memref<!tpu.dma_semaphore, #tpu.memory_space<semaphore_mem>>)
      %c18 = arith.constant 18 : index
      %188 = memref.load %arg1[%c18] : memref<128xi32, #tpu.memory_space<smem>>
      %c0_i32_145 = arith.constant 0 : i32
      %c2_i32_146 = arith.constant 2 : i32
      %c0_i32_147 = arith.constant 0 : i32
      %c0_i32_148 = arith.constant 0 : i32
      %189 = tpu.memref_slice %arg3[%188, %c0_i32_148] : memref<101x128xf32, #tpu.memory_space<any>> -> memref<1x128xf32, #tpu.memory_space<any>>
      %c2_i32_149 = arith.constant 2 : i32
      %c0_i32_150 = arith.constant 0 : i32
      %190 = tpu.memref_slice %arg5[%c0_i32_145, %c2_i32_146, %c2_i32_149, %c0_i32_150] : memref<2x8x8x128xf32, #tpu.memory_space<vmem>> -> memref<1x1x1x128xf32, #tpu.memory_space<vmem>>
      %191 = tpu.memref_squeeze %190 : memref<1x1x1x128xf32, #tpu.memory_space<vmem>> -> memref<1x128xf32, #tpu.memory_space<vmem>>
      %192 = tpu.memref_slice %arg6[%c0_i32_147] : memref<2x!tpu.dma_semaphore, #tpu.memory_space<semaphore_mem>> -> memref<1x!tpu.dma_semaphore, #tpu.memory_space<semaphore_mem>>
      %193 = tpu.memref_squeeze %192 : memref<1x!tpu.dma_semaphore, #tpu.memory_space<semaphore_mem>> -> memref<!tpu.dma_semaphore, #tpu.memory_space<semaphore_mem>>
      tpu.enqueue_dma source(%189 : memref<1x128xf32, #tpu.memory_space<any>>) target(%191 : memref<1x128xf32, #tpu.memory_space<vmem>>) target_semaphore(%193 : memref<!tpu.dma_semaphore, #tpu.memory_space<semaphore_mem>>)
      %c19 = arith.constant 19 : index
      %194 = memref.load %arg1[%c19] : memref<128xi32, #tpu.memory_space<smem>>
      %c0_i32_151 = arith.constant 0 : i32
      %c3_i32_152 = arith.constant 3 : i32
      %c0_i32_153 = arith.constant 0 : i32
      %c0_i32_154 = arith.constant 0 : i32
      %195 = tpu.memref_slice %arg3[%194, %c0_i32_154] : memref<101x128xf32, #tpu.memory_space<any>> -> memref<1x128xf32, #tpu.memory_space<any>>
      %c2_i32_155 = arith.constant 2 : i32
      %c0_i32_156 = arith.constant 0 : i32
      %196 = tpu.memref_slice %arg5[%c0_i32_151, %c3_i32_152, %c2_i32_155, %c0_i32_156] : memref<2x8x8x128xf32, #tpu.memory_space<vmem>> -> memref<1x1x1x128xf32, #tpu.memory_space<vmem>>
      %197 = tpu.memref_squeeze %196 : memref<1x1x1x128xf32, #tpu.memory_space<vmem>> -> memref<1x128xf32, #tpu.memory_space<vmem>>
      %198 = tpu.memref_slice %arg6[%c0_i32_153] : memref<2x!tpu.dma_semaphore, #tpu.memory_space<semaphore_mem>> -> memref<1x!tpu.dma_semaphore, #tpu.memory_space<semaphore_mem>>
      %199 = tpu.memref_squeeze %198 : memref<1x!tpu.dma_semaphore, #tpu.memory_space<semaphore_mem>> -> memref<!tpu.dma_semaphore, #tpu.memory_space<semaphore_mem>>
      tpu.enqueue_dma source(%195 : memref<1x128xf32, #tpu.memory_space<any>>) target(%197 : memref<1x128xf32, #tpu.memory_space<vmem>>) target_semaphore(%199 : memref<!tpu.dma_semaphore, #tpu.memory_space<semaphore_mem>>)
      %c20 = arith.constant 20 : index
      %200 = memref.load %arg1[%c20] : memref<128xi32, #tpu.memory_space<smem>>
      %c0_i32_157 = arith.constant 0 : i32
      %c4_i32_158 = arith.constant 4 : i32
      %c0_i32_159 = arith.constant 0 : i32
      %c0_i32_160 = arith.constant 0 : i32
      %201 = tpu.memref_slice %arg3[%200, %c0_i32_160] : memref<101x128xf32, #tpu.memory_space<any>> -> memref<1x128xf32, #tpu.memory_space<any>>
      %c2_i32_161 = arith.constant 2 : i32
      %c0_i32_162 = arith.constant 0 : i32
      %202 = tpu.memref_slice %arg5[%c0_i32_157, %c4_i32_158, %c2_i32_161, %c0_i32_162] : memref<2x8x8x128xf32, #tpu.memory_space<vmem>> -> memref<1x1x1x128xf32, #tpu.memory_space<vmem>>
      %203 = tpu.memref_squeeze %202 : memref<1x1x1x128xf32, #tpu.memory_space<vmem>> -> memref<1x128xf32, #tpu.memory_space<vmem>>
      %204 = tpu.memref_slice %arg6[%c0_i32_159] : memref<2x!tpu.dma_semaphore, #tpu.memory_space<semaphore_mem>> -> memref<1x!tpu.dma_semaphore, #tpu.memory_space<semaphore_mem>>
      %205 = tpu.memref_squeeze %204 : memref<1x!tpu.dma_semaphore, #tpu.memory_space<semaphore_mem>> -> memref<!tpu.dma_semaphore, #tpu.memory_space<semaphore_mem>>
      tpu.enqueue_dma source(%201 : memref<1x128xf32, #tpu.memory_space<any>>) target(%203 : memref<1x128xf32, #tpu.memory_space<vmem>>) target_semaphore(%205 : memref<!tpu.dma_semaphore, #tpu.memory_space<semaphore_mem>>)
      %c21 = arith.constant 21 : index
      %206 = memref.load %arg1[%c21] : memref<128xi32, #tpu.memory_space<smem>>
      %c0_i32_163 = arith.constant 0 : i32
      %c5_i32_164 = arith.constant 5 : i32
      %c0_i32_165 = arith.constant 0 : i32
      %c0_i32_166 = arith.constant 0 : i32
      %207 = tpu.memref_slice %arg3[%206, %c0_i32_166] : memref<101x128xf32, #tpu.memory_space<any>> -> memref<1x128xf32, #tpu.memory_space<any>>
      %c2_i32_167 = arith.constant 2 : i32
      %c0_i32_168 = arith.constant 0 : i32
      %208 = tpu.memref_slice %arg5[%c0_i32_163, %c5_i32_164, %c2_i32_167, %c0_i32_168] : memref<2x8x8x128xf32, #tpu.memory_space<vmem>> -> memref<1x1x1x128xf32, #tpu.memory_space<vmem>>
      %209 = tpu.memref_squeeze %208 : memref<1x1x1x128xf32, #tpu.memory_space<vmem>> -> memref<1x128xf32, #tpu.memory_space<vmem>>
      %210 = tpu.memref_slice %arg6[%c0_i32_165] : memref<2x!tpu.dma_semaphore, #tpu.memory_space<semaphore_mem>> -> memref<1x!tpu.dma_semaphore, #tpu.memory_space<semaphore_mem>>
      %211 = tpu.memref_squeeze %210 : memref<1x!tpu.dma_semaphore, #tpu.memory_space<semaphore_mem>> -> memref<!tpu.dma_semaphore, #tpu.memory_space<semaphore_mem>>
      tpu.enqueue_dma source(%207 : memref<1x128xf32, #tpu.memory_space<any>>) target(%209 : memref<1x128xf32, #tpu.memory_space<vmem>>) target_semaphore(%211 : memref<!tpu.dma_semaphore, #tpu.memory_space<semaphore_mem>>)
      %c22 = arith.constant 22 : index
      %212 = memref.load %arg1[%c22] : memref<128xi32, #tpu.memory_space<smem>>
      %c0_i32_169 = arith.constant 0 : i32
      %c6_i32_170 = arith.constant 6 : i32
      %c0_i32_171 = arith.constant 0 : i32
      %c0_i32_172 = arith.constant 0 : i32
      %213 = tpu.memref_slice %arg3[%212, %c0_i32_172] : memref<101x128xf32, #tpu.memory_space<any>> -> memref<1x128xf32, #tpu.memory_space<any>>
      %c2_i32_173 = arith.constant 2 : i32
      %c0_i32_174 = arith.constant 0 : i32
      %214 = tpu.memref_slice %arg5[%c0_i32_169, %c6_i32_170, %c2_i32_173, %c0_i32_174] : memref<2x8x8x128xf32, #tpu.memory_space<vmem>> -> memref<1x1x1x128xf32, #tpu.memory_space<vmem>>
      %215 = tpu.memref_squeeze %214 : memref<1x1x1x128xf32, #tpu.memory_space<vmem>> -> memref<1x128xf32, #tpu.memory_space<vmem>>
      %216 = tpu.memref_slice %arg6[%c0_i32_171] : memref<2x!tpu.dma_semaphore, #tpu.memory_space<semaphore_mem>> -> memref<1x!tpu.dma_semaphore, #tpu.memory_space<semaphore_mem>>
      %217 = tpu.memref_squeeze %216 : memref<1x!tpu.dma_semaphore, #tpu.memory_space<semaphore_mem>> -> memref<!tpu.dma_semaphore, #tpu.memory_space<semaphore_mem>>
      tpu.enqueue_dma source(%213 : memref<1x128xf32, #tpu.memory_space<any>>) target(%215 : memref<1x128xf32, #tpu.memory_space<vmem>>) target_semaphore(%217 : memref<!tpu.dma_semaphore, #tpu.memory_space<semaphore_mem>>)
      %c23 = arith.constant 23 : index
      %218 = memref.load %arg1[%c23] : memref<128xi32, #tpu.memory_space<smem>>
      %c0_i32_175 = arith.constant 0 : i32
      %c7_i32_176 = arith.constant 7 : i32
      %c0_i32_177 = arith.constant 0 : i32
      %c0_i32_178 = arith.constant 0 : i32
      %219 = tpu.memref_slice %arg3[%218, %c0_i32_178] : memref<101x128xf32, #tpu.memory_space<any>> -> memref<1x128xf32, #tpu.memory_space<any>>
      %c2_i32_179 = arith.constant 2 : i32
      %c0_i32_180 = arith.constant 0 : i32
      %220 = tpu.memref_slice %arg5[%c0_i32_175, %c7_i32_176, %c2_i32_179, %c0_i32_180] : memref<2x8x8x128xf32, #tpu.memory_space<vmem>> -> memref<1x1x1x128xf32, #tpu.memory_space<vmem>>
      %221 = tpu.memref_squeeze %220 : memref<1x1x1x128xf32, #tpu.memory_space<vmem>> -> memref<1x128xf32, #tpu.memory_space<vmem>>
      %222 = tpu.memref_slice %arg6[%c0_i32_177] : memref<2x!tpu.dma_semaphore, #tpu.memory_space<semaphore_mem>> -> memref<1x!tpu.dma_semaphore, #tpu.memory_space<semaphore_mem>>
      %223 = tpu.memref_squeeze %222 : memref<1x!tpu.dma_semaphore, #tpu.memory_space<semaphore_mem>> -> memref<!tpu.dma_semaphore, #tpu.memory_space<semaphore_mem>>
      tpu.enqueue_dma source(%219 : memref<1x128xf32, #tpu.memory_space<any>>) target(%221 : memref<1x128xf32, #tpu.memory_space<vmem>>) target_semaphore(%223 : memref<!tpu.dma_semaphore, #tpu.memory_space<semaphore_mem>>)
      %c24 = arith.constant 24 : index
      %224 = memref.load %arg1[%c24] : memref<128xi32, #tpu.memory_space<smem>>
      %c0_i32_181 = arith.constant 0 : i32
      %c0_i32_182 = arith.constant 0 : i32
      %c0_i32_183 = arith.constant 0 : i32
      %c0_i32_184 = arith.constant 0 : i32
      %225 = tpu.memref_slice %arg3[%224, %c0_i32_184] : memref<101x128xf32, #tpu.memory_space<any>> -> memref<1x128xf32, #tpu.memory_space<any>>
      %c3_i32_185 = arith.constant 3 : i32
      %c0_i32_186 = arith.constant 0 : i32
      %226 = tpu.memref_slice %arg5[%c0_i32_181, %c0_i32_182, %c3_i32_185, %c0_i32_186] : memref<2x8x8x128xf32, #tpu.memory_space<vmem>> -> memref<1x1x1x128xf32, #tpu.memory_space<vmem>>
      %227 = tpu.memref_squeeze %226 : memref<1x1x1x128xf32, #tpu.memory_space<vmem>> -> memref<1x128xf32, #tpu.memory_space<vmem>>
      %228 = tpu.memref_slice %arg6[%c0_i32_183] : memref<2x!tpu.dma_semaphore, #tpu.memory_space<semaphore_mem>> -> memref<1x!tpu.dma_semaphore, #tpu.memory_space<semaphore_mem>>
      %229 = tpu.memref_squeeze %228 : memref<1x!tpu.dma_semaphore, #tpu.memory_space<semaphore_mem>> -> memref<!tpu.dma_semaphore, #tpu.memory_space<semaphore_mem>>
      tpu.enqueue_dma source(%225 : memref<1x128xf32, #tpu.memory_space<any>>) target(%227 : memref<1x128xf32, #tpu.memory_space<vmem>>) target_semaphore(%229 : memref<!tpu.dma_semaphore, #tpu.memory_space<semaphore_mem>>)
      %c25 = arith.constant 25 : index
      %230 = memref.load %arg1[%c25] : memref<128xi32, #tpu.memory_space<smem>>
      %c0_i32_187 = arith.constant 0 : i32
      %c1_i32_188 = arith.constant 1 : i32
      %c0_i32_189 = arith.constant 0 : i32
      %c0_i32_190 = arith.constant 0 : i32
      %231 = tpu.memref_slice %arg3[%230, %c0_i32_190] : memref<101x128xf32, #tpu.memory_space<any>> -> memref<1x128xf32, #tpu.memory_space<any>>
      %c3_i32_191 = arith.constant 3 : i32
      %c0_i32_192 = arith.constant 0 : i32
      %232 = tpu.memref_slice %arg5[%c0_i32_187, %c1_i32_188, %c3_i32_191, %c0_i32_192] : memref<2x8x8x128xf32, #tpu.memory_space<vmem>> -> memref<1x1x1x128xf32, #tpu.memory_space<vmem>>
      %233 = tpu.memref_squeeze %232 : memref<1x1x1x128xf32, #tpu.memory_space<vmem>> -> memref<1x128xf32, #tpu.memory_space<vmem>>
      %234 = tpu.memref_slice %arg6[%c0_i32_189] : memref<2x!tpu.dma_semaphore, #tpu.memory_space<semaphore_mem>> -> memref<1x!tpu.dma_semaphore, #tpu.memory_space<semaphore_mem>>
      %235 = tpu.memref_squeeze %234 : memref<1x!tpu.dma_semaphore, #tpu.memory_space<semaphore_mem>> -> memref<!tpu.dma_semaphore, #tpu.memory_space<semaphore_mem>>
      tpu.enqueue_dma source(%231 : memref<1x128xf32, #tpu.memory_space<any>>) target(%233 : memref<1x128xf32, #tpu.memory_space<vmem>>) target_semaphore(%235 : memref<!tpu.dma_semaphore, #tpu.memory_space<semaphore_mem>>)
      %c26 = arith.constant 26 : index
      %236 = memref.load %arg1[%c26] : memref<128xi32, #tpu.memory_space<smem>>
      %c0_i32_193 = arith.constant 0 : i32
      %c2_i32_194 = arith.constant 2 : i32
      %c0_i32_195 = arith.constant 0 : i32
      %c0_i32_196 = arith.constant 0 : i32
      %237 = tpu.memref_slice %arg3[%236, %c0_i32_196] : memref<101x128xf32, #tpu.memory_space<any>> -> memref<1x128xf32, #tpu.memory_space<any>>
      %c3_i32_197 = arith.constant 3 : i32
      %c0_i32_198 = arith.constant 0 : i32
      %238 = tpu.memref_slice %arg5[%c0_i32_193, %c2_i32_194, %c3_i32_197, %c0_i32_198] : memref<2x8x8x128xf32, #tpu.memory_space<vmem>> -> memref<1x1x1x128xf32, #tpu.memory_space<vmem>>
      %239 = tpu.memref_squeeze %238 : memref<1x1x1x128xf32, #tpu.memory_space<vmem>> -> memref<1x128xf32, #tpu.memory_space<vmem>>
      %240 = tpu.memref_slice %arg6[%c0_i32_195] : memref<2x!tpu.dma_semaphore, #tpu.memory_space<semaphore_mem>> -> memref<1x!tpu.dma_semaphore, #tpu.memory_space<semaphore_mem>>
      %241 = tpu.memref_squeeze %240 : memref<1x!tpu.dma_semaphore, #tpu.memory_space<semaphore_mem>> -> memref<!tpu.dma_semaphore, #tpu.memory_space<semaphore_mem>>
      tpu.enqueue_dma source(%237 : memref<1x128xf32, #tpu.memory_space<any>>) target(%239 : memref<1x128xf32, #tpu.memory_space<vmem>>) target_semaphore(%241 : memref<!tpu.dma_semaphore, #tpu.memory_space<semaphore_mem>>)
      %c27 = arith.constant 27 : index
      %242 = memref.load %arg1[%c27] : memref<128xi32, #tpu.memory_space<smem>>
      %c0_i32_199 = arith.constant 0 : i32
      %c3_i32_200 = arith.constant 3 : i32
      %c0_i32_201 = arith.constant 0 : i32
      %c0_i32_202 = arith.constant 0 : i32
      %243 = tpu.memref_slice %arg3[%242, %c0_i32_202] : memref<101x128xf32, #tpu.memory_space<any>> -> memref<1x128xf32, #tpu.memory_space<any>>
      %c3_i32_203 = arith.constant 3 : i32
      %c0_i32_204 = arith.constant 0 : i32
      %244 = tpu.memref_slice %arg5[%c0_i32_199, %c3_i32_200, %c3_i32_203, %c0_i32_204] : memref<2x8x8x128xf32, #tpu.memory_space<vmem>> -> memref<1x1x1x128xf32, #tpu.memory_space<vmem>>
      %245 = tpu.memref_squeeze %244 : memref<1x1x1x128xf32, #tpu.memory_space<vmem>> -> memref<1x128xf32, #tpu.memory_space<vmem>>
      %246 = tpu.memref_slice %arg6[%c0_i32_201] : memref<2x!tpu.dma_semaphore, #tpu.memory_space<semaphore_mem>> -> memref<1x!tpu.dma_semaphore, #tpu.memory_space<semaphore_mem>>
      %247 = tpu.memref_squeeze %246 : memref<1x!tpu.dma_semaphore, #tpu.memory_space<semaphore_mem>> -> memref<!tpu.dma_semaphore, #tpu.memory_space<semaphore_mem>>
      tpu.enqueue_dma source(%243 : memref<1x128xf32, #tpu.memory_space<any>>) target(%245 : memref<1x128xf32, #tpu.memory_space<vmem>>) target_semaphore(%247 : memref<!tpu.dma_semaphore, #tpu.memory_space<semaphore_mem>>)
      %c28 = arith.constant 28 : index
      %248 = memref.load %arg1[%c28] : memref<128xi32, #tpu.memory_space<smem>>
      %c0_i32_205 = arith.constant 0 : i32
      %c4_i32_206 = arith.constant 4 : i32
      %c0_i32_207 = arith.constant 0 : i32
      %c0_i32_208 = arith.constant 0 : i32
      %249 = tpu.memref_slice %arg3[%248, %c0_i32_208] : memref<101x128xf32, #tpu.memory_space<any>> -> memref<1x128xf32, #tpu.memory_space<any>>
      %c3_i32_209 = arith.constant 3 : i32
      %c0_i32_210 = arith.constant 0 : i32
      %250 = tpu.memref_slice %arg5[%c0_i32_205, %c4_i32_206, %c3_i32_209, %c0_i32_210] : memref<2x8x8x128xf32, #tpu.memory_space<vmem>> -> memref<1x1x1x128xf32, #tpu.memory_space<vmem>>
      %251 = tpu.memref_squeeze %250 : memref<1x1x1x128xf32, #tpu.memory_space<vmem>> -> memref<1x128xf32, #tpu.memory_space<vmem>>
      %252 = tpu.memref_slice %arg6[%c0_i32_207] : memref<2x!tpu.dma_semaphore, #tpu.memory_space<semaphore_mem>> -> memref<1x!tpu.dma_semaphore, #tpu.memory_space<semaphore_mem>>
      %253 = tpu.memref_squeeze %252 : memref<1x!tpu.dma_semaphore, #tpu.memory_space<semaphore_mem>> -> memref<!tpu.dma_semaphore, #tpu.memory_space<semaphore_mem>>
      tpu.enqueue_dma source(%249 : memref<1x128xf32, #tpu.memory_space<any>>) target(%251 : memref<1x128xf32, #tpu.memory_space<vmem>>) target_semaphore(%253 : memref<!tpu.dma_semaphore, #tpu.memory_space<semaphore_mem>>)
      %c29 = arith.constant 29 : index
      %254 = memref.load %arg1[%c29] : memref<128xi32, #tpu.memory_space<smem>>
      %c0_i32_211 = arith.constant 0 : i32
      %c5_i32_212 = arith.constant 5 : i32
      %c0_i32_213 = arith.constant 0 : i32
      %c0_i32_214 = arith.constant 0 : i32
      %255 = tpu.memref_slice %arg3[%254, %c0_i32_214] : memref<101x128xf32, #tpu.memory_space<any>> -> memref<1x128xf32, #tpu.memory_space<any>>
      %c3_i32_215 = arith.constant 3 : i32
      %c0_i32_216 = arith.constant 0 : i32
      %256 = tpu.memref_slice %arg5[%c0_i32_211, %c5_i32_212, %c3_i32_215, %c0_i32_216] : memref<2x8x8x128xf32, #tpu.memory_space<vmem>> -> memref<1x1x1x128xf32, #tpu.memory_space<vmem>>
      %257 = tpu.memref_squeeze %256 : memref<1x1x1x128xf32, #tpu.memory_space<vmem>> -> memref<1x128xf32, #tpu.memory_space<vmem>>
      %258 = tpu.memref_slice %arg6[%c0_i32_213] : memref<2x!tpu.dma_semaphore, #tpu.memory_space<semaphore_mem>> -> memref<1x!tpu.dma_semaphore, #tpu.memory_space<semaphore_mem>>
      %259 = tpu.memref_squeeze %258 : memref<1x!tpu.dma_semaphore, #tpu.memory_space<semaphore_mem>> -> memref<!tpu.dma_semaphore, #tpu.memory_space<semaphore_mem>>
      tpu.enqueue_dma source(%255 : memref<1x128xf32, #tpu.memory_space<any>>) target(%257 : memref<1x128xf32, #tpu.memory_space<vmem>>) target_semaphore(%259 : memref<!tpu.dma_semaphore, #tpu.memory_space<semaphore_mem>>)
      %c30 = arith.constant 30 : index
      %260 = memref.load %arg1[%c30] : memref<128xi32, #tpu.memory_space<smem>>
      %c0_i32_217 = arith.constant 0 : i32
      %c6_i32_218 = arith.constant 6 : i32
      %c0_i32_219 = arith.constant 0 : i32
      %c0_i32_220 = arith.constant 0 : i32
      %261 = tpu.memref_slice %arg3[%260, %c0_i32_220] : memref<101x128xf32, #tpu.memory_space<any>> -> memref<1x128xf32, #tpu.memory_space<any>>
      %c3_i32_221 = arith.constant 3 : i32
      %c0_i32_222 = arith.constant 0 : i32
      %262 = tpu.memref_slice %arg5[%c0_i32_217, %c6_i32_218, %c3_i32_221, %c0_i32_222] : memref<2x8x8x128xf32, #tpu.memory_space<vmem>> -> memref<1x1x1x128xf32, #tpu.memory_space<vmem>>
      %263 = tpu.memref_squeeze %262 : memref<1x1x1x128xf32, #tpu.memory_space<vmem>> -> memref<1x128xf32, #tpu.memory_space<vmem>>
      %264 = tpu.memref_slice %arg6[%c0_i32_219] : memref<2x!tpu.dma_semaphore, #tpu.memory_space<semaphore_mem>> -> memref<1x!tpu.dma_semaphore, #tpu.memory_space<semaphore_mem>>
      %265 = tpu.memref_squeeze %264 : memref<1x!tpu.dma_semaphore, #tpu.memory_space<semaphore_mem>> -> memref<!tpu.dma_semaphore, #tpu.memory_space<semaphore_mem>>
      tpu.enqueue_dma source(%261 : memref<1x128xf32, #tpu.memory_space<any>>) target(%263 : memref<1x128xf32, #tpu.memory_space<vmem>>) target_semaphore(%265 : memref<!tpu.dma_semaphore, #tpu.memory_space<semaphore_mem>>)
      %c31 = arith.constant 31 : index
      %266 = memref.load %arg1[%c31] : memref<128xi32, #tpu.memory_space<smem>>
      %c0_i32_223 = arith.constant 0 : i32
      %c7_i32_224 = arith.constant 7 : i32
      %c0_i32_225 = arith.constant 0 : i32
      %c0_i32_226 = arith.constant 0 : i32
      %267 = tpu.memref_slice %arg3[%266, %c0_i32_226] : memref<101x128xf32, #tpu.memory_space<any>> -> memref<1x128xf32, #tpu.memory_space<any>>
      %c3_i32_227 = arith.constant 3 : i32
      %c0_i32_228 = arith.constant 0 : i32
      %268 = tpu.memref_slice %arg5[%c0_i32_223, %c7_i32_224, %c3_i32_227, %c0_i32_228] : memref<2x8x8x128xf32, #tpu.memory_space<vmem>> -> memref<1x1x1x128xf32, #tpu.memory_space<vmem>>
      %269 = tpu.memref_squeeze %268 : memref<1x1x1x128xf32, #tpu.memory_space<vmem>> -> memref<1x128xf32, #tpu.memory_space<vmem>>
      %270 = tpu.memref_slice %arg6[%c0_i32_225] : memref<2x!tpu.dma_semaphore, #tpu.memory_space<semaphore_mem>> -> memref<1x!tpu.dma_semaphore, #tpu.memory_space<semaphore_mem>>
      %271 = tpu.memref_squeeze %270 : memref<1x!tpu.dma_semaphore, #tpu.memory_space<semaphore_mem>> -> memref<!tpu.dma_semaphore, #tpu.memory_space<semaphore_mem>>
      tpu.enqueue_dma source(%267 : memref<1x128xf32, #tpu.memory_space<any>>) target(%269 : memref<1x128xf32, #tpu.memory_space<vmem>>) target_semaphore(%271 : memref<!tpu.dma_semaphore, #tpu.memory_space<semaphore_mem>>)
      %c32 = arith.constant 32 : index
      %272 = memref.load %arg1[%c32] : memref<128xi32, #tpu.memory_space<smem>>
      %c0_i32_229 = arith.constant 0 : i32
      %c0_i32_230 = arith.constant 0 : i32
      %c0_i32_231 = arith.constant 0 : i32
      %c0_i32_232 = arith.constant 0 : i32
      %273 = tpu.memref_slice %arg3[%272, %c0_i32_232] : memref<101x128xf32, #tpu.memory_space<any>> -> memref<1x128xf32, #tpu.memory_space<any>>
      %c4_i32_233 = arith.constant 4 : i32
      %c0_i32_234 = arith.constant 0 : i32
      %274 = tpu.memref_slice %arg5[%c0_i32_229, %c0_i32_230, %c4_i32_233, %c0_i32_234] : memref<2x8x8x128xf32, #tpu.memory_space<vmem>> -> memref<1x1x1x128xf32, #tpu.memory_space<vmem>>
      %275 = tpu.memref_squeeze %274 : memref<1x1x1x128xf32, #tpu.memory_space<vmem>> -> memref<1x128xf32, #tpu.memory_space<vmem>>
      %276 = tpu.memref_slice %arg6[%c0_i32_231] : memref<2x!tpu.dma_semaphore, #tpu.memory_space<semaphore_mem>> -> memref<1x!tpu.dma_semaphore, #tpu.memory_space<semaphore_mem>>
      %277 = tpu.memref_squeeze %276 : memref<1x!tpu.dma_semaphore, #tpu.memory_space<semaphore_mem>> -> memref<!tpu.dma_semaphore, #tpu.memory_space<semaphore_mem>>
      tpu.enqueue_dma source(%273 : memref<1x128xf32, #tpu.memory_space<any>>) target(%275 : memref<1x128xf32, #tpu.memory_space<vmem>>) target_semaphore(%277 : memref<!tpu.dma_semaphore, #tpu.memory_space<semaphore_mem>>)
      %c33 = arith.constant 33 : index
      %278 = memref.load %arg1[%c33] : memref<128xi32, #tpu.memory_space<smem>>
      %c0_i32_235 = arith.constant 0 : i32
      %c1_i32_236 = arith.constant 1 : i32
      %c0_i32_237 = arith.constant 0 : i32
      %c0_i32_238 = arith.constant 0 : i32
      %279 = tpu.memref_slice %arg3[%278, %c0_i32_238] : memref<101x128xf32, #tpu.memory_space<any>> -> memref<1x128xf32, #tpu.memory_space<any>>
      %c4_i32_239 = arith.constant 4 : i32
      %c0_i32_240 = arith.constant 0 : i32
      %280 = tpu.memref_slice %arg5[%c0_i32_235, %c1_i32_236, %c4_i32_239, %c0_i32_240] : memref<2x8x8x128xf32, #tpu.memory_space<vmem>> -> memref<1x1x1x128xf32, #tpu.memory_space<vmem>>
      %281 = tpu.memref_squeeze %280 : memref<1x1x1x128xf32, #tpu.memory_space<vmem>> -> memref<1x128xf32, #tpu.memory_space<vmem>>
      %282 = tpu.memref_slice %arg6[%c0_i32_237] : memref<2x!tpu.dma_semaphore, #tpu.memory_space<semaphore_mem>> -> memref<1x!tpu.dma_semaphore, #tpu.memory_space<semaphore_mem>>
      %283 = tpu.memref_squeeze %282 : memref<1x!tpu.dma_semaphore, #tpu.memory_space<semaphore_mem>> -> memref<!tpu.dma_semaphore, #tpu.memory_space<semaphore_mem>>
      tpu.enqueue_dma source(%279 : memref<1x128xf32, #tpu.memory_space<any>>) target(%281 : memref<1x128xf32, #tpu.memory_space<vmem>>) target_semaphore(%283 : memref<!tpu.dma_semaphore, #tpu.memory_space<semaphore_mem>>)
      %c34 = arith.constant 34 : index
      %284 = memref.load %arg1[%c34] : memref<128xi32, #tpu.memory_space<smem>>
      %c0_i32_241 = arith.constant 0 : i32
      %c2_i32_242 = arith.constant 2 : i32
      %c0_i32_243 = arith.constant 0 : i32
      %c0_i32_244 = arith.constant 0 : i32
      %285 = tpu.memref_slice %arg3[%284, %c0_i32_244] : memref<101x128xf32, #tpu.memory_space<any>> -> memref<1x128xf32, #tpu.memory_space<any>>
      %c4_i32_245 = arith.constant 4 : i32
      %c0_i32_246 = arith.constant 0 : i32
      %286 = tpu.memref_slice %arg5[%c0_i32_241, %c2_i32_242, %c4_i32_245, %c0_i32_246] : memref<2x8x8x128xf32, #tpu.memory_space<vmem>> -> memref<1x1x1x128xf32, #tpu.memory_space<vmem>>
      %287 = tpu.memref_squeeze %286 : memref<1x1x1x128xf32, #tpu.memory_space<vmem>> -> memref<1x128xf32, #tpu.memory_space<vmem>>
      %288 = tpu.memref_slice %arg6[%c0_i32_243] : memref<2x!tpu.dma_semaphore, #tpu.memory_space<semaphore_mem>> -> memref<1x!tpu.dma_semaphore, #tpu.memory_space<semaphore_mem>>
      %289 = tpu.memref_squeeze %288 : memref<1x!tpu.dma_semaphore, #tpu.memory_space<semaphore_mem>> -> memref<!tpu.dma_semaphore, #tpu.memory_space<semaphore_mem>>
      tpu.enqueue_dma source(%285 : memref<1x128xf32, #tpu.memory_space<any>>) target(%287 : memref<1x128xf32, #tpu.memory_space<vmem>>) target_semaphore(%289 : memref<!tpu.dma_semaphore, #tpu.memory_space<semaphore_mem>>)
      %c35 = arith.constant 35 : index
      %290 = memref.load %arg1[%c35] : memref<128xi32, #tpu.memory_space<smem>>
      %c0_i32_247 = arith.constant 0 : i32
      %c3_i32_248 = arith.constant 3 : i32
      %c0_i32_249 = arith.constant 0 : i32
      %c0_i32_250 = arith.constant 0 : i32
      %291 = tpu.memref_slice %arg3[%290, %c0_i32_250] : memref<101x128xf32, #tpu.memory_space<any>> -> memref<1x128xf32, #tpu.memory_space<any>>
      %c4_i32_251 = arith.constant 4 : i32
      %c0_i32_252 = arith.constant 0 : i32
      %292 = tpu.memref_slice %arg5[%c0_i32_247, %c3_i32_248, %c4_i32_251, %c0_i32_252] : memref<2x8x8x128xf32, #tpu.memory_space<vmem>> -> memref<1x1x1x128xf32, #tpu.memory_space<vmem>>
      %293 = tpu.memref_squeeze %292 : memref<1x1x1x128xf32, #tpu.memory_space<vmem>> -> memref<1x128xf32, #tpu.memory_space<vmem>>
      %294 = tpu.memref_slice %arg6[%c0_i32_249] : memref<2x!tpu.dma_semaphore, #tpu.memory_space<semaphore_mem>> -> memref<1x!tpu.dma_semaphore, #tpu.memory_space<semaphore_mem>>
      %295 = tpu.memref_squeeze %294 : memref<1x!tpu.dma_semaphore, #tpu.memory_space<semaphore_mem>> -> memref<!tpu.dma_semaphore, #tpu.memory_space<semaphore_mem>>
      tpu.enqueue_dma source(%291 : memref<1x128xf32, #tpu.memory_space<any>>) target(%293 : memref<1x128xf32, #tpu.memory_space<vmem>>) target_semaphore(%295 : memref<!tpu.dma_semaphore, #tpu.memory_space<semaphore_mem>>)
      %c36 = arith.constant 36 : index
      %296 = memref.load %arg1[%c36] : memref<128xi32, #tpu.memory_space<smem>>
      %c0_i32_253 = arith.constant 0 : i32
      %c4_i32_254 = arith.constant 4 : i32
      %c0_i32_255 = arith.constant 0 : i32
      %c0_i32_256 = arith.constant 0 : i32
      %297 = tpu.memref_slice %arg3[%296, %c0_i32_256] : memref<101x128xf32, #tpu.memory_space<any>> -> memref<1x128xf32, #tpu.memory_space<any>>
      %c4_i32_257 = arith.constant 4 : i32
      %c0_i32_258 = arith.constant 0 : i32
      %298 = tpu.memref_slice %arg5[%c0_i32_253, %c4_i32_254, %c4_i32_257, %c0_i32_258] : memref<2x8x8x128xf32, #tpu.memory_space<vmem>> -> memref<1x1x1x128xf32, #tpu.memory_space<vmem>>
      %299 = tpu.memref_squeeze %298 : memref<1x1x1x128xf32, #tpu.memory_space<vmem>> -> memref<1x128xf32, #tpu.memory_space<vmem>>
      %300 = tpu.memref_slice %arg6[%c0_i32_255] : memref<2x!tpu.dma_semaphore, #tpu.memory_space<semaphore_mem>> -> memref<1x!tpu.dma_semaphore, #tpu.memory_space<semaphore_mem>>
      %301 = tpu.memref_squeeze %300 : memref<1x!tpu.dma_semaphore, #tpu.memory_space<semaphore_mem>> -> memref<!tpu.dma_semaphore, #tpu.memory_space<semaphore_mem>>
      tpu.enqueue_dma source(%297 : memref<1x128xf32, #tpu.memory_space<any>>) target(%299 : memref<1x128xf32, #tpu.memory_space<vmem>>) target_semaphore(%301 : memref<!tpu.dma_semaphore, #tpu.memory_space<semaphore_mem>>)
      %c37 = arith.constant 37 : index
      %302 = memref.load %arg1[%c37] : memref<128xi32, #tpu.memory_space<smem>>
      %c0_i32_259 = arith.constant 0 : i32
      %c5_i32_260 = arith.constant 5 : i32
      %c0_i32_261 = arith.constant 0 : i32
      %c0_i32_262 = arith.constant 0 : i32
      %303 = tpu.memref_slice %arg3[%302, %c0_i32_262] : memref<101x128xf32, #tpu.memory_space<any>> -> memref<1x128xf32, #tpu.memory_space<any>>
      %c4_i32_263 = arith.constant 4 : i32
      %c0_i32_264 = arith.constant 0 : i32
      %304 = tpu.memref_slice %arg5[%c0_i32_259, %c5_i32_260, %c4_i32_263, %c0_i32_264] : memref<2x8x8x128xf32, #tpu.memory_space<vmem>> -> memref<1x1x1x128xf32, #tpu.memory_space<vmem>>
      %305 = tpu.memref_squeeze %304 : memref<1x1x1x128xf32, #tpu.memory_space<vmem>> -> memref<1x128xf32, #tpu.memory_space<vmem>>
      %306 = tpu.memref_slice %arg6[%c0_i32_261] : memref<2x!tpu.dma_semaphore, #tpu.memory_space<semaphore_mem>> -> memref<1x!tpu.dma_semaphore, #tpu.memory_space<semaphore_mem>>
      %307 = tpu.memref_squeeze %306 : memref<1x!tpu.dma_semaphore, #tpu.memory_space<semaphore_mem>> -> memref<!tpu.dma_semaphore, #tpu.memory_space<semaphore_mem>>
      tpu.enqueue_dma source(%303 : memref<1x128xf32, #tpu.memory_space<any>>) target(%305 : memref<1x128xf32, #tpu.memory_space<vmem>>) target_semaphore(%307 : memref<!tpu.dma_semaphore, #tpu.memory_space<semaphore_mem>>)
      %c38 = arith.constant 38 : index
      %308 = memref.load %arg1[%c38] : memref<128xi32, #tpu.memory_space<smem>>
      %c0_i32_265 = arith.constant 0 : i32
      %c6_i32_266 = arith.constant 6 : i32
      %c0_i32_267 = arith.constant 0 : i32
      %c0_i32_268 = arith.constant 0 : i32
      %309 = tpu.memref_slice %arg3[%308, %c0_i32_268] : memref<101x128xf32, #tpu.memory_space<any>> -> memref<1x128xf32, #tpu.memory_space<any>>
      %c4_i32_269 = arith.constant 4 : i32
      %c0_i32_270 = arith.constant 0 : i32
      %310 = tpu.memref_slice %arg5[%c0_i32_265, %c6_i32_266, %c4_i32_269, %c0_i32_270] : memref<2x8x8x128xf32, #tpu.memory_space<vmem>> -> memref<1x1x1x128xf32, #tpu.memory_space<vmem>>
      %311 = tpu.memref_squeeze %310 : memref<1x1x1x128xf32, #tpu.memory_space<vmem>> -> memref<1x128xf32, #tpu.memory_space<vmem>>
      %312 = tpu.memref_slice %arg6[%c0_i32_267] : memref<2x!tpu.dma_semaphore, #tpu.memory_space<semaphore_mem>> -> memref<1x!tpu.dma_semaphore, #tpu.memory_space<semaphore_mem>>
      %313 = tpu.memref_squeeze %312 : memref<1x!tpu.dma_semaphore, #tpu.memory_space<semaphore_mem>> -> memref<!tpu.dma_semaphore, #tpu.memory_space<semaphore_mem>>
      tpu.enqueue_dma source(%309 : memref<1x128xf32, #tpu.memory_space<any>>) target(%311 : memref<1x128xf32, #tpu.memory_space<vmem>>) target_semaphore(%313 : memref<!tpu.dma_semaphore, #tpu.memory_space<semaphore_mem>>)
      %c39 = arith.constant 39 : index
      %314 = memref.load %arg1[%c39] : memref<128xi32, #tpu.memory_space<smem>>
      %c0_i32_271 = arith.constant 0 : i32
      %c7_i32_272 = arith.constant 7 : i32
      %c0_i32_273 = arith.constant 0 : i32
      %c0_i32_274 = arith.constant 0 : i32
      %315 = tpu.memref_slice %arg3[%314, %c0_i32_274] : memref<101x128xf32, #tpu.memory_space<any>> -> memref<1x128xf32, #tpu.memory_space<any>>
      %c4_i32_275 = arith.constant 4 : i32
      %c0_i32_276 = arith.constant 0 : i32
      %316 = tpu.memref_slice %arg5[%c0_i32_271, %c7_i32_272, %c4_i32_275, %c0_i32_276] : memref<2x8x8x128xf32, #tpu.memory_space<vmem>> -> memref<1x1x1x128xf32, #tpu.memory_space<vmem>>
      %317 = tpu.memref_squeeze %316 : memref<1x1x1x128xf32, #tpu.memory_space<vmem>> -> memref<1x128xf32, #tpu.memory_space<vmem>>
      %318 = tpu.memref_slice %arg6[%c0_i32_273] : memref<2x!tpu.dma_semaphore, #tpu.memory_space<semaphore_mem>> -> memref<1x!tpu.dma_semaphore, #tpu.memory_space<semaphore_mem>>
      %319 = tpu.memref_squeeze %318 : memref<1x!tpu.dma_semaphore, #tpu.memory_space<semaphore_mem>> -> memref<!tpu.dma_semaphore, #tpu.memory_space<semaphore_mem>>
      tpu.enqueue_dma source(%315 : memref<1x128xf32, #tpu.memory_space<any>>) target(%317 : memref<1x128xf32, #tpu.memory_space<vmem>>) target_semaphore(%319 : memref<!tpu.dma_semaphore, #tpu.memory_space<semaphore_mem>>)
      %c40 = arith.constant 40 : index
      %320 = memref.load %arg1[%c40] : memref<128xi32, #tpu.memory_space<smem>>
      %c0_i32_277 = arith.constant 0 : i32
      %c0_i32_278 = arith.constant 0 : i32
      %c0_i32_279 = arith.constant 0 : i32
      %c0_i32_280 = arith.constant 0 : i32
      %321 = tpu.memref_slice %arg3[%320, %c0_i32_280] : memref<101x128xf32, #tpu.memory_space<any>> -> memref<1x128xf32, #tpu.memory_space<any>>
      %c5_i32_281 = arith.constant 5 : i32
      %c0_i32_282 = arith.constant 0 : i32
      %322 = tpu.memref_slice %arg5[%c0_i32_277, %c0_i32_278, %c5_i32_281, %c0_i32_282] : memref<2x8x8x128xf32, #tpu.memory_space<vmem>> -> memref<1x1x1x128xf32, #tpu.memory_space<vmem>>
      %323 = tpu.memref_squeeze %322 : memref<1x1x1x128xf32, #tpu.memory_space<vmem>> -> memref<1x128xf32, #tpu.memory_space<vmem>>
      %324 = tpu.memref_slice %arg6[%c0_i32_279] : memref<2x!tpu.dma_semaphore, #tpu.memory_space<semaphore_mem>> -> memref<1x!tpu.dma_semaphore, #tpu.memory_space<semaphore_mem>>
      %325 = tpu.memref_squeeze %324 : memref<1x!tpu.dma_semaphore, #tpu.memory_space<semaphore_mem>> -> memref<!tpu.dma_semaphore, #tpu.memory_space<semaphore_mem>>
      tpu.enqueue_dma source(%321 : memref<1x128xf32, #tpu.memory_space<any>>) target(%323 : memref<1x128xf32, #tpu.memory_space<vmem>>) target_semaphore(%325 : memref<!tpu.dma_semaphore, #tpu.memory_space<semaphore_mem>>)
      %c41 = arith.constant 41 : index
      %326 = memref.load %arg1[%c41] : memref<128xi32, #tpu.memory_space<smem>>
      %c0_i32_283 = arith.constant 0 : i32
      %c1_i32_284 = arith.constant 1 : i32
      %c0_i32_285 = arith.constant 0 : i32
      %c0_i32_286 = arith.constant 0 : i32
      %327 = tpu.memref_slice %arg3[%326, %c0_i32_286] : memref<101x128xf32, #tpu.memory_space<any>> -> memref<1x128xf32, #tpu.memory_space<any>>
      %c5_i32_287 = arith.constant 5 : i32
      %c0_i32_288 = arith.constant 0 : i32
      %328 = tpu.memref_slice %arg5[%c0_i32_283, %c1_i32_284, %c5_i32_287, %c0_i32_288] : memref<2x8x8x128xf32, #tpu.memory_space<vmem>> -> memref<1x1x1x128xf32, #tpu.memory_space<vmem>>
      %329 = tpu.memref_squeeze %328 : memref<1x1x1x128xf32, #tpu.memory_space<vmem>> -> memref<1x128xf32, #tpu.memory_space<vmem>>
      %330 = tpu.memref_slice %arg6[%c0_i32_285] : memref<2x!tpu.dma_semaphore, #tpu.memory_space<semaphore_mem>> -> memref<1x!tpu.dma_semaphore, #tpu.memory_space<semaphore_mem>>
      %331 = tpu.memref_squeeze %330 : memref<1x!tpu.dma_semaphore, #tpu.memory_space<semaphore_mem>> -> memref<!tpu.dma_semaphore, #tpu.memory_space<semaphore_mem>>
      tpu.enqueue_dma source(%327 : memref<1x128xf32, #tpu.memory_space<any>>) target(%329 : memref<1x128xf32, #tpu.memory_space<vmem>>) target_semaphore(%331 : memref<!tpu.dma_semaphore, #tpu.memory_space<semaphore_mem>>)
      %c42 = arith.constant 42 : index
      %332 = memref.load %arg1[%c42] : memref<128xi32, #tpu.memory_space<smem>>
      %c0_i32_289 = arith.constant 0 : i32
      %c2_i32_290 = arith.constant 2 : i32
      %c0_i32_291 = arith.constant 0 : i32
      %c0_i32_292 = arith.constant 0 : i32
      %333 = tpu.memref_slice %arg3[%332, %c0_i32_292] : memref<101x128xf32, #tpu.memory_space<any>> -> memref<1x128xf32, #tpu.memory_space<any>>
      %c5_i32_293 = arith.constant 5 : i32
      %c0_i32_294 = arith.constant 0 : i32
      %334 = tpu.memref_slice %arg5[%c0_i32_289, %c2_i32_290, %c5_i32_293, %c0_i32_294] : memref<2x8x8x128xf32, #tpu.memory_space<vmem>> -> memref<1x1x1x128xf32, #tpu.memory_space<vmem>>
      %335 = tpu.memref_squeeze %334 : memref<1x1x1x128xf32, #tpu.memory_space<vmem>> -> memref<1x128xf32, #tpu.memory_space<vmem>>
      %336 = tpu.memref_slice %arg6[%c0_i32_291] : memref<2x!tpu.dma_semaphore, #tpu.memory_space<semaphore_mem>> -> memref<1x!tpu.dma_semaphore, #tpu.memory_space<semaphore_mem>>
      %337 = tpu.memref_squeeze %336 : memref<1x!tpu.dma_semaphore, #tpu.memory_space<semaphore_mem>> -> memref<!tpu.dma_semaphore, #tpu.memory_space<semaphore_mem>>
      tpu.enqueue_dma source(%333 : memref<1x128xf32, #tpu.memory_space<any>>) target(%335 : memref<1x128xf32, #tpu.memory_space<vmem>>) target_semaphore(%337 : memref<!tpu.dma_semaphore, #tpu.memory_space<semaphore_mem>>)
      %c43 = arith.constant 43 : index
      %338 = memref.load %arg1[%c43] : memref<128xi32, #tpu.memory_space<smem>>
      %c0_i32_295 = arith.constant 0 : i32
      %c3_i32_296 = arith.constant 3 : i32
      %c0_i32_297 = arith.constant 0 : i32
      %c0_i32_298 = arith.constant 0 : i32
      %339 = tpu.memref_slice %arg3[%338, %c0_i32_298] : memref<101x128xf32, #tpu.memory_space<any>> -> memref<1x128xf32, #tpu.memory_space<any>>
      %c5_i32_299 = arith.constant 5 : i32
      %c0_i32_300 = arith.constant 0 : i32
      %340 = tpu.memref_slice %arg5[%c0_i32_295, %c3_i32_296, %c5_i32_299, %c0_i32_300] : memref<2x8x8x128xf32, #tpu.memory_space<vmem>> -> memref<1x1x1x128xf32, #tpu.memory_space<vmem>>
      %341 = tpu.memref_squeeze %340 : memref<1x1x1x128xf32, #tpu.memory_space<vmem>> -> memref<1x128xf32, #tpu.memory_space<vmem>>
      %342 = tpu.memref_slice %arg6[%c0_i32_297] : memref<2x!tpu.dma_semaphore, #tpu.memory_space<semaphore_mem>> -> memref<1x!tpu.dma_semaphore, #tpu.memory_space<semaphore_mem>>
      %343 = tpu.memref_squeeze %342 : memref<1x!tpu.dma_semaphore, #tpu.memory_space<semaphore_mem>> -> memref<!tpu.dma_semaphore, #tpu.memory_space<semaphore_mem>>
      tpu.enqueue_dma source(%339 : memref<1x128xf32, #tpu.memory_space<any>>) target(%341 : memref<1x128xf32, #tpu.memory_space<vmem>>) target_semaphore(%343 : memref<!tpu.dma_semaphore, #tpu.memory_space<semaphore_mem>>)
      %c44 = arith.constant 44 : index
      %344 = memref.load %arg1[%c44] : memref<128xi32, #tpu.memory_space<smem>>
      %c0_i32_301 = arith.constant 0 : i32
      %c4_i32_302 = arith.constant 4 : i32
      %c0_i32_303 = arith.constant 0 : i32
      %c0_i32_304 = arith.constant 0 : i32
      %345 = tpu.memref_slice %arg3[%344, %c0_i32_304] : memref<101x128xf32, #tpu.memory_space<any>> -> memref<1x128xf32, #tpu.memory_space<any>>
      %c5_i32_305 = arith.constant 5 : i32
      %c0_i32_306 = arith.constant 0 : i32
      %346 = tpu.memref_slice %arg5[%c0_i32_301, %c4_i32_302, %c5_i32_305, %c0_i32_306] : memref<2x8x8x128xf32, #tpu.memory_space<vmem>> -> memref<1x1x1x128xf32, #tpu.memory_space<vmem>>
      %347 = tpu.memref_squeeze %346 : memref<1x1x1x128xf32, #tpu.memory_space<vmem>> -> memref<1x128xf32, #tpu.memory_space<vmem>>
      %348 = tpu.memref_slice %arg6[%c0_i32_303] : memref<2x!tpu.dma_semaphore, #tpu.memory_space<semaphore_mem>> -> memref<1x!tpu.dma_semaphore, #tpu.memory_space<semaphore_mem>>
      %349 = tpu.memref_squeeze %348 : memref<1x!tpu.dma_semaphore, #tpu.memory_space<semaphore_mem>> -> memref<!tpu.dma_semaphore, #tpu.memory_space<semaphore_mem>>
      tpu.enqueue_dma source(%345 : memref<1x128xf32, #tpu.memory_space<any>>) target(%347 : memref<1x128xf32, #tpu.memory_space<vmem>>) target_semaphore(%349 : memref<!tpu.dma_semaphore, #tpu.memory_space<semaphore_mem>>)
      %c45 = arith.constant 45 : index
      %350 = memref.load %arg1[%c45] : memref<128xi32, #tpu.memory_space<smem>>
      %c0_i32_307 = arith.constant 0 : i32
      %c5_i32_308 = arith.constant 5 : i32
      %c0_i32_309 = arith.constant 0 : i32
      %c0_i32_310 = arith.constant 0 : i32
      %351 = tpu.memref_slice %arg3[%350, %c0_i32_310] : memref<101x128xf32, #tpu.memory_space<any>> -> memref<1x128xf32, #tpu.memory_space<any>>
      %c5_i32_311 = arith.constant 5 : i32
      %c0_i32_312 = arith.constant 0 : i32
      %352 = tpu.memref_slice %arg5[%c0_i32_307, %c5_i32_308, %c5_i32_311, %c0_i32_312] : memref<2x8x8x128xf32, #tpu.memory_space<vmem>> -> memref<1x1x1x128xf32, #tpu.memory_space<vmem>>
      %353 = tpu.memref_squeeze %352 : memref<1x1x1x128xf32, #tpu.memory_space<vmem>> -> memref<1x128xf32, #tpu.memory_space<vmem>>
      %354 = tpu.memref_slice %arg6[%c0_i32_309] : memref<2x!tpu.dma_semaphore, #tpu.memory_space<semaphore_mem>> -> memref<1x!tpu.dma_semaphore, #tpu.memory_space<semaphore_mem>>
      %355 = tpu.memref_squeeze %354 : memref<1x!tpu.dma_semaphore, #tpu.memory_space<semaphore_mem>> -> memref<!tpu.dma_semaphore, #tpu.memory_space<semaphore_mem>>
      tpu.enqueue_dma source(%351 : memref<1x128xf32, #tpu.memory_space<any>>) target(%353 : memref<1x128xf32, #tpu.memory_space<vmem>>) target_semaphore(%355 : memref<!tpu.dma_semaphore, #tpu.memory_space<semaphore_mem>>)
      %c46 = arith.constant 46 : index
      %356 = memref.load %arg1[%c46] : memref<128xi32, #tpu.memory_space<smem>>
      %c0_i32_313 = arith.constant 0 : i32
      %c6_i32_314 = arith.constant 6 : i32
      %c0_i32_315 = arith.constant 0 : i32
      %c0_i32_316 = arith.constant 0 : i32
      %357 = tpu.memref_slice %arg3[%356, %c0_i32_316] : memref<101x128xf32, #tpu.memory_space<any>> -> memref<1x128xf32, #tpu.memory_space<any>>
      %c5_i32_317 = arith.constant 5 : i32
      %c0_i32_318 = arith.constant 0 : i32
      %358 = tpu.memref_slice %arg5[%c0_i32_313, %c6_i32_314, %c5_i32_317, %c0_i32_318] : memref<2x8x8x128xf32, #tpu.memory_space<vmem>> -> memref<1x1x1x128xf32, #tpu.memory_space<vmem>>
      %359 = tpu.memref_squeeze %358 : memref<1x1x1x128xf32, #tpu.memory_space<vmem>> -> memref<1x128xf32, #tpu.memory_space<vmem>>
      %360 = tpu.memref_slice %arg6[%c0_i32_315] : memref<2x!tpu.dma_semaphore, #tpu.memory_space<semaphore_mem>> -> memref<1x!tpu.dma_semaphore, #tpu.memory_space<semaphore_mem>>
      %361 = tpu.memref_squeeze %360 : memref<1x!tpu.dma_semaphore, #tpu.memory_space<semaphore_mem>> -> memref<!tpu.dma_semaphore, #tpu.memory_space<semaphore_mem>>
      tpu.enqueue_dma source(%357 : memref<1x128xf32, #tpu.memory_space<any>>) target(%359 : memref<1x128xf32, #tpu.memory_space<vmem>>) target_semaphore(%361 : memref<!tpu.dma_semaphore, #tpu.memory_space<semaphore_mem>>)
      %c47 = arith.constant 47 : index
      %362 = memref.load %arg1[%c47] : memref<128xi32, #tpu.memory_space<smem>>
      %c0_i32_319 = arith.constant 0 : i32
      %c7_i32_320 = arith.constant 7 : i32
      %c0_i32_321 = arith.constant 0 : i32
      %c0_i32_322 = arith.constant 0 : i32
      %363 = tpu.memref_slice %arg3[%362, %c0_i32_322] : memref<101x128xf32, #tpu.memory_space<any>> -> memref<1x128xf32, #tpu.memory_space<any>>
      %c5_i32_323 = arith.constant 5 : i32
      %c0_i32_324 = arith.constant 0 : i32
      %364 = tpu.memref_slice %arg5[%c0_i32_319, %c7_i32_320, %c5_i32_323, %c0_i32_324] : memref<2x8x8x128xf32, #tpu.memory_space<vmem>> -> memref<1x1x1x128xf32, #tpu.memory_space<vmem>>
      %365 = tpu.memref_squeeze %364 : memref<1x1x1x128xf32, #tpu.memory_space<vmem>> -> memref<1x128xf32, #tpu.memory_space<vmem>>
      %366 = tpu.memref_slice %arg6[%c0_i32_321] : memref<2x!tpu.dma_semaphore, #tpu.memory_space<semaphore_mem>> -> memref<1x!tpu.dma_semaphore, #tpu.memory_space<semaphore_mem>>
      %367 = tpu.memref_squeeze %366 : memref<1x!tpu.dma_semaphore, #tpu.memory_space<semaphore_mem>> -> memref<!tpu.dma_semaphore, #tpu.memory_space<semaphore_mem>>
      tpu.enqueue_dma source(%363 : memref<1x128xf32, #tpu.memory_space<any>>) target(%365 : memref<1x128xf32, #tpu.memory_space<vmem>>) target_semaphore(%367 : memref<!tpu.dma_semaphore, #tpu.memory_space<semaphore_mem>>)
      %c48 = arith.constant 48 : index
      %368 = memref.load %arg1[%c48] : memref<128xi32, #tpu.memory_space<smem>>
      %c0_i32_325 = arith.constant 0 : i32
      %c0_i32_326 = arith.constant 0 : i32
      %c0_i32_327 = arith.constant 0 : i32
      %c0_i32_328 = arith.constant 0 : i32
      %369 = tpu.memref_slice %arg3[%368, %c0_i32_328] : memref<101x128xf32, #tpu.memory_space<any>> -> memref<1x128xf32, #tpu.memory_space<any>>
      %c6_i32_329 = arith.constant 6 : i32
      %c0_i32_330 = arith.constant 0 : i32
      %370 = tpu.memref_slice %arg5[%c0_i32_325, %c0_i32_326, %c6_i32_329, %c0_i32_330] : memref<2x8x8x128xf32, #tpu.memory_space<vmem>> -> memref<1x1x1x128xf32, #tpu.memory_space<vmem>>
      %371 = tpu.memref_squeeze %370 : memref<1x1x1x128xf32, #tpu.memory_space<vmem>> -> memref<1x128xf32, #tpu.memory_space<vmem>>
      %372 = tpu.memref_slice %arg6[%c0_i32_327] : memref<2x!tpu.dma_semaphore, #tpu.memory_space<semaphore_mem>> -> memref<1x!tpu.dma_semaphore, #tpu.memory_space<semaphore_mem>>
      %373 = tpu.memref_squeeze %372 : memref<1x!tpu.dma_semaphore, #tpu.memory_space<semaphore_mem>> -> memref<!tpu.dma_semaphore, #tpu.memory_space<semaphore_mem>>
      tpu.enqueue_dma source(%369 : memref<1x128xf32, #tpu.memory_space<any>>) target(%371 : memref<1x128xf32, #tpu.memory_space<vmem>>) target_semaphore(%373 : memref<!tpu.dma_semaphore, #tpu.memory_space<semaphore_mem>>)
      %c49 = arith.constant 49 : index
      %374 = memref.load %arg1[%c49] : memref<128xi32, #tpu.memory_space<smem>>
      %c0_i32_331 = arith.constant 0 : i32
      %c1_i32_332 = arith.constant 1 : i32
      %c0_i32_333 = arith.constant 0 : i32
      %c0_i32_334 = arith.constant 0 : i32
      %375 = tpu.memref_slice %arg3[%374, %c0_i32_334] : memref<101x128xf32, #tpu.memory_space<any>> -> memref<1x128xf32, #tpu.memory_space<any>>
      %c6_i32_335 = arith.constant 6 : i32
      %c0_i32_336 = arith.constant 0 : i32
      %376 = tpu.memref_slice %arg5[%c0_i32_331, %c1_i32_332, %c6_i32_335, %c0_i32_336] : memref<2x8x8x128xf32, #tpu.memory_space<vmem>> -> memref<1x1x1x128xf32, #tpu.memory_space<vmem>>
      %377 = tpu.memref_squeeze %376 : memref<1x1x1x128xf32, #tpu.memory_space<vmem>> -> memref<1x128xf32, #tpu.memory_space<vmem>>
      %378 = tpu.memref_slice %arg6[%c0_i32_333] : memref<2x!tpu.dma_semaphore, #tpu.memory_space<semaphore_mem>> -> memref<1x!tpu.dma_semaphore, #tpu.memory_space<semaphore_mem>>
      %379 = tpu.memref_squeeze %378 : memref<1x!tpu.dma_semaphore, #tpu.memory_space<semaphore_mem>> -> memref<!tpu.dma_semaphore, #tpu.memory_space<semaphore_mem>>
      tpu.enqueue_dma source(%375 : memref<1x128xf32, #tpu.memory_space<any>>) target(%377 : memref<1x128xf32, #tpu.memory_space<vmem>>) target_semaphore(%379 : memref<!tpu.dma_semaphore, #tpu.memory_space<semaphore_mem>>)
      %c50 = arith.constant 50 : index
      %380 = memref.load %arg1[%c50] : memref<128xi32, #tpu.memory_space<smem>>
      %c0_i32_337 = arith.constant 0 : i32
      %c2_i32_338 = arith.constant 2 : i32
      %c0_i32_339 = arith.constant 0 : i32
      %c0_i32_340 = arith.constant 0 : i32
      %381 = tpu.memref_slice %arg3[%380, %c0_i32_340] : memref<101x128xf32, #tpu.memory_space<any>> -> memref<1x128xf32, #tpu.memory_space<any>>
      %c6_i32_341 = arith.constant 6 : i32
      %c0_i32_342 = arith.constant 0 : i32
      %382 = tpu.memref_slice %arg5[%c0_i32_337, %c2_i32_338, %c6_i32_341, %c0_i32_342] : memref<2x8x8x128xf32, #tpu.memory_space<vmem>> -> memref<1x1x1x128xf32, #tpu.memory_space<vmem>>
      %383 = tpu.memref_squeeze %382 : memref<1x1x1x128xf32, #tpu.memory_space<vmem>> -> memref<1x128xf32, #tpu.memory_space<vmem>>
      %384 = tpu.memref_slice %arg6[%c0_i32_339] : memref<2x!tpu.dma_semaphore, #tpu.memory_space<semaphore_mem>> -> memref<1x!tpu.dma_semaphore, #tpu.memory_space<semaphore_mem>>
      %385 = tpu.memref_squeeze %384 : memref<1x!tpu.dma_semaphore, #tpu.memory_space<semaphore_mem>> -> memref<!tpu.dma_semaphore, #tpu.memory_space<semaphore_mem>>
      tpu.enqueue_dma source(%381 : memref<1x128xf32, #tpu.memory_space<any>>) target(%383 : memref<1x128xf32, #tpu.memory_space<vmem>>) target_semaphore(%385 : memref<!tpu.dma_semaphore, #tpu.memory_space<semaphore_mem>>)
      %c51 = arith.constant 51 : index
      %386 = memref.load %arg1[%c51] : memref<128xi32, #tpu.memory_space<smem>>
      %c0_i32_343 = arith.constant 0 : i32
      %c3_i32_344 = arith.constant 3 : i32
      %c0_i32_345 = arith.constant 0 : i32
      %c0_i32_346 = arith.constant 0 : i32
      %387 = tpu.memref_slice %arg3[%386, %c0_i32_346] : memref<101x128xf32, #tpu.memory_space<any>> -> memref<1x128xf32, #tpu.memory_space<any>>
      %c6_i32_347 = arith.constant 6 : i32
      %c0_i32_348 = arith.constant 0 : i32
      %388 = tpu.memref_slice %arg5[%c0_i32_343, %c3_i32_344, %c6_i32_347, %c0_i32_348] : memref<2x8x8x128xf32, #tpu.memory_space<vmem>> -> memref<1x1x1x128xf32, #tpu.memory_space<vmem>>
      %389 = tpu.memref_squeeze %388 : memref<1x1x1x128xf32, #tpu.memory_space<vmem>> -> memref<1x128xf32, #tpu.memory_space<vmem>>
      %390 = tpu.memref_slice %arg6[%c0_i32_345] : memref<2x!tpu.dma_semaphore, #tpu.memory_space<semaphore_mem>> -> memref<1x!tpu.dma_semaphore, #tpu.memory_space<semaphore_mem>>
      %391 = tpu.memref_squeeze %390 : memref<1x!tpu.dma_semaphore, #tpu.memory_space<semaphore_mem>> -> memref<!tpu.dma_semaphore, #tpu.memory_space<semaphore_mem>>
      tpu.enqueue_dma source(%387 : memref<1x128xf32, #tpu.memory_space<any>>) target(%389 : memref<1x128xf32, #tpu.memory_space<vmem>>) target_semaphore(%391 : memref<!tpu.dma_semaphore, #tpu.memory_space<semaphore_mem>>)
      %c52 = arith.constant 52 : index
      %392 = memref.load %arg1[%c52] : memref<128xi32, #tpu.memory_space<smem>>
      %c0_i32_349 = arith.constant 0 : i32
      %c4_i32_350 = arith.constant 4 : i32
      %c0_i32_351 = arith.constant 0 : i32
      %c0_i32_352 = arith.constant 0 : i32
      %393 = tpu.memref_slice %arg3[%392, %c0_i32_352] : memref<101x128xf32, #tpu.memory_space<any>> -> memref<1x128xf32, #tpu.memory_space<any>>
      %c6_i32_353 = arith.constant 6 : i32
      %c0_i32_354 = arith.constant 0 : i32
      %394 = tpu.memref_slice %arg5[%c0_i32_349, %c4_i32_350, %c6_i32_353, %c0_i32_354] : memref<2x8x8x128xf32, #tpu.memory_space<vmem>> -> memref<1x1x1x128xf32, #tpu.memory_space<vmem>>
      %395 = tpu.memref_squeeze %394 : memref<1x1x1x128xf32, #tpu.memory_space<vmem>> -> memref<1x128xf32, #tpu.memory_space<vmem>>
      %396 = tpu.memref_slice %arg6[%c0_i32_351] : memref<2x!tpu.dma_semaphore, #tpu.memory_space<semaphore_mem>> -> memref<1x!tpu.dma_semaphore, #tpu.memory_space<semaphore_mem>>
      %397 = tpu.memref_squeeze %396 : memref<1x!tpu.dma_semaphore, #tpu.memory_space<semaphore_mem>> -> memref<!tpu.dma_semaphore, #tpu.memory_space<semaphore_mem>>
      tpu.enqueue_dma source(%393 : memref<1x128xf32, #tpu.memory_space<any>>) target(%395 : memref<1x128xf32, #tpu.memory_space<vmem>>) target_semaphore(%397 : memref<!tpu.dma_semaphore, #tpu.memory_space<semaphore_mem>>)
      %c53 = arith.constant 53 : index
      %398 = memref.load %arg1[%c53] : memref<128xi32, #tpu.memory_space<smem>>
      %c0_i32_355 = arith.constant 0 : i32
      %c5_i32_356 = arith.constant 5 : i32
      %c0_i32_357 = arith.constant 0 : i32
      %c0_i32_358 = arith.constant 0 : i32
      %399 = tpu.memref_slice %arg3[%398, %c0_i32_358] : memref<101x128xf32, #tpu.memory_space<any>> -> memref<1x128xf32, #tpu.memory_space<any>>
      %c6_i32_359 = arith.constant 6 : i32
      %c0_i32_360 = arith.constant 0 : i32
      %400 = tpu.memref_slice %arg5[%c0_i32_355, %c5_i32_356, %c6_i32_359, %c0_i32_360] : memref<2x8x8x128xf32, #tpu.memory_space<vmem>> -> memref<1x1x1x128xf32, #tpu.memory_space<vmem>>
      %401 = tpu.memref_squeeze %400 : memref<1x1x1x128xf32, #tpu.memory_space<vmem>> -> memref<1x128xf32, #tpu.memory_space<vmem>>
      %402 = tpu.memref_slice %arg6[%c0_i32_357] : memref<2x!tpu.dma_semaphore, #tpu.memory_space<semaphore_mem>> -> memref<1x!tpu.dma_semaphore, #tpu.memory_space<semaphore_mem>>
      %403 = tpu.memref_squeeze %402 : memref<1x!tpu.dma_semaphore, #tpu.memory_space<semaphore_mem>> -> memref<!tpu.dma_semaphore, #tpu.memory_space<semaphore_mem>>
      tpu.enqueue_dma source(%399 : memref<1x128xf32, #tpu.memory_space<any>>) target(%401 : memref<1x128xf32, #tpu.memory_space<vmem>>) target_semaphore(%403 : memref<!tpu.dma_semaphore, #tpu.memory_space<semaphore_mem>>)
      %c54 = arith.constant 54 : index
      %404 = memref.load %arg1[%c54] : memref<128xi32, #tpu.memory_space<smem>>
      %c0_i32_361 = arith.constant 0 : i32
      %c6_i32_362 = arith.constant 6 : i32
      %c0_i32_363 = arith.constant 0 : i32
      %c0_i32_364 = arith.constant 0 : i32
      %405 = tpu.memref_slice %arg3[%404, %c0_i32_364] : memref<101x128xf32, #tpu.memory_space<any>> -> memref<1x128xf32, #tpu.memory_space<any>>
      %c6_i32_365 = arith.constant 6 : i32
      %c0_i32_366 = arith.constant 0 : i32
      %406 = tpu.memref_slice %arg5[%c0_i32_361, %c6_i32_362, %c6_i32_365, %c0_i32_366] : memref<2x8x8x128xf32, #tpu.memory_space<vmem>> -> memref<1x1x1x128xf32, #tpu.memory_space<vmem>>
      %407 = tpu.memref_squeeze %406 : memref<1x1x1x128xf32, #tpu.memory_space<vmem>> -> memref<1x128xf32, #tpu.memory_space<vmem>>
      %408 = tpu.memref_slice %arg6[%c0_i32_363] : memref<2x!tpu.dma_semaphore, #tpu.memory_space<semaphore_mem>> -> memref<1x!tpu.dma_semaphore, #tpu.memory_space<semaphore_mem>>
      %409 = tpu.memref_squeeze %408 : memref<1x!tpu.dma_semaphore, #tpu.memory_space<semaphore_mem>> -> memref<!tpu.dma_semaphore, #tpu.memory_space<semaphore_mem>>
      tpu.enqueue_dma source(%405 : memref<1x128xf32, #tpu.memory_space<any>>) target(%407 : memref<1x128xf32, #tpu.memory_space<vmem>>) target_semaphore(%409 : memref<!tpu.dma_semaphore, #tpu.memory_space<semaphore_mem>>)
      %c55 = arith.constant 55 : index
      %410 = memref.load %arg1[%c55] : memref<128xi32, #tpu.memory_space<smem>>
      %c0_i32_367 = arith.constant 0 : i32
      %c7_i32_368 = arith.constant 7 : i32
      %c0_i32_369 = arith.constant 0 : i32
      %c0_i32_370 = arith.constant 0 : i32
      %411 = tpu.memref_slice %arg3[%410, %c0_i32_370] : memref<101x128xf32, #tpu.memory_space<any>> -> memref<1x128xf32, #tpu.memory_space<any>>
      %c6_i32_371 = arith.constant 6 : i32
      %c0_i32_372 = arith.constant 0 : i32
      %412 = tpu.memref_slice %arg5[%c0_i32_367, %c7_i32_368, %c6_i32_371, %c0_i32_372] : memref<2x8x8x128xf32, #tpu.memory_space<vmem>> -> memref<1x1x1x128xf32, #tpu.memory_space<vmem>>
      %413 = tpu.memref_squeeze %412 : memref<1x1x1x128xf32, #tpu.memory_space<vmem>> -> memref<1x128xf32, #tpu.memory_space<vmem>>
      %414 = tpu.memref_slice %arg6[%c0_i32_369] : memref<2x!tpu.dma_semaphore, #tpu.memory_space<semaphore_mem>> -> memref<1x!tpu.dma_semaphore, #tpu.memory_space<semaphore_mem>>
      %415 = tpu.memref_squeeze %414 : memref<1x!tpu.dma_semaphore, #tpu.memory_space<semaphore_mem>> -> memref<!tpu.dma_semaphore, #tpu.memory_space<semaphore_mem>>
      tpu.enqueue_dma source(%411 : memref<1x128xf32, #tpu.memory_space<any>>) target(%413 : memref<1x128xf32, #tpu.memory_space<vmem>>) target_semaphore(%415 : memref<!tpu.dma_semaphore, #tpu.memory_space<semaphore_mem>>)
      %c56 = arith.constant 56 : index
      %416 = memref.load %arg1[%c56] : memref<128xi32, #tpu.memory_space<smem>>
      %c0_i32_373 = arith.constant 0 : i32
      %c0_i32_374 = arith.constant 0 : i32
      %c0_i32_375 = arith.constant 0 : i32
      %c0_i32_376 = arith.constant 0 : i32
      %417 = tpu.memref_slice %arg3[%416, %c0_i32_376] : memref<101x128xf32, #tpu.memory_space<any>> -> memref<1x128xf32, #tpu.memory_space<any>>
      %c7_i32_377 = arith.constant 7 : i32
      %c0_i32_378 = arith.constant 0 : i32
      %418 = tpu.memref_slice %arg5[%c0_i32_373, %c0_i32_374, %c7_i32_377, %c0_i32_378] : memref<2x8x8x128xf32, #tpu.memory_space<vmem>> -> memref<1x1x1x128xf32, #tpu.memory_space<vmem>>
      %419 = tpu.memref_squeeze %418 : memref<1x1x1x128xf32, #tpu.memory_space<vmem>> -> memref<1x128xf32, #tpu.memory_space<vmem>>
      %420 = tpu.memref_slice %arg6[%c0_i32_375] : memref<2x!tpu.dma_semaphore, #tpu.memory_space<semaphore_mem>> -> memref<1x!tpu.dma_semaphore, #tpu.memory_space<semaphore_mem>>
      %421 = tpu.memref_squeeze %420 : memref<1x!tpu.dma_semaphore, #tpu.memory_space<semaphore_mem>> -> memref<!tpu.dma_semaphore, #tpu.memory_space<semaphore_mem>>
      tpu.enqueue_dma source(%417 : memref<1x128xf32, #tpu.memory_space<any>>) target(%419 : memref<1x128xf32, #tpu.memory_space<vmem>>) target_semaphore(%421 : memref<!tpu.dma_semaphore, #tpu.memory_space<semaphore_mem>>)
      %c57 = arith.constant 57 : index
      %422 = memref.load %arg1[%c57] : memref<128xi32, #tpu.memory_space<smem>>
      %c0_i32_379 = arith.constant 0 : i32
      %c1_i32_380 = arith.constant 1 : i32
      %c0_i32_381 = arith.constant 0 : i32
      %c0_i32_382 = arith.constant 0 : i32
      %423 = tpu.memref_slice %arg3[%422, %c0_i32_382] : memref<101x128xf32, #tpu.memory_space<any>> -> memref<1x128xf32, #tpu.memory_space<any>>
      %c7_i32_383 = arith.constant 7 : i32
      %c0_i32_384 = arith.constant 0 : i32
      %424 = tpu.memref_slice %arg5[%c0_i32_379, %c1_i32_380, %c7_i32_383, %c0_i32_384] : memref<2x8x8x128xf32, #tpu.memory_space<vmem>> -> memref<1x1x1x128xf32, #tpu.memory_space<vmem>>
      %425 = tpu.memref_squeeze %424 : memref<1x1x1x128xf32, #tpu.memory_space<vmem>> -> memref<1x128xf32, #tpu.memory_space<vmem>>
      %426 = tpu.memref_slice %arg6[%c0_i32_381] : memref<2x!tpu.dma_semaphore, #tpu.memory_space<semaphore_mem>> -> memref<1x!tpu.dma_semaphore, #tpu.memory_space<semaphore_mem>>
      %427 = tpu.memref_squeeze %426 : memref<1x!tpu.dma_semaphore, #tpu.memory_space<semaphore_mem>> -> memref<!tpu.dma_semaphore, #tpu.memory_space<semaphore_mem>>
      tpu.enqueue_dma source(%423 : memref<1x128xf32, #tpu.memory_space<any>>) target(%425 : memref<1x128xf32, #tpu.memory_space<vmem>>) target_semaphore(%427 : memref<!tpu.dma_semaphore, #tpu.memory_space<semaphore_mem>>)
      %c58 = arith.constant 58 : index
      %428 = memref.load %arg1[%c58] : memref<128xi32, #tpu.memory_space<smem>>
      %c0_i32_385 = arith.constant 0 : i32
      %c2_i32_386 = arith.constant 2 : i32
      %c0_i32_387 = arith.constant 0 : i32
      %c0_i32_388 = arith.constant 0 : i32
      %429 = tpu.memref_slice %arg3[%428, %c0_i32_388] : memref<101x128xf32, #tpu.memory_space<any>> -> memref<1x128xf32, #tpu.memory_space<any>>
      %c7_i32_389 = arith.constant 7 : i32
      %c0_i32_390 = arith.constant 0 : i32
      %430 = tpu.memref_slice %arg5[%c0_i32_385, %c2_i32_386, %c7_i32_389, %c0_i32_390] : memref<2x8x8x128xf32, #tpu.memory_space<vmem>> -> memref<1x1x1x128xf32, #tpu.memory_space<vmem>>
      %431 = tpu.memref_squeeze %430 : memref<1x1x1x128xf32, #tpu.memory_space<vmem>> -> memref<1x128xf32, #tpu.memory_space<vmem>>
      %432 = tpu.memref_slice %arg6[%c0_i32_387] : memref<2x!tpu.dma_semaphore, #tpu.memory_space<semaphore_mem>> -> memref<1x!tpu.dma_semaphore, #tpu.memory_space<semaphore_mem>>
      %433 = tpu.memref_squeeze %432 : memref<1x!tpu.dma_semaphore, #tpu.memory_space<semaphore_mem>> -> memref<!tpu.dma_semaphore, #tpu.memory_space<semaphore_mem>>
      tpu.enqueue_dma source(%429 : memref<1x128xf32, #tpu.memory_space<any>>) target(%431 : memref<1x128xf32, #tpu.memory_space<vmem>>) target_semaphore(%433 : memref<!tpu.dma_semaphore, #tpu.memory_space<semaphore_mem>>)
      %c59 = arith.constant 59 : index
      %434 = memref.load %arg1[%c59] : memref<128xi32, #tpu.memory_space<smem>>
      %c0_i32_391 = arith.constant 0 : i32
      %c3_i32_392 = arith.constant 3 : i32
      %c0_i32_393 = arith.constant 0 : i32
      %c0_i32_394 = arith.constant 0 : i32
      %435 = tpu.memref_slice %arg3[%434, %c0_i32_394] : memref<101x128xf32, #tpu.memory_space<any>> -> memref<1x128xf32, #tpu.memory_space<any>>
      %c7_i32_395 = arith.constant 7 : i32
      %c0_i32_396 = arith.constant 0 : i32
      %436 = tpu.memref_slice %arg5[%c0_i32_391, %c3_i32_392, %c7_i32_395, %c0_i32_396] : memref<2x8x8x128xf32, #tpu.memory_space<vmem>> -> memref<1x1x1x128xf32, #tpu.memory_space<vmem>>
      %437 = tpu.memref_squeeze %436 : memref<1x1x1x128xf32, #tpu.memory_space<vmem>> -> memref<1x128xf32, #tpu.memory_space<vmem>>
      %438 = tpu.memref_slice %arg6[%c0_i32_393] : memref<2x!tpu.dma_semaphore, #tpu.memory_space<semaphore_mem>> -> memref<1x!tpu.dma_semaphore, #tpu.memory_space<semaphore_mem>>
      %439 = tpu.memref_squeeze %438 : memref<1x!tpu.dma_semaphore, #tpu.memory_space<semaphore_mem>> -> memref<!tpu.dma_semaphore, #tpu.memory_space<semaphore_mem>>
      tpu.enqueue_dma source(%435 : memref<1x128xf32, #tpu.memory_space<any>>) target(%437 : memref<1x128xf32, #tpu.memory_space<vmem>>) target_semaphore(%439 : memref<!tpu.dma_semaphore, #tpu.memory_space<semaphore_mem>>)
      %c60 = arith.constant 60 : index
      %440 = memref.load %arg1[%c60] : memref<128xi32, #tpu.memory_space<smem>>
      %c0_i32_397 = arith.constant 0 : i32
      %c4_i32_398 = arith.constant 4 : i32
      %c0_i32_399 = arith.constant 0 : i32
      %c0_i32_400 = arith.constant 0 : i32
      %441 = tpu.memref_slice %arg3[%440, %c0_i32_400] : memref<101x128xf32, #tpu.memory_space<any>> -> memref<1x128xf32, #tpu.memory_space<any>>
      %c7_i32_401 = arith.constant 7 : i32
      %c0_i32_402 = arith.constant 0 : i32
      %442 = tpu.memref_slice %arg5[%c0_i32_397, %c4_i32_398, %c7_i32_401, %c0_i32_402] : memref<2x8x8x128xf32, #tpu.memory_space<vmem>> -> memref<1x1x1x128xf32, #tpu.memory_space<vmem>>
      %443 = tpu.memref_squeeze %442 : memref<1x1x1x128xf32, #tpu.memory_space<vmem>> -> memref<1x128xf32, #tpu.memory_space<vmem>>
      %444 = tpu.memref_slice %arg6[%c0_i32_399] : memref<2x!tpu.dma_semaphore, #tpu.memory_space<semaphore_mem>> -> memref<1x!tpu.dma_semaphore, #tpu.memory_space<semaphore_mem>>
      %445 = tpu.memref_squeeze %444 : memref<1x!tpu.dma_semaphore, #tpu.memory_space<semaphore_mem>> -> memref<!tpu.dma_semaphore, #tpu.memory_space<semaphore_mem>>
      tpu.enqueue_dma source(%441 : memref<1x128xf32, #tpu.memory_space<any>>) target(%443 : memref<1x128xf32, #tpu.memory_space<vmem>>) target_semaphore(%445 : memref<!tpu.dma_semaphore, #tpu.memory_space<semaphore_mem>>)
      %c61 = arith.constant 61 : index
      %446 = memref.load %arg1[%c61] : memref<128xi32, #tpu.memory_space<smem>>
      %c0_i32_403 = arith.constant 0 : i32
      %c5_i32_404 = arith.constant 5 : i32
      %c0_i32_405 = arith.constant 0 : i32
      %c0_i32_406 = arith.constant 0 : i32
      %447 = tpu.memref_slice %arg3[%446, %c0_i32_406] : memref<101x128xf32, #tpu.memory_space<any>> -> memref<1x128xf32, #tpu.memory_space<any>>
      %c7_i32_407 = arith.constant 7 : i32
      %c0_i32_408 = arith.constant 0 : i32
      %448 = tpu.memref_slice %arg5[%c0_i32_403, %c5_i32_404, %c7_i32_407, %c0_i32_408] : memref<2x8x8x128xf32, #tpu.memory_space<vmem>> -> memref<1x1x1x128xf32, #tpu.memory_space<vmem>>
      %449 = tpu.memref_squeeze %448 : memref<1x1x1x128xf32, #tpu.memory_space<vmem>> -> memref<1x128xf32, #tpu.memory_space<vmem>>
      %450 = tpu.memref_slice %arg6[%c0_i32_405] : memref<2x!tpu.dma_semaphore, #tpu.memory_space<semaphore_mem>> -> memref<1x!tpu.dma_semaphore, #tpu.memory_space<semaphore_mem>>
      %451 = tpu.memref_squeeze %450 : memref<1x!tpu.dma_semaphore, #tpu.memory_space<semaphore_mem>> -> memref<!tpu.dma_semaphore, #tpu.memory_space<semaphore_mem>>
      tpu.enqueue_dma source(%447 : memref<1x128xf32, #tpu.memory_space<any>>) target(%449 : memref<1x128xf32, #tpu.memory_space<vmem>>) target_semaphore(%451 : memref<!tpu.dma_semaphore, #tpu.memory_space<semaphore_mem>>)
      %c62 = arith.constant 62 : index
      %452 = memref.load %arg1[%c62] : memref<128xi32, #tpu.memory_space<smem>>
      %c0_i32_409 = arith.constant 0 : i32
      %c6_i32_410 = arith.constant 6 : i32
      %c0_i32_411 = arith.constant 0 : i32
      %c0_i32_412 = arith.constant 0 : i32
      %453 = tpu.memref_slice %arg3[%452, %c0_i32_412] : memref<101x128xf32, #tpu.memory_space<any>> -> memref<1x128xf32, #tpu.memory_space<any>>
      %c7_i32_413 = arith.constant 7 : i32
      %c0_i32_414 = arith.constant 0 : i32
      %454 = tpu.memref_slice %arg5[%c0_i32_409, %c6_i32_410, %c7_i32_413, %c0_i32_414] : memref<2x8x8x128xf32, #tpu.memory_space<vmem>> -> memref<1x1x1x128xf32, #tpu.memory_space<vmem>>
      %455 = tpu.memref_squeeze %454 : memref<1x1x1x128xf32, #tpu.memory_space<vmem>> -> memref<1x128xf32, #tpu.memory_space<vmem>>
      %456 = tpu.memref_slice %arg6[%c0_i32_411] : memref<2x!tpu.dma_semaphore, #tpu.memory_space<semaphore_mem>> -> memref<1x!tpu.dma_semaphore, #tpu.memory_space<semaphore_mem>>
      %457 = tpu.memref_squeeze %456 : memref<1x!tpu.dma_semaphore, #tpu.memory_space<semaphore_mem>> -> memref<!tpu.dma_semaphore, #tpu.memory_space<semaphore_mem>>
      tpu.enqueue_dma source(%453 : memref<1x128xf32, #tpu.memory_space<any>>) target(%455 : memref<1x128xf32, #tpu.memory_space<vmem>>) target_semaphore(%457 : memref<!tpu.dma_semaphore, #tpu.memory_space<semaphore_mem>>)
      %c63 = arith.constant 63 : index
      %458 = memref.load %arg1[%c63] : memref<128xi32, #tpu.memory_space<smem>>
      %c0_i32_415 = arith.constant 0 : i32
      %c7_i32_416 = arith.constant 7 : i32
      %c0_i32_417 = arith.constant 0 : i32
      %c0_i32_418 = arith.constant 0 : i32
      %459 = tpu.memref_slice %arg3[%458, %c0_i32_418] : memref<101x128xf32, #tpu.memory_space<any>> -> memref<1x128xf32, #tpu.memory_space<any>>
      %c7_i32_419 = arith.constant 7 : i32
      %c0_i32_420 = arith.constant 0 : i32
      %460 = tpu.memref_slice %arg5[%c0_i32_415, %c7_i32_416, %c7_i32_419, %c0_i32_420] : memref<2x8x8x128xf32, #tpu.memory_space<vmem>> -> memref<1x1x1x128xf32, #tpu.memory_space<vmem>>
      %461 = tpu.memref_squeeze %460 : memref<1x1x1x128xf32, #tpu.memory_space<vmem>> -> memref<1x128xf32, #tpu.memory_space<vmem>>
      %462 = tpu.memref_slice %arg6[%c0_i32_417] : memref<2x!tpu.dma_semaphore, #tpu.memory_space<semaphore_mem>> -> memref<1x!tpu.dma_semaphore, #tpu.memory_space<semaphore_mem>>
      %463 = tpu.memref_squeeze %462 : memref<1x!tpu.dma_semaphore, #tpu.memory_space<semaphore_mem>> -> memref<!tpu.dma_semaphore, #tpu.memory_space<semaphore_mem>>
      tpu.enqueue_dma source(%459 : memref<1x128xf32, #tpu.memory_space<any>>) target(%461 : memref<1x128xf32, #tpu.memory_space<vmem>>) target_semaphore(%463 : memref<!tpu.dma_semaphore, #tpu.memory_space<semaphore_mem>>)
    } else {
    }
    %c1_i32 = arith.constant 1 : i32
    %3 = arith.addi %arg0, %c1_i32 : i32
    %c2_i32 = arith.constant 2 : i32
    %4 = arith.cmpi slt, %3, %c2_i32 : i32
    %5 = arith.extui %4 : i1 to i32
    %c0_i32_1 = arith.constant 0 : i32
    %6 = arith.cmpi ne, %5, %c0_i32_1 : i32
    scf.if %6 {
      %c1_i32_34 = arith.constant 1 : i32
      %80 = arith.addi %arg0, %c1_i32_34 : i32
      %c1_i32_35 = arith.constant 1 : i32
      %81 = arith.addi %arg0, %c1_i32_35 : i32
      %c2_i32_36 = arith.constant 2 : i32
      %c0_i32_37 = arith.constant 0 : i32
      %82 = arith.cmpi eq, %c2_i32_36, %c0_i32_37 : i32
      %c1_i32_38 = arith.constant 1 : i32
      %83 = arith.select %82, %c1_i32_38, %c2_i32_36 : i32
      %84 = arith.remsi %81, %83 : i32
      %c0_i32_39 = arith.constant 0 : i32
      %85 = arith.cmpi ne, %84, %c0_i32_39 : i32
      %c0_i32_40 = arith.constant 0 : i32
      %86 = arith.cmpi slt, %84, %c0_i32_40 : i32
      %c0_i32_41 = arith.constant 0 : i32
      %87 = arith.cmpi slt, %83, %c0_i32_41 : i32
      %88 = arith.xori %86, %87 : i1
      %89 = arith.andi %88, %85 : i1
      %90 = arith.addi %84, %83 : i32
      %91 = arith.select %89, %90, %84 : i32
      %c64_i32 = arith.constant 64 : i32
      %92 = arith.muli %80, %c64_i32 : i32
      %c0_i32_42 = arith.constant 0 : i32
      %93 = arith.addi %92, %c0_i32_42 : i32
      %c0_i32_43 = arith.constant 0 : i32
      %94 = arith.addi %93, %c0_i32_43 : i32
      %95 = arith.index_cast %94 : i32 to index
      %96 = memref.load %arg1[%95] : memref<128xi32, #tpu.memory_space<smem>>
      %c0_i32_44 = arith.constant 0 : i32
      %c0_i32_45 = arith.constant 0 : i32
      %97 = tpu.memref_slice %arg3[%96, %c0_i32_45] : memref<101x128xf32, #tpu.memory_space<any>> -> memref<1x128xf32, #tpu.memory_space<any>>
      %c0_i32_46 = arith.constant 0 : i32
      %c0_i32_47 = arith.constant 0 : i32
      %98 = tpu.memref_slice %arg5[%91, %c0_i32_44, %c0_i32_46, %c0_i32_47] : memref<2x8x8x128xf32, #tpu.memory_space<vmem>> -> memref<1x1x1x128xf32, #tpu.memory_space<vmem>>
      %99 = tpu.memref_squeeze %98 : memref<1x1x1x128xf32, #tpu.memory_space<vmem>> -> memref<1x128xf32, #tpu.memory_space<vmem>>
      %100 = tpu.memref_slice %arg6[%91] : memref<2x!tpu.dma_semaphore, #tpu.memory_space<semaphore_mem>> -> memref<1x!tpu.dma_semaphore, #tpu.memory_space<semaphore_mem>>
      %101 = tpu.memref_squeeze %100 : memref<1x!tpu.dma_semaphore, #tpu.memory_space<semaphore_mem>> -> memref<!tpu.dma_semaphore, #tpu.memory_space<semaphore_mem>>
      tpu.enqueue_dma source(%97 : memref<1x128xf32, #tpu.memory_space<any>>) target(%99 : memref<1x128xf32, #tpu.memory_space<vmem>>) target_semaphore(%101 : memref<!tpu.dma_semaphore, #tpu.memory_space<semaphore_mem>>)
      %c0_i32_48 = arith.constant 0 : i32
      %102 = arith.addi %92, %c0_i32_48 : i32
      %c1_i32_49 = arith.constant 1 : i32
      %103 = arith.addi %102, %c1_i32_49 : i32
      %104 = arith.index_cast %103 : i32 to index
      %105 = memref.load %arg1[%104] : memref<128xi32, #tpu.memory_space<smem>>
      %c1_i32_50 = arith.constant 1 : i32
      %c0_i32_51 = arith.constant 0 : i32
      %106 = tpu.memref_slice %arg3[%105, %c0_i32_51] : memref<101x128xf32, #tpu.memory_space<any>> -> memref<1x128xf32, #tpu.memory_space<any>>
      %c0_i32_52 = arith.constant 0 : i32
      %c0_i32_53 = arith.constant 0 : i32
      %107 = tpu.memref_slice %arg5[%91, %c1_i32_50, %c0_i32_52, %c0_i32_53] : memref<2x8x8x128xf32, #tpu.memory_space<vmem>> -> memref<1x1x1x128xf32, #tpu.memory_space<vmem>>
      %108 = tpu.memref_squeeze %107 : memref<1x1x1x128xf32, #tpu.memory_space<vmem>> -> memref<1x128xf32, #tpu.memory_space<vmem>>
      %109 = tpu.memref_slice %arg6[%91] : memref<2x!tpu.dma_semaphore, #tpu.memory_space<semaphore_mem>> -> memref<1x!tpu.dma_semaphore, #tpu.memory_space<semaphore_mem>>
      %110 = tpu.memref_squeeze %109 : memref<1x!tpu.dma_semaphore, #tpu.memory_space<semaphore_mem>> -> memref<!tpu.dma_semaphore, #tpu.memory_space<semaphore_mem>>
      tpu.enqueue_dma source(%106 : memref<1x128xf32, #tpu.memory_space<any>>) target(%108 : memref<1x128xf32, #tpu.memory_space<vmem>>) target_semaphore(%110 : memref<!tpu.dma_semaphore, #tpu.memory_space<semaphore_mem>>)
      %c0_i32_54 = arith.constant 0 : i32
      %111 = arith.addi %92, %c0_i32_54 : i32
      %c2_i32_55 = arith.constant 2 : i32
      %112 = arith.addi %111, %c2_i32_55 : i32
      %113 = arith.index_cast %112 : i32 to index
      %114 = memref.load %arg1[%113] : memref<128xi32, #tpu.memory_space<smem>>
      %c2_i32_56 = arith.constant 2 : i32
      %c0_i32_57 = arith.constant 0 : i32
      %115 = tpu.memref_slice %arg3[%114, %c0_i32_57] : memref<101x128xf32, #tpu.memory_space<any>> -> memref<1x128xf32, #tpu.memory_space<any>>
      %c0_i32_58 = arith.constant 0 : i32
      %c0_i32_59 = arith.constant 0 : i32
      %116 = tpu.memref_slice %arg5[%91, %c2_i32_56, %c0_i32_58, %c0_i32_59] : memref<2x8x8x128xf32, #tpu.memory_space<vmem>> -> memref<1x1x1x128xf32, #tpu.memory_space<vmem>>
      %117 = tpu.memref_squeeze %116 : memref<1x1x1x128xf32, #tpu.memory_space<vmem>> -> memref<1x128xf32, #tpu.memory_space<vmem>>
      %118 = tpu.memref_slice %arg6[%91] : memref<2x!tpu.dma_semaphore, #tpu.memory_space<semaphore_mem>> -> memref<1x!tpu.dma_semaphore, #tpu.memory_space<semaphore_mem>>
      %119 = tpu.memref_squeeze %118 : memref<1x!tpu.dma_semaphore, #tpu.memory_space<semaphore_mem>> -> memref<!tpu.dma_semaphore, #tpu.memory_space<semaphore_mem>>
      tpu.enqueue_dma source(%115 : memref<1x128xf32, #tpu.memory_space<any>>) target(%117 : memref<1x128xf32, #tpu.memory_space<vmem>>) target_semaphore(%119 : memref<!tpu.dma_semaphore, #tpu.memory_space<semaphore_mem>>)
      %c0_i32_60 = arith.constant 0 : i32
      %120 = arith.addi %92, %c0_i32_60 : i32
      %c3_i32 = arith.constant 3 : i32
      %121 = arith.addi %120, %c3_i32 : i32
      %122 = arith.index_cast %121 : i32 to index
      %123 = memref.load %arg1[%122] : memref<128xi32, #tpu.memory_space<smem>>
      %c3_i32_61 = arith.constant 3 : i32
      %c0_i32_62 = arith.constant 0 : i32
      %124 = tpu.memref_slice %arg3[%123, %c0_i32_62] : memref<101x128xf32, #tpu.memory_space<any>> -> memref<1x128xf32, #tpu.memory_space<any>>
      %c0_i32_63 = arith.constant 0 : i32
      %c0_i32_64 = arith.constant 0 : i32
      %125 = tpu.memref_slice %arg5[%91, %c3_i32_61, %c0_i32_63, %c0_i32_64] : memref<2x8x8x128xf32, #tpu.memory_space<vmem>> -> memref<1x1x1x128xf32, #tpu.memory_space<vmem>>
      %126 = tpu.memref_squeeze %125 : memref<1x1x1x128xf32, #tpu.memory_space<vmem>> -> memref<1x128xf32, #tpu.memory_space<vmem>>
      %127 = tpu.memref_slice %arg6[%91] : memref<2x!tpu.dma_semaphore, #tpu.memory_space<semaphore_mem>> -> memref<1x!tpu.dma_semaphore, #tpu.memory_space<semaphore_mem>>
      %128 = tpu.memref_squeeze %127 : memref<1x!tpu.dma_semaphore, #tpu.memory_space<semaphore_mem>> -> memref<!tpu.dma_semaphore, #tpu.memory_space<semaphore_mem>>
      tpu.enqueue_dma source(%124 : memref<1x128xf32, #tpu.memory_space<any>>) target(%126 : memref<1x128xf32, #tpu.memory_space<vmem>>) target_semaphore(%128 : memref<!tpu.dma_semaphore, #tpu.memory_space<semaphore_mem>>)
      %c0_i32_65 = arith.constant 0 : i32
      %129 = arith.addi %92, %c0_i32_65 : i32
      %c4_i32 = arith.constant 4 : i32
      %130 = arith.addi %129, %c4_i32 : i32
      %131 = arith.index_cast %130 : i32 to index
      %132 = memref.load %arg1[%131] : memref<128xi32, #tpu.memory_space<smem>>
      %c4_i32_66 = arith.constant 4 : i32
      %c0_i32_67 = arith.constant 0 : i32
      %133 = tpu.memref_slice %arg3[%132, %c0_i32_67] : memref<101x128xf32, #tpu.memory_space<any>> -> memref<1x128xf32, #tpu.memory_space<any>>
      %c0_i32_68 = arith.constant 0 : i32
      %c0_i32_69 = arith.constant 0 : i32
      %134 = tpu.memref_slice %arg5[%91, %c4_i32_66, %c0_i32_68, %c0_i32_69] : memref<2x8x8x128xf32, #tpu.memory_space<vmem>> -> memref<1x1x1x128xf32, #tpu.memory_space<vmem>>
      %135 = tpu.memref_squeeze %134 : memref<1x1x1x128xf32, #tpu.memory_space<vmem>> -> memref<1x128xf32, #tpu.memory_space<vmem>>
      %136 = tpu.memref_slice %arg6[%91] : memref<2x!tpu.dma_semaphore, #tpu.memory_space<semaphore_mem>> -> memref<1x!tpu.dma_semaphore, #tpu.memory_space<semaphore_mem>>
      %137 = tpu.memref_squeeze %136 : memref<1x!tpu.dma_semaphore, #tpu.memory_space<semaphore_mem>> -> memref<!tpu.dma_semaphore, #tpu.memory_space<semaphore_mem>>
      tpu.enqueue_dma source(%133 : memref<1x128xf32, #tpu.memory_space<any>>) target(%135 : memref<1x128xf32, #tpu.memory_space<vmem>>) target_semaphore(%137 : memref<!tpu.dma_semaphore, #tpu.memory_space<semaphore_mem>>)
      %c0_i32_70 = arith.constant 0 : i32
      %138 = arith.addi %92, %c0_i32_70 : i32
      %c5_i32 = arith.constant 5 : i32
      %139 = arith.addi %138, %c5_i32 : i32
      %140 = arith.index_cast %139 : i32 to index
      %141 = memref.load %arg1[%140] : memref<128xi32, #tpu.memory_space<smem>>
      %c5_i32_71 = arith.constant 5 : i32
      %c0_i32_72 = arith.constant 0 : i32
      %142 = tpu.memref_slice %arg3[%141, %c0_i32_72] : memref<101x128xf32, #tpu.memory_space<any>> -> memref<1x128xf32, #tpu.memory_space<any>>
      %c0_i32_73 = arith.constant 0 : i32
      %c0_i32_74 = arith.constant 0 : i32
      %143 = tpu.memref_slice %arg5[%91, %c5_i32_71, %c0_i32_73, %c0_i32_74] : memref<2x8x8x128xf32, #tpu.memory_space<vmem>> -> memref<1x1x1x128xf32, #tpu.memory_space<vmem>>
      %144 = tpu.memref_squeeze %143 : memref<1x1x1x128xf32, #tpu.memory_space<vmem>> -> memref<1x128xf32, #tpu.memory_space<vmem>>
      %145 = tpu.memref_slice %arg6[%91] : memref<2x!tpu.dma_semaphore, #tpu.memory_space<semaphore_mem>> -> memref<1x!tpu.dma_semaphore, #tpu.memory_space<semaphore_mem>>
      %146 = tpu.memref_squeeze %145 : memref<1x!tpu.dma_semaphore, #tpu.memory_space<semaphore_mem>> -> memref<!tpu.dma_semaphore, #tpu.memory_space<semaphore_mem>>
      tpu.enqueue_dma source(%142 : memref<1x128xf32, #tpu.memory_space<any>>) target(%144 : memref<1x128xf32, #tpu.memory_space<vmem>>) target_semaphore(%146 : memref<!tpu.dma_semaphore, #tpu.memory_space<semaphore_mem>>)
      %c0_i32_75 = arith.constant 0 : i32
      %147 = arith.addi %92, %c0_i32_75 : i32
      %c6_i32 = arith.constant 6 : i32
      %148 = arith.addi %147, %c6_i32 : i32
      %149 = arith.index_cast %148 : i32 to index
      %150 = memref.load %arg1[%149] : memref<128xi32, #tpu.memory_space<smem>>
      %c6_i32_76 = arith.constant 6 : i32
      %c0_i32_77 = arith.constant 0 : i32
      %151 = tpu.memref_slice %arg3[%150, %c0_i32_77] : memref<101x128xf32, #tpu.memory_space<any>> -> memref<1x128xf32, #tpu.memory_space<any>>
      %c0_i32_78 = arith.constant 0 : i32
      %c0_i32_79 = arith.constant 0 : i32
      %152 = tpu.memref_slice %arg5[%91, %c6_i32_76, %c0_i32_78, %c0_i32_79] : memref<2x8x8x128xf32, #tpu.memory_space<vmem>> -> memref<1x1x1x128xf32, #tpu.memory_space<vmem>>
      %153 = tpu.memref_squeeze %152 : memref<1x1x1x128xf32, #tpu.memory_space<vmem>> -> memref<1x128xf32, #tpu.memory_space<vmem>>
      %154 = tpu.memref_slice %arg6[%91] : memref<2x!tpu.dma_semaphore, #tpu.memory_space<semaphore_mem>> -> memref<1x!tpu.dma_semaphore, #tpu.memory_space<semaphore_mem>>
      %155 = tpu.memref_squeeze %154 : memref<1x!tpu.dma_semaphore, #tpu.memory_space<semaphore_mem>> -> memref<!tpu.dma_semaphore, #tpu.memory_space<semaphore_mem>>
      tpu.enqueue_dma source(%151 : memref<1x128xf32, #tpu.memory_space<any>>) target(%153 : memref<1x128xf32, #tpu.memory_space<vmem>>) target_semaphore(%155 : memref<!tpu.dma_semaphore, #tpu.memory_space<semaphore_mem>>)
      %c0_i32_80 = arith.constant 0 : i32
      %156 = arith.addi %92, %c0_i32_80 : i32
      %c7_i32 = arith.constant 7 : i32
      %157 = arith.addi %156, %c7_i32 : i32
      %158 = arith.index_cast %157 : i32 to index
      %159 = memref.load %arg1[%158] : memref<128xi32, #tpu.memory_space<smem>>
      %c7_i32_81 = arith.constant 7 : i32
      %c0_i32_82 = arith.constant 0 : i32
      %160 = tpu.memref_slice %arg3[%159, %c0_i32_82] : memref<101x128xf32, #tpu.memory_space<any>> -> memref<1x128xf32, #tpu.memory_space<any>>
      %c0_i32_83 = arith.constant 0 : i32
      %c0_i32_84 = arith.constant 0 : i32
      %161 = tpu.memref_slice %arg5[%91, %c7_i32_81, %c0_i32_83, %c0_i32_84] : memref<2x8x8x128xf32, #tpu.memory_space<vmem>> -> memref<1x1x1x128xf32, #tpu.memory_space<vmem>>
      %162 = tpu.memref_squeeze %161 : memref<1x1x1x128xf32, #tpu.memory_space<vmem>> -> memref<1x128xf32, #tpu.memory_space<vmem>>
      %163 = tpu.memref_slice %arg6[%91] : memref<2x!tpu.dma_semaphore, #tpu.memory_space<semaphore_mem>> -> memref<1x!tpu.dma_semaphore, #tpu.memory_space<semaphore_mem>>
      %164 = tpu.memref_squeeze %163 : memref<1x!tpu.dma_semaphore, #tpu.memory_space<semaphore_mem>> -> memref<!tpu.dma_semaphore, #tpu.memory_space<semaphore_mem>>
      tpu.enqueue_dma source(%160 : memref<1x128xf32, #tpu.memory_space<any>>) target(%162 : memref<1x128xf32, #tpu.memory_space<vmem>>) target_semaphore(%164 : memref<!tpu.dma_semaphore, #tpu.memory_space<semaphore_mem>>)
      %c8_i32 = arith.constant 8 : i32
      %165 = arith.addi %92, %c8_i32 : i32
      %c0_i32_85 = arith.constant 0 : i32
      %166 = arith.addi %165, %c0_i32_85 : i32
      %167 = arith.index_cast %166 : i32 to index
      %168 = memref.load %arg1[%167] : memref<128xi32, #tpu.memory_space<smem>>
      %c0_i32_86 = arith.constant 0 : i32
      %c0_i32_87 = arith.constant 0 : i32
      %169 = tpu.memref_slice %arg3[%168, %c0_i32_87] : memref<101x128xf32, #tpu.memory_space<any>> -> memref<1x128xf32, #tpu.memory_space<any>>
      %c1_i32_88 = arith.constant 1 : i32
      %c0_i32_89 = arith.constant 0 : i32
      %170 = tpu.memref_slice %arg5[%91, %c0_i32_86, %c1_i32_88, %c0_i32_89] : memref<2x8x8x128xf32, #tpu.memory_space<vmem>> -> memref<1x1x1x128xf32, #tpu.memory_space<vmem>>
      %171 = tpu.memref_squeeze %170 : memref<1x1x1x128xf32, #tpu.memory_space<vmem>> -> memref<1x128xf32, #tpu.memory_space<vmem>>
      %172 = tpu.memref_slice %arg6[%91] : memref<2x!tpu.dma_semaphore, #tpu.memory_space<semaphore_mem>> -> memref<1x!tpu.dma_semaphore, #tpu.memory_space<semaphore_mem>>
      %173 = tpu.memref_squeeze %172 : memref<1x!tpu.dma_semaphore, #tpu.memory_space<semaphore_mem>> -> memref<!tpu.dma_semaphore, #tpu.memory_space<semaphore_mem>>
      tpu.enqueue_dma source(%169 : memref<1x128xf32, #tpu.memory_space<any>>) target(%171 : memref<1x128xf32, #tpu.memory_space<vmem>>) target_semaphore(%173 : memref<!tpu.dma_semaphore, #tpu.memory_space<semaphore_mem>>)
      %c8_i32_90 = arith.constant 8 : i32
      %174 = arith.addi %92, %c8_i32_90 : i32
      %c1_i32_91 = arith.constant 1 : i32
      %175 = arith.addi %174, %c1_i32_91 : i32
      %176 = arith.index_cast %175 : i32 to index
      %177 = memref.load %arg1[%176] : memref<128xi32, #tpu.memory_space<smem>>
      %c1_i32_92 = arith.constant 1 : i32
      %c0_i32_93 = arith.constant 0 : i32
      %178 = tpu.memref_slice %arg3[%177, %c0_i32_93] : memref<101x128xf32, #tpu.memory_space<any>> -> memref<1x128xf32, #tpu.memory_space<any>>
      %c1_i32_94 = arith.constant 1 : i32
      %c0_i32_95 = arith.constant 0 : i32
      %179 = tpu.memref_slice %arg5[%91, %c1_i32_92, %c1_i32_94, %c0_i32_95] : memref<2x8x8x128xf32, #tpu.memory_space<vmem>> -> memref<1x1x1x128xf32, #tpu.memory_space<vmem>>
      %180 = tpu.memref_squeeze %179 : memref<1x1x1x128xf32, #tpu.memory_space<vmem>> -> memref<1x128xf32, #tpu.memory_space<vmem>>
      %181 = tpu.memref_slice %arg6[%91] : memref<2x!tpu.dma_semaphore, #tpu.memory_space<semaphore_mem>> -> memref<1x!tpu.dma_semaphore, #tpu.memory_space<semaphore_mem>>
      %182 = tpu.memref_squeeze %181 : memref<1x!tpu.dma_semaphore, #tpu.memory_space<semaphore_mem>> -> memref<!tpu.dma_semaphore, #tpu.memory_space<semaphore_mem>>
      tpu.enqueue_dma source(%178 : memref<1x128xf32, #tpu.memory_space<any>>) target(%180 : memref<1x128xf32, #tpu.memory_space<vmem>>) target_semaphore(%182 : memref<!tpu.dma_semaphore, #tpu.memory_space<semaphore_mem>>)
      %c8_i32_96 = arith.constant 8 : i32
      %183 = arith.addi %92, %c8_i32_96 : i32
      %c2_i32_97 = arith.constant 2 : i32
      %184 = arith.addi %183, %c2_i32_97 : i32
      %185 = arith.index_cast %184 : i32 to index
      %186 = memref.load %arg1[%185] : memref<128xi32, #tpu.memory_space<smem>>
      %c2_i32_98 = arith.constant 2 : i32
      %c0_i32_99 = arith.constant 0 : i32
      %187 = tpu.memref_slice %arg3[%186, %c0_i32_99] : memref<101x128xf32, #tpu.memory_space<any>> -> memref<1x128xf32, #tpu.memory_space<any>>
      %c1_i32_100 = arith.constant 1 : i32
      %c0_i32_101 = arith.constant 0 : i32
      %188 = tpu.memref_slice %arg5[%91, %c2_i32_98, %c1_i32_100, %c0_i32_101] : memref<2x8x8x128xf32, #tpu.memory_space<vmem>> -> memref<1x1x1x128xf32, #tpu.memory_space<vmem>>
      %189 = tpu.memref_squeeze %188 : memref<1x1x1x128xf32, #tpu.memory_space<vmem>> -> memref<1x128xf32, #tpu.memory_space<vmem>>
      %190 = tpu.memref_slice %arg6[%91] : memref<2x!tpu.dma_semaphore, #tpu.memory_space<semaphore_mem>> -> memref<1x!tpu.dma_semaphore, #tpu.memory_space<semaphore_mem>>
      %191 = tpu.memref_squeeze %190 : memref<1x!tpu.dma_semaphore, #tpu.memory_space<semaphore_mem>> -> memref<!tpu.dma_semaphore, #tpu.memory_space<semaphore_mem>>
      tpu.enqueue_dma source(%187 : memref<1x128xf32, #tpu.memory_space<any>>) target(%189 : memref<1x128xf32, #tpu.memory_space<vmem>>) target_semaphore(%191 : memref<!tpu.dma_semaphore, #tpu.memory_space<semaphore_mem>>)
      %c8_i32_102 = arith.constant 8 : i32
      %192 = arith.addi %92, %c8_i32_102 : i32
      %c3_i32_103 = arith.constant 3 : i32
      %193 = arith.addi %192, %c3_i32_103 : i32
      %194 = arith.index_cast %193 : i32 to index
      %195 = memref.load %arg1[%194] : memref<128xi32, #tpu.memory_space<smem>>
      %c3_i32_104 = arith.constant 3 : i32
      %c0_i32_105 = arith.constant 0 : i32
      %196 = tpu.memref_slice %arg3[%195, %c0_i32_105] : memref<101x128xf32, #tpu.memory_space<any>> -> memref<1x128xf32, #tpu.memory_space<any>>
      %c1_i32_106 = arith.constant 1 : i32
      %c0_i32_107 = arith.constant 0 : i32
      %197 = tpu.memref_slice %arg5[%91, %c3_i32_104, %c1_i32_106, %c0_i32_107] : memref<2x8x8x128xf32, #tpu.memory_space<vmem>> -> memref<1x1x1x128xf32, #tpu.memory_space<vmem>>
      %198 = tpu.memref_squeeze %197 : memref<1x1x1x128xf32, #tpu.memory_space<vmem>> -> memref<1x128xf32, #tpu.memory_space<vmem>>
      %199 = tpu.memref_slice %arg6[%91] : memref<2x!tpu.dma_semaphore, #tpu.memory_space<semaphore_mem>> -> memref<1x!tpu.dma_semaphore, #tpu.memory_space<semaphore_mem>>
      %200 = tpu.memref_squeeze %199 : memref<1x!tpu.dma_semaphore, #tpu.memory_space<semaphore_mem>> -> memref<!tpu.dma_semaphore, #tpu.memory_space<semaphore_mem>>
      tpu.enqueue_dma source(%196 : memref<1x128xf32, #tpu.memory_space<any>>) target(%198 : memref<1x128xf32, #tpu.memory_space<vmem>>) target_semaphore(%200 : memref<!tpu.dma_semaphore, #tpu.memory_space<semaphore_mem>>)
      %c8_i32_108 = arith.constant 8 : i32
      %201 = arith.addi %92, %c8_i32_108 : i32
      %c4_i32_109 = arith.constant 4 : i32
      %202 = arith.addi %201, %c4_i32_109 : i32
      %203 = arith.index_cast %202 : i32 to index
      %204 = memref.load %arg1[%203] : memref<128xi32, #tpu.memory_space<smem>>
      %c4_i32_110 = arith.constant 4 : i32
      %c0_i32_111 = arith.constant 0 : i32
      %205 = tpu.memref_slice %arg3[%204, %c0_i32_111] : memref<101x128xf32, #tpu.memory_space<any>> -> memref<1x128xf32, #tpu.memory_space<any>>
      %c1_i32_112 = arith.constant 1 : i32
      %c0_i32_113 = arith.constant 0 : i32
      %206 = tpu.memref_slice %arg5[%91, %c4_i32_110, %c1_i32_112, %c0_i32_113] : memref<2x8x8x128xf32, #tpu.memory_space<vmem>> -> memref<1x1x1x128xf32, #tpu.memory_space<vmem>>
      %207 = tpu.memref_squeeze %206 : memref<1x1x1x128xf32, #tpu.memory_space<vmem>> -> memref<1x128xf32, #tpu.memory_space<vmem>>
      %208 = tpu.memref_slice %arg6[%91] : memref<2x!tpu.dma_semaphore, #tpu.memory_space<semaphore_mem>> -> memref<1x!tpu.dma_semaphore, #tpu.memory_space<semaphore_mem>>
      %209 = tpu.memref_squeeze %208 : memref<1x!tpu.dma_semaphore, #tpu.memory_space<semaphore_mem>> -> memref<!tpu.dma_semaphore, #tpu.memory_space<semaphore_mem>>
      tpu.enqueue_dma source(%205 : memref<1x128xf32, #tpu.memory_space<any>>) target(%207 : memref<1x128xf32, #tpu.memory_space<vmem>>) target_semaphore(%209 : memref<!tpu.dma_semaphore, #tpu.memory_space<semaphore_mem>>)
      %c8_i32_114 = arith.constant 8 : i32
      %210 = arith.addi %92, %c8_i32_114 : i32
      %c5_i32_115 = arith.constant 5 : i32
      %211 = arith.addi %210, %c5_i32_115 : i32
      %212 = arith.index_cast %211 : i32 to index
      %213 = memref.load %arg1[%212] : memref<128xi32, #tpu.memory_space<smem>>
      %c5_i32_116 = arith.constant 5 : i32
      %c0_i32_117 = arith.constant 0 : i32
      %214 = tpu.memref_slice %arg3[%213, %c0_i32_117] : memref<101x128xf32, #tpu.memory_space<any>> -> memref<1x128xf32, #tpu.memory_space<any>>
      %c1_i32_118 = arith.constant 1 : i32
      %c0_i32_119 = arith.constant 0 : i32
      %215 = tpu.memref_slice %arg5[%91, %c5_i32_116, %c1_i32_118, %c0_i32_119] : memref<2x8x8x128xf32, #tpu.memory_space<vmem>> -> memref<1x1x1x128xf32, #tpu.memory_space<vmem>>
      %216 = tpu.memref_squeeze %215 : memref<1x1x1x128xf32, #tpu.memory_space<vmem>> -> memref<1x128xf32, #tpu.memory_space<vmem>>
      %217 = tpu.memref_slice %arg6[%91] : memref<2x!tpu.dma_semaphore, #tpu.memory_space<semaphore_mem>> -> memref<1x!tpu.dma_semaphore, #tpu.memory_space<semaphore_mem>>
      %218 = tpu.memref_squeeze %217 : memref<1x!tpu.dma_semaphore, #tpu.memory_space<semaphore_mem>> -> memref<!tpu.dma_semaphore, #tpu.memory_space<semaphore_mem>>
      tpu.enqueue_dma source(%214 : memref<1x128xf32, #tpu.memory_space<any>>) target(%216 : memref<1x128xf32, #tpu.memory_space<vmem>>) target_semaphore(%218 : memref<!tpu.dma_semaphore, #tpu.memory_space<semaphore_mem>>)
      %c8_i32_120 = arith.constant 8 : i32
      %219 = arith.addi %92, %c8_i32_120 : i32
      %c6_i32_121 = arith.constant 6 : i32
      %220 = arith.addi %219, %c6_i32_121 : i32
      %221 = arith.index_cast %220 : i32 to index
      %222 = memref.load %arg1[%221] : memref<128xi32, #tpu.memory_space<smem>>
      %c6_i32_122 = arith.constant 6 : i32
      %c0_i32_123 = arith.constant 0 : i32
      %223 = tpu.memref_slice %arg3[%222, %c0_i32_123] : memref<101x128xf32, #tpu.memory_space<any>> -> memref<1x128xf32, #tpu.memory_space<any>>
      %c1_i32_124 = arith.constant 1 : i32
      %c0_i32_125 = arith.constant 0 : i32
      %224 = tpu.memref_slice %arg5[%91, %c6_i32_122, %c1_i32_124, %c0_i32_125] : memref<2x8x8x128xf32, #tpu.memory_space<vmem>> -> memref<1x1x1x128xf32, #tpu.memory_space<vmem>>
      %225 = tpu.memref_squeeze %224 : memref<1x1x1x128xf32, #tpu.memory_space<vmem>> -> memref<1x128xf32, #tpu.memory_space<vmem>>
      %226 = tpu.memref_slice %arg6[%91] : memref<2x!tpu.dma_semaphore, #tpu.memory_space<semaphore_mem>> -> memref<1x!tpu.dma_semaphore, #tpu.memory_space<semaphore_mem>>
      %227 = tpu.memref_squeeze %226 : memref<1x!tpu.dma_semaphore, #tpu.memory_space<semaphore_mem>> -> memref<!tpu.dma_semaphore, #tpu.memory_space<semaphore_mem>>
      tpu.enqueue_dma source(%223 : memref<1x128xf32, #tpu.memory_space<any>>) target(%225 : memref<1x128xf32, #tpu.memory_space<vmem>>) target_semaphore(%227 : memref<!tpu.dma_semaphore, #tpu.memory_space<semaphore_mem>>)
      %c8_i32_126 = arith.constant 8 : i32
      %228 = arith.addi %92, %c8_i32_126 : i32
      %c7_i32_127 = arith.constant 7 : i32
      %229 = arith.addi %228, %c7_i32_127 : i32
      %230 = arith.index_cast %229 : i32 to index
      %231 = memref.load %arg1[%230] : memref<128xi32, #tpu.memory_space<smem>>
      %c7_i32_128 = arith.constant 7 : i32
      %c0_i32_129 = arith.constant 0 : i32
      %232 = tpu.memref_slice %arg3[%231, %c0_i32_129] : memref<101x128xf32, #tpu.memory_space<any>> -> memref<1x128xf32, #tpu.memory_space<any>>
      %c1_i32_130 = arith.constant 1 : i32
      %c0_i32_131 = arith.constant 0 : i32
      %233 = tpu.memref_slice %arg5[%91, %c7_i32_128, %c1_i32_130, %c0_i32_131] : memref<2x8x8x128xf32, #tpu.memory_space<vmem>> -> memref<1x1x1x128xf32, #tpu.memory_space<vmem>>
      %234 = tpu.memref_squeeze %233 : memref<1x1x1x128xf32, #tpu.memory_space<vmem>> -> memref<1x128xf32, #tpu.memory_space<vmem>>
      %235 = tpu.memref_slice %arg6[%91] : memref<2x!tpu.dma_semaphore, #tpu.memory_space<semaphore_mem>> -> memref<1x!tpu.dma_semaphore, #tpu.memory_space<semaphore_mem>>
      %236 = tpu.memref_squeeze %235 : memref<1x!tpu.dma_semaphore, #tpu.memory_space<semaphore_mem>> -> memref<!tpu.dma_semaphore, #tpu.memory_space<semaphore_mem>>
      tpu.enqueue_dma source(%232 : memref<1x128xf32, #tpu.memory_space<any>>) target(%234 : memref<1x128xf32, #tpu.memory_space<vmem>>) target_semaphore(%236 : memref<!tpu.dma_semaphore, #tpu.memory_space<semaphore_mem>>)
      %c16_i32 = arith.constant 16 : i32
      %237 = arith.addi %92, %c16_i32 : i32
      %c0_i32_132 = arith.constant 0 : i32
      %238 = arith.addi %237, %c0_i32_132 : i32
      %239 = arith.index_cast %238 : i32 to index
      %240 = memref.load %arg1[%239] : memref<128xi32, #tpu.memory_space<smem>>
      %c0_i32_133 = arith.constant 0 : i32
      %c0_i32_134 = arith.constant 0 : i32
      %241 = tpu.memref_slice %arg3[%240, %c0_i32_134] : memref<101x128xf32, #tpu.memory_space<any>> -> memref<1x128xf32, #tpu.memory_space<any>>
      %c2_i32_135 = arith.constant 2 : i32
      %c0_i32_136 = arith.constant 0 : i32
      %242 = tpu.memref_slice %arg5[%91, %c0_i32_133, %c2_i32_135, %c0_i32_136] : memref<2x8x8x128xf32, #tpu.memory_space<vmem>> -> memref<1x1x1x128xf32, #tpu.memory_space<vmem>>
      %243 = tpu.memref_squeeze %242 : memref<1x1x1x128xf32, #tpu.memory_space<vmem>> -> memref<1x128xf32, #tpu.memory_space<vmem>>
      %244 = tpu.memref_slice %arg6[%91] : memref<2x!tpu.dma_semaphore, #tpu.memory_space<semaphore_mem>> -> memref<1x!tpu.dma_semaphore, #tpu.memory_space<semaphore_mem>>
      %245 = tpu.memref_squeeze %244 : memref<1x!tpu.dma_semaphore, #tpu.memory_space<semaphore_mem>> -> memref<!tpu.dma_semaphore, #tpu.memory_space<semaphore_mem>>
      tpu.enqueue_dma source(%241 : memref<1x128xf32, #tpu.memory_space<any>>) target(%243 : memref<1x128xf32, #tpu.memory_space<vmem>>) target_semaphore(%245 : memref<!tpu.dma_semaphore, #tpu.memory_space<semaphore_mem>>)
      %c16_i32_137 = arith.constant 16 : i32
      %246 = arith.addi %92, %c16_i32_137 : i32
      %c1_i32_138 = arith.constant 1 : i32
      %247 = arith.addi %246, %c1_i32_138 : i32
      %248 = arith.index_cast %247 : i32 to index
      %249 = memref.load %arg1[%248] : memref<128xi32, #tpu.memory_space<smem>>
      %c1_i32_139 = arith.constant 1 : i32
      %c0_i32_140 = arith.constant 0 : i32
      %250 = tpu.memref_slice %arg3[%249, %c0_i32_140] : memref<101x128xf32, #tpu.memory_space<any>> -> memref<1x128xf32, #tpu.memory_space<any>>
      %c2_i32_141 = arith.constant 2 : i32
      %c0_i32_142 = arith.constant 0 : i32
      %251 = tpu.memref_slice %arg5[%91, %c1_i32_139, %c2_i32_141, %c0_i32_142] : memref<2x8x8x128xf32, #tpu.memory_space<vmem>> -> memref<1x1x1x128xf32, #tpu.memory_space<vmem>>
      %252 = tpu.memref_squeeze %251 : memref<1x1x1x128xf32, #tpu.memory_space<vmem>> -> memref<1x128xf32, #tpu.memory_space<vmem>>
      %253 = tpu.memref_slice %arg6[%91] : memref<2x!tpu.dma_semaphore, #tpu.memory_space<semaphore_mem>> -> memref<1x!tpu.dma_semaphore, #tpu.memory_space<semaphore_mem>>
      %254 = tpu.memref_squeeze %253 : memref<1x!tpu.dma_semaphore, #tpu.memory_space<semaphore_mem>> -> memref<!tpu.dma_semaphore, #tpu.memory_space<semaphore_mem>>
      tpu.enqueue_dma source(%250 : memref<1x128xf32, #tpu.memory_space<any>>) target(%252 : memref<1x128xf32, #tpu.memory_space<vmem>>) target_semaphore(%254 : memref<!tpu.dma_semaphore, #tpu.memory_space<semaphore_mem>>)
      %c16_i32_143 = arith.constant 16 : i32
      %255 = arith.addi %92, %c16_i32_143 : i32
      %c2_i32_144 = arith.constant 2 : i32
      %256 = arith.addi %255, %c2_i32_144 : i32
      %257 = arith.index_cast %256 : i32 to index
      %258 = memref.load %arg1[%257] : memref<128xi32, #tpu.memory_space<smem>>
      %c2_i32_145 = arith.constant 2 : i32
      %c0_i32_146 = arith.constant 0 : i32
      %259 = tpu.memref_slice %arg3[%258, %c0_i32_146] : memref<101x128xf32, #tpu.memory_space<any>> -> memref<1x128xf32, #tpu.memory_space<any>>
      %c2_i32_147 = arith.constant 2 : i32
      %c0_i32_148 = arith.constant 0 : i32
      %260 = tpu.memref_slice %arg5[%91, %c2_i32_145, %c2_i32_147, %c0_i32_148] : memref<2x8x8x128xf32, #tpu.memory_space<vmem>> -> memref<1x1x1x128xf32, #tpu.memory_space<vmem>>
      %261 = tpu.memref_squeeze %260 : memref<1x1x1x128xf32, #tpu.memory_space<vmem>> -> memref<1x128xf32, #tpu.memory_space<vmem>>
      %262 = tpu.memref_slice %arg6[%91] : memref<2x!tpu.dma_semaphore, #tpu.memory_space<semaphore_mem>> -> memref<1x!tpu.dma_semaphore, #tpu.memory_space<semaphore_mem>>
      %263 = tpu.memref_squeeze %262 : memref<1x!tpu.dma_semaphore, #tpu.memory_space<semaphore_mem>> -> memref<!tpu.dma_semaphore, #tpu.memory_space<semaphore_mem>>
      tpu.enqueue_dma source(%259 : memref<1x128xf32, #tpu.memory_space<any>>) target(%261 : memref<1x128xf32, #tpu.memory_space<vmem>>) target_semaphore(%263 : memref<!tpu.dma_semaphore, #tpu.memory_space<semaphore_mem>>)
      %c16_i32_149 = arith.constant 16 : i32
      %264 = arith.addi %92, %c16_i32_149 : i32
      %c3_i32_150 = arith.constant 3 : i32
      %265 = arith.addi %264, %c3_i32_150 : i32
      %266 = arith.index_cast %265 : i32 to index
      %267 = memref.load %arg1[%266] : memref<128xi32, #tpu.memory_space<smem>>
      %c3_i32_151 = arith.constant 3 : i32
      %c0_i32_152 = arith.constant 0 : i32
      %268 = tpu.memref_slice %arg3[%267, %c0_i32_152] : memref<101x128xf32, #tpu.memory_space<any>> -> memref<1x128xf32, #tpu.memory_space<any>>
      %c2_i32_153 = arith.constant 2 : i32
      %c0_i32_154 = arith.constant 0 : i32
      %269 = tpu.memref_slice %arg5[%91, %c3_i32_151, %c2_i32_153, %c0_i32_154] : memref<2x8x8x128xf32, #tpu.memory_space<vmem>> -> memref<1x1x1x128xf32, #tpu.memory_space<vmem>>
      %270 = tpu.memref_squeeze %269 : memref<1x1x1x128xf32, #tpu.memory_space<vmem>> -> memref<1x128xf32, #tpu.memory_space<vmem>>
      %271 = tpu.memref_slice %arg6[%91] : memref<2x!tpu.dma_semaphore, #tpu.memory_space<semaphore_mem>> -> memref<1x!tpu.dma_semaphore, #tpu.memory_space<semaphore_mem>>
      %272 = tpu.memref_squeeze %271 : memref<1x!tpu.dma_semaphore, #tpu.memory_space<semaphore_mem>> -> memref<!tpu.dma_semaphore, #tpu.memory_space<semaphore_mem>>
      tpu.enqueue_dma source(%268 : memref<1x128xf32, #tpu.memory_space<any>>) target(%270 : memref<1x128xf32, #tpu.memory_space<vmem>>) target_semaphore(%272 : memref<!tpu.dma_semaphore, #tpu.memory_space<semaphore_mem>>)
      %c16_i32_155 = arith.constant 16 : i32
      %273 = arith.addi %92, %c16_i32_155 : i32
      %c4_i32_156 = arith.constant 4 : i32
      %274 = arith.addi %273, %c4_i32_156 : i32
      %275 = arith.index_cast %274 : i32 to index
      %276 = memref.load %arg1[%275] : memref<128xi32, #tpu.memory_space<smem>>
      %c4_i32_157 = arith.constant 4 : i32
      %c0_i32_158 = arith.constant 0 : i32
      %277 = tpu.memref_slice %arg3[%276, %c0_i32_158] : memref<101x128xf32, #tpu.memory_space<any>> -> memref<1x128xf32, #tpu.memory_space<any>>
      %c2_i32_159 = arith.constant 2 : i32
      %c0_i32_160 = arith.constant 0 : i32
      %278 = tpu.memref_slice %arg5[%91, %c4_i32_157, %c2_i32_159, %c0_i32_160] : memref<2x8x8x128xf32, #tpu.memory_space<vmem>> -> memref<1x1x1x128xf32, #tpu.memory_space<vmem>>
      %279 = tpu.memref_squeeze %278 : memref<1x1x1x128xf32, #tpu.memory_space<vmem>> -> memref<1x128xf32, #tpu.memory_space<vmem>>
      %280 = tpu.memref_slice %arg6[%91] : memref<2x!tpu.dma_semaphore, #tpu.memory_space<semaphore_mem>> -> memref<1x!tpu.dma_semaphore, #tpu.memory_space<semaphore_mem>>
      %281 = tpu.memref_squeeze %280 : memref<1x!tpu.dma_semaphore, #tpu.memory_space<semaphore_mem>> -> memref<!tpu.dma_semaphore, #tpu.memory_space<semaphore_mem>>
      tpu.enqueue_dma source(%277 : memref<1x128xf32, #tpu.memory_space<any>>) target(%279 : memref<1x128xf32, #tpu.memory_space<vmem>>) target_semaphore(%281 : memref<!tpu.dma_semaphore, #tpu.memory_space<semaphore_mem>>)
      %c16_i32_161 = arith.constant 16 : i32
      %282 = arith.addi %92, %c16_i32_161 : i32
      %c5_i32_162 = arith.constant 5 : i32
      %283 = arith.addi %282, %c5_i32_162 : i32
      %284 = arith.index_cast %283 : i32 to index
      %285 = memref.load %arg1[%284] : memref<128xi32, #tpu.memory_space<smem>>
      %c5_i32_163 = arith.constant 5 : i32
      %c0_i32_164 = arith.constant 0 : i32
      %286 = tpu.memref_slice %arg3[%285, %c0_i32_164] : memref<101x128xf32, #tpu.memory_space<any>> -> memref<1x128xf32, #tpu.memory_space<any>>
      %c2_i32_165 = arith.constant 2 : i32
      %c0_i32_166 = arith.constant 0 : i32
      %287 = tpu.memref_slice %arg5[%91, %c5_i32_163, %c2_i32_165, %c0_i32_166] : memref<2x8x8x128xf32, #tpu.memory_space<vmem>> -> memref<1x1x1x128xf32, #tpu.memory_space<vmem>>
      %288 = tpu.memref_squeeze %287 : memref<1x1x1x128xf32, #tpu.memory_space<vmem>> -> memref<1x128xf32, #tpu.memory_space<vmem>>
      %289 = tpu.memref_slice %arg6[%91] : memref<2x!tpu.dma_semaphore, #tpu.memory_space<semaphore_mem>> -> memref<1x!tpu.dma_semaphore, #tpu.memory_space<semaphore_mem>>
      %290 = tpu.memref_squeeze %289 : memref<1x!tpu.dma_semaphore, #tpu.memory_space<semaphore_mem>> -> memref<!tpu.dma_semaphore, #tpu.memory_space<semaphore_mem>>
      tpu.enqueue_dma source(%286 : memref<1x128xf32, #tpu.memory_space<any>>) target(%288 : memref<1x128xf32, #tpu.memory_space<vmem>>) target_semaphore(%290 : memref<!tpu.dma_semaphore, #tpu.memory_space<semaphore_mem>>)
      %c16_i32_167 = arith.constant 16 : i32
      %291 = arith.addi %92, %c16_i32_167 : i32
      %c6_i32_168 = arith.constant 6 : i32
      %292 = arith.addi %291, %c6_i32_168 : i32
      %293 = arith.index_cast %292 : i32 to index
      %294 = memref.load %arg1[%293] : memref<128xi32, #tpu.memory_space<smem>>
      %c6_i32_169 = arith.constant 6 : i32
      %c0_i32_170 = arith.constant 0 : i32
      %295 = tpu.memref_slice %arg3[%294, %c0_i32_170] : memref<101x128xf32, #tpu.memory_space<any>> -> memref<1x128xf32, #tpu.memory_space<any>>
      %c2_i32_171 = arith.constant 2 : i32
      %c0_i32_172 = arith.constant 0 : i32
      %296 = tpu.memref_slice %arg5[%91, %c6_i32_169, %c2_i32_171, %c0_i32_172] : memref<2x8x8x128xf32, #tpu.memory_space<vmem>> -> memref<1x1x1x128xf32, #tpu.memory_space<vmem>>
      %297 = tpu.memref_squeeze %296 : memref<1x1x1x128xf32, #tpu.memory_space<vmem>> -> memref<1x128xf32, #tpu.memory_space<vmem>>
      %298 = tpu.memref_slice %arg6[%91] : memref<2x!tpu.dma_semaphore, #tpu.memory_space<semaphore_mem>> -> memref<1x!tpu.dma_semaphore, #tpu.memory_space<semaphore_mem>>
      %299 = tpu.memref_squeeze %298 : memref<1x!tpu.dma_semaphore, #tpu.memory_space<semaphore_mem>> -> memref<!tpu.dma_semaphore, #tpu.memory_space<semaphore_mem>>
      tpu.enqueue_dma source(%295 : memref<1x128xf32, #tpu.memory_space<any>>) target(%297 : memref<1x128xf32, #tpu.memory_space<vmem>>) target_semaphore(%299 : memref<!tpu.dma_semaphore, #tpu.memory_space<semaphore_mem>>)
      %c16_i32_173 = arith.constant 16 : i32
      %300 = arith.addi %92, %c16_i32_173 : i32
      %c7_i32_174 = arith.constant 7 : i32
      %301 = arith.addi %300, %c7_i32_174 : i32
      %302 = arith.index_cast %301 : i32 to index
      %303 = memref.load %arg1[%302] : memref<128xi32, #tpu.memory_space<smem>>
      %c7_i32_175 = arith.constant 7 : i32
      %c0_i32_176 = arith.constant 0 : i32
      %304 = tpu.memref_slice %arg3[%303, %c0_i32_176] : memref<101x128xf32, #tpu.memory_space<any>> -> memref<1x128xf32, #tpu.memory_space<any>>
      %c2_i32_177 = arith.constant 2 : i32
      %c0_i32_178 = arith.constant 0 : i32
      %305 = tpu.memref_slice %arg5[%91, %c7_i32_175, %c2_i32_177, %c0_i32_178] : memref<2x8x8x128xf32, #tpu.memory_space<vmem>> -> memref<1x1x1x128xf32, #tpu.memory_space<vmem>>
      %306 = tpu.memref_squeeze %305 : memref<1x1x1x128xf32, #tpu.memory_space<vmem>> -> memref<1x128xf32, #tpu.memory_space<vmem>>
      %307 = tpu.memref_slice %arg6[%91] : memref<2x!tpu.dma_semaphore, #tpu.memory_space<semaphore_mem>> -> memref<1x!tpu.dma_semaphore, #tpu.memory_space<semaphore_mem>>
      %308 = tpu.memref_squeeze %307 : memref<1x!tpu.dma_semaphore, #tpu.memory_space<semaphore_mem>> -> memref<!tpu.dma_semaphore, #tpu.memory_space<semaphore_mem>>
      tpu.enqueue_dma source(%304 : memref<1x128xf32, #tpu.memory_space<any>>) target(%306 : memref<1x128xf32, #tpu.memory_space<vmem>>) target_semaphore(%308 : memref<!tpu.dma_semaphore, #tpu.memory_space<semaphore_mem>>)
      %c24_i32 = arith.constant 24 : i32
      %309 = arith.addi %92, %c24_i32 : i32
      %c0_i32_179 = arith.constant 0 : i32
      %310 = arith.addi %309, %c0_i32_179 : i32
      %311 = arith.index_cast %310 : i32 to index
      %312 = memref.load %arg1[%311] : memref<128xi32, #tpu.memory_space<smem>>
      %c0_i32_180 = arith.constant 0 : i32
      %c0_i32_181 = arith.constant 0 : i32
      %313 = tpu.memref_slice %arg3[%312, %c0_i32_181] : memref<101x128xf32, #tpu.memory_space<any>> -> memref<1x128xf32, #tpu.memory_space<any>>
      %c3_i32_182 = arith.constant 3 : i32
      %c0_i32_183 = arith.constant 0 : i32
      %314 = tpu.memref_slice %arg5[%91, %c0_i32_180, %c3_i32_182, %c0_i32_183] : memref<2x8x8x128xf32, #tpu.memory_space<vmem>> -> memref<1x1x1x128xf32, #tpu.memory_space<vmem>>
      %315 = tpu.memref_squeeze %314 : memref<1x1x1x128xf32, #tpu.memory_space<vmem>> -> memref<1x128xf32, #tpu.memory_space<vmem>>
      %316 = tpu.memref_slice %arg6[%91] : memref<2x!tpu.dma_semaphore, #tpu.memory_space<semaphore_mem>> -> memref<1x!tpu.dma_semaphore, #tpu.memory_space<semaphore_mem>>
      %317 = tpu.memref_squeeze %316 : memref<1x!tpu.dma_semaphore, #tpu.memory_space<semaphore_mem>> -> memref<!tpu.dma_semaphore, #tpu.memory_space<semaphore_mem>>
      tpu.enqueue_dma source(%313 : memref<1x128xf32, #tpu.memory_space<any>>) target(%315 : memref<1x128xf32, #tpu.memory_space<vmem>>) target_semaphore(%317 : memref<!tpu.dma_semaphore, #tpu.memory_space<semaphore_mem>>)
      %c24_i32_184 = arith.constant 24 : i32
      %318 = arith.addi %92, %c24_i32_184 : i32
      %c1_i32_185 = arith.constant 1 : i32
      %319 = arith.addi %318, %c1_i32_185 : i32
      %320 = arith.index_cast %319 : i32 to index
      %321 = memref.load %arg1[%320] : memref<128xi32, #tpu.memory_space<smem>>
      %c1_i32_186 = arith.constant 1 : i32
      %c0_i32_187 = arith.constant 0 : i32
      %322 = tpu.memref_slice %arg3[%321, %c0_i32_187] : memref<101x128xf32, #tpu.memory_space<any>> -> memref<1x128xf32, #tpu.memory_space<any>>
      %c3_i32_188 = arith.constant 3 : i32
      %c0_i32_189 = arith.constant 0 : i32
      %323 = tpu.memref_slice %arg5[%91, %c1_i32_186, %c3_i32_188, %c0_i32_189] : memref<2x8x8x128xf32, #tpu.memory_space<vmem>> -> memref<1x1x1x128xf32, #tpu.memory_space<vmem>>
      %324 = tpu.memref_squeeze %323 : memref<1x1x1x128xf32, #tpu.memory_space<vmem>> -> memref<1x128xf32, #tpu.memory_space<vmem>>
      %325 = tpu.memref_slice %arg6[%91] : memref<2x!tpu.dma_semaphore, #tpu.memory_space<semaphore_mem>> -> memref<1x!tpu.dma_semaphore, #tpu.memory_space<semaphore_mem>>
      %326 = tpu.memref_squeeze %325 : memref<1x!tpu.dma_semaphore, #tpu.memory_space<semaphore_mem>> -> memref<!tpu.dma_semaphore, #tpu.memory_space<semaphore_mem>>
      tpu.enqueue_dma source(%322 : memref<1x128xf32, #tpu.memory_space<any>>) target(%324 : memref<1x128xf32, #tpu.memory_space<vmem>>) target_semaphore(%326 : memref<!tpu.dma_semaphore, #tpu.memory_space<semaphore_mem>>)
      %c24_i32_190 = arith.constant 24 : i32
      %327 = arith.addi %92, %c24_i32_190 : i32
      %c2_i32_191 = arith.constant 2 : i32
      %328 = arith.addi %327, %c2_i32_191 : i32
      %329 = arith.index_cast %328 : i32 to index
      %330 = memref.load %arg1[%329] : memref<128xi32, #tpu.memory_space<smem>>
      %c2_i32_192 = arith.constant 2 : i32
      %c0_i32_193 = arith.constant 0 : i32
      %331 = tpu.memref_slice %arg3[%330, %c0_i32_193] : memref<101x128xf32, #tpu.memory_space<any>> -> memref<1x128xf32, #tpu.memory_space<any>>
      %c3_i32_194 = arith.constant 3 : i32
      %c0_i32_195 = arith.constant 0 : i32
      %332 = tpu.memref_slice %arg5[%91, %c2_i32_192, %c3_i32_194, %c0_i32_195] : memref<2x8x8x128xf32, #tpu.memory_space<vmem>> -> memref<1x1x1x128xf32, #tpu.memory_space<vmem>>
      %333 = tpu.memref_squeeze %332 : memref<1x1x1x128xf32, #tpu.memory_space<vmem>> -> memref<1x128xf32, #tpu.memory_space<vmem>>
      %334 = tpu.memref_slice %arg6[%91] : memref<2x!tpu.dma_semaphore, #tpu.memory_space<semaphore_mem>> -> memref<1x!tpu.dma_semaphore, #tpu.memory_space<semaphore_mem>>
      %335 = tpu.memref_squeeze %334 : memref<1x!tpu.dma_semaphore, #tpu.memory_space<semaphore_mem>> -> memref<!tpu.dma_semaphore, #tpu.memory_space<semaphore_mem>>
      tpu.enqueue_dma source(%331 : memref<1x128xf32, #tpu.memory_space<any>>) target(%333 : memref<1x128xf32, #tpu.memory_space<vmem>>) target_semaphore(%335 : memref<!tpu.dma_semaphore, #tpu.memory_space<semaphore_mem>>)
      %c24_i32_196 = arith.constant 24 : i32
      %336 = arith.addi %92, %c24_i32_196 : i32
      %c3_i32_197 = arith.constant 3 : i32
      %337 = arith.addi %336, %c3_i32_197 : i32
      %338 = arith.index_cast %337 : i32 to index
      %339 = memref.load %arg1[%338] : memref<128xi32, #tpu.memory_space<smem>>
      %c3_i32_198 = arith.constant 3 : i32
      %c0_i32_199 = arith.constant 0 : i32
      %340 = tpu.memref_slice %arg3[%339, %c0_i32_199] : memref<101x128xf32, #tpu.memory_space<any>> -> memref<1x128xf32, #tpu.memory_space<any>>
      %c3_i32_200 = arith.constant 3 : i32
      %c0_i32_201 = arith.constant 0 : i32
      %341 = tpu.memref_slice %arg5[%91, %c3_i32_198, %c3_i32_200, %c0_i32_201] : memref<2x8x8x128xf32, #tpu.memory_space<vmem>> -> memref<1x1x1x128xf32, #tpu.memory_space<vmem>>
      %342 = tpu.memref_squeeze %341 : memref<1x1x1x128xf32, #tpu.memory_space<vmem>> -> memref<1x128xf32, #tpu.memory_space<vmem>>
      %343 = tpu.memref_slice %arg6[%91] : memref<2x!tpu.dma_semaphore, #tpu.memory_space<semaphore_mem>> -> memref<1x!tpu.dma_semaphore, #tpu.memory_space<semaphore_mem>>
      %344 = tpu.memref_squeeze %343 : memref<1x!tpu.dma_semaphore, #tpu.memory_space<semaphore_mem>> -> memref<!tpu.dma_semaphore, #tpu.memory_space<semaphore_mem>>
      tpu.enqueue_dma source(%340 : memref<1x128xf32, #tpu.memory_space<any>>) target(%342 : memref<1x128xf32, #tpu.memory_space<vmem>>) target_semaphore(%344 : memref<!tpu.dma_semaphore, #tpu.memory_space<semaphore_mem>>)
      %c24_i32_202 = arith.constant 24 : i32
      %345 = arith.addi %92, %c24_i32_202 : i32
      %c4_i32_203 = arith.constant 4 : i32
      %346 = arith.addi %345, %c4_i32_203 : i32
      %347 = arith.index_cast %346 : i32 to index
      %348 = memref.load %arg1[%347] : memref<128xi32, #tpu.memory_space<smem>>
      %c4_i32_204 = arith.constant 4 : i32
      %c0_i32_205 = arith.constant 0 : i32
      %349 = tpu.memref_slice %arg3[%348, %c0_i32_205] : memref<101x128xf32, #tpu.memory_space<any>> -> memref<1x128xf32, #tpu.memory_space<any>>
      %c3_i32_206 = arith.constant 3 : i32
      %c0_i32_207 = arith.constant 0 : i32
      %350 = tpu.memref_slice %arg5[%91, %c4_i32_204, %c3_i32_206, %c0_i32_207] : memref<2x8x8x128xf32, #tpu.memory_space<vmem>> -> memref<1x1x1x128xf32, #tpu.memory_space<vmem>>
      %351 = tpu.memref_squeeze %350 : memref<1x1x1x128xf32, #tpu.memory_space<vmem>> -> memref<1x128xf32, #tpu.memory_space<vmem>>
      %352 = tpu.memref_slice %arg6[%91] : memref<2x!tpu.dma_semaphore, #tpu.memory_space<semaphore_mem>> -> memref<1x!tpu.dma_semaphore, #tpu.memory_space<semaphore_mem>>
      %353 = tpu.memref_squeeze %352 : memref<1x!tpu.dma_semaphore, #tpu.memory_space<semaphore_mem>> -> memref<!tpu.dma_semaphore, #tpu.memory_space<semaphore_mem>>
      tpu.enqueue_dma source(%349 : memref<1x128xf32, #tpu.memory_space<any>>) target(%351 : memref<1x128xf32, #tpu.memory_space<vmem>>) target_semaphore(%353 : memref<!tpu.dma_semaphore, #tpu.memory_space<semaphore_mem>>)
      %c24_i32_208 = arith.constant 24 : i32
      %354 = arith.addi %92, %c24_i32_208 : i32
      %c5_i32_209 = arith.constant 5 : i32
      %355 = arith.addi %354, %c5_i32_209 : i32
      %356 = arith.index_cast %355 : i32 to index
      %357 = memref.load %arg1[%356] : memref<128xi32, #tpu.memory_space<smem>>
      %c5_i32_210 = arith.constant 5 : i32
      %c0_i32_211 = arith.constant 0 : i32
      %358 = tpu.memref_slice %arg3[%357, %c0_i32_211] : memref<101x128xf32, #tpu.memory_space<any>> -> memref<1x128xf32, #tpu.memory_space<any>>
      %c3_i32_212 = arith.constant 3 : i32
      %c0_i32_213 = arith.constant 0 : i32
      %359 = tpu.memref_slice %arg5[%91, %c5_i32_210, %c3_i32_212, %c0_i32_213] : memref<2x8x8x128xf32, #tpu.memory_space<vmem>> -> memref<1x1x1x128xf32, #tpu.memory_space<vmem>>
      %360 = tpu.memref_squeeze %359 : memref<1x1x1x128xf32, #tpu.memory_space<vmem>> -> memref<1x128xf32, #tpu.memory_space<vmem>>
      %361 = tpu.memref_slice %arg6[%91] : memref<2x!tpu.dma_semaphore, #tpu.memory_space<semaphore_mem>> -> memref<1x!tpu.dma_semaphore, #tpu.memory_space<semaphore_mem>>
      %362 = tpu.memref_squeeze %361 : memref<1x!tpu.dma_semaphore, #tpu.memory_space<semaphore_mem>> -> memref<!tpu.dma_semaphore, #tpu.memory_space<semaphore_mem>>
      tpu.enqueue_dma source(%358 : memref<1x128xf32, #tpu.memory_space<any>>) target(%360 : memref<1x128xf32, #tpu.memory_space<vmem>>) target_semaphore(%362 : memref<!tpu.dma_semaphore, #tpu.memory_space<semaphore_mem>>)
      %c24_i32_214 = arith.constant 24 : i32
      %363 = arith.addi %92, %c24_i32_214 : i32
      %c6_i32_215 = arith.constant 6 : i32
      %364 = arith.addi %363, %c6_i32_215 : i32
      %365 = arith.index_cast %364 : i32 to index
      %366 = memref.load %arg1[%365] : memref<128xi32, #tpu.memory_space<smem>>
      %c6_i32_216 = arith.constant 6 : i32
      %c0_i32_217 = arith.constant 0 : i32
      %367 = tpu.memref_slice %arg3[%366, %c0_i32_217] : memref<101x128xf32, #tpu.memory_space<any>> -> memref<1x128xf32, #tpu.memory_space<any>>
      %c3_i32_218 = arith.constant 3 : i32
      %c0_i32_219 = arith.constant 0 : i32
      %368 = tpu.memref_slice %arg5[%91, %c6_i32_216, %c3_i32_218, %c0_i32_219] : memref<2x8x8x128xf32, #tpu.memory_space<vmem>> -> memref<1x1x1x128xf32, #tpu.memory_space<vmem>>
      %369 = tpu.memref_squeeze %368 : memref<1x1x1x128xf32, #tpu.memory_space<vmem>> -> memref<1x128xf32, #tpu.memory_space<vmem>>
      %370 = tpu.memref_slice %arg6[%91] : memref<2x!tpu.dma_semaphore, #tpu.memory_space<semaphore_mem>> -> memref<1x!tpu.dma_semaphore, #tpu.memory_space<semaphore_mem>>
      %371 = tpu.memref_squeeze %370 : memref<1x!tpu.dma_semaphore, #tpu.memory_space<semaphore_mem>> -> memref<!tpu.dma_semaphore, #tpu.memory_space<semaphore_mem>>
      tpu.enqueue_dma source(%367 : memref<1x128xf32, #tpu.memory_space<any>>) target(%369 : memref<1x128xf32, #tpu.memory_space<vmem>>) target_semaphore(%371 : memref<!tpu.dma_semaphore, #tpu.memory_space<semaphore_mem>>)
      %c24_i32_220 = arith.constant 24 : i32
      %372 = arith.addi %92, %c24_i32_220 : i32
      %c7_i32_221 = arith.constant 7 : i32
      %373 = arith.addi %372, %c7_i32_221 : i32
      %374 = arith.index_cast %373 : i32 to index
      %375 = memref.load %arg1[%374] : memref<128xi32, #tpu.memory_space<smem>>
      %c7_i32_222 = arith.constant 7 : i32
      %c0_i32_223 = arith.constant 0 : i32
      %376 = tpu.memref_slice %arg3[%375, %c0_i32_223] : memref<101x128xf32, #tpu.memory_space<any>> -> memref<1x128xf32, #tpu.memory_space<any>>
      %c3_i32_224 = arith.constant 3 : i32
      %c0_i32_225 = arith.constant 0 : i32
      %377 = tpu.memref_slice %arg5[%91, %c7_i32_222, %c3_i32_224, %c0_i32_225] : memref<2x8x8x128xf32, #tpu.memory_space<vmem>> -> memref<1x1x1x128xf32, #tpu.memory_space<vmem>>
      %378 = tpu.memref_squeeze %377 : memref<1x1x1x128xf32, #tpu.memory_space<vmem>> -> memref<1x128xf32, #tpu.memory_space<vmem>>
      %379 = tpu.memref_slice %arg6[%91] : memref<2x!tpu.dma_semaphore, #tpu.memory_space<semaphore_mem>> -> memref<1x!tpu.dma_semaphore, #tpu.memory_space<semaphore_mem>>
      %380 = tpu.memref_squeeze %379 : memref<1x!tpu.dma_semaphore, #tpu.memory_space<semaphore_mem>> -> memref<!tpu.dma_semaphore, #tpu.memory_space<semaphore_mem>>
      tpu.enqueue_dma source(%376 : memref<1x128xf32, #tpu.memory_space<any>>) target(%378 : memref<1x128xf32, #tpu.memory_space<vmem>>) target_semaphore(%380 : memref<!tpu.dma_semaphore, #tpu.memory_space<semaphore_mem>>)
      %c32_i32 = arith.constant 32 : i32
      %381 = arith.addi %92, %c32_i32 : i32
      %c0_i32_226 = arith.constant 0 : i32
      %382 = arith.addi %381, %c0_i32_226 : i32
      %383 = arith.index_cast %382 : i32 to index
      %384 = memref.load %arg1[%383] : memref<128xi32, #tpu.memory_space<smem>>
      %c0_i32_227 = arith.constant 0 : i32
      %c0_i32_228 = arith.constant 0 : i32
      %385 = tpu.memref_slice %arg3[%384, %c0_i32_228] : memref<101x128xf32, #tpu.memory_space<any>> -> memref<1x128xf32, #tpu.memory_space<any>>
      %c4_i32_229 = arith.constant 4 : i32
      %c0_i32_230 = arith.constant 0 : i32
      %386 = tpu.memref_slice %arg5[%91, %c0_i32_227, %c4_i32_229, %c0_i32_230] : memref<2x8x8x128xf32, #tpu.memory_space<vmem>> -> memref<1x1x1x128xf32, #tpu.memory_space<vmem>>
      %387 = tpu.memref_squeeze %386 : memref<1x1x1x128xf32, #tpu.memory_space<vmem>> -> memref<1x128xf32, #tpu.memory_space<vmem>>
      %388 = tpu.memref_slice %arg6[%91] : memref<2x!tpu.dma_semaphore, #tpu.memory_space<semaphore_mem>> -> memref<1x!tpu.dma_semaphore, #tpu.memory_space<semaphore_mem>>
      %389 = tpu.memref_squeeze %388 : memref<1x!tpu.dma_semaphore, #tpu.memory_space<semaphore_mem>> -> memref<!tpu.dma_semaphore, #tpu.memory_space<semaphore_mem>>
      tpu.enqueue_dma source(%385 : memref<1x128xf32, #tpu.memory_space<any>>) target(%387 : memref<1x128xf32, #tpu.memory_space<vmem>>) target_semaphore(%389 : memref<!tpu.dma_semaphore, #tpu.memory_space<semaphore_mem>>)
      %c32_i32_231 = arith.constant 32 : i32
      %390 = arith.addi %92, %c32_i32_231 : i32
      %c1_i32_232 = arith.constant 1 : i32
      %391 = arith.addi %390, %c1_i32_232 : i32
      %392 = arith.index_cast %391 : i32 to index
      %393 = memref.load %arg1[%392] : memref<128xi32, #tpu.memory_space<smem>>
      %c1_i32_233 = arith.constant 1 : i32
      %c0_i32_234 = arith.constant 0 : i32
      %394 = tpu.memref_slice %arg3[%393, %c0_i32_234] : memref<101x128xf32, #tpu.memory_space<any>> -> memref<1x128xf32, #tpu.memory_space<any>>
      %c4_i32_235 = arith.constant 4 : i32
      %c0_i32_236 = arith.constant 0 : i32
      %395 = tpu.memref_slice %arg5[%91, %c1_i32_233, %c4_i32_235, %c0_i32_236] : memref<2x8x8x128xf32, #tpu.memory_space<vmem>> -> memref<1x1x1x128xf32, #tpu.memory_space<vmem>>
      %396 = tpu.memref_squeeze %395 : memref<1x1x1x128xf32, #tpu.memory_space<vmem>> -> memref<1x128xf32, #tpu.memory_space<vmem>>
      %397 = tpu.memref_slice %arg6[%91] : memref<2x!tpu.dma_semaphore, #tpu.memory_space<semaphore_mem>> -> memref<1x!tpu.dma_semaphore, #tpu.memory_space<semaphore_mem>>
      %398 = tpu.memref_squeeze %397 : memref<1x!tpu.dma_semaphore, #tpu.memory_space<semaphore_mem>> -> memref<!tpu.dma_semaphore, #tpu.memory_space<semaphore_mem>>
      tpu.enqueue_dma source(%394 : memref<1x128xf32, #tpu.memory_space<any>>) target(%396 : memref<1x128xf32, #tpu.memory_space<vmem>>) target_semaphore(%398 : memref<!tpu.dma_semaphore, #tpu.memory_space<semaphore_mem>>)
      %c32_i32_237 = arith.constant 32 : i32
      %399 = arith.addi %92, %c32_i32_237 : i32
      %c2_i32_238 = arith.constant 2 : i32
      %400 = arith.addi %399, %c2_i32_238 : i32
      %401 = arith.index_cast %400 : i32 to index
      %402 = memref.load %arg1[%401] : memref<128xi32, #tpu.memory_space<smem>>
      %c2_i32_239 = arith.constant 2 : i32
      %c0_i32_240 = arith.constant 0 : i32
      %403 = tpu.memref_slice %arg3[%402, %c0_i32_240] : memref<101x128xf32, #tpu.memory_space<any>> -> memref<1x128xf32, #tpu.memory_space<any>>
      %c4_i32_241 = arith.constant 4 : i32
      %c0_i32_242 = arith.constant 0 : i32
      %404 = tpu.memref_slice %arg5[%91, %c2_i32_239, %c4_i32_241, %c0_i32_242] : memref<2x8x8x128xf32, #tpu.memory_space<vmem>> -> memref<1x1x1x128xf32, #tpu.memory_space<vmem>>
      %405 = tpu.memref_squeeze %404 : memref<1x1x1x128xf32, #tpu.memory_space<vmem>> -> memref<1x128xf32, #tpu.memory_space<vmem>>
      %406 = tpu.memref_slice %arg6[%91] : memref<2x!tpu.dma_semaphore, #tpu.memory_space<semaphore_mem>> -> memref<1x!tpu.dma_semaphore, #tpu.memory_space<semaphore_mem>>
      %407 = tpu.memref_squeeze %406 : memref<1x!tpu.dma_semaphore, #tpu.memory_space<semaphore_mem>> -> memref<!tpu.dma_semaphore, #tpu.memory_space<semaphore_mem>>
      tpu.enqueue_dma source(%403 : memref<1x128xf32, #tpu.memory_space<any>>) target(%405 : memref<1x128xf32, #tpu.memory_space<vmem>>) target_semaphore(%407 : memref<!tpu.dma_semaphore, #tpu.memory_space<semaphore_mem>>)
      %c32_i32_243 = arith.constant 32 : i32
      %408 = arith.addi %92, %c32_i32_243 : i32
      %c3_i32_244 = arith.constant 3 : i32
      %409 = arith.addi %408, %c3_i32_244 : i32
      %410 = arith.index_cast %409 : i32 to index
      %411 = memref.load %arg1[%410] : memref<128xi32, #tpu.memory_space<smem>>
      %c3_i32_245 = arith.constant 3 : i32
      %c0_i32_246 = arith.constant 0 : i32
      %412 = tpu.memref_slice %arg3[%411, %c0_i32_246] : memref<101x128xf32, #tpu.memory_space<any>> -> memref<1x128xf32, #tpu.memory_space<any>>
      %c4_i32_247 = arith.constant 4 : i32
      %c0_i32_248 = arith.constant 0 : i32
      %413 = tpu.memref_slice %arg5[%91, %c3_i32_245, %c4_i32_247, %c0_i32_248] : memref<2x8x8x128xf32, #tpu.memory_space<vmem>> -> memref<1x1x1x128xf32, #tpu.memory_space<vmem>>
      %414 = tpu.memref_squeeze %413 : memref<1x1x1x128xf32, #tpu.memory_space<vmem>> -> memref<1x128xf32, #tpu.memory_space<vmem>>
      %415 = tpu.memref_slice %arg6[%91] : memref<2x!tpu.dma_semaphore, #tpu.memory_space<semaphore_mem>> -> memref<1x!tpu.dma_semaphore, #tpu.memory_space<semaphore_mem>>
      %416 = tpu.memref_squeeze %415 : memref<1x!tpu.dma_semaphore, #tpu.memory_space<semaphore_mem>> -> memref<!tpu.dma_semaphore, #tpu.memory_space<semaphore_mem>>
      tpu.enqueue_dma source(%412 : memref<1x128xf32, #tpu.memory_space<any>>) target(%414 : memref<1x128xf32, #tpu.memory_space<vmem>>) target_semaphore(%416 : memref<!tpu.dma_semaphore, #tpu.memory_space<semaphore_mem>>)
      %c32_i32_249 = arith.constant 32 : i32
      %417 = arith.addi %92, %c32_i32_249 : i32
      %c4_i32_250 = arith.constant 4 : i32
      %418 = arith.addi %417, %c4_i32_250 : i32
      %419 = arith.index_cast %418 : i32 to index
      %420 = memref.load %arg1[%419] : memref<128xi32, #tpu.memory_space<smem>>
      %c4_i32_251 = arith.constant 4 : i32
      %c0_i32_252 = arith.constant 0 : i32
      %421 = tpu.memref_slice %arg3[%420, %c0_i32_252] : memref<101x128xf32, #tpu.memory_space<any>> -> memref<1x128xf32, #tpu.memory_space<any>>
      %c4_i32_253 = arith.constant 4 : i32
      %c0_i32_254 = arith.constant 0 : i32
      %422 = tpu.memref_slice %arg5[%91, %c4_i32_251, %c4_i32_253, %c0_i32_254] : memref<2x8x8x128xf32, #tpu.memory_space<vmem>> -> memref<1x1x1x128xf32, #tpu.memory_space<vmem>>
      %423 = tpu.memref_squeeze %422 : memref<1x1x1x128xf32, #tpu.memory_space<vmem>> -> memref<1x128xf32, #tpu.memory_space<vmem>>
      %424 = tpu.memref_slice %arg6[%91] : memref<2x!tpu.dma_semaphore, #tpu.memory_space<semaphore_mem>> -> memref<1x!tpu.dma_semaphore, #tpu.memory_space<semaphore_mem>>
      %425 = tpu.memref_squeeze %424 : memref<1x!tpu.dma_semaphore, #tpu.memory_space<semaphore_mem>> -> memref<!tpu.dma_semaphore, #tpu.memory_space<semaphore_mem>>
      tpu.enqueue_dma source(%421 : memref<1x128xf32, #tpu.memory_space<any>>) target(%423 : memref<1x128xf32, #tpu.memory_space<vmem>>) target_semaphore(%425 : memref<!tpu.dma_semaphore, #tpu.memory_space<semaphore_mem>>)
      %c32_i32_255 = arith.constant 32 : i32
      %426 = arith.addi %92, %c32_i32_255 : i32
      %c5_i32_256 = arith.constant 5 : i32
      %427 = arith.addi %426, %c5_i32_256 : i32
      %428 = arith.index_cast %427 : i32 to index
      %429 = memref.load %arg1[%428] : memref<128xi32, #tpu.memory_space<smem>>
      %c5_i32_257 = arith.constant 5 : i32
      %c0_i32_258 = arith.constant 0 : i32
      %430 = tpu.memref_slice %arg3[%429, %c0_i32_258] : memref<101x128xf32, #tpu.memory_space<any>> -> memref<1x128xf32, #tpu.memory_space<any>>
      %c4_i32_259 = arith.constant 4 : i32
      %c0_i32_260 = arith.constant 0 : i32
      %431 = tpu.memref_slice %arg5[%91, %c5_i32_257, %c4_i32_259, %c0_i32_260] : memref<2x8x8x128xf32, #tpu.memory_space<vmem>> -> memref<1x1x1x128xf32, #tpu.memory_space<vmem>>
      %432 = tpu.memref_squeeze %431 : memref<1x1x1x128xf32, #tpu.memory_space<vmem>> -> memref<1x128xf32, #tpu.memory_space<vmem>>
      %433 = tpu.memref_slice %arg6[%91] : memref<2x!tpu.dma_semaphore, #tpu.memory_space<semaphore_mem>> -> memref<1x!tpu.dma_semaphore, #tpu.memory_space<semaphore_mem>>
      %434 = tpu.memref_squeeze %433 : memref<1x!tpu.dma_semaphore, #tpu.memory_space<semaphore_mem>> -> memref<!tpu.dma_semaphore, #tpu.memory_space<semaphore_mem>>
      tpu.enqueue_dma source(%430 : memref<1x128xf32, #tpu.memory_space<any>>) target(%432 : memref<1x128xf32, #tpu.memory_space<vmem>>) target_semaphore(%434 : memref<!tpu.dma_semaphore, #tpu.memory_space<semaphore_mem>>)
      %c32_i32_261 = arith.constant 32 : i32
      %435 = arith.addi %92, %c32_i32_261 : i32
      %c6_i32_262 = arith.constant 6 : i32
      %436 = arith.addi %435, %c6_i32_262 : i32
      %437 = arith.index_cast %436 : i32 to index
      %438 = memref.load %arg1[%437] : memref<128xi32, #tpu.memory_space<smem>>
      %c6_i32_263 = arith.constant 6 : i32
      %c0_i32_264 = arith.constant 0 : i32
      %439 = tpu.memref_slice %arg3[%438, %c0_i32_264] : memref<101x128xf32, #tpu.memory_space<any>> -> memref<1x128xf32, #tpu.memory_space<any>>
      %c4_i32_265 = arith.constant 4 : i32
      %c0_i32_266 = arith.constant 0 : i32
      %440 = tpu.memref_slice %arg5[%91, %c6_i32_263, %c4_i32_265, %c0_i32_266] : memref<2x8x8x128xf32, #tpu.memory_space<vmem>> -> memref<1x1x1x128xf32, #tpu.memory_space<vmem>>
      %441 = tpu.memref_squeeze %440 : memref<1x1x1x128xf32, #tpu.memory_space<vmem>> -> memref<1x128xf32, #tpu.memory_space<vmem>>
      %442 = tpu.memref_slice %arg6[%91] : memref<2x!tpu.dma_semaphore, #tpu.memory_space<semaphore_mem>> -> memref<1x!tpu.dma_semaphore, #tpu.memory_space<semaphore_mem>>
      %443 = tpu.memref_squeeze %442 : memref<1x!tpu.dma_semaphore, #tpu.memory_space<semaphore_mem>> -> memref<!tpu.dma_semaphore, #tpu.memory_space<semaphore_mem>>
      tpu.enqueue_dma source(%439 : memref<1x128xf32, #tpu.memory_space<any>>) target(%441 : memref<1x128xf32, #tpu.memory_space<vmem>>) target_semaphore(%443 : memref<!tpu.dma_semaphore, #tpu.memory_space<semaphore_mem>>)
      %c32_i32_267 = arith.constant 32 : i32
      %444 = arith.addi %92, %c32_i32_267 : i32
      %c7_i32_268 = arith.constant 7 : i32
      %445 = arith.addi %444, %c7_i32_268 : i32
      %446 = arith.index_cast %445 : i32 to index
      %447 = memref.load %arg1[%446] : memref<128xi32, #tpu.memory_space<smem>>
      %c7_i32_269 = arith.constant 7 : i32
      %c0_i32_270 = arith.constant 0 : i32
      %448 = tpu.memref_slice %arg3[%447, %c0_i32_270] : memref<101x128xf32, #tpu.memory_space<any>> -> memref<1x128xf32, #tpu.memory_space<any>>
      %c4_i32_271 = arith.constant 4 : i32
      %c0_i32_272 = arith.constant 0 : i32
      %449 = tpu.memref_slice %arg5[%91, %c7_i32_269, %c4_i32_271, %c0_i32_272] : memref<2x8x8x128xf32, #tpu.memory_space<vmem>> -> memref<1x1x1x128xf32, #tpu.memory_space<vmem>>
      %450 = tpu.memref_squeeze %449 : memref<1x1x1x128xf32, #tpu.memory_space<vmem>> -> memref<1x128xf32, #tpu.memory_space<vmem>>
      %451 = tpu.memref_slice %arg6[%91] : memref<2x!tpu.dma_semaphore, #tpu.memory_space<semaphore_mem>> -> memref<1x!tpu.dma_semaphore, #tpu.memory_space<semaphore_mem>>
      %452 = tpu.memref_squeeze %451 : memref<1x!tpu.dma_semaphore, #tpu.memory_space<semaphore_mem>> -> memref<!tpu.dma_semaphore, #tpu.memory_space<semaphore_mem>>
      tpu.enqueue_dma source(%448 : memref<1x128xf32, #tpu.memory_space<any>>) target(%450 : memref<1x128xf32, #tpu.memory_space<vmem>>) target_semaphore(%452 : memref<!tpu.dma_semaphore, #tpu.memory_space<semaphore_mem>>)
      %c40_i32 = arith.constant 40 : i32
      %453 = arith.addi %92, %c40_i32 : i32
      %c0_i32_273 = arith.constant 0 : i32
      %454 = arith.addi %453, %c0_i32_273 : i32
      %455 = arith.index_cast %454 : i32 to index
      %456 = memref.load %arg1[%455] : memref<128xi32, #tpu.memory_space<smem>>
      %c0_i32_274 = arith.constant 0 : i32
      %c0_i32_275 = arith.constant 0 : i32
      %457 = tpu.memref_slice %arg3[%456, %c0_i32_275] : memref<101x128xf32, #tpu.memory_space<any>> -> memref<1x128xf32, #tpu.memory_space<any>>
      %c5_i32_276 = arith.constant 5 : i32
      %c0_i32_277 = arith.constant 0 : i32
      %458 = tpu.memref_slice %arg5[%91, %c0_i32_274, %c5_i32_276, %c0_i32_277] : memref<2x8x8x128xf32, #tpu.memory_space<vmem>> -> memref<1x1x1x128xf32, #tpu.memory_space<vmem>>
      %459 = tpu.memref_squeeze %458 : memref<1x1x1x128xf32, #tpu.memory_space<vmem>> -> memref<1x128xf32, #tpu.memory_space<vmem>>
      %460 = tpu.memref_slice %arg6[%91] : memref<2x!tpu.dma_semaphore, #tpu.memory_space<semaphore_mem>> -> memref<1x!tpu.dma_semaphore, #tpu.memory_space<semaphore_mem>>
      %461 = tpu.memref_squeeze %460 : memref<1x!tpu.dma_semaphore, #tpu.memory_space<semaphore_mem>> -> memref<!tpu.dma_semaphore, #tpu.memory_space<semaphore_mem>>
      tpu.enqueue_dma source(%457 : memref<1x128xf32, #tpu.memory_space<any>>) target(%459 : memref<1x128xf32, #tpu.memory_space<vmem>>) target_semaphore(%461 : memref<!tpu.dma_semaphore, #tpu.memory_space<semaphore_mem>>)
      %c40_i32_278 = arith.constant 40 : i32
      %462 = arith.addi %92, %c40_i32_278 : i32
      %c1_i32_279 = arith.constant 1 : i32
      %463 = arith.addi %462, %c1_i32_279 : i32
      %464 = arith.index_cast %463 : i32 to index
      %465 = memref.load %arg1[%464] : memref<128xi32, #tpu.memory_space<smem>>
      %c1_i32_280 = arith.constant 1 : i32
      %c0_i32_281 = arith.constant 0 : i32
      %466 = tpu.memref_slice %arg3[%465, %c0_i32_281] : memref<101x128xf32, #tpu.memory_space<any>> -> memref<1x128xf32, #tpu.memory_space<any>>
      %c5_i32_282 = arith.constant 5 : i32
      %c0_i32_283 = arith.constant 0 : i32
      %467 = tpu.memref_slice %arg5[%91, %c1_i32_280, %c5_i32_282, %c0_i32_283] : memref<2x8x8x128xf32, #tpu.memory_space<vmem>> -> memref<1x1x1x128xf32, #tpu.memory_space<vmem>>
      %468 = tpu.memref_squeeze %467 : memref<1x1x1x128xf32, #tpu.memory_space<vmem>> -> memref<1x128xf32, #tpu.memory_space<vmem>>
      %469 = tpu.memref_slice %arg6[%91] : memref<2x!tpu.dma_semaphore, #tpu.memory_space<semaphore_mem>> -> memref<1x!tpu.dma_semaphore, #tpu.memory_space<semaphore_mem>>
      %470 = tpu.memref_squeeze %469 : memref<1x!tpu.dma_semaphore, #tpu.memory_space<semaphore_mem>> -> memref<!tpu.dma_semaphore, #tpu.memory_space<semaphore_mem>>
      tpu.enqueue_dma source(%466 : memref<1x128xf32, #tpu.memory_space<any>>) target(%468 : memref<1x128xf32, #tpu.memory_space<vmem>>) target_semaphore(%470 : memref<!tpu.dma_semaphore, #tpu.memory_space<semaphore_mem>>)
      %c40_i32_284 = arith.constant 40 : i32
      %471 = arith.addi %92, %c40_i32_284 : i32
      %c2_i32_285 = arith.constant 2 : i32
      %472 = arith.addi %471, %c2_i32_285 : i32
      %473 = arith.index_cast %472 : i32 to index
      %474 = memref.load %arg1[%473] : memref<128xi32, #tpu.memory_space<smem>>
      %c2_i32_286 = arith.constant 2 : i32
      %c0_i32_287 = arith.constant 0 : i32
      %475 = tpu.memref_slice %arg3[%474, %c0_i32_287] : memref<101x128xf32, #tpu.memory_space<any>> -> memref<1x128xf32, #tpu.memory_space<any>>
      %c5_i32_288 = arith.constant 5 : i32
      %c0_i32_289 = arith.constant 0 : i32
      %476 = tpu.memref_slice %arg5[%91, %c2_i32_286, %c5_i32_288, %c0_i32_289] : memref<2x8x8x128xf32, #tpu.memory_space<vmem>> -> memref<1x1x1x128xf32, #tpu.memory_space<vmem>>
      %477 = tpu.memref_squeeze %476 : memref<1x1x1x128xf32, #tpu.memory_space<vmem>> -> memref<1x128xf32, #tpu.memory_space<vmem>>
      %478 = tpu.memref_slice %arg6[%91] : memref<2x!tpu.dma_semaphore, #tpu.memory_space<semaphore_mem>> -> memref<1x!tpu.dma_semaphore, #tpu.memory_space<semaphore_mem>>
      %479 = tpu.memref_squeeze %478 : memref<1x!tpu.dma_semaphore, #tpu.memory_space<semaphore_mem>> -> memref<!tpu.dma_semaphore, #tpu.memory_space<semaphore_mem>>
      tpu.enqueue_dma source(%475 : memref<1x128xf32, #tpu.memory_space<any>>) target(%477 : memref<1x128xf32, #tpu.memory_space<vmem>>) target_semaphore(%479 : memref<!tpu.dma_semaphore, #tpu.memory_space<semaphore_mem>>)
      %c40_i32_290 = arith.constant 40 : i32
      %480 = arith.addi %92, %c40_i32_290 : i32
      %c3_i32_291 = arith.constant 3 : i32
      %481 = arith.addi %480, %c3_i32_291 : i32
      %482 = arith.index_cast %481 : i32 to index
      %483 = memref.load %arg1[%482] : memref<128xi32, #tpu.memory_space<smem>>
      %c3_i32_292 = arith.constant 3 : i32
      %c0_i32_293 = arith.constant 0 : i32
      %484 = tpu.memref_slice %arg3[%483, %c0_i32_293] : memref<101x128xf32, #tpu.memory_space<any>> -> memref<1x128xf32, #tpu.memory_space<any>>
      %c5_i32_294 = arith.constant 5 : i32
      %c0_i32_295 = arith.constant 0 : i32
      %485 = tpu.memref_slice %arg5[%91, %c3_i32_292, %c5_i32_294, %c0_i32_295] : memref<2x8x8x128xf32, #tpu.memory_space<vmem>> -> memref<1x1x1x128xf32, #tpu.memory_space<vmem>>
      %486 = tpu.memref_squeeze %485 : memref<1x1x1x128xf32, #tpu.memory_space<vmem>> -> memref<1x128xf32, #tpu.memory_space<vmem>>
      %487 = tpu.memref_slice %arg6[%91] : memref<2x!tpu.dma_semaphore, #tpu.memory_space<semaphore_mem>> -> memref<1x!tpu.dma_semaphore, #tpu.memory_space<semaphore_mem>>
      %488 = tpu.memref_squeeze %487 : memref<1x!tpu.dma_semaphore, #tpu.memory_space<semaphore_mem>> -> memref<!tpu.dma_semaphore, #tpu.memory_space<semaphore_mem>>
      tpu.enqueue_dma source(%484 : memref<1x128xf32, #tpu.memory_space<any>>) target(%486 : memref<1x128xf32, #tpu.memory_space<vmem>>) target_semaphore(%488 : memref<!tpu.dma_semaphore, #tpu.memory_space<semaphore_mem>>)
      %c40_i32_296 = arith.constant 40 : i32
      %489 = arith.addi %92, %c40_i32_296 : i32
      %c4_i32_297 = arith.constant 4 : i32
      %490 = arith.addi %489, %c4_i32_297 : i32
      %491 = arith.index_cast %490 : i32 to index
      %492 = memref.load %arg1[%491] : memref<128xi32, #tpu.memory_space<smem>>
      %c4_i32_298 = arith.constant 4 : i32
      %c0_i32_299 = arith.constant 0 : i32
      %493 = tpu.memref_slice %arg3[%492, %c0_i32_299] : memref<101x128xf32, #tpu.memory_space<any>> -> memref<1x128xf32, #tpu.memory_space<any>>
      %c5_i32_300 = arith.constant 5 : i32
      %c0_i32_301 = arith.constant 0 : i32
      %494 = tpu.memref_slice %arg5[%91, %c4_i32_298, %c5_i32_300, %c0_i32_301] : memref<2x8x8x128xf32, #tpu.memory_space<vmem>> -> memref<1x1x1x128xf32, #tpu.memory_space<vmem>>
      %495 = tpu.memref_squeeze %494 : memref<1x1x1x128xf32, #tpu.memory_space<vmem>> -> memref<1x128xf32, #tpu.memory_space<vmem>>
      %496 = tpu.memref_slice %arg6[%91] : memref<2x!tpu.dma_semaphore, #tpu.memory_space<semaphore_mem>> -> memref<1x!tpu.dma_semaphore, #tpu.memory_space<semaphore_mem>>
      %497 = tpu.memref_squeeze %496 : memref<1x!tpu.dma_semaphore, #tpu.memory_space<semaphore_mem>> -> memref<!tpu.dma_semaphore, #tpu.memory_space<semaphore_mem>>
      tpu.enqueue_dma source(%493 : memref<1x128xf32, #tpu.memory_space<any>>) target(%495 : memref<1x128xf32, #tpu.memory_space<vmem>>) target_semaphore(%497 : memref<!tpu.dma_semaphore, #tpu.memory_space<semaphore_mem>>)
      %c40_i32_302 = arith.constant 40 : i32
      %498 = arith.addi %92, %c40_i32_302 : i32
      %c5_i32_303 = arith.constant 5 : i32
      %499 = arith.addi %498, %c5_i32_303 : i32
      %500 = arith.index_cast %499 : i32 to index
      %501 = memref.load %arg1[%500] : memref<128xi32, #tpu.memory_space<smem>>
      %c5_i32_304 = arith.constant 5 : i32
      %c0_i32_305 = arith.constant 0 : i32
      %502 = tpu.memref_slice %arg3[%501, %c0_i32_305] : memref<101x128xf32, #tpu.memory_space<any>> -> memref<1x128xf32, #tpu.memory_space<any>>
      %c5_i32_306 = arith.constant 5 : i32
      %c0_i32_307 = arith.constant 0 : i32
      %503 = tpu.memref_slice %arg5[%91, %c5_i32_304, %c5_i32_306, %c0_i32_307] : memref<2x8x8x128xf32, #tpu.memory_space<vmem>> -> memref<1x1x1x128xf32, #tpu.memory_space<vmem>>
      %504 = tpu.memref_squeeze %503 : memref<1x1x1x128xf32, #tpu.memory_space<vmem>> -> memref<1x128xf32, #tpu.memory_space<vmem>>
      %505 = tpu.memref_slice %arg6[%91] : memref<2x!tpu.dma_semaphore, #tpu.memory_space<semaphore_mem>> -> memref<1x!tpu.dma_semaphore, #tpu.memory_space<semaphore_mem>>
      %506 = tpu.memref_squeeze %505 : memref<1x!tpu.dma_semaphore, #tpu.memory_space<semaphore_mem>> -> memref<!tpu.dma_semaphore, #tpu.memory_space<semaphore_mem>>
      tpu.enqueue_dma source(%502 : memref<1x128xf32, #tpu.memory_space<any>>) target(%504 : memref<1x128xf32, #tpu.memory_space<vmem>>) target_semaphore(%506 : memref<!tpu.dma_semaphore, #tpu.memory_space<semaphore_mem>>)
      %c40_i32_308 = arith.constant 40 : i32
      %507 = arith.addi %92, %c40_i32_308 : i32
      %c6_i32_309 = arith.constant 6 : i32
      %508 = arith.addi %507, %c6_i32_309 : i32
      %509 = arith.index_cast %508 : i32 to index
      %510 = memref.load %arg1[%509] : memref<128xi32, #tpu.memory_space<smem>>
      %c6_i32_310 = arith.constant 6 : i32
      %c0_i32_311 = arith.constant 0 : i32
      %511 = tpu.memref_slice %arg3[%510, %c0_i32_311] : memref<101x128xf32, #tpu.memory_space<any>> -> memref<1x128xf32, #tpu.memory_space<any>>
      %c5_i32_312 = arith.constant 5 : i32
      %c0_i32_313 = arith.constant 0 : i32
      %512 = tpu.memref_slice %arg5[%91, %c6_i32_310, %c5_i32_312, %c0_i32_313] : memref<2x8x8x128xf32, #tpu.memory_space<vmem>> -> memref<1x1x1x128xf32, #tpu.memory_space<vmem>>
      %513 = tpu.memref_squeeze %512 : memref<1x1x1x128xf32, #tpu.memory_space<vmem>> -> memref<1x128xf32, #tpu.memory_space<vmem>>
      %514 = tpu.memref_slice %arg6[%91] : memref<2x!tpu.dma_semaphore, #tpu.memory_space<semaphore_mem>> -> memref<1x!tpu.dma_semaphore, #tpu.memory_space<semaphore_mem>>
      %515 = tpu.memref_squeeze %514 : memref<1x!tpu.dma_semaphore, #tpu.memory_space<semaphore_mem>> -> memref<!tpu.dma_semaphore, #tpu.memory_space<semaphore_mem>>
      tpu.enqueue_dma source(%511 : memref<1x128xf32, #tpu.memory_space<any>>) target(%513 : memref<1x128xf32, #tpu.memory_space<vmem>>) target_semaphore(%515 : memref<!tpu.dma_semaphore, #tpu.memory_space<semaphore_mem>>)
      %c40_i32_314 = arith.constant 40 : i32
      %516 = arith.addi %92, %c40_i32_314 : i32
      %c7_i32_315 = arith.constant 7 : i32
      %517 = arith.addi %516, %c7_i32_315 : i32
      %518 = arith.index_cast %517 : i32 to index
      %519 = memref.load %arg1[%518] : memref<128xi32, #tpu.memory_space<smem>>
      %c7_i32_316 = arith.constant 7 : i32
      %c0_i32_317 = arith.constant 0 : i32
      %520 = tpu.memref_slice %arg3[%519, %c0_i32_317] : memref<101x128xf32, #tpu.memory_space<any>> -> memref<1x128xf32, #tpu.memory_space<any>>
      %c5_i32_318 = arith.constant 5 : i32
      %c0_i32_319 = arith.constant 0 : i32
      %521 = tpu.memref_slice %arg5[%91, %c7_i32_316, %c5_i32_318, %c0_i32_319] : memref<2x8x8x128xf32, #tpu.memory_space<vmem>> -> memref<1x1x1x128xf32, #tpu.memory_space<vmem>>
      %522 = tpu.memref_squeeze %521 : memref<1x1x1x128xf32, #tpu.memory_space<vmem>> -> memref<1x128xf32, #tpu.memory_space<vmem>>
      %523 = tpu.memref_slice %arg6[%91] : memref<2x!tpu.dma_semaphore, #tpu.memory_space<semaphore_mem>> -> memref<1x!tpu.dma_semaphore, #tpu.memory_space<semaphore_mem>>
      %524 = tpu.memref_squeeze %523 : memref<1x!tpu.dma_semaphore, #tpu.memory_space<semaphore_mem>> -> memref<!tpu.dma_semaphore, #tpu.memory_space<semaphore_mem>>
      tpu.enqueue_dma source(%520 : memref<1x128xf32, #tpu.memory_space<any>>) target(%522 : memref<1x128xf32, #tpu.memory_space<vmem>>) target_semaphore(%524 : memref<!tpu.dma_semaphore, #tpu.memory_space<semaphore_mem>>)
      %c48_i32 = arith.constant 48 : i32
      %525 = arith.addi %92, %c48_i32 : i32
      %c0_i32_320 = arith.constant 0 : i32
      %526 = arith.addi %525, %c0_i32_320 : i32
      %527 = arith.index_cast %526 : i32 to index
      %528 = memref.load %arg1[%527] : memref<128xi32, #tpu.memory_space<smem>>
      %c0_i32_321 = arith.constant 0 : i32
      %c0_i32_322 = arith.constant 0 : i32
      %529 = tpu.memref_slice %arg3[%528, %c0_i32_322] : memref<101x128xf32, #tpu.memory_space<any>> -> memref<1x128xf32, #tpu.memory_space<any>>
      %c6_i32_323 = arith.constant 6 : i32
      %c0_i32_324 = arith.constant 0 : i32
      %530 = tpu.memref_slice %arg5[%91, %c0_i32_321, %c6_i32_323, %c0_i32_324] : memref<2x8x8x128xf32, #tpu.memory_space<vmem>> -> memref<1x1x1x128xf32, #tpu.memory_space<vmem>>
      %531 = tpu.memref_squeeze %530 : memref<1x1x1x128xf32, #tpu.memory_space<vmem>> -> memref<1x128xf32, #tpu.memory_space<vmem>>
      %532 = tpu.memref_slice %arg6[%91] : memref<2x!tpu.dma_semaphore, #tpu.memory_space<semaphore_mem>> -> memref<1x!tpu.dma_semaphore, #tpu.memory_space<semaphore_mem>>
      %533 = tpu.memref_squeeze %532 : memref<1x!tpu.dma_semaphore, #tpu.memory_space<semaphore_mem>> -> memref<!tpu.dma_semaphore, #tpu.memory_space<semaphore_mem>>
      tpu.enqueue_dma source(%529 : memref<1x128xf32, #tpu.memory_space<any>>) target(%531 : memref<1x128xf32, #tpu.memory_space<vmem>>) target_semaphore(%533 : memref<!tpu.dma_semaphore, #tpu.memory_space<semaphore_mem>>)
      %c48_i32_325 = arith.constant 48 : i32
      %534 = arith.addi %92, %c48_i32_325 : i32
      %c1_i32_326 = arith.constant 1 : i32
      %535 = arith.addi %534, %c1_i32_326 : i32
      %536 = arith.index_cast %535 : i32 to index
      %537 = memref.load %arg1[%536] : memref<128xi32, #tpu.memory_space<smem>>
      %c1_i32_327 = arith.constant 1 : i32
      %c0_i32_328 = arith.constant 0 : i32
      %538 = tpu.memref_slice %arg3[%537, %c0_i32_328] : memref<101x128xf32, #tpu.memory_space<any>> -> memref<1x128xf32, #tpu.memory_space<any>>
      %c6_i32_329 = arith.constant 6 : i32
      %c0_i32_330 = arith.constant 0 : i32
      %539 = tpu.memref_slice %arg5[%91, %c1_i32_327, %c6_i32_329, %c0_i32_330] : memref<2x8x8x128xf32, #tpu.memory_space<vmem>> -> memref<1x1x1x128xf32, #tpu.memory_space<vmem>>
      %540 = tpu.memref_squeeze %539 : memref<1x1x1x128xf32, #tpu.memory_space<vmem>> -> memref<1x128xf32, #tpu.memory_space<vmem>>
      %541 = tpu.memref_slice %arg6[%91] : memref<2x!tpu.dma_semaphore, #tpu.memory_space<semaphore_mem>> -> memref<1x!tpu.dma_semaphore, #tpu.memory_space<semaphore_mem>>
      %542 = tpu.memref_squeeze %541 : memref<1x!tpu.dma_semaphore, #tpu.memory_space<semaphore_mem>> -> memref<!tpu.dma_semaphore, #tpu.memory_space<semaphore_mem>>
      tpu.enqueue_dma source(%538 : memref<1x128xf32, #tpu.memory_space<any>>) target(%540 : memref<1x128xf32, #tpu.memory_space<vmem>>) target_semaphore(%542 : memref<!tpu.dma_semaphore, #tpu.memory_space<semaphore_mem>>)
      %c48_i32_331 = arith.constant 48 : i32
      %543 = arith.addi %92, %c48_i32_331 : i32
      %c2_i32_332 = arith.constant 2 : i32
      %544 = arith.addi %543, %c2_i32_332 : i32
      %545 = arith.index_cast %544 : i32 to index
      %546 = memref.load %arg1[%545] : memref<128xi32, #tpu.memory_space<smem>>
      %c2_i32_333 = arith.constant 2 : i32
      %c0_i32_334 = arith.constant 0 : i32
      %547 = tpu.memref_slice %arg3[%546, %c0_i32_334] : memref<101x128xf32, #tpu.memory_space<any>> -> memref<1x128xf32, #tpu.memory_space<any>>
      %c6_i32_335 = arith.constant 6 : i32
      %c0_i32_336 = arith.constant 0 : i32
      %548 = tpu.memref_slice %arg5[%91, %c2_i32_333, %c6_i32_335, %c0_i32_336] : memref<2x8x8x128xf32, #tpu.memory_space<vmem>> -> memref<1x1x1x128xf32, #tpu.memory_space<vmem>>
      %549 = tpu.memref_squeeze %548 : memref<1x1x1x128xf32, #tpu.memory_space<vmem>> -> memref<1x128xf32, #tpu.memory_space<vmem>>
      %550 = tpu.memref_slice %arg6[%91] : memref<2x!tpu.dma_semaphore, #tpu.memory_space<semaphore_mem>> -> memref<1x!tpu.dma_semaphore, #tpu.memory_space<semaphore_mem>>
      %551 = tpu.memref_squeeze %550 : memref<1x!tpu.dma_semaphore, #tpu.memory_space<semaphore_mem>> -> memref<!tpu.dma_semaphore, #tpu.memory_space<semaphore_mem>>
      tpu.enqueue_dma source(%547 : memref<1x128xf32, #tpu.memory_space<any>>) target(%549 : memref<1x128xf32, #tpu.memory_space<vmem>>) target_semaphore(%551 : memref<!tpu.dma_semaphore, #tpu.memory_space<semaphore_mem>>)
      %c48_i32_337 = arith.constant 48 : i32
      %552 = arith.addi %92, %c48_i32_337 : i32
      %c3_i32_338 = arith.constant 3 : i32
      %553 = arith.addi %552, %c3_i32_338 : i32
      %554 = arith.index_cast %553 : i32 to index
      %555 = memref.load %arg1[%554] : memref<128xi32, #tpu.memory_space<smem>>
      %c3_i32_339 = arith.constant 3 : i32
      %c0_i32_340 = arith.constant 0 : i32
      %556 = tpu.memref_slice %arg3[%555, %c0_i32_340] : memref<101x128xf32, #tpu.memory_space<any>> -> memref<1x128xf32, #tpu.memory_space<any>>
      %c6_i32_341 = arith.constant 6 : i32
      %c0_i32_342 = arith.constant 0 : i32
      %557 = tpu.memref_slice %arg5[%91, %c3_i32_339, %c6_i32_341, %c0_i32_342] : memref<2x8x8x128xf32, #tpu.memory_space<vmem>> -> memref<1x1x1x128xf32, #tpu.memory_space<vmem>>
      %558 = tpu.memref_squeeze %557 : memref<1x1x1x128xf32, #tpu.memory_space<vmem>> -> memref<1x128xf32, #tpu.memory_space<vmem>>
      %559 = tpu.memref_slice %arg6[%91] : memref<2x!tpu.dma_semaphore, #tpu.memory_space<semaphore_mem>> -> memref<1x!tpu.dma_semaphore, #tpu.memory_space<semaphore_mem>>
      %560 = tpu.memref_squeeze %559 : memref<1x!tpu.dma_semaphore, #tpu.memory_space<semaphore_mem>> -> memref<!tpu.dma_semaphore, #tpu.memory_space<semaphore_mem>>
      tpu.enqueue_dma source(%556 : memref<1x128xf32, #tpu.memory_space<any>>) target(%558 : memref<1x128xf32, #tpu.memory_space<vmem>>) target_semaphore(%560 : memref<!tpu.dma_semaphore, #tpu.memory_space<semaphore_mem>>)
      %c48_i32_343 = arith.constant 48 : i32
      %561 = arith.addi %92, %c48_i32_343 : i32
      %c4_i32_344 = arith.constant 4 : i32
      %562 = arith.addi %561, %c4_i32_344 : i32
      %563 = arith.index_cast %562 : i32 to index
      %564 = memref.load %arg1[%563] : memref<128xi32, #tpu.memory_space<smem>>
      %c4_i32_345 = arith.constant 4 : i32
      %c0_i32_346 = arith.constant 0 : i32
      %565 = tpu.memref_slice %arg3[%564, %c0_i32_346] : memref<101x128xf32, #tpu.memory_space<any>> -> memref<1x128xf32, #tpu.memory_space<any>>
      %c6_i32_347 = arith.constant 6 : i32
      %c0_i32_348 = arith.constant 0 : i32
      %566 = tpu.memref_slice %arg5[%91, %c4_i32_345, %c6_i32_347, %c0_i32_348] : memref<2x8x8x128xf32, #tpu.memory_space<vmem>> -> memref<1x1x1x128xf32, #tpu.memory_space<vmem>>
      %567 = tpu.memref_squeeze %566 : memref<1x1x1x128xf32, #tpu.memory_space<vmem>> -> memref<1x128xf32, #tpu.memory_space<vmem>>
      %568 = tpu.memref_slice %arg6[%91] : memref<2x!tpu.dma_semaphore, #tpu.memory_space<semaphore_mem>> -> memref<1x!tpu.dma_semaphore, #tpu.memory_space<semaphore_mem>>
      %569 = tpu.memref_squeeze %568 : memref<1x!tpu.dma_semaphore, #tpu.memory_space<semaphore_mem>> -> memref<!tpu.dma_semaphore, #tpu.memory_space<semaphore_mem>>
      tpu.enqueue_dma source(%565 : memref<1x128xf32, #tpu.memory_space<any>>) target(%567 : memref<1x128xf32, #tpu.memory_space<vmem>>) target_semaphore(%569 : memref<!tpu.dma_semaphore, #tpu.memory_space<semaphore_mem>>)
      %c48_i32_349 = arith.constant 48 : i32
      %570 = arith.addi %92, %c48_i32_349 : i32
      %c5_i32_350 = arith.constant 5 : i32
      %571 = arith.addi %570, %c5_i32_350 : i32
      %572 = arith.index_cast %571 : i32 to index
      %573 = memref.load %arg1[%572] : memref<128xi32, #tpu.memory_space<smem>>
      %c5_i32_351 = arith.constant 5 : i32
      %c0_i32_352 = arith.constant 0 : i32
      %574 = tpu.memref_slice %arg3[%573, %c0_i32_352] : memref<101x128xf32, #tpu.memory_space<any>> -> memref<1x128xf32, #tpu.memory_space<any>>
      %c6_i32_353 = arith.constant 6 : i32
      %c0_i32_354 = arith.constant 0 : i32
      %575 = tpu.memref_slice %arg5[%91, %c5_i32_351, %c6_i32_353, %c0_i32_354] : memref<2x8x8x128xf32, #tpu.memory_space<vmem>> -> memref<1x1x1x128xf32, #tpu.memory_space<vmem>>
      %576 = tpu.memref_squeeze %575 : memref<1x1x1x128xf32, #tpu.memory_space<vmem>> -> memref<1x128xf32, #tpu.memory_space<vmem>>
      %577 = tpu.memref_slice %arg6[%91] : memref<2x!tpu.dma_semaphore, #tpu.memory_space<semaphore_mem>> -> memref<1x!tpu.dma_semaphore, #tpu.memory_space<semaphore_mem>>
      %578 = tpu.memref_squeeze %577 : memref<1x!tpu.dma_semaphore, #tpu.memory_space<semaphore_mem>> -> memref<!tpu.dma_semaphore, #tpu.memory_space<semaphore_mem>>
      tpu.enqueue_dma source(%574 : memref<1x128xf32, #tpu.memory_space<any>>) target(%576 : memref<1x128xf32, #tpu.memory_space<vmem>>) target_semaphore(%578 : memref<!tpu.dma_semaphore, #tpu.memory_space<semaphore_mem>>)
      %c48_i32_355 = arith.constant 48 : i32
      %579 = arith.addi %92, %c48_i32_355 : i32
      %c6_i32_356 = arith.constant 6 : i32
      %580 = arith.addi %579, %c6_i32_356 : i32
      %581 = arith.index_cast %580 : i32 to index
      %582 = memref.load %arg1[%581] : memref<128xi32, #tpu.memory_space<smem>>
      %c6_i32_357 = arith.constant 6 : i32
      %c0_i32_358 = arith.constant 0 : i32
      %583 = tpu.memref_slice %arg3[%582, %c0_i32_358] : memref<101x128xf32, #tpu.memory_space<any>> -> memref<1x128xf32, #tpu.memory_space<any>>
      %c6_i32_359 = arith.constant 6 : i32
      %c0_i32_360 = arith.constant 0 : i32
      %584 = tpu.memref_slice %arg5[%91, %c6_i32_357, %c6_i32_359, %c0_i32_360] : memref<2x8x8x128xf32, #tpu.memory_space<vmem>> -> memref<1x1x1x128xf32, #tpu.memory_space<vmem>>
      %585 = tpu.memref_squeeze %584 : memref<1x1x1x128xf32, #tpu.memory_space<vmem>> -> memref<1x128xf32, #tpu.memory_space<vmem>>
      %586 = tpu.memref_slice %arg6[%91] : memref<2x!tpu.dma_semaphore, #tpu.memory_space<semaphore_mem>> -> memref<1x!tpu.dma_semaphore, #tpu.memory_space<semaphore_mem>>
      %587 = tpu.memref_squeeze %586 : memref<1x!tpu.dma_semaphore, #tpu.memory_space<semaphore_mem>> -> memref<!tpu.dma_semaphore, #tpu.memory_space<semaphore_mem>>
      tpu.enqueue_dma source(%583 : memref<1x128xf32, #tpu.memory_space<any>>) target(%585 : memref<1x128xf32, #tpu.memory_space<vmem>>) target_semaphore(%587 : memref<!tpu.dma_semaphore, #tpu.memory_space<semaphore_mem>>)
      %c48_i32_361 = arith.constant 48 : i32
      %588 = arith.addi %92, %c48_i32_361 : i32
      %c7_i32_362 = arith.constant 7 : i32
      %589 = arith.addi %588, %c7_i32_362 : i32
      %590 = arith.index_cast %589 : i32 to index
      %591 = memref.load %arg1[%590] : memref<128xi32, #tpu.memory_space<smem>>
      %c7_i32_363 = arith.constant 7 : i32
      %c0_i32_364 = arith.constant 0 : i32
      %592 = tpu.memref_slice %arg3[%591, %c0_i32_364] : memref<101x128xf32, #tpu.memory_space<any>> -> memref<1x128xf32, #tpu.memory_space<any>>
      %c6_i32_365 = arith.constant 6 : i32
      %c0_i32_366 = arith.constant 0 : i32
      %593 = tpu.memref_slice %arg5[%91, %c7_i32_363, %c6_i32_365, %c0_i32_366] : memref<2x8x8x128xf32, #tpu.memory_space<vmem>> -> memref<1x1x1x128xf32, #tpu.memory_space<vmem>>
      %594 = tpu.memref_squeeze %593 : memref<1x1x1x128xf32, #tpu.memory_space<vmem>> -> memref<1x128xf32, #tpu.memory_space<vmem>>
      %595 = tpu.memref_slice %arg6[%91] : memref<2x!tpu.dma_semaphore, #tpu.memory_space<semaphore_mem>> -> memref<1x!tpu.dma_semaphore, #tpu.memory_space<semaphore_mem>>
      %596 = tpu.memref_squeeze %595 : memref<1x!tpu.dma_semaphore, #tpu.memory_space<semaphore_mem>> -> memref<!tpu.dma_semaphore, #tpu.memory_space<semaphore_mem>>
      tpu.enqueue_dma source(%592 : memref<1x128xf32, #tpu.memory_space<any>>) target(%594 : memref<1x128xf32, #tpu.memory_space<vmem>>) target_semaphore(%596 : memref<!tpu.dma_semaphore, #tpu.memory_space<semaphore_mem>>)
      %c56_i32 = arith.constant 56 : i32
      %597 = arith.addi %92, %c56_i32 : i32
      %c0_i32_367 = arith.constant 0 : i32
      %598 = arith.addi %597, %c0_i32_367 : i32
      %599 = arith.index_cast %598 : i32 to index
      %600 = memref.load %arg1[%599] : memref<128xi32, #tpu.memory_space<smem>>
      %c0_i32_368 = arith.constant 0 : i32
      %c0_i32_369 = arith.constant 0 : i32
      %601 = tpu.memref_slice %arg3[%600, %c0_i32_369] : memref<101x128xf32, #tpu.memory_space<any>> -> memref<1x128xf32, #tpu.memory_space<any>>
      %c7_i32_370 = arith.constant 7 : i32
      %c0_i32_371 = arith.constant 0 : i32
      %602 = tpu.memref_slice %arg5[%91, %c0_i32_368, %c7_i32_370, %c0_i32_371] : memref<2x8x8x128xf32, #tpu.memory_space<vmem>> -> memref<1x1x1x128xf32, #tpu.memory_space<vmem>>
      %603 = tpu.memref_squeeze %602 : memref<1x1x1x128xf32, #tpu.memory_space<vmem>> -> memref<1x128xf32, #tpu.memory_space<vmem>>
      %604 = tpu.memref_slice %arg6[%91] : memref<2x!tpu.dma_semaphore, #tpu.memory_space<semaphore_mem>> -> memref<1x!tpu.dma_semaphore, #tpu.memory_space<semaphore_mem>>
      %605 = tpu.memref_squeeze %604 : memref<1x!tpu.dma_semaphore, #tpu.memory_space<semaphore_mem>> -> memref<!tpu.dma_semaphore, #tpu.memory_space<semaphore_mem>>
      tpu.enqueue_dma source(%601 : memref<1x128xf32, #tpu.memory_space<any>>) target(%603 : memref<1x128xf32, #tpu.memory_space<vmem>>) target_semaphore(%605 : memref<!tpu.dma_semaphore, #tpu.memory_space<semaphore_mem>>)
      %c56_i32_372 = arith.constant 56 : i32
      %606 = arith.addi %92, %c56_i32_372 : i32
      %c1_i32_373 = arith.constant 1 : i32
      %607 = arith.addi %606, %c1_i32_373 : i32
      %608 = arith.index_cast %607 : i32 to index
      %609 = memref.load %arg1[%608] : memref<128xi32, #tpu.memory_space<smem>>
      %c1_i32_374 = arith.constant 1 : i32
      %c0_i32_375 = arith.constant 0 : i32
      %610 = tpu.memref_slice %arg3[%609, %c0_i32_375] : memref<101x128xf32, #tpu.memory_space<any>> -> memref<1x128xf32, #tpu.memory_space<any>>
      %c7_i32_376 = arith.constant 7 : i32
      %c0_i32_377 = arith.constant 0 : i32
      %611 = tpu.memref_slice %arg5[%91, %c1_i32_374, %c7_i32_376, %c0_i32_377] : memref<2x8x8x128xf32, #tpu.memory_space<vmem>> -> memref<1x1x1x128xf32, #tpu.memory_space<vmem>>
      %612 = tpu.memref_squeeze %611 : memref<1x1x1x128xf32, #tpu.memory_space<vmem>> -> memref<1x128xf32, #tpu.memory_space<vmem>>
      %613 = tpu.memref_slice %arg6[%91] : memref<2x!tpu.dma_semaphore, #tpu.memory_space<semaphore_mem>> -> memref<1x!tpu.dma_semaphore, #tpu.memory_space<semaphore_mem>>
      %614 = tpu.memref_squeeze %613 : memref<1x!tpu.dma_semaphore, #tpu.memory_space<semaphore_mem>> -> memref<!tpu.dma_semaphore, #tpu.memory_space<semaphore_mem>>
      tpu.enqueue_dma source(%610 : memref<1x128xf32, #tpu.memory_space<any>>) target(%612 : memref<1x128xf32, #tpu.memory_space<vmem>>) target_semaphore(%614 : memref<!tpu.dma_semaphore, #tpu.memory_space<semaphore_mem>>)
      %c56_i32_378 = arith.constant 56 : i32
      %615 = arith.addi %92, %c56_i32_378 : i32
      %c2_i32_379 = arith.constant 2 : i32
      %616 = arith.addi %615, %c2_i32_379 : i32
      %617 = arith.index_cast %616 : i32 to index
      %618 = memref.load %arg1[%617] : memref<128xi32, #tpu.memory_space<smem>>
      %c2_i32_380 = arith.constant 2 : i32
      %c0_i32_381 = arith.constant 0 : i32
      %619 = tpu.memref_slice %arg3[%618, %c0_i32_381] : memref<101x128xf32, #tpu.memory_space<any>> -> memref<1x128xf32, #tpu.memory_space<any>>
      %c7_i32_382 = arith.constant 7 : i32
      %c0_i32_383 = arith.constant 0 : i32
      %620 = tpu.memref_slice %arg5[%91, %c2_i32_380, %c7_i32_382, %c0_i32_383] : memref<2x8x8x128xf32, #tpu.memory_space<vmem>> -> memref<1x1x1x128xf32, #tpu.memory_space<vmem>>
      %621 = tpu.memref_squeeze %620 : memref<1x1x1x128xf32, #tpu.memory_space<vmem>> -> memref<1x128xf32, #tpu.memory_space<vmem>>
      %622 = tpu.memref_slice %arg6[%91] : memref<2x!tpu.dma_semaphore, #tpu.memory_space<semaphore_mem>> -> memref<1x!tpu.dma_semaphore, #tpu.memory_space<semaphore_mem>>
      %623 = tpu.memref_squeeze %622 : memref<1x!tpu.dma_semaphore, #tpu.memory_space<semaphore_mem>> -> memref<!tpu.dma_semaphore, #tpu.memory_space<semaphore_mem>>
      tpu.enqueue_dma source(%619 : memref<1x128xf32, #tpu.memory_space<any>>) target(%621 : memref<1x128xf32, #tpu.memory_space<vmem>>) target_semaphore(%623 : memref<!tpu.dma_semaphore, #tpu.memory_space<semaphore_mem>>)
      %c56_i32_384 = arith.constant 56 : i32
      %624 = arith.addi %92, %c56_i32_384 : i32
      %c3_i32_385 = arith.constant 3 : i32
      %625 = arith.addi %624, %c3_i32_385 : i32
      %626 = arith.index_cast %625 : i32 to index
      %627 = memref.load %arg1[%626] : memref<128xi32, #tpu.memory_space<smem>>
      %c3_i32_386 = arith.constant 3 : i32
      %c0_i32_387 = arith.constant 0 : i32
      %628 = tpu.memref_slice %arg3[%627, %c0_i32_387] : memref<101x128xf32, #tpu.memory_space<any>> -> memref<1x128xf32, #tpu.memory_space<any>>
      %c7_i32_388 = arith.constant 7 : i32
      %c0_i32_389 = arith.constant 0 : i32
      %629 = tpu.memref_slice %arg5[%91, %c3_i32_386, %c7_i32_388, %c0_i32_389] : memref<2x8x8x128xf32, #tpu.memory_space<vmem>> -> memref<1x1x1x128xf32, #tpu.memory_space<vmem>>
      %630 = tpu.memref_squeeze %629 : memref<1x1x1x128xf32, #tpu.memory_space<vmem>> -> memref<1x128xf32, #tpu.memory_space<vmem>>
      %631 = tpu.memref_slice %arg6[%91] : memref<2x!tpu.dma_semaphore, #tpu.memory_space<semaphore_mem>> -> memref<1x!tpu.dma_semaphore, #tpu.memory_space<semaphore_mem>>
      %632 = tpu.memref_squeeze %631 : memref<1x!tpu.dma_semaphore, #tpu.memory_space<semaphore_mem>> -> memref<!tpu.dma_semaphore, #tpu.memory_space<semaphore_mem>>
      tpu.enqueue_dma source(%628 : memref<1x128xf32, #tpu.memory_space<any>>) target(%630 : memref<1x128xf32, #tpu.memory_space<vmem>>) target_semaphore(%632 : memref<!tpu.dma_semaphore, #tpu.memory_space<semaphore_mem>>)
      %c56_i32_390 = arith.constant 56 : i32
      %633 = arith.addi %92, %c56_i32_390 : i32
      %c4_i32_391 = arith.constant 4 : i32
      %634 = arith.addi %633, %c4_i32_391 : i32
      %635 = arith.index_cast %634 : i32 to index
      %636 = memref.load %arg1[%635] : memref<128xi32, #tpu.memory_space<smem>>
      %c4_i32_392 = arith.constant 4 : i32
      %c0_i32_393 = arith.constant 0 : i32
      %637 = tpu.memref_slice %arg3[%636, %c0_i32_393] : memref<101x128xf32, #tpu.memory_space<any>> -> memref<1x128xf32, #tpu.memory_space<any>>
      %c7_i32_394 = arith.constant 7 : i32
      %c0_i32_395 = arith.constant 0 : i32
      %638 = tpu.memref_slice %arg5[%91, %c4_i32_392, %c7_i32_394, %c0_i32_395] : memref<2x8x8x128xf32, #tpu.memory_space<vmem>> -> memref<1x1x1x128xf32, #tpu.memory_space<vmem>>
      %639 = tpu.memref_squeeze %638 : memref<1x1x1x128xf32, #tpu.memory_space<vmem>> -> memref<1x128xf32, #tpu.memory_space<vmem>>
      %640 = tpu.memref_slice %arg6[%91] : memref<2x!tpu.dma_semaphore, #tpu.memory_space<semaphore_mem>> -> memref<1x!tpu.dma_semaphore, #tpu.memory_space<semaphore_mem>>
      %641 = tpu.memref_squeeze %640 : memref<1x!tpu.dma_semaphore, #tpu.memory_space<semaphore_mem>> -> memref<!tpu.dma_semaphore, #tpu.memory_space<semaphore_mem>>
      tpu.enqueue_dma source(%637 : memref<1x128xf32, #tpu.memory_space<any>>) target(%639 : memref<1x128xf32, #tpu.memory_space<vmem>>) target_semaphore(%641 : memref<!tpu.dma_semaphore, #tpu.memory_space<semaphore_mem>>)
      %c56_i32_396 = arith.constant 56 : i32
      %642 = arith.addi %92, %c56_i32_396 : i32
      %c5_i32_397 = arith.constant 5 : i32
      %643 = arith.addi %642, %c5_i32_397 : i32
      %644 = arith.index_cast %643 : i32 to index
      %645 = memref.load %arg1[%644] : memref<128xi32, #tpu.memory_space<smem>>
      %c5_i32_398 = arith.constant 5 : i32
      %c0_i32_399 = arith.constant 0 : i32
      %646 = tpu.memref_slice %arg3[%645, %c0_i32_399] : memref<101x128xf32, #tpu.memory_space<any>> -> memref<1x128xf32, #tpu.memory_space<any>>
      %c7_i32_400 = arith.constant 7 : i32
      %c0_i32_401 = arith.constant 0 : i32
      %647 = tpu.memref_slice %arg5[%91, %c5_i32_398, %c7_i32_400, %c0_i32_401] : memref<2x8x8x128xf32, #tpu.memory_space<vmem>> -> memref<1x1x1x128xf32, #tpu.memory_space<vmem>>
      %648 = tpu.memref_squeeze %647 : memref<1x1x1x128xf32, #tpu.memory_space<vmem>> -> memref<1x128xf32, #tpu.memory_space<vmem>>
      %649 = tpu.memref_slice %arg6[%91] : memref<2x!tpu.dma_semaphore, #tpu.memory_space<semaphore_mem>> -> memref<1x!tpu.dma_semaphore, #tpu.memory_space<semaphore_mem>>
      %650 = tpu.memref_squeeze %649 : memref<1x!tpu.dma_semaphore, #tpu.memory_space<semaphore_mem>> -> memref<!tpu.dma_semaphore, #tpu.memory_space<semaphore_mem>>
      tpu.enqueue_dma source(%646 : memref<1x128xf32, #tpu.memory_space<any>>) target(%648 : memref<1x128xf32, #tpu.memory_space<vmem>>) target_semaphore(%650 : memref<!tpu.dma_semaphore, #tpu.memory_space<semaphore_mem>>)
      %c56_i32_402 = arith.constant 56 : i32
      %651 = arith.addi %92, %c56_i32_402 : i32
      %c6_i32_403 = arith.constant 6 : i32
      %652 = arith.addi %651, %c6_i32_403 : i32
      %653 = arith.index_cast %652 : i32 to index
      %654 = memref.load %arg1[%653] : memref<128xi32, #tpu.memory_space<smem>>
      %c6_i32_404 = arith.constant 6 : i32
      %c0_i32_405 = arith.constant 0 : i32
      %655 = tpu.memref_slice %arg3[%654, %c0_i32_405] : memref<101x128xf32, #tpu.memory_space<any>> -> memref<1x128xf32, #tpu.memory_space<any>>
      %c7_i32_406 = arith.constant 7 : i32
      %c0_i32_407 = arith.constant 0 : i32
      %656 = tpu.memref_slice %arg5[%91, %c6_i32_404, %c7_i32_406, %c0_i32_407] : memref<2x8x8x128xf32, #tpu.memory_space<vmem>> -> memref<1x1x1x128xf32, #tpu.memory_space<vmem>>
      %657 = tpu.memref_squeeze %656 : memref<1x1x1x128xf32, #tpu.memory_space<vmem>> -> memref<1x128xf32, #tpu.memory_space<vmem>>
      %658 = tpu.memref_slice %arg6[%91] : memref<2x!tpu.dma_semaphore, #tpu.memory_space<semaphore_mem>> -> memref<1x!tpu.dma_semaphore, #tpu.memory_space<semaphore_mem>>
      %659 = tpu.memref_squeeze %658 : memref<1x!tpu.dma_semaphore, #tpu.memory_space<semaphore_mem>> -> memref<!tpu.dma_semaphore, #tpu.memory_space<semaphore_mem>>
      tpu.enqueue_dma source(%655 : memref<1x128xf32, #tpu.memory_space<any>>) target(%657 : memref<1x128xf32, #tpu.memory_space<vmem>>) target_semaphore(%659 : memref<!tpu.dma_semaphore, #tpu.memory_space<semaphore_mem>>)
      %c56_i32_408 = arith.constant 56 : i32
      %660 = arith.addi %92, %c56_i32_408 : i32
      %c7_i32_409 = arith.constant 7 : i32
      %661 = arith.addi %660, %c7_i32_409 : i32
      %662 = arith.index_cast %661 : i32 to index
      %663 = memref.load %arg1[%662] : memref<128xi32, #tpu.memory_space<smem>>
      %c7_i32_410 = arith.constant 7 : i32
      %c0_i32_411 = arith.constant 0 : i32
      %664 = tpu.memref_slice %arg3[%663, %c0_i32_411] : memref<101x128xf32, #tpu.memory_space<any>> -> memref<1x128xf32, #tpu.memory_space<any>>
      %c7_i32_412 = arith.constant 7 : i32
      %c0_i32_413 = arith.constant 0 : i32
      %665 = tpu.memref_slice %arg5[%91, %c7_i32_410, %c7_i32_412, %c0_i32_413] : memref<2x8x8x128xf32, #tpu.memory_space<vmem>> -> memref<1x1x1x128xf32, #tpu.memory_space<vmem>>
      %666 = tpu.memref_squeeze %665 : memref<1x1x1x128xf32, #tpu.memory_space<vmem>> -> memref<1x128xf32, #tpu.memory_space<vmem>>
      %667 = tpu.memref_slice %arg6[%91] : memref<2x!tpu.dma_semaphore, #tpu.memory_space<semaphore_mem>> -> memref<1x!tpu.dma_semaphore, #tpu.memory_space<semaphore_mem>>
      %668 = tpu.memref_squeeze %667 : memref<1x!tpu.dma_semaphore, #tpu.memory_space<semaphore_mem>> -> memref<!tpu.dma_semaphore, #tpu.memory_space<semaphore_mem>>
      tpu.enqueue_dma source(%664 : memref<1x128xf32, #tpu.memory_space<any>>) target(%666 : memref<1x128xf32, #tpu.memory_space<vmem>>) target_semaphore(%668 : memref<!tpu.dma_semaphore, #tpu.memory_space<semaphore_mem>>)
    } else {
    }
    %c2_i32_2 = arith.constant 2 : i32
    %c0_i32_3 = arith.constant 0 : i32
    %7 = arith.cmpi eq, %c2_i32_2, %c0_i32_3 : i32
    %c1_i32_4 = arith.constant 1 : i32
    %8 = arith.select %7, %c1_i32_4, %c2_i32_2 : i32
    %9 = arith.remsi %arg0, %8 : i32
    %c0_i32_5 = arith.constant 0 : i32
    %10 = arith.cmpi ne, %9, %c0_i32_5 : i32
    %c0_i32_6 = arith.constant 0 : i32
    %11 = arith.cmpi slt, %9, %c0_i32_6 : i32
    %c0_i32_7 = arith.constant 0 : i32
    %12 = arith.cmpi slt, %8, %c0_i32_7 : i32
    %13 = arith.xori %11, %12 : i1
    %14 = arith.andi %13, %10 : i1
    %15 = arith.addi %9, %8 : i32
    %16 = arith.select %14, %15, %9 : i32
    %c0_i32_8 = arith.constant 0 : i32
    %c0_i32_9 = arith.constant 0 : i32
    %c0_i32_10 = arith.constant 0 : i32
    %17 = tpu.memref_slice %arg5[%16, %c0_i32_8, %c0_i32_9, %c0_i32_10] : memref<2x8x8x128xf32, #tpu.memory_space<vmem>> -> memref<1x8x8x128xf32, #tpu.memory_space<vmem>>
    %18 = tpu.memref_squeeze %17 : memref<1x8x8x128xf32, #tpu.memory_space<vmem>> -> memref<8x8x128xf32, #tpu.memory_space<vmem>>
    %c0_i32_11 = arith.constant 0 : i32
    %c0_i32_12 = arith.constant 0 : i32
    %c0_i32_13 = arith.constant 0 : i32
    %19 = tpu.memref_slice %arg5[%16, %c0_i32_11, %c0_i32_12, %c0_i32_13] : memref<2x8x8x128xf32, #tpu.memory_space<vmem>> -> memref<1x8x8x128xf32, #tpu.memory_space<vmem>>
    %20 = tpu.memref_squeeze %19 : memref<1x8x8x128xf32, #tpu.memory_space<vmem>> -> memref<8x8x128xf32, #tpu.memory_space<vmem>>
    %21 = tpu.memref_slice %arg6[%16] : memref<2x!tpu.dma_semaphore, #tpu.memory_space<semaphore_mem>> -> memref<1x!tpu.dma_semaphore, #tpu.memory_space<semaphore_mem>>
    %22 = tpu.memref_squeeze %21 : memref<1x!tpu.dma_semaphore, #tpu.memory_space<semaphore_mem>> -> memref<!tpu.dma_semaphore, #tpu.memory_space<semaphore_mem>>
    tpu.wait_dma2 semaphore(%22 : memref<!tpu.dma_semaphore, #tpu.memory_space<semaphore_mem>>) src(%18 : memref<8x8x128xf32, #tpu.memory_space<vmem>>) dst(%20 : memref<8x8x128xf32, #tpu.memory_space<vmem>>)
    %c0 = arith.constant 0 : index
    %c0_14 = arith.constant 0 : index
    %23 = vector.load %arg2[%c0, %c0_14] : memref<8x8xf32, #tpu.memory_space<vmem>>, vector<8x8xf32>
    %24 = arith.index_cast %16 : i32 to index
    %c0_15 = arith.constant 0 : index
    %c0_16 = arith.constant 0 : index
    %c0_17 = arith.constant 0 : index
    %25 = vector.load %arg5[%24, %c0_15, %c0_16, %c0_17] : memref<2x8x8x128xf32, #tpu.memory_space<vmem>>, vector<1x1x8x128xf32>
    %26 = vector.shape_cast %25 : vector<1x1x8x128xf32> to vector<8x128xf32>
    %27 = vector.extract_strided_slice %23 {offsets = [0, 0], sizes = [8, 1], strides = [1, 1]} : vector<8x8xf32> to vector<8x1xf32>
    %28 = vector.broadcast %27 : vector<8x1xf32> to vector<8x128xf32>
    %29 = arith.mulf %26, %28 : vector<8x128xf32>
    %30 = arith.index_cast %16 : i32 to index
    %c1 = arith.constant 1 : index
    %c0_18 = arith.constant 0 : index
    %c0_19 = arith.constant 0 : index
    %31 = vector.load %arg5[%30, %c1, %c0_18, %c0_19] : memref<2x8x8x128xf32, #tpu.memory_space<vmem>>, vector<1x1x8x128xf32>
    %32 = vector.shape_cast %31 : vector<1x1x8x128xf32> to vector<8x128xf32>
    %33 = vector.extract_strided_slice %23 {offsets = [0, 1], sizes = [8, 1], strides = [1, 1]} : vector<8x8xf32> to vector<8x1xf32>
    %34 = vector.broadcast %33 : vector<8x1xf32> to vector<8x128xf32>
    %35 = arith.mulf %32, %34 : vector<8x128xf32>
    %36 = arith.addf %29, %35 : vector<8x128xf32>
    %37 = arith.index_cast %16 : i32 to index
    %c2 = arith.constant 2 : index
    %c0_20 = arith.constant 0 : index
    %c0_21 = arith.constant 0 : index
    %38 = vector.load %arg5[%37, %c2, %c0_20, %c0_21] : memref<2x8x8x128xf32, #tpu.memory_space<vmem>>, vector<1x1x8x128xf32>
    %39 = vector.shape_cast %38 : vector<1x1x8x128xf32> to vector<8x128xf32>
    %40 = vector.extract_strided_slice %23 {offsets = [0, 2], sizes = [8, 1], strides = [1, 1]} : vector<8x8xf32> to vector<8x1xf32>
    %41 = vector.broadcast %40 : vector<8x1xf32> to vector<8x128xf32>
    %42 = arith.mulf %39, %41 : vector<8x128xf32>
    %43 = arith.addf %36, %42 : vector<8x128xf32>
    %44 = arith.index_cast %16 : i32 to index
    %c3 = arith.constant 3 : index
    %c0_22 = arith.constant 0 : index
    %c0_23 = arith.constant 0 : index
    %45 = vector.load %arg5[%44, %c3, %c0_22, %c0_23] : memref<2x8x8x128xf32, #tpu.memory_space<vmem>>, vector<1x1x8x128xf32>
    %46 = vector.shape_cast %45 : vector<1x1x8x128xf32> to vector<8x128xf32>
    %47 = vector.extract_strided_slice %23 {offsets = [0, 3], sizes = [8, 1], strides = [1, 1]} : vector<8x8xf32> to vector<8x1xf32>
    %48 = vector.broadcast %47 : vector<8x1xf32> to vector<8x128xf32>
    %49 = arith.mulf %46, %48 : vector<8x128xf32>
    %50 = arith.addf %43, %49 : vector<8x128xf32>
    %51 = arith.index_cast %16 : i32 to index
    %c4 = arith.constant 4 : index
    %c0_24 = arith.constant 0 : index
    %c0_25 = arith.constant 0 : index
    %52 = vector.load %arg5[%51, %c4, %c0_24, %c0_25] : memref<2x8x8x128xf32, #tpu.memory_space<vmem>>, vector<1x1x8x128xf32>
    %53 = vector.shape_cast %52 : vector<1x1x8x128xf32> to vector<8x128xf32>
    %54 = vector.extract_strided_slice %23 {offsets = [0, 4], sizes = [8, 1], strides = [1, 1]} : vector<8x8xf32> to vector<8x1xf32>
    %55 = vector.broadcast %54 : vector<8x1xf32> to vector<8x128xf32>
    %56 = arith.mulf %53, %55 : vector<8x128xf32>
    %57 = arith.addf %50, %56 : vector<8x128xf32>
    %58 = arith.index_cast %16 : i32 to index
    %c5 = arith.constant 5 : index
    %c0_26 = arith.constant 0 : index
    %c0_27 = arith.constant 0 : index
    %59 = vector.load %arg5[%58, %c5, %c0_26, %c0_27] : memref<2x8x8x128xf32, #tpu.memory_space<vmem>>, vector<1x1x8x128xf32>
    %60 = vector.shape_cast %59 : vector<1x1x8x128xf32> to vector<8x128xf32>
    %61 = vector.extract_strided_slice %23 {offsets = [0, 5], sizes = [8, 1], strides = [1, 1]} : vector<8x8xf32> to vector<8x1xf32>
    %62 = vector.broadcast %61 : vector<8x1xf32> to vector<8x128xf32>
    %63 = arith.mulf %60, %62 : vector<8x128xf32>
    %64 = arith.addf %57, %63 : vector<8x128xf32>
    %65 = arith.index_cast %16 : i32 to index
    %c6 = arith.constant 6 : index
    %c0_28 = arith.constant 0 : index
    %c0_29 = arith.constant 0 : index
    %66 = vector.load %arg5[%65, %c6, %c0_28, %c0_29] : memref<2x8x8x128xf32, #tpu.memory_space<vmem>>, vector<1x1x8x128xf32>
    %67 = vector.shape_cast %66 : vector<1x1x8x128xf32> to vector<8x128xf32>
    %68 = vector.extract_strided_slice %23 {offsets = [0, 6], sizes = [8, 1], strides = [1, 1]} : vector<8x8xf32> to vector<8x1xf32>
    %69 = vector.broadcast %68 : vector<8x1xf32> to vector<8x128xf32>
    %70 = arith.mulf %67, %69 : vector<8x128xf32>
    %71 = arith.addf %64, %70 : vector<8x128xf32>
    %72 = arith.index_cast %16 : i32 to index
    %c7 = arith.constant 7 : index
    %c0_30 = arith.constant 0 : index
    %c0_31 = arith.constant 0 : index
    %73 = vector.load %arg5[%72, %c7, %c0_30, %c0_31] : memref<2x8x8x128xf32, #tpu.memory_space<vmem>>, vector<1x1x8x128xf32>
    %74 = vector.shape_cast %73 : vector<1x1x8x128xf32> to vector<8x128xf32>
    %75 = vector.extract_strided_slice %23 {offsets = [0, 7], sizes = [8, 1], strides = [1, 1]} : vector<8x8xf32> to vector<8x1xf32>
    %76 = vector.broadcast %75 : vector<8x1xf32> to vector<8x128xf32>
    %77 = arith.mulf %74, %76 : vector<8x128xf32>
    %78 = arith.addf %71, %77 : vector<8x128xf32>
    %c0_32 = arith.constant 0 : index
    %c0_33 = arith.constant 0 : index
    %79 = vector.load %arg4[%c0_32, %c0_33] : memref<8x128xf32, #tpu.memory_space<vmem>>, vector<8x128xf32>
    tpu.vector_store %arg4[%c0_32, %c0_33], %78 {strides = array<i32>} : memref<8x128xf32, #tpu.memory_space<vmem>>, vector<8x128xf32>,
    return
  }
  func.func @transform_0(%arg0: i32, %arg1: memref<128xi32, #tpu.memory_space<smem>>) -> (i32, i32) {
    %c0_i32 = arith.constant 0 : i32
    %c0_i32_0 = arith.constant 0 : i32
    return %arg0, %c0_i32 : i32, i32
  }
  func.func @transform_2(%arg0: i32, %arg1: memref<128xi32, #tpu.memory_space<smem>>) -> (i32, i32) {
    %c0_i32 = arith.constant 0 : i32
    %c0_i32_0 = arith.constant 0 : i32
    return %arg0, %c0_i32 : i32, i32
  }
}

</mosaic_0001>

<llo_original>
// kernel: tpu_custom_call.1
$region0: #{tpu_custom_call.1}
  #allocation0 [shape = 'u32[]', space=smem, size = 0x4, offset = 0x4, fixed_abs, tag = 'smem constant byte address 0x4 - core index']
  #allocation1 [shape = 'u32[72,128]{1,0:T(1,128)}', space=vmem, size = 0x9000, scoped, tag = 'internal scratch']
  #allocation2 [shape = 'f32[2,8,8,128]{3,2,1,0:T(8,128)}', space=vmem, size = 0x10000, scoped, tag = 'scratch operand']
  #allocation3 [shape = 's32[2]{0}', space=sflag, size = 0x8, scoped, tag = 'scratch operand']
  #allocation4 [shape = 's32[1]{0}', space=sflag, size = 0x4, scoped, tag = 'scoped memory for tpu_custom_call.1']
  #allocation5 [shape = 'u8[512]{0}', space=smem, size = 0x200, scoped, tag = 'prefetched SMEM operand 0']
  #allocation8 [shape = 's32[]', space=sflag, size = 0x4, offset = 0, fixed_abs, tag = 'sflag constant byte address 0x0 - dummy sync flag']
  #allocation9 [shape = 's32[]', space=sflag, size = 0x4, offset = 0, fixed_abs, tag = 'sflag constant byte address 0x0 - dummy sync flag']
  #allocation10 [shape = 'u32[]', space=smem, size = 0x4, offset = 0x44, fixed_abs, tag = 'smem constant byte address 0x44 - assertion arg 0']
  #allocation11 [shape = 'u32[]', space=smem, size = 0x4, offset = 0x48, fixed_abs, tag = 'smem constant byte address 0x48 - assertion arg 1']
  #allocation12 [shape = 's32[]', space=sflag, size = 0x4, offset = 0, fixed_abs, tag = 'sflag constant byte address 0x0 - dummy sync flag']
  #allocation13 [shape = 's32[]', space=sflag, size = 0x4, offset = 0, fixed_abs, tag = 'sflag constant byte address 0x0 - dummy sync flag']
  #allocation14 [shape = 's32[]', space=sflag, size = 0x4, offset = 0, fixed_abs, tag = 'sflag constant byte address 0x0 - dummy sync flag']
  #allocation15 [shape = 's32[]', space=sflag, size = 0x4, offset = 0, fixed_abs, tag = 'sflag constant byte address 0x0 - dummy sync flag']
  #allocation16 [shape = 's32[]', space=sflag, size = 0x4, offset = 0, fixed_abs, tag = 'sflag constant byte address 0x0 - dummy sync flag']
  #allocation17 [shape = 's32[]', space=sflag, size = 0x4, offset = 0, fixed_abs, tag = 'sflag constant byte address 0x0 - dummy sync flag']
  #allocation18 [shape = 's32[]', space=sflag, size = 0x4, offset = 0, fixed_abs, tag = 'sflag constant byte address 0x0 - dummy sync flag']
  #allocation19 [shape = 's32[]', space=sflag, size = 0x4, offset = 0, fixed_abs, tag = 'sflag constant byte address 0x0 - dummy sync flag']
  #allocation20 [shape = 's32[]', space=sflag, size = 0x4, offset = 0, fixed_abs, tag = 'sflag constant byte address 0x0 - dummy sync flag']
  #allocation21 [shape = 's32[]', space=sflag, size = 0x4, offset = 0, fixed_abs, tag = 'sflag constant byte address 0x0 - dummy sync flag']
  #allocation22 [shape = 's32[]', space=sflag, size = 0x4, offset = 0, fixed_abs, tag = 'sflag constant byte address 0x0 - dummy sync flag']
  #allocation23 [shape = 's32[]', space=sflag, size = 0x4, offset = 0, fixed_abs, tag = 'sflag constant byte address 0x0 - dummy sync flag']
  #allocation24 [shape = 's32[]', space=sflag, size = 0x4, offset = 0, fixed_abs, tag = 'sflag constant byte address 0x0 - dummy sync flag']
  #allocation25 [shape = 's32[]', space=sflag, size = 0x4, offset = 0, fixed_abs, tag = 'sflag constant byte address 0x0 - dummy sync flag']
  #allocation26 [shape = 's32[]', space=sflag, size = 0x4, offset = 0, fixed_abs, tag = 'sflag constant byte address 0x0 - dummy sync flag']
  #allocation27 [shape = 's32[]', space=sflag, size = 0x4, offset = 0, fixed_abs, tag = 'sflag constant byte address 0x0 - dummy sync flag']
  #allocation28 [shape = 's32[]', space=sflag, size = 0x4, offset = 0, fixed_abs, tag = 'sflag constant byte address 0x0 - dummy sync flag']
  #allocation29 [shape = 's32[]', space=sflag, size = 0x4, offset = 0, fixed_abs, tag = 'sflag constant byte address 0x0 - dummy sync flag']
  #allocation30 [shape = 's32[]', space=sflag, size = 0x4, offset = 0, fixed_abs, tag = 'sflag constant byte address 0x0 - dummy sync flag']
  #allocation31 [shape = 's32[]', space=sflag, size = 0x4, offset = 0, fixed_abs, tag = 'sflag constant byte address 0x0 - dummy sync flag']
  #allocation32 [shape = 's32[]', space=sflag, size = 0x4, offset = 0, fixed_abs, tag = 'sflag constant byte address 0x0 - dummy sync flag']
  #allocation33 [shape = 's32[]', space=sflag, size = 0x4, offset = 0, fixed_abs, tag = 'sflag constant byte address 0x0 - dummy sync flag']
  #allocation34 [shape = 's32[]', space=sflag, size = 0x4, offset = 0, fixed_abs, tag = 'sflag constant byte address 0x0 - dummy sync flag']
  #allocation35 [shape = 's32[]', space=sflag, size = 0x4, offset = 0, fixed_abs, tag = 'sflag constant byte address 0x0 - dummy sync flag']
  #allocation36 [shape = 's32[]', space=sflag, size = 0x4, offset = 0, fixed_abs, tag = 'sflag constant byte address 0x0 - dummy sync flag']
  #allocation37 [shape = 's32[]', space=sflag, size = 0x4, offset = 0, fixed_abs, tag = 'sflag constant byte address 0x0 - dummy sync flag']
  #allocation38 [shape = 's32[]', space=sflag, size = 0x4, offset = 0, fixed_abs, tag = 'sflag constant byte address 0x0 - dummy sync flag']
  #allocation39 [shape = 's32[]', space=sflag, size = 0x4, offset = 0, fixed_abs, tag = 'sflag constant byte address 0x0 - dummy sync flag']
  #allocation40 [shape = 's32[]', space=sflag, size = 0x4, offset = 0, fixed_abs, tag = 'sflag constant byte address 0x0 - dummy sync flag']
  #allocation41 [shape = 's32[]', space=sflag, size = 0x4, offset = 0, fixed_abs, tag = 'sflag constant byte address 0x0 - dummy sync flag']
  #allocation42 [shape = 's32[]', space=sflag, size = 0x4, offset = 0, fixed_abs, tag = 'sflag constant byte address 0x0 - dummy sync flag']
  #allocation43 [shape = 's32[]', space=sflag, size = 0x4, offset = 0, fixed_abs, tag = 'sflag constant byte address 0x0 - dummy sync flag']
  #allocation44 [shape = 's32[]', space=sflag, size = 0x4, offset = 0, fixed_abs, tag = 'sflag constant byte address 0x0 - dummy sync flag']
  #allocation45 [shape = 's32[]', space=sflag, size = 0x4, offset = 0, fixed_abs, tag = 'sflag constant byte address 0x0 - dummy sync flag']
  #allocation46 [shape = 's32[]', space=sflag, size = 0x4, offset = 0, fixed_abs, tag = 'sflag constant byte address 0x0 - dummy sync flag']
  #allocation47 [shape = 's32[]', space=sflag, size = 0x4, offset = 0, fixed_abs, tag = 'sflag constant byte address 0x0 - dummy sync flag']
  #allocation48 [shape = 's32[]', space=sflag, size = 0x4, offset = 0, fixed_abs, tag = 'sflag constant byte address 0x0 - dummy sync flag']
  #allocation49 [shape = 's32[]', space=sflag, size = 0x4, offset = 0, fixed_abs, tag = 'sflag constant byte address 0x0 - dummy sync flag']
  #allocation50 [shape = 's32[]', space=sflag, size = 0x4, offset = 0, fixed_abs, tag = 'sflag constant byte address 0x0 - dummy sync flag']
  #allocation51 [shape = 's32[]', space=sflag, size = 0x4, offset = 0, fixed_abs, tag = 'sflag constant byte address 0x0 - dummy sync flag']
  #allocation52 [shape = 's32[]', space=sflag, size = 0x4, offset = 0, fixed_abs, tag = 'sflag constant byte address 0x0 - dummy sync flag']
  #allocation53 [shape = 's32[]', space=sflag, size = 0x4, offset = 0, fixed_abs, tag = 'sflag constant byte address 0x0 - dummy sync flag']
  #allocation54 [shape = 's32[]', space=sflag, size = 0x4, offset = 0, fixed_abs, tag = 'sflag constant byte address 0x0 - dummy sync flag']
  #allocation55 [shape = 's32[]', space=sflag, size = 0x4, offset = 0, fixed_abs, tag = 'sflag constant byte address 0x0 - dummy sync flag']
  #allocation56 [shape = 's32[]', space=sflag, size = 0x4, offset = 0, fixed_abs, tag = 'sflag constant byte address 0x0 - dummy sync flag']
  #allocation57 [shape = 's32[]', space=sflag, size = 0x4, offset = 0, fixed_abs, tag = 'sflag constant byte address 0x0 - dummy sync flag']
  #allocation58 [shape = 's32[]', space=sflag, size = 0x4, offset = 0, fixed_abs, tag = 'sflag constant byte address 0x0 - dummy sync flag']
  #allocation59 [shape = 's32[]', space=sflag, size = 0x4, offset = 0, fixed_abs, tag = 'sflag constant byte address 0x0 - dummy sync flag']
  #allocation60 [shape = 's32[]', space=sflag, size = 0x4, offset = 0, fixed_abs, tag = 'sflag constant byte address 0x0 - dummy sync flag']
  #allocation61 [shape = 's32[]', space=sflag, size = 0x4, offset = 0, fixed_abs, tag = 'sflag constant byte address 0x0 - dummy sync flag']
  #allocation62 [shape = 's32[]', space=sflag, size = 0x4, offset = 0, fixed_abs, tag = 'sflag constant byte address 0x0 - dummy sync flag']
  #allocation63 [shape = 's32[]', space=sflag, size = 0x4, offset = 0, fixed_abs, tag = 'sflag constant byte address 0x0 - dummy sync flag']
  #allocation64 [shape = 's32[]', space=sflag, size = 0x4, offset = 0, fixed_abs, tag = 'sflag constant byte address 0x0 - dummy sync flag']
  #allocation65 [shape = 's32[]', space=sflag, size = 0x4, offset = 0, fixed_abs, tag = 'sflag constant byte address 0x0 - dummy sync flag']
  #allocation66 [shape = 's32[]', space=sflag, size = 0x4, offset = 0, fixed_abs, tag = 'sflag constant byte address 0x0 - dummy sync flag']
  #allocation67 [shape = 's32[]', space=sflag, size = 0x4, offset = 0, fixed_abs, tag = 'sflag constant byte address 0x0 - dummy sync flag']
  #allocation68 [shape = 's32[]', space=sflag, size = 0x4, offset = 0, fixed_abs, tag = 'sflag constant byte address 0x0 - dummy sync flag']
  #allocation69 [shape = 's32[]', space=sflag, size = 0x4, offset = 0, fixed_abs, tag = 'sflag constant byte address 0x0 - dummy sync flag']
  #allocation70 [shape = 's32[]', space=sflag, size = 0x4, offset = 0, fixed_abs, tag = 'sflag constant byte address 0x0 - dummy sync flag']
  #allocation71 [shape = 's32[]', space=sflag, size = 0x4, offset = 0, fixed_abs, tag = 'sflag constant byte address 0x0 - dummy sync flag']
  #allocation72 [shape = 's32[]', space=sflag, size = 0x4, offset = 0, fixed_abs, tag = 'sflag constant byte address 0x0 - dummy sync flag']
  #allocation73 [shape = 's32[]', space=sflag, size = 0x4, offset = 0, fixed_abs, tag = 'sflag constant byte address 0x0 - dummy sync flag']
  #allocation74 [shape = 's32[]', space=sflag, size = 0x4, offset = 0, fixed_abs, tag = 'sflag constant byte address 0x0 - dummy sync flag']
  #allocation75 [shape = 's32[]', space=sflag, size = 0x4, offset = 0, fixed_abs, tag = 'sflag constant byte address 0x0 - dummy sync flag']
  #allocation76 [shape = 's32[]', space=sflag, size = 0x4, offset = 0, fixed_abs, tag = 'sflag constant byte address 0x0 - dummy sync flag']
  #allocation77 [shape = 's32[]', space=sflag, size = 0x4, offset = 0, fixed_abs, tag = 'sflag constant byte address 0x0 - dummy sync flag']
  #allocation78 [shape = 's32[]', space=sflag, size = 0x4, offset = 0, fixed_abs, tag = 'sflag constant byte address 0x0 - dummy sync flag']
  #allocation79 [shape = 's32[]', space=sflag, size = 0x4, offset = 0, fixed_abs, tag = 'sflag constant byte address 0x0 - dummy sync flag']
  #allocation80 [shape = 's32[]', space=sflag, size = 0x4, offset = 0, fixed_abs, tag = 'sflag constant byte address 0x0 - dummy sync flag']
  #allocation81 [shape = 's32[]', space=sflag, size = 0x4, offset = 0, fixed_abs, tag = 'sflag constant byte address 0x0 - dummy sync flag']
  #allocation82 [shape = 's32[]', space=sflag, size = 0x4, offset = 0, fixed_abs, tag = 'sflag constant byte address 0x0 - dummy sync flag']
  #allocation83 [shape = 's32[]', space=sflag, size = 0x4, offset = 0, fixed_abs, tag = 'sflag constant byte address 0x0 - dummy sync flag']
  #allocation84 [shape = 's32[]', space=sflag, size = 0x4, offset = 0, fixed_abs, tag = 'sflag constant byte address 0x0 - dummy sync flag']
  #allocation85 [shape = 's32[]', space=sflag, size = 0x4, offset = 0, fixed_abs, tag = 'sflag constant byte address 0x0 - dummy sync flag']
  #allocation86 [shape = 's32[]', space=sflag, size = 0x4, offset = 0, fixed_abs, tag = 'sflag constant byte address 0x0 - dummy sync flag']
  #allocation87 [shape = 's32[]', space=sflag, size = 0x4, offset = 0, fixed_abs, tag = 'sflag constant byte address 0x0 - dummy sync flag']
  #allocation88 [shape = 's32[]', space=sflag, size = 0x4, offset = 0, fixed_abs, tag = 'sflag constant byte address 0x0 - dummy sync flag']
  #allocation89 [shape = 's32[]', space=sflag, size = 0x4, offset = 0, fixed_abs, tag = 'sflag constant byte address 0x0 - dummy sync flag']
  #allocation90 [shape = 's32[]', space=sflag, size = 0x4, offset = 0, fixed_abs, tag = 'sflag constant byte address 0x0 - dummy sync flag']
  #allocation91 [shape = 's32[]', space=sflag, size = 0x4, offset = 0, fixed_abs, tag = 'sflag constant byte address 0x0 - dummy sync flag']
  #allocation92 [shape = 's32[]', space=sflag, size = 0x4, offset = 0, fixed_abs, tag = 'sflag constant byte address 0x0 - dummy sync flag']
  #allocation93 [shape = 's32[]', space=sflag, size = 0x4, offset = 0, fixed_abs, tag = 'sflag constant byte address 0x0 - dummy sync flag']
  #allocation94 [shape = 's32[]', space=sflag, size = 0x4, offset = 0, fixed_abs, tag = 'sflag constant byte address 0x0 - dummy sync flag']
  #allocation95 [shape = 's32[]', space=sflag, size = 0x4, offset = 0, fixed_abs, tag = 'sflag constant byte address 0x0 - dummy sync flag']
  #allocation96 [shape = 's32[]', space=sflag, size = 0x4, offset = 0, fixed_abs, tag = 'sflag constant byte address 0x0 - dummy sync flag']
  #allocation97 [shape = 's32[]', space=sflag, size = 0x4, offset = 0, fixed_abs, tag = 'sflag constant byte address 0x0 - dummy sync flag']
  #allocation98 [shape = 's32[]', space=sflag, size = 0x4, offset = 0, fixed_abs, tag = 'sflag constant byte address 0x0 - dummy sync flag']
  #allocation99 [shape = 's32[]', space=sflag, size = 0x4, offset = 0, fixed_abs, tag = 'sflag constant byte address 0x0 - dummy sync flag']
  #allocation100 [shape = 's32[]', space=sflag, size = 0x4, offset = 0, fixed_abs, tag = 'sflag constant byte address 0x0 - dummy sync flag']
  #allocation101 [shape = 's32[]', space=sflag, size = 0x4, offset = 0, fixed_abs, tag = 'sflag constant byte address 0x0 - dummy sync flag']
  #allocation102 [shape = 's32[]', space=sflag, size = 0x4, offset = 0, fixed_abs, tag = 'sflag constant byte address 0x0 - dummy sync flag']
  #allocation103 [shape = 's32[]', space=sflag, size = 0x4, offset = 0, fixed_abs, tag = 'sflag constant byte address 0x0 - dummy sync flag']
  #allocation104 [shape = 's32[]', space=sflag, size = 0x4, offset = 0, fixed_abs, tag = 'sflag constant byte address 0x0 - dummy sync flag']
  #allocation105 [shape = 's32[]', space=sflag, size = 0x4, offset = 0, fixed_abs, tag = 'sflag constant byte address 0x0 - dummy sync flag']
  #allocation106 [shape = 's32[]', space=sflag, size = 0x4, offset = 0, fixed_abs, tag = 'sflag constant byte address 0x0 - dummy sync flag']
  #allocation107 [shape = 's32[]', space=sflag, size = 0x4, offset = 0, fixed_abs, tag = 'sflag constant byte address 0x0 - dummy sync flag']
  #allocation108 [shape = 's32[]', space=sflag, size = 0x4, offset = 0, fixed_abs, tag = 'sflag constant byte address 0x0 - dummy sync flag']
  #allocation109 [shape = 's32[]', space=sflag, size = 0x4, offset = 0, fixed_abs, tag = 'sflag constant byte address 0x0 - dummy sync flag']
  #allocation110 [shape = 's32[]', space=sflag, size = 0x4, offset = 0, fixed_abs, tag = 'sflag constant byte address 0x0 - dummy sync flag']
  #allocation111 [shape = 's32[]', space=sflag, size = 0x4, offset = 0, fixed_abs, tag = 'sflag constant byte address 0x0 - dummy sync flag']
  #allocation112 [shape = 's32[]', space=sflag, size = 0x4, offset = 0, fixed_abs, tag = 'sflag constant byte address 0x0 - dummy sync flag']
  #allocation113 [shape = 's32[]', space=sflag, size = 0x4, offset = 0, fixed_abs, tag = 'sflag constant byte address 0x0 - dummy sync flag']
  #allocation114 [shape = 's32[]', space=sflag, size = 0x4, offset = 0, fixed_abs, tag = 'sflag constant byte address 0x0 - dummy sync flag']
  #allocation115 [shape = 's32[]', space=sflag, size = 0x4, offset = 0, fixed_abs, tag = 'sflag constant byte address 0x0 - dummy sync flag']
  #allocation116 [shape = 's32[]', space=sflag, size = 0x4, offset = 0, fixed_abs, tag = 'sflag constant byte address 0x0 - dummy sync flag']
  #allocation117 [shape = 's32[]', space=sflag, size = 0x4, offset = 0, fixed_abs, tag = 'sflag constant byte address 0x0 - dummy sync flag']
  #allocation118 [shape = 's32[]', space=sflag, size = 0x4, offset = 0, fixed_abs, tag = 'sflag constant byte address 0x0 - dummy sync flag']
  #allocation119 [shape = 's32[]', space=sflag, size = 0x4, offset = 0, fixed_abs, tag = 'sflag constant byte address 0x0 - dummy sync flag']
  #allocation120 [shape = 's32[]', space=sflag, size = 0x4, offset = 0, fixed_abs, tag = 'sflag constant byte address 0x0 - dummy sync flag']
  #allocation121 [shape = 's32[]', space=sflag, size = 0x4, offset = 0, fixed_abs, tag = 'sflag constant byte address 0x0 - dummy sync flag']
  #allocation122 [shape = 's32[]', space=sflag, size = 0x4, offset = 0, fixed_abs, tag = 'sflag constant byte address 0x0 - dummy sync flag']
  #allocation123 [shape = 's32[]', space=sflag, size = 0x4, offset = 0, fixed_abs, tag = 'sflag constant byte address 0x0 - dummy sync flag']
  #allocation124 [shape = 's32[]', space=sflag, size = 0x4, offset = 0, fixed_abs, tag = 'sflag constant byte address 0x0 - dummy sync flag']
  #allocation125 [shape = 's32[]', space=sflag, size = 0x4, offset = 0, fixed_abs, tag = 'sflag constant byte address 0x0 - dummy sync flag']
  #allocation126 [shape = 's32[]', space=sflag, size = 0x4, offset = 0, fixed_abs, tag = 'sflag constant byte address 0x0 - dummy sync flag']
  #allocation127 [shape = 's32[]', space=sflag, size = 0x4, offset = 0, fixed_abs, tag = 'sflag constant byte address 0x0 - dummy sync flag']
  #allocation128 [shape = 's32[]', space=sflag, size = 0x4, offset = 0, fixed_abs, tag = 'sflag constant byte address 0x0 - dummy sync flag']
  #allocation129 [shape = 's32[]', space=sflag, size = 0x4, offset = 0, fixed_abs, tag = 'sflag constant byte address 0x0 - dummy sync flag']
  #allocation130 [shape = 's32[]', space=sflag, size = 0x4, offset = 0, fixed_abs, tag = 'sflag constant byte address 0x0 - dummy sync flag']
  #allocation131 [shape = 's32[]', space=sflag, size = 0x4, offset = 0, fixed_abs, tag = 'sflag constant byte address 0x0 - dummy sync flag']
  #allocation132 [shape = 's32[]', space=sflag, size = 0x4, offset = 0, fixed_abs, tag = 'sflag constant byte address 0x0 - dummy sync flag']
  #allocation133 [shape = 's32[]', space=sflag, size = 0x4, offset = 0, fixed_abs, tag = 'sflag constant byte address 0x0 - dummy sync flag']
  #allocation134 [shape = 's32[]', space=sflag, size = 0x4, offset = 0, fixed_abs, tag = 'sflag constant byte address 0x0 - dummy sync flag']
  #allocation135 [shape = 's32[]', space=sflag, size = 0x4, offset = 0, fixed_abs, tag = 'sflag constant byte address 0x0 - dummy sync flag']
  #allocation136 [shape = 's32[]', space=sflag, size = 0x4, offset = 0, fixed_abs, tag = 'sflag constant byte address 0x0 - dummy sync flag']
  #allocation137 [shape = 's32[]', space=sflag, size = 0x4, offset = 0, fixed_abs, tag = 'sflag constant byte address 0x0 - dummy sync flag']
  #allocation138 [shape = 's32[]', space=sflag, size = 0x4, offset = 0, fixed_abs, tag = 'sflag constant byte address 0x0 - dummy sync flag']
  #allocation139 [shape = 's32[]', space=sflag, size = 0x4, offset = 0, fixed_abs, tag = 'sflag constant byte address 0x0 - dummy sync flag']
  #allocation140 [shape = 's32[]', space=sflag, size = 0x4, offset = 0, fixed_abs, tag = 'sflag constant byte address 0x0 - dummy sync flag']
  #allocation141 [shape = 's32[]', space=sflag, size = 0x4, offset = 0, fixed_abs, tag = 'sflag constant byte address 0x0 - dummy sync flag']
  #allocation142 [shape = 's32[]', space=sflag, size = 0x4, offset = 0, fixed_abs, tag = 'sflag constant byte address 0x0 - dummy sync flag']
  #allocation143 [shape = 's32[]', space=sflag, size = 0x4, offset = 0, fixed_abs, tag = 'sflag constant byte address 0x0 - dummy sync flag']
  #allocation144 [shape = 's32[]', space=sflag, size = 0x4, offset = 0, fixed_abs, tag = 'sflag constant byte address 0x0 - dummy sync flag']
  #allocation145 [shape = 's32[]', space=sflag, size = 0x4, offset = 0, fixed_abs, tag = 'sflag constant byte address 0x0 - dummy sync flag']
  #allocation146 [shape = 's32[]', space=sflag, size = 0x4, offset = 0, fixed_abs, tag = 'sflag constant byte address 0x0 - dummy sync flag']
  #allocation147 [shape = 's32[]', space=sflag, size = 0x4, offset = 0, fixed_abs, tag = 'sflag constant byte address 0x0 - dummy sync flag']
  #allocation148 [shape = 's32[]', space=sflag, size = 0x4, offset = 0, fixed_abs, tag = 'sflag constant byte address 0x0 - dummy sync flag']
  #allocation149 [shape = 's32[]', space=sflag, size = 0x4, offset = 0, fixed_abs, tag = 'sflag constant byte address 0x0 - dummy sync flag']
  #allocation150 [shape = 's32[]', space=sflag, size = 0x4, offset = 0, fixed_abs, tag = 'sflag constant byte address 0x0 - dummy sync flag']
  #allocation151 [shape = 's32[]', space=sflag, size = 0x4, offset = 0, fixed_abs, tag = 'sflag constant byte address 0x0 - dummy sync flag']
  #allocation152 [shape = 's32[]', space=sflag, size = 0x4, offset = 0, fixed_abs, tag = 'sflag constant byte address 0x0 - dummy sync flag']
  #allocation153 [shape = 's32[]', space=sflag, size = 0x4, offset = 0, fixed_abs, tag = 'sflag constant byte address 0x0 - dummy sync flag']
  #allocation154 [shape = 's32[]', space=sflag, size = 0x4, offset = 0, fixed_abs, tag = 'sflag constant byte address 0x0 - dummy sync flag']
  #allocation155 [shape = 's32[]', space=sflag, size = 0x4, offset = 0, fixed_abs, tag = 'sflag constant byte address 0x0 - dummy sync flag']
  #allocation156 [shape = 's32[]', space=sflag, size = 0x4, offset = 0, fixed_abs, tag = 'sflag constant byte address 0x0 - dummy sync flag']
  #allocation157 [shape = 's32[]', space=sflag, size = 0x4, offset = 0, fixed_abs, tag = 'sflag constant byte address 0x0 - dummy sync flag']
  #allocation158 [shape = 's32[]', space=sflag, size = 0x4, offset = 0, fixed_abs, tag = 'sflag constant byte address 0x0 - dummy sync flag']
  #allocation159 [shape = 's32[]', space=sflag, size = 0x4, offset = 0, fixed_abs, tag = 'sflag constant byte address 0x0 - dummy sync flag']
  #allocation160 [shape = 's32[]', space=sflag, size = 0x4, offset = 0, fixed_abs, tag = 'sflag constant byte address 0x0 - dummy sync flag']
  #allocation161 [shape = 's32[]', space=sflag, size = 0x4, offset = 0, fixed_abs, tag = 'sflag constant byte address 0x0 - dummy sync flag']
  #allocation162 [shape = 's32[]', space=sflag, size = 0x4, offset = 0, fixed_abs, tag = 'sflag constant byte address 0x0 - dummy sync flag']
  #allocation163 [shape = 's32[]', space=sflag, size = 0x4, offset = 0, fixed_abs, tag = 'sflag constant byte address 0x0 - dummy sync flag']
  #allocation164 [shape = 's32[]', space=sflag, size = 0x4, offset = 0, fixed_abs, tag = 'sflag constant byte address 0x0 - dummy sync flag']
  #allocation165 [shape = 's32[]', space=sflag, size = 0x4, offset = 0, fixed_abs, tag = 'sflag constant byte address 0x0 - dummy sync flag']
  #allocation166 [shape = 's32[]', space=sflag, size = 0x4, offset = 0, fixed_abs, tag = 'sflag constant byte address 0x0 - dummy sync flag']
  #allocation167 [shape = 's32[]', space=sflag, size = 0x4, offset = 0, fixed_abs, tag = 'sflag constant byte address 0x0 - dummy sync flag']
  #allocation168 [shape = 's32[]', space=sflag, size = 0x4, offset = 0, fixed_abs, tag = 'sflag constant byte address 0x0 - dummy sync flag']
  #allocation169 [shape = 's32[]', space=sflag, size = 0x4, offset = 0, fixed_abs, tag = 'sflag constant byte address 0x0 - dummy sync flag']
  #allocation170 [shape = 's32[]', space=sflag, size = 0x4, offset = 0, fixed_abs, tag = 'sflag constant byte address 0x0 - dummy sync flag']
  #allocation171 [shape = 's32[]', space=sflag, size = 0x4, offset = 0, fixed_abs, tag = 'sflag constant byte address 0x0 - dummy sync flag']
  #allocation172 [shape = 's32[]', space=sflag, size = 0x4, offset = 0, fixed_abs, tag = 'sflag constant byte address 0x0 - dummy sync flag']
  #allocation173 [shape = 's32[]', space=sflag, size = 0x4, offset = 0, fixed_abs, tag = 'sflag constant byte address 0x0 - dummy sync flag']
  #allocation174 [shape = 's32[]', space=sflag, size = 0x4, offset = 0, fixed_abs, tag = 'sflag constant byte address 0x0 - dummy sync flag']
  #allocation175 [shape = 's32[]', space=sflag, size = 0x4, offset = 0, fixed_abs, tag = 'sflag constant byte address 0x0 - dummy sync flag']
  #allocation176 [shape = 's32[]', space=sflag, size = 0x4, offset = 0, fixed_abs, tag = 'sflag constant byte address 0x0 - dummy sync flag']
  #allocation177 [shape = 's32[]', space=sflag, size = 0x4, offset = 0, fixed_abs, tag = 'sflag constant byte address 0x0 - dummy sync flag']
  #allocation178 [shape = 's32[]', space=sflag, size = 0x4, offset = 0, fixed_abs, tag = 'sflag constant byte address 0x0 - dummy sync flag']
  #allocation179 [shape = 's32[]', space=sflag, size = 0x4, offset = 0, fixed_abs, tag = 'sflag constant byte address 0x0 - dummy sync flag']
  #allocation180 [shape = 's32[]', space=sflag, size = 0x4, offset = 0, fixed_abs, tag = 'sflag constant byte address 0x0 - dummy sync flag']
  #allocation181 [shape = 's32[]', space=sflag, size = 0x4, offset = 0, fixed_abs, tag = 'sflag constant byte address 0x0 - dummy sync flag']
  #allocation182 [shape = 's32[]', space=sflag, size = 0x4, offset = 0, fixed_abs, tag = 'sflag constant byte address 0x0 - dummy sync flag']
  #allocation183 [shape = 's32[]', space=sflag, size = 0x4, offset = 0, fixed_abs, tag = 'sflag constant byte address 0x0 - dummy sync flag']
  #allocation184 [shape = 's32[]', space=sflag, size = 0x4, offset = 0, fixed_abs, tag = 'sflag constant byte address 0x0 - dummy sync flag']
  #allocation185 [shape = 's32[]', space=sflag, size = 0x4, offset = 0, fixed_abs, tag = 'sflag constant byte address 0x0 - dummy sync flag']
  #allocation186 [shape = 's32[]', space=sflag, size = 0x4, offset = 0, fixed_abs, tag = 'sflag constant byte address 0x0 - dummy sync flag']
  #allocation187 [shape = 's32[]', space=sflag, size = 0x4, offset = 0, fixed_abs, tag = 'sflag constant byte address 0x0 - dummy sync flag']
  #allocation188 [shape = 's32[]', space=sflag, size = 0x4, offset = 0, fixed_abs, tag = 'sflag constant byte address 0x0 - dummy sync flag']
  #allocation189 [shape = 's32[]', space=sflag, size = 0x4, offset = 0, fixed_abs, tag = 'sflag constant byte address 0x0 - dummy sync flag']
  #allocation190 [shape = 's32[]', space=sflag, size = 0x4, offset = 0, fixed_abs, tag = 'sflag constant byte address 0x0 - dummy sync flag']
  #allocation191 [shape = 's32[]', space=sflag, size = 0x4, offset = 0, fixed_abs, tag = 'sflag constant byte address 0x0 - dummy sync flag']
  #allocation192 [shape = 's32[]', space=sflag, size = 0x4, offset = 0, fixed_abs, tag = 'sflag constant byte address 0x0 - dummy sync flag']
  #allocation193 [shape = 's32[]', space=sflag, size = 0x4, offset = 0, fixed_abs, tag = 'sflag constant byte address 0x0 - dummy sync flag']
  #allocation194 [shape = 's32[]', space=sflag, size = 0x4, offset = 0, fixed_abs, tag = 'sflag constant byte address 0x0 - dummy sync flag']
  #allocation195 [shape = 's32[]', space=sflag, size = 0x4, offset = 0, fixed_abs, tag = 'sflag constant byte address 0x0 - dummy sync flag']
  #allocation196 [shape = 's32[]', space=sflag, size = 0x4, offset = 0, fixed_abs, tag = 'sflag constant byte address 0x0 - dummy sync flag']
  #allocation197 [shape = 's32[]', space=sflag, size = 0x4, offset = 0, fixed_abs, tag = 'sflag constant byte address 0x0 - dummy sync flag']
  #allocation198 [shape = 's32[]', space=sflag, size = 0x4, offset = 0, fixed_abs, tag = 'sflag constant byte address 0x0 - dummy sync flag']
  #allocation199 [shape = 's32[]', space=sflag, size = 0x4, offset = 0, fixed_abs, tag = 'sflag constant byte address 0x0 - dummy sync flag']
  #allocation200 [shape = 's32[]', space=sflag, size = 0x4, offset = 0, fixed_abs, tag = 'sflag constant byte address 0x0 - dummy sync flag']
  #allocation201 [shape = 's32[]', space=sflag, size = 0x4, offset = 0, fixed_abs, tag = 'sflag constant byte address 0x0 - dummy sync flag']
  #allocation202 [shape = 's32[]', space=sflag, size = 0x4, offset = 0, fixed_abs, tag = 'sflag constant byte address 0x0 - dummy sync flag']
  #allocation203 [shape = 's32[]', space=sflag, size = 0x4, offset = 0, fixed_abs, tag = 'sflag constant byte address 0x0 - dummy sync flag']
  #allocation204 [shape = 's32[]', space=sflag, size = 0x4, offset = 0, fixed_abs, tag = 'sflag constant byte address 0x0 - dummy sync flag']
  #allocation205 [shape = 's32[]', space=sflag, size = 0x4, offset = 0, fixed_abs, tag = 'sflag constant byte address 0x0 - dummy sync flag']
  #allocation206 [shape = 's32[]', space=sflag, size = 0x4, offset = 0, fixed_abs, tag = 'sflag constant byte address 0x0 - dummy sync flag']
  #allocation207 [shape = 's32[]', space=sflag, size = 0x4, offset = 0, fixed_abs, tag = 'sflag constant byte address 0x0 - dummy sync flag']
  #allocation208 [shape = 's32[]', space=sflag, size = 0x4, offset = 0, fixed_abs, tag = 'sflag constant byte address 0x0 - dummy sync flag']
  #allocation209 [shape = 's32[]', space=sflag, size = 0x4, offset = 0, fixed_abs, tag = 'sflag constant byte address 0x0 - dummy sync flag']
  #allocation210 [shape = 's32[]', space=sflag, size = 0x4, offset = 0, fixed_abs, tag = 'sflag constant byte address 0x0 - dummy sync flag']
  #allocation211 [shape = 's32[]', space=sflag, size = 0x4, offset = 0, fixed_abs, tag = 'sflag constant byte address 0x0 - dummy sync flag']
  #allocation212 [shape = 's32[]', space=sflag, size = 0x4, offset = 0, fixed_abs, tag = 'sflag constant byte address 0x0 - dummy sync flag']
  #allocation213 [shape = 's32[]', space=sflag, size = 0x4, offset = 0, fixed_abs, tag = 'sflag constant byte address 0x0 - dummy sync flag']
  #allocation214 [shape = 's32[]', space=sflag, size = 0x4, offset = 0, fixed_abs, tag = 'sflag constant byte address 0x0 - dummy sync flag']
  #allocation215 [shape = 's32[]', space=sflag, size = 0x4, offset = 0, fixed_abs, tag = 'sflag constant byte address 0x0 - dummy sync flag']
  #allocation216 [shape = 's32[]', space=sflag, size = 0x4, offset = 0, fixed_abs, tag = 'sflag constant byte address 0x0 - dummy sync flag']
  #allocation217 [shape = 's32[]', space=sflag, size = 0x4, offset = 0, fixed_abs, tag = 'sflag constant byte address 0x0 - dummy sync flag']
  #allocation218 [shape = 's32[]', space=sflag, size = 0x4, offset = 0, fixed_abs, tag = 'sflag constant byte address 0x0 - dummy sync flag']
  #allocation219 [shape = 's32[]', space=sflag, size = 0x4, offset = 0, fixed_abs, tag = 'sflag constant byte address 0x0 - dummy sync flag']
  #allocation220 [shape = 's32[]', space=sflag, size = 0x4, offset = 0, fixed_abs, tag = 'sflag constant byte address 0x0 - dummy sync flag']
  #allocation221 [shape = 's32[]', space=sflag, size = 0x4, offset = 0, fixed_abs, tag = 'sflag constant byte address 0x0 - dummy sync flag']
  #allocation222 [shape = 's32[]', space=sflag, size = 0x4, offset = 0, fixed_abs, tag = 'sflag constant byte address 0x0 - dummy sync flag']
  #allocation223 [shape = 's32[]', space=sflag, size = 0x4, offset = 0, fixed_abs, tag = 'sflag constant byte address 0x0 - dummy sync flag']
  #allocation224 [shape = 's32[]', space=sflag, size = 0x4, offset = 0, fixed_abs, tag = 'sflag constant byte address 0x0 - dummy sync flag']
  #allocation225 [shape = 's32[]', space=sflag, size = 0x4, offset = 0, fixed_abs, tag = 'sflag constant byte address 0x0 - dummy sync flag']
  #allocation226 [shape = 's32[]', space=sflag, size = 0x4, offset = 0, fixed_abs, tag = 'sflag constant byte address 0x0 - dummy sync flag']
  #allocation227 [shape = 's32[]', space=sflag, size = 0x4, offset = 0, fixed_abs, tag = 'sflag constant byte address 0x0 - dummy sync flag']
  #allocation228 [shape = 's32[]', space=sflag, size = 0x4, offset = 0, fixed_abs, tag = 'sflag constant byte address 0x0 - dummy sync flag']
  #allocation229 [shape = 's32[]', space=sflag, size = 0x4, offset = 0, fixed_abs, tag = 'sflag constant byte address 0x0 - dummy sync flag']
  #allocation230 [shape = 's32[]', space=sflag, size = 0x4, offset = 0, fixed_abs, tag = 'sflag constant byte address 0x0 - dummy sync flag']
  #allocation231 [shape = 's32[]', space=sflag, size = 0x4, offset = 0, fixed_abs, tag = 'sflag constant byte address 0x0 - dummy sync flag']
  #allocation232 [shape = 's32[]', space=sflag, size = 0x4, offset = 0, fixed_abs, tag = 'sflag constant byte address 0x0 - dummy sync flag']
  #allocation233 [shape = 's32[]', space=sflag, size = 0x4, offset = 0, fixed_abs, tag = 'sflag constant byte address 0x0 - dummy sync flag']
  #allocation234 [shape = 's32[]', space=sflag, size = 0x4, offset = 0, fixed_abs, tag = 'sflag constant byte address 0x0 - dummy sync flag']
  #allocation235 [shape = 's32[]', space=sflag, size = 0x4, offset = 0, fixed_abs, tag = 'sflag constant byte address 0x0 - dummy sync flag']
  #allocation236 [shape = 's32[]', space=sflag, size = 0x4, offset = 0, fixed_abs, tag = 'sflag constant byte address 0x0 - dummy sync flag']
  #allocation237 [shape = 's32[]', space=sflag, size = 0x4, offset = 0, fixed_abs, tag = 'sflag constant byte address 0x0 - dummy sync flag']
  #allocation238 [shape = 's32[]', space=sflag, size = 0x4, offset = 0, fixed_abs, tag = 'sflag constant byte address 0x0 - dummy sync flag']
  #allocation239 [shape = 's32[]', space=sflag, size = 0x4, offset = 0, fixed_abs, tag = 'sflag constant byte address 0x0 - dummy sync flag']
  #allocation240 [shape = 's32[]', space=sflag, size = 0x4, offset = 0, fixed_abs, tag = 'sflag constant byte address 0x0 - dummy sync flag']
  #allocation241 [shape = 's32[]', space=sflag, size = 0x4, offset = 0, fixed_abs, tag = 'sflag constant byte address 0x0 - dummy sync flag']
  #allocation242 [shape = 's32[]', space=sflag, size = 0x4, offset = 0, fixed_abs, tag = 'sflag constant byte address 0x0 - dummy sync flag']
  #allocation243 [shape = 's32[]', space=sflag, size = 0x4, offset = 0, fixed_abs, tag = 'sflag constant byte address 0x0 - dummy sync flag']
  #allocation244 [shape = 's32[]', space=sflag, size = 0x4, offset = 0, fixed_abs, tag = 'sflag constant byte address 0x0 - dummy sync flag']
  #allocation245 [shape = 's32[]', space=sflag, size = 0x4, offset = 0, fixed_abs, tag = 'sflag constant byte address 0x0 - dummy sync flag']
  #allocation246 [shape = 's32[]', space=sflag, size = 0x4, offset = 0, fixed_abs, tag = 'sflag constant byte address 0x0 - dummy sync flag']
  #allocation247 [shape = 's32[]', space=sflag, size = 0x4, offset = 0, fixed_abs, tag = 'sflag constant byte address 0x0 - dummy sync flag']
  #allocation248 [shape = 's32[]', space=sflag, size = 0x4, offset = 0, fixed_abs, tag = 'sflag constant byte address 0x0 - dummy sync flag']
  #allocation249 [shape = 's32[]', space=sflag, size = 0x4, offset = 0, fixed_abs, tag = 'sflag constant byte address 0x0 - dummy sync flag']
  #allocation250 [shape = 's32[]', space=sflag, size = 0x4, offset = 0, fixed_abs, tag = 'sflag constant byte address 0x0 - dummy sync flag']
  #allocation251 [shape = 's32[]', space=sflag, size = 0x4, offset = 0, fixed_abs, tag = 'sflag constant byte address 0x0 - dummy sync flag']
  #allocation252 [shape = 's32[]', space=sflag, size = 0x4, offset = 0, fixed_abs, tag = 'sflag constant byte address 0x0 - dummy sync flag']
  #allocation253 [shape = 's32[]', space=sflag, size = 0x4, offset = 0, fixed_abs, tag = 'sflag constant byte address 0x0 - dummy sync flag']
  #allocation254 [shape = 's32[]', space=sflag, size = 0x4, offset = 0, fixed_abs, tag = 'sflag constant byte address 0x0 - dummy sync flag']
  #allocation255 [shape = 's32[]', space=sflag, size = 0x4, offset = 0, fixed_abs, tag = 'sflag constant byte address 0x0 - dummy sync flag']
  #allocation256 [shape = 's32[]', space=sflag, size = 0x4, offset = 0, fixed_abs, tag = 'sflag constant byte address 0x0 - dummy sync flag']
  #allocation257 [shape = 's32[]', space=sflag, size = 0x4, offset = 0, fixed_abs, tag = 'sflag constant byte address 0x0 - dummy sync flag']
  #allocation258 [shape = 's32[]', space=sflag, size = 0x4, offset = 0, fixed_abs, tag = 'sflag constant byte address 0x0 - dummy sync flag']
  #allocation259 [shape = 's32[]', space=sflag, size = 0x4, offset = 0, fixed_abs, tag = 'sflag constant byte address 0x0 - dummy sync flag']
  #allocation260 [shape = 's32[]', space=sflag, size = 0x4, offset = 0, fixed_abs, tag = 'sflag constant byte address 0x0 - dummy sync flag']
  #allocation261 [shape = 's32[]', space=sflag, size = 0x4, offset = 0, fixed_abs, tag = 'sflag constant byte address 0x0 - dummy sync flag']
  #allocation262 [shape = 's32[]', space=sflag, size = 0x4, offset = 0, fixed_abs, tag = 'sflag constant byte address 0x0 - dummy sync flag']
  #allocation263 [shape = 's32[]', space=sflag, size = 0x4, offset = 0, fixed_abs, tag = 'sflag constant byte address 0x0 - dummy sync flag']
  #allocation264 [shape = 's32[]', space=sflag, size = 0x4, offset = 0, fixed_abs, tag = 'sflag constant byte address 0x0 - dummy sync flag']
  #allocation265 [shape = 's32[]', space=sflag, size = 0x4, offset = 0, fixed_abs, tag = 'sflag constant byte address 0x0 - dummy sync flag']
  %s0 = inlined_call_operand.vmem [shape: s32[128], index: 0, kind: input, shape index: {}]
  %s1 = inlined_call_operand.vmem [shape: f32[16,8], index: 1, kind: input, shape index: {}]
  %s2 = inlined_call_operand.hbm [shape: f32[101,128], index: 2, kind: input, shape index: {}]
  %s3 = inlined_call_operand.hbm [shape: f32[16,128], index: 3, kind: output, shape index: {}]
  %s4 = sld [smem:[#allocation0]]
  $region557: #{tpu_custom_call.1} parent=0
    _
  %s6 = ssub.s32 1, %s4
  %s7 = scalar_select 0, %s6, %s4
  %s9 = sshll.u32 %s0, 4
  %s10 = int_to_ptr.vmem [resolvable:$true] %s9
  %12 = dma.vmem_to_smem %s10, 16, [#allocation5], [#allocation4]
  %14 = dma.done [#allocation4], 16
  %15 = sfence
  $region1: #{tpu_custom_call.1} parent=0
    #allocation6 [shape = 'u8[8192]{0}', space=vmem, size = 0x2000, scoped, tag = 'output window, operand 0']
    #allocation7 [shape = 's32[2]{0}', space=sflag, size = 0x8, scoped, tag = 'scoped memory for tpu_custom_call.1']
    %16 = vsyncpa [#allocation7], 0
    %s17 = scalar_lea.sflag [#allocation7], 1
    %18 = vsyncpa %s17, 0
    loop: start=0, step=1, limit=4
    $region2: #{tpu_custom_call.1} parent=1 // loop_pre_header
      _
    $region3: #{tpu_custom_call.1} parent=1 // loop_header
      %s20 = sphi 0, %s24
      %p21 = scmp.ge.s32.totalorder %s20, 4
      %s30 = sphi 0, %s32
      %s33 = sphi 0, %s30
      %s34 = sphi 0, %s33
      %s50 = sphi 0, %s34
      %s56 = sphi 0, %s58
      %s59 = sphi 0, %s56
      %s60 = sphi 0, %s59
      %s76 = sphi 0, %s60
    $region4: #{tpu_custom_call.1} parent=1 // loop_header_branch
      %23 = sbr.rel (%p21) target = $region8
    $region5: #{tpu_custom_call.1} parent=1 // loop_body
      %s25 = ssub.s32 %s20, 1
      %s26 = ssub.s32 %s20, 2
      %s27 = sadd.s32 %s20, 1
      %s28 = ssub.s32 %s20, %s27
      %p29 = scmp.eq.s32.totalorder %s28, 0
      %s31 = sadd.s32 %s30, 1
      %s32 = scalar_select %p29, %s30, %s31
      %p35 = pneg %p29
      %p36 = scmp.eq.s32.totalorder %s20, 1
      %p37 = por %p35, %p36
      %p38 = scmp.ne.s32.totalorder %s30, %s33
      %p39 = scmp.eq.s32.totalorder %s20, 0
      %p40 = por %p38, %p39
      %p41 = scmp.ne.s32.totalorder %s30, %s33
      %p42 = scmp.eq.s32.totalorder %s25, 1
      %p43 = por %p41, %p42
      %p44 = scmp.ne.s32.totalorder %s33, %s34
      %p45 = scmp.eq.s32.totalorder %s25, 0
      %p46 = por %p44, %p45
      %p47 = scmp.ne.s32.totalorder %s33, %s34
      %p48 = scmp.eq.s32.totalorder %s26, 1
      %p49 = por %p47, %p48
      %p51 = scmp.ne.s32.totalorder %s34, %s50
      %p52 = scmp.eq.s32.totalorder %s26, 0
      %p53 = por %p51, %p52
      %s54 = ssub.s32 %s20, %s27
      %p55 = scmp.eq.s32.totalorder %s54, 0
      %s57 = sadd.s32 %s56, 1
      %s58 = scalar_select %p55, %s56, %s57
      %p61 = pneg %p55
      %p62 = scmp.eq.s32.totalorder %s20, 1
      %p63 = por %p61, %p62
      %p64 = scmp.ne.s32.totalorder %s56, %s59
      %p65 = scmp.eq.s32.totalorder %s20, 0
      %p66 = por %p64, %p65
      %p67 = scmp.ne.s32.totalorder %s56, %s59
      %p68 = scmp.eq.s32.totalorder %s25, 1
      %p69 = por %p67, %p68
      %p70 = scmp.ne.s32.totalorder %s59, %s60
      %p71 = scmp.eq.s32.totalorder %s25, 0
      %p72 = por %p70, %p71
      %p73 = scmp.ne.s32.totalorder %s59, %s60
      %p74 = scmp.eq.s32.totalorder %s26, 1
      %p75 = por %p73, %p74
      %p77 = scmp.ne.s32.totalorder %s60, %s76
      %p78 = scmp.eq.s32.totalorder %s26, 0
      %p79 = por %p77, %p78
      %p80 = scmp.le.s32.totalorder 1, %s20
      %p81 = scmp.lt.s32.totalorder %s20, 3
      %p82 = pnand %p80, %p81
      %p83 = pneg %p82
      // Predicated region
      $region9: #{tpu_custom_call.1} parent=5 // pred_check
        _
      $region10: #{tpu_custom_call.1} parent=5 // pred_check_branch
        %85 = sbr.rel (%p82) target = $region12
      $region11: #{tpu_custom_call.1} parent=5 // pred_region
        %s86 = ssub.s32 %s20, 1
      $region12: #{tpu_custom_call.1} parent=5 // pred_fallthru
        _
      %p87 = scmp.lt.s32.totalorder %s20, 2
      // Predicated region
      $region13: #{tpu_custom_call.1} parent=5 // pred_check
        %p88 = pneg %p87
      $region14: #{tpu_custom_call.1} parent=5 // pred_check_branch
        %90 = sbr.rel (%p88) target = $region16
      $region15: #{tpu_custom_call.1} parent=5 // pred_region
        // Predicated region
        $region17: #{tpu_custom_call.1} parent=15 // pred_check
          %p91 = pneg %p40
        $region18: #{tpu_custom_call.1} parent=15 // pred_check_branch
          %93 = sbr.rel (%p91) target = $region20
        $region19: #{tpu_custom_call.1} parent=15 // pred_region
          %p94 = scmp.lt.s32.totalorder %s20, 1
          %s95 = scalar_select %p94, %s20, 1
          %s96 = smul.addr %s95, 8
          %s97 = scalar_lea.vmem %s1, %s96
        $region20: #{tpu_custom_call.1} parent=15 // pred_fallthru
          _
      $region16: #{tpu_custom_call.1} parent=5 // pred_fallthru
        _
      %p98 = scmp.le.s32.totalorder 1, %s20
      %p99 = scmp.lt.s32.totalorder %s20, 3
      %p100 = pnand %p98, %p99
      %p101 = pneg %p100
      // Predicated region
      $region21: #{tpu_custom_call.1} parent=5 // pred_check
        _
      $region22: #{tpu_custom_call.1} parent=5 // pred_check_branch
        %103 = sbr.rel (%p100) target = $region24
      $region23: #{tpu_custom_call.1} parent=5 // pred_region
        %s104 = ssub.s32 %s20, 1
        %p105 = scmp.lt.s32.totalorder %s25, 1
        %s106 = scalar_select %p105, %s25, 1
        %s107 = smul.addr %s106, 8
        %s108 = scalar_lea.vmem %s1, %s107
        %p109 = pneg %p46
        %p110 = pneg %p43
        %p111 = pneg %p72
        %p112 = pneg %p69
        %s113 = sand.u32 %s59, 1
        %s114 = scalar_lea.sflag [#allocation7], %s113
        %s115 = sand.u32 %s59, 1
        %s116 = smul.addr %s115, 8
        %s117 = scalar_lea.vmem [#allocation6], %s116
        %p118 = scmp.lt.s32.totalorder %s25, 1
        %s119 = scalar_select %p118, %s25, 1
        %s120 = smul.addr %s119, 8
        %s121 = scalar_lea.vmem %s1, %s120
        %p122 = scmp.eq.s32.totalorder %s25, 0
        // Predicated region
        $region25: #{tpu_custom_call.1} parent=23 // pred_check
          %p123 = pneg %p122
        $region26: #{tpu_custom_call.1} parent=23 // pred_check_branch
          %125 = sbr.rel (%p123) target = $region28
        $region27: #{tpu_custom_call.1} parent=23 // pred_region
          %s126 = sld [smem:[#allocation5]]
          %s127 = scalar_lea.hbm %s2, %s126
          // Predicated region
          $region29: #{tpu_custom_call.1} parent=27 // pred_check
            _
          $region30: #{tpu_custom_call.1} parent=27 // pred_check_branch
            %129 = sbr.rel target = $region32
          $region31: #{tpu_custom_call.1} parent=27 // pred_region
            %130 = sst [smem:[#allocation10]] [#allocation9]
            %131 = sst [smem:[#allocation11]] [#allocation8]
          $region32: #{tpu_custom_call.1} parent=27 // pred_fallthru
            _
          %133 = shalt.err (0)
          %s135 = sshll.u32 %s127, 4
          %s136 = int_to_ptr.hbm [resolvable:$true] %s135
          %s137 = sshll.u32 [#allocation2], 4
          %s138 = int_to_ptr.vmem [resolvable:$true] %s137
          %140 = dma.hbm_to_vmem [thread:$0]  %s136, 16, %s138, [#allocation3]
          %s141 = sld [smem:[#allocation5 + $0x1]]
          %s142 = scalar_lea.hbm %s2, %s141
          %s143 = scalar_lea.vmem [#allocation2], 8
          // Predicated region
          $region33: #{tpu_custom_call.1} parent=27 // pred_check
            _
          $region34: #{tpu_custom_call.1} parent=27 // pred_check_branch
            %145 = sbr.rel target = $region36
          $region35: #{tpu_custom_call.1} parent=27 // pred_region
            %146 = sst [smem:[#allocation10]] [#allocation13]
            %147 = sst [smem:[#allocation11]] [#allocation12]
          $region36: #{tpu_custom_call.1} parent=27 // pred_fallthru
            _
          %149 = shalt.err (0)
          %s151 = sshll.u32 %s142, 4
          %s152 = int_to_ptr.hbm [resolvable:$true] %s151
          %s153 = sshll.u32 %s143, 4
          %s154 = int_to_ptr.vmem [resolvable:$true] %s153
          %156 = dma.hbm_to_vmem [thread:$0]  %s152, 16, %s154, [#allocation3]
          %s157 = sld [smem:[#allocation5 + $0x2]]
          %s158 = scalar_lea.hbm %s2, %s157
          %s159 = scalar_lea.vmem [#allocation2], 16
          // Predicated region
          $region37: #{tpu_custom_call.1} parent=27 // pred_check
            _
          $region38: #{tpu_custom_call.1} parent=27 // pred_check_branch
            %161 = sbr.rel target = $region40
          $region39: #{tpu_custom_call.1} parent=27 // pred_region
            %162 = sst [smem:[#allocation10]] [#allocation15]
            %163 = sst [smem:[#allocation11]] [#allocation14]
          $region40: #{tpu_custom_call.1} parent=27 // pred_fallthru
            _
          %165 = shalt.err (0)
          %s167 = sshll.u32 %s158, 4
          %s168 = int_to_ptr.hbm [resolvable:$true] %s167
          %s169 = sshll.u32 %s159, 4
          %s170 = int_to_ptr.vmem [resolvable:$true] %s169
          %172 = dma.hbm_to_vmem [thread:$0]  %s168, 16, %s170, [#allocation3]
          %s173 = sld [smem:[#allocation5 + $0x3]]
          %s174 = scalar_lea.hbm %s2, %s173
          %s175 = scalar_lea.vmem [#allocation2], 24
          // Predicated region
          $region41: #{tpu_custom_call.1} parent=27 // pred_check
            _
          $region42: #{tpu_custom_call.1} parent=27 // pred_check_branch
            %177 = sbr.rel target = $region44
          $region43: #{tpu_custom_call.1} parent=27 // pred_region
            %178 = sst [smem:[#allocation10]] [#allocation17]
            %179 = sst [smem:[#allocation11]] [#allocation16]
          $region44: #{tpu_custom_call.1} parent=27 // pred_fallthru
            _
          %181 = shalt.err (0)
          %s183 = sshll.u32 %s174, 4
          %s184 = int_to_ptr.hbm [resolvable:$true] %s183
          %s185 = sshll.u32 %s175, 4
          %s186 = int_to_ptr.vmem [resolvable:$true] %s185
          %188 = dma.hbm_to_vmem [thread:$0]  %s184, 16, %s186, [#allocation3]
          %s189 = sld [smem:[#allocation5 + $0x4]]
          %s190 = scalar_lea.hbm %s2, %s189
          %s191 = scalar_lea.vmem [#allocation2], 32
          // Predicated region
          $region45: #{tpu_custom_call.1} parent=27 // pred_check
            _
          $region46: #{tpu_custom_call.1} parent=27 // pred_check_branch
            %193 = sbr.rel target = $region48
          $region47: #{tpu_custom_call.1} parent=27 // pred_region
            %194 = sst [smem:[#allocation10]] [#allocation19]
            %195 = sst [smem:[#allocation11]] [#allocation18]
          $region48: #{tpu_custom_call.1} parent=27 // pred_fallthru
            _
          %197 = shalt.err (0)
          %s199 = sshll.u32 %s190, 4
          %s200 = int_to_ptr.hbm [resolvable:$true] %s199
          %s201 = sshll.u32 %s191, 4
          %s202 = int_to_ptr.vmem [resolvable:$true] %s201
          %204 = dma.hbm_to_vmem [thread:$0]  %s200, 16, %s202, [#allocation3]
          %s205 = sld [smem:[#allocation5 + $0x5]]
          %s206 = scalar_lea.hbm %s2, %s205
          %s207 = scalar_lea.vmem [#allocation2], 40
          // Predicated region
          $region49: #{tpu_custom_call.1} parent=27 // pred_check
            _
          $region50: #{tpu_custom_call.1} parent=27 // pred_check_branch
            %209 = sbr.rel target = $region52
          $region51: #{tpu_custom_call.1} parent=27 // pred_region
            %210 = sst [smem:[#allocation10]] [#allocation21]
            %211 = sst [smem:[#allocation11]] [#allocation20]
          $region52: #{tpu_custom_call.1} parent=27 // pred_fallthru
            _
          %213 = shalt.err (0)
          %s215 = sshll.u32 %s206, 4
          %s216 = int_to_ptr.hbm [resolvable:$true] %s215
          %s217 = sshll.u32 %s207, 4
          %s218 = int_to_ptr.vmem [resolvable:$true] %s217
          %220 = dma.hbm_to_vmem [thread:$0]  %s216, 16, %s218, [#allocation3]
          %s221 = sld [smem:[#allocation5 + $0x6]]
          %s222 = scalar_lea.hbm %s2, %s221
          %s223 = scalar_lea.vmem [#allocation2], 48
          // Predicated region
          $region53: #{tpu_custom_call.1} parent=27 // pred_check
            _
          $region54: #{tpu_custom_call.1} parent=27 // pred_check_branch
            %225 = sbr.rel target = $region56
          $region55: #{tpu_custom_call.1} parent=27 // pred_region
            %226 = sst [smem:[#allocation10]] [#allocation23]
            %227 = sst [smem:[#allocation11]] [#allocation22]
          $region56: #{tpu_custom_call.1} parent=27 // pred_fallthru
            _
          %229 = shalt.err (0)
          %s231 = sshll.u32 %s222, 4
          %s232 = int_to_ptr.hbm [resolvable:$true] %s231
          %s233 = sshll.u32 %s223, 4
          %s234 = int_to_ptr.vmem [resolvable:$true] %s233
          %236 = dma.hbm_to_vmem [thread:$0]  %s232, 16, %s234, [#allocation3]
          %s237 = sld [smem:[#allocation5 + $0x7]]
          %s238 = scalar_lea.hbm %s2, %s237
          %s239 = scalar_lea.vmem [#allocation2], 56
          // Predicated region
          $region57: #{tpu_custom_call.1} parent=27 // pred_check
            _
          $region58: #{tpu_custom_call.1} parent=27 // pred_check_branch
            %241 = sbr.rel target = $region60
          $region59: #{tpu_custom_call.1} parent=27 // pred_region
            %242 = sst [smem:[#allocation10]] [#allocation25]
            %243 = sst [smem:[#allocation11]] [#allocation24]
          $region60: #{tpu_custom_call.1} parent=27 // pred_fallthru
            _
          %245 = shalt.err (0)
          %s247 = sshll.u32 %s238, 4
          %s248 = int_to_ptr.hbm [resolvable:$true] %s247
          %s249 = sshll.u32 %s239, 4
          %s250 = int_to_ptr.vmem [resolvable:$true] %s249
          %252 = dma.hbm_to_vmem [thread:$0]  %s248, 16, %s250, [#allocation3]
          %s253 = sld [smem:[#allocation5 + $0x8]]
          %s254 = scalar_lea.hbm %s2, %s253
          %s255 = scalar_lea.vmem [#allocation2], 1
          // Predicated region
          $region61: #{tpu_custom_call.1} parent=27 // pred_check
            _
          $region62: #{tpu_custom_call.1} parent=27 // pred_check_branch
            %257 = sbr.rel target = $region64
          $region63: #{tpu_custom_call.1} parent=27 // pred_region
            %258 = sst [smem:[#allocation10]] [#allocation27]
            %259 = sst [smem:[#allocation11]] [#allocation26]
          $region64: #{tpu_custom_call.1} parent=27 // pred_fallthru
            _
          %261 = shalt.err (0)
          %s263 = sshll.u32 %s254, 4
          %s264 = int_to_ptr.hbm [resolvable:$true] %s263
          %s265 = sshll.u32 %s255, 4
          %s266 = int_to_ptr.vmem [resolvable:$true] %s265
          %268 = dma.hbm_to_vmem [thread:$0]  %s264, 16, %s266, [#allocation3]
          %s269 = sld [smem:[#allocation5 + $0x9]]
          %s270 = scalar_lea.hbm %s2, %s269
          %s271 = scalar_lea.vmem [#allocation2], 9
          // Predicated region
          $region65: #{tpu_custom_call.1} parent=27 // pred_check
            _
          $region66: #{tpu_custom_call.1} parent=27 // pred_check_branch
            %273 = sbr.rel target = $region68
          $region67: #{tpu_custom_call.1} parent=27 // pred_region
            %274 = sst [smem:[#allocation10]] [#allocation29]
            %275 = sst [smem:[#allocation11]] [#allocation28]
          $region68: #{tpu_custom_call.1} parent=27 // pred_fallthru
            _
          %277 = shalt.err (0)
          %s279 = sshll.u32 %s270, 4
          %s280 = int_to_ptr.hbm [resolvable:$true] %s279
          %s281 = sshll.u32 %s271, 4
          %s282 = int_to_ptr.vmem [resolvable:$true] %s281
          %284 = dma.hbm_to_vmem [thread:$0]  %s280, 16, %s282, [#allocation3]
          %s285 = sld [smem:[#allocation5 + $0xa]]
          %s286 = scalar_lea.hbm %s2, %s285
          %s287 = scalar_lea.vmem [#allocation2], 17
          // Predicated region
          $region69: #{tpu_custom_call.1} parent=27 // pred_check
            _
          $region70: #{tpu_custom_call.1} parent=27 // pred_check_branch
            %289 = sbr.rel target = $region72
          $region71: #{tpu_custom_call.1} parent=27 // pred_region
            %290 = sst [smem:[#allocation10]] [#allocation31]
            %291 = sst [smem:[#allocation11]] [#allocation30]
          $region72: #{tpu_custom_call.1} parent=27 // pred_fallthru
            _
          %293 = shalt.err (0)
          %s295 = sshll.u32 %s286, 4
          %s296 = int_to_ptr.hbm [resolvable:$true] %s295
          %s297 = sshll.u32 %s287, 4
          %s298 = int_to_ptr.vmem [resolvable:$true] %s297
          %300 = dma.hbm_to_vmem [thread:$0]  %s296, 16, %s298, [#allocation3]
          %s301 = sld [smem:[#allocation5 + $0xb]]
          %s302 = scalar_lea.hbm %s2, %s301
          %s303 = scalar_lea.vmem [#allocation2], 25
          // Predicated region
          $region73: #{tpu_custom_call.1} parent=27 // pred_check
            _
          $region74: #{tpu_custom_call.1} parent=27 // pred_check_branch
            %305 = sbr.rel target = $region76
          $region75: #{tpu_custom_call.1} parent=27 // pred_region
            %306 = sst [smem:[#allocation10]] [#allocation33]
            %307 = sst [smem:[#allocation11]] [#allocation32]
          $region76: #{tpu_custom_call.1} parent=27 // pred_fallthru
            _
          %309 = shalt.err (0)
          %s311 = sshll.u32 %s302, 4
          %s312 = int_to_ptr.hbm [resolvable:$true] %s311
          %s313 = sshll.u32 %s303, 4
          %s314 = int_to_ptr.vmem [resolvable:$true] %s313
          %316 = dma.hbm_to_vmem [thread:$0]  %s312, 16, %s314, [#allocation3]
          %s317 = sld [smem:[#allocation5 + $0xc]]
          %s318 = scalar_lea.hbm %s2, %s317
          %s319 = scalar_lea.vmem [#allocation2], 33
          // Predicated region
          $region77: #{tpu_custom_call.1} parent=27 // pred_check
            _
          $region78: #{tpu_custom_call.1} parent=27 // pred_check_branch
            %321 = sbr.rel target = $region80
          $region79: #{tpu_custom_call.1} parent=27 // pred_region
            %322 = sst [smem:[#allocation10]] [#allocation35]
            %323 = sst [smem:[#allocation11]] [#allocation34]
          $region80: #{tpu_custom_call.1} parent=27 // pred_fallthru
            _
          %325 = shalt.err (0)
          %s327 = sshll.u32 %s318, 4
          %s328 = int_to_ptr.hbm [resolvable:$true] %s327
          %s329 = sshll.u32 %s319, 4
          %s330 = int_to_ptr.vmem [resolvable:$true] %s329
          %332 = dma.hbm_to_vmem [thread:$0]  %s328, 16, %s330, [#allocation3]
          %s333 = sld [smem:[#allocation5 + $0xd]]
          %s334 = scalar_lea.hbm %s2, %s333
          %s335 = scalar_lea.vmem [#allocation2], 41
          // Predicated region
          $region81: #{tpu_custom_call.1} parent=27 // pred_check
            _
          $region82: #{tpu_custom_call.1} parent=27 // pred_check_branch
            %337 = sbr.rel target = $region84
          $region83: #{tpu_custom_call.1} parent=27 // pred_region
            %338 = sst [smem:[#allocation10]] [#allocation37]
            %339 = sst [smem:[#allocation11]] [#allocation36]
          $region84: #{tpu_custom_call.1} parent=27 // pred_fallthru
            _
          %341 = shalt.err (0)
          %s343 = sshll.u32 %s334, 4
          %s344 = int_to_ptr.hbm [resolvable:$true] %s343
          %s345 = sshll.u32 %s335, 4
          %s346 = int_to_ptr.vmem [resolvable:$true] %s345
          %348 = dma.hbm_to_vmem [thread:$0]  %s344, 16, %s346, [#allocation3]
          %s349 = sld [smem:[#allocation5 + $0xe]]
          %s350 = scalar_lea.hbm %s2, %s349
          %s351 = scalar_lea.vmem [#allocation2], 49
          // Predicated region
          $region85: #{tpu_custom_call.1} parent=27 // pred_check
            _
          $region86: #{tpu_custom_call.1} parent=27 // pred_check_branch
            %353 = sbr.rel target = $region88
          $region87: #{tpu_custom_call.1} parent=27 // pred_region
            %354 = sst [smem:[#allocation10]] [#allocation39]
            %355 = sst [smem:[#allocation11]] [#allocation38]
          $region88: #{tpu_custom_call.1} parent=27 // pred_fallthru
            _
          %357 = shalt.err (0)
          %s359 = sshll.u32 %s350, 4
          %s360 = int_to_ptr.hbm [resolvable:$true] %s359
          %s361 = sshll.u32 %s351, 4
          %s362 = int_to_ptr.vmem [resolvable:$true] %s361
          %364 = dma.hbm_to_vmem [thread:$0]  %s360, 16, %s362, [#allocation3]
          %s365 = sld [smem:[#allocation5 + $0xf]]
          %s366 = scalar_lea.hbm %s2, %s365
          %s367 = scalar_lea.vmem [#allocation2], 57
          // Predicated region
          $region89: #{tpu_custom_call.1} parent=27 // pred_check
            _
          $region90: #{tpu_custom_call.1} parent=27 // pred_check_branch
            %369 = sbr.rel target = $region92
          $region91: #{tpu_custom_call.1} parent=27 // pred_region
            %370 = sst [smem:[#allocation10]] [#allocation41]
            %371 = sst [smem:[#allocation11]] [#allocation40]
          $region92: #{tpu_custom_call.1} parent=27 // pred_fallthru
            _
          %373 = shalt.err (0)
          %s375 = sshll.u32 %s366, 4
          %s376 = int_to_ptr.hbm [resolvable:$true] %s375
          %s377 = sshll.u32 %s367, 4
          %s378 = int_to_ptr.vmem [resolvable:$true] %s377
          %380 = dma.hbm_to_vmem [thread:$0]  %s376, 16, %s378, [#allocation3]
          %s381 = sld [smem:[#allocation5 + $0x10]]
          %s382 = scalar_lea.hbm %s2, %s381
          %s383 = scalar_lea.vmem [#allocation2], 2
          // Predicated region
          $region93: #{tpu_custom_call.1} parent=27 // pred_check
            _
          $region94: #{tpu_custom_call.1} parent=27 // pred_check_branch
            %385 = sbr.rel target = $region96
          $region95: #{tpu_custom_call.1} parent=27 // pred_region
            %386 = sst [smem:[#allocation10]] [#allocation43]
            %387 = sst [smem:[#allocation11]] [#allocation42]
          $region96: #{tpu_custom_call.1} parent=27 // pred_fallthru
            _
          %389 = shalt.err (0)
          %s391 = sshll.u32 %s382, 4
          %s392 = int_to_ptr.hbm [resolvable:$true] %s391
          %s393 = sshll.u32 %s383, 4
          %s394 = int_to_ptr.vmem [resolvable:$true] %s393
          %396 = dma.hbm_to_vmem [thread:$0]  %s392, 16, %s394, [#allocation3]
          %s397 = sld [smem:[#allocation5 + $0x11]]
          %s398 = scalar_lea.hbm %s2, %s397
          %s399 = scalar_lea.vmem [#allocation2], 10
          // Predicated region
          $region97: #{tpu_custom_call.1} parent=27 // pred_check
            _
          $region98: #{tpu_custom_call.1} parent=27 // pred_check_branch
            %401 = sbr.rel target = $region100
          $region99: #{tpu_custom_call.1} parent=27 // pred_region
            %402 = sst [smem:[#allocation10]] [#allocation45]
            %403 = sst [smem:[#allocation11]] [#allocation44]
          $region100: #{tpu_custom_call.1} parent=27 // pred_fallthru
            _
          %405 = shalt.err (0)
          %s407 = sshll.u32 %s398, 4
          %s408 = int_to_ptr.hbm [resolvable:$true] %s407
          %s409 = sshll.u32 %s399, 4
          %s410 = int_to_ptr.vmem [resolvable:$true] %s409
          %412 = dma.hbm_to_vmem [thread:$0]  %s408, 16, %s410, [#allocation3]
          %s413 = sld [smem:[#allocation5 + $0x12]]
          %s414 = scalar_lea.hbm %s2, %s413
          %s415 = scalar_lea.vmem [#allocation2], 18
          // Predicated region
          $region101: #{tpu_custom_call.1} parent=27 // pred_check
            _
          $region102: #{tpu_custom_call.1} parent=27 // pred_check_branch
            %417 = sbr.rel target = $region104
          $region103: #{tpu_custom_call.1} parent=27 // pred_region
            %418 = sst [smem:[#allocation10]] [#allocation47]
            %419 = sst [smem:[#allocation11]] [#allocation46]
          $region104: #{tpu_custom_call.1} parent=27 // pred_fallthru
            _
          %421 = shalt.err (0)
          %s423 = sshll.u32 %s414, 4
          %s424 = int_to_ptr.hbm [resolvable:$true] %s423
          %s425 = sshll.u32 %s415, 4
          %s426 = int_to_ptr.vmem [resolvable:$true] %s425
          %428 = dma.hbm_to_vmem [thread:$0]  %s424, 16, %s426, [#allocation3]
          %s429 = sld [smem:[#allocation5 + $0x13]]
          %s430 = scalar_lea.hbm %s2, %s429
          %s431 = scalar_lea.vmem [#allocation2], 26
          // Predicated region
          $region105: #{tpu_custom_call.1} parent=27 // pred_check
            _
          $region106: #{tpu_custom_call.1} parent=27 // pred_check_branch
            %433 = sbr.rel target = $region108
          $region107: #{tpu_custom_call.1} parent=27 // pred_region
            %434 = sst [smem:[#allocation10]] [#allocation49]
            %435 = sst [smem:[#allocation11]] [#allocation48]
          $region108: #{tpu_custom_call.1} parent=27 // pred_fallthru
            _
          %437 = shalt.err (0)
          %s439 = sshll.u32 %s430, 4
          %s440 = int_to_ptr.hbm [resolvable:$true] %s439
          %s441 = sshll.u32 %s431, 4
          %s442 = int_to_ptr.vmem [resolvable:$true] %s441
          %444 = dma.hbm_to_vmem [thread:$0]  %s440, 16, %s442, [#allocation3]
          %s445 = sld [smem:[#allocation5 + $0x14]]
          %s446 = scalar_lea.hbm %s2, %s445
          %s447 = scalar_lea.vmem [#allocation2], 34
          // Predicated region
          $region109: #{tpu_custom_call.1} parent=27 // pred_check
            _
          $region110: #{tpu_custom_call.1} parent=27 // pred_check_branch
            %449 = sbr.rel target = $region112
          $region111: #{tpu_custom_call.1} parent=27 // pred_region
            %450 = sst [smem:[#allocation10]] [#allocation51]
            %451 = sst [smem:[#allocation11]] [#allocation50]
          $region112: #{tpu_custom_call.1} parent=27 // pred_fallthru
            _
          %453 = shalt.err (0)
          %s455 = sshll.u32 %s446, 4
          %s456 = int_to_ptr.hbm [resolvable:$true] %s455
          %s457 = sshll.u32 %s447, 4
          %s458 = int_to_ptr.vmem [resolvable:$true] %s457
          %460 = dma.hbm_to_vmem [thread:$0]  %s456, 16, %s458, [#allocation3]
          %s461 = sld [smem:[#allocation5 + $0x15]]
          %s462 = scalar_lea.hbm %s2, %s461
          %s463 = scalar_lea.vmem [#allocation2], 42
          // Predicated region
          $region113: #{tpu_custom_call.1} parent=27 // pred_check
            _
          $region114: #{tpu_custom_call.1} parent=27 // pred_check_branch
            %465 = sbr.rel target = $region116
          $region115: #{tpu_custom_call.1} parent=27 // pred_region
            %466 = sst [smem:[#allocation10]] [#allocation53]
            %467 = sst [smem:[#allocation11]] [#allocation52]
          $region116: #{tpu_custom_call.1} parent=27 // pred_fallthru
            _
          %469 = shalt.err (0)
          %s471 = sshll.u32 %s462, 4
          %s472 = int_to_ptr.hbm [resolvable:$true] %s471
          %s473 = sshll.u32 %s463, 4
          %s474 = int_to_ptr.vmem [resolvable:$true] %s473
          %476 = dma.hbm_to_vmem [thread:$0]  %s472, 16, %s474, [#allocation3]
          %s477 = sld [smem:[#allocation5 + $0x16]]
          %s478 = scalar_lea.hbm %s2, %s477
          %s479 = scalar_lea.vmem [#allocation2], 50
          // Predicated region
          $region117: #{tpu_custom_call.1} parent=27 // pred_check
            _
          $region118: #{tpu_custom_call.1} parent=27 // pred_check_branch
            %481 = sbr.rel target = $region120
          $region119: #{tpu_custom_call.1} parent=27 // pred_region
            %482 = sst [smem:[#allocation10]] [#allocation55]
            %483 = sst [smem:[#allocation11]] [#allocation54]
          $region120: #{tpu_custom_call.1} parent=27 // pred_fallthru
            _
          %485 = shalt.err (0)
          %s487 = sshll.u32 %s478, 4
          %s488 = int_to_ptr.hbm [resolvable:$true] %s487
          %s489 = sshll.u32 %s479, 4
          %s490 = int_to_ptr.vmem [resolvable:$true] %s489
          %492 = dma.hbm_to_vmem [thread:$0]  %s488, 16, %s490, [#allocation3]
          %s493 = sld [smem:[#allocation5 + $0x17]]
          %s494 = scalar_lea.hbm %s2, %s493
          %s495 = scalar_lea.vmem [#allocation2], 58
          // Predicated region
          $region121: #{tpu_custom_call.1} parent=27 // pred_check
            _
          $region122: #{tpu_custom_call.1} parent=27 // pred_check_branch
            %497 = sbr.rel target = $region124
          $region123: #{tpu_custom_call.1} parent=27 // pred_region
            %498 = sst [smem:[#allocation10]] [#allocation57]
            %499 = sst [smem:[#allocation11]] [#allocation56]
          $region124: #{tpu_custom_call.1} parent=27 // pred_fallthru
            _
          %501 = shalt.err (0)
          %s503 = sshll.u32 %s494, 4
          %s504 = int_to_ptr.hbm [resolvable:$true] %s503
          %s505 = sshll.u32 %s495, 4
          %s506 = int_to_ptr.vmem [resolvable:$true] %s505
          %508 = dma.hbm_to_vmem [thread:$0]  %s504, 16, %s506, [#allocation3]
          %s509 = sld [smem:[#allocation5 + $0x18]]
          %s510 = scalar_lea.hbm %s2, %s509
          %s511 = scalar_lea.vmem [#allocation2], 3
          // Predicated region
          $region125: #{tpu_custom_call.1} parent=27 // pred_check
            _
          $region126: #{tpu_custom_call.1} parent=27 // pred_check_branch
            %513 = sbr.rel target = $region128
          $region127: #{tpu_custom_call.1} parent=27 // pred_region
            %514 = sst [smem:[#allocation10]] [#allocation59]
            %515 = sst [smem:[#allocation11]] [#allocation58]
          $region128: #{tpu_custom_call.1} parent=27 // pred_fallthru
            _
          %517 = shalt.err (0)
          %s519 = sshll.u32 %s510, 4
          %s520 = int_to_ptr.hbm [resolvable:$true] %s519
          %s521 = sshll.u32 %s511, 4
          %s522 = int_to_ptr.vmem [resolvable:$true] %s521
          %524 = dma.hbm_to_vmem [thread:$0]  %s520, 16, %s522, [#allocation3]
          %s525 = sld [smem:[#allocation5 + $0x19]]
          %s526 = scalar_lea.hbm %s2, %s525
          %s527 = scalar_lea.vmem [#allocation2], 11
          // Predicated region
          $region129: #{tpu_custom_call.1} parent=27 // pred_check
            _
          $region130: #{tpu_custom_call.1} parent=27 // pred_check_branch
            %529 = sbr.rel target = $region132
          $region131: #{tpu_custom_call.1} parent=27 // pred_region
            %530 = sst [smem:[#allocation10]] [#allocation61]
            %531 = sst [smem:[#allocation11]] [#allocation60]
          $region132: #{tpu_custom_call.1} parent=27 // pred_fallthru
            _
          %533 = shalt.err (0)
          %s535 = sshll.u32 %s526, 4
          %s536 = int_to_ptr.hbm [resolvable:$true] %s535
          %s537 = sshll.u32 %s527, 4
          %s538 = int_to_ptr.vmem [resolvable:$true] %s537
          %540 = dma.hbm_to_vmem [thread:$0]  %s536, 16, %s538, [#allocation3]
          %s541 = sld [smem:[#allocation5 + $0x1a]]
          %s542 = scalar_lea.hbm %s2, %s541
          %s543 = scalar_lea.vmem [#allocation2], 19
          // Predicated region
          $region133: #{tpu_custom_call.1} parent=27 // pred_check
            _
          $region134: #{tpu_custom_call.1} parent=27 // pred_check_branch
            %545 = sbr.rel target = $region136
          $region135: #{tpu_custom_call.1} parent=27 // pred_region
            %546 = sst [smem:[#allocation10]] [#allocation63]
            %547 = sst [smem:[#allocation11]] [#allocation62]
          $region136: #{tpu_custom_call.1} parent=27 // pred_fallthru
            _
          %549 = shalt.err (0)
          %s551 = sshll.u32 %s542, 4
          %s552 = int_to_ptr.hbm [resolvable:$true] %s551
          %s553 = sshll.u32 %s543, 4
          %s554 = int_to_ptr.vmem [resolvable:$true] %s553
          %556 = dma.hbm_to_vmem [thread:$0]  %s552, 16, %s554, [#allocation3]
          %s557 = sld [smem:[#allocation5 + $0x1b]]
          %s558 = scalar_lea.hbm %s2, %s557
          %s559 = scalar_lea.vmem [#allocation2], 27
          // Predicated region
          $region137: #{tpu_custom_call.1} parent=27 // pred_check
            _
          $region138: #{tpu_custom_call.1} parent=27 // pred_check_branch
            %561 = sbr.rel target = $region140
          $region139: #{tpu_custom_call.1} parent=27 // pred_region
            %562 = sst [smem:[#allocation10]] [#allocation65]
            %563 = sst [smem:[#allocation11]] [#allocation64]
          $region140: #{tpu_custom_call.1} parent=27 // pred_fallthru
            _
          %565 = shalt.err (0)
          %s567 = sshll.u32 %s558, 4
          %s568 = int_to_ptr.hbm [resolvable:$true] %s567
          %s569 = sshll.u32 %s559, 4
          %s570 = int_to_ptr.vmem [resolvable:$true] %s569
          %572 = dma.hbm_to_vmem [thread:$0]  %s568, 16, %s570, [#allocation3]
          %s573 = sld [smem:[#allocation5 + $0x1c]]
          %s574 = scalar_lea.hbm %s2, %s573
          %s575 = scalar_lea.vmem [#allocation2], 35
          // Predicated region
          $region141: #{tpu_custom_call.1} parent=27 // pred_check
            _
          $region142: #{tpu_custom_call.1} parent=27 // pred_check_branch
            %577 = sbr.rel target = $region144
          $region143: #{tpu_custom_call.1} parent=27 // pred_region
            %578 = sst [smem:[#allocation10]] [#allocation67]
            %579 = sst [smem:[#allocation11]] [#allocation66]
          $region144: #{tpu_custom_call.1} parent=27 // pred_fallthru
            _
          %581 = shalt.err (0)
          %s583 = sshll.u32 %s574, 4
          %s584 = int_to_ptr.hbm [resolvable:$true] %s583
          %s585 = sshll.u32 %s575, 4
          %s586 = int_to_ptr.vmem [resolvable:$true] %s585
          %588 = dma.hbm_to_vmem [thread:$0]  %s584, 16, %s586, [#allocation3]
          %s589 = sld [smem:[#allocation5 + $0x1d]]
          %s590 = scalar_lea.hbm %s2, %s589
          %s591 = scalar_lea.vmem [#allocation2], 43
          // Predicated region
          $region145: #{tpu_custom_call.1} parent=27 // pred_check
            _
          $region146: #{tpu_custom_call.1} parent=27 // pred_check_branch
            %593 = sbr.rel target = $region148
          $region147: #{tpu_custom_call.1} parent=27 // pred_region
            %594 = sst [smem:[#allocation10]] [#allocation69]
            %595 = sst [smem:[#allocation11]] [#allocation68]
          $region148: #{tpu_custom_call.1} parent=27 // pred_fallthru
            _
          %597 = shalt.err (0)
          %s599 = sshll.u32 %s590, 4
          %s600 = int_to_ptr.hbm [resolvable:$true] %s599
          %s601 = sshll.u32 %s591, 4
          %s602 = int_to_ptr.vmem [resolvable:$true] %s601
          %604 = dma.hbm_to_vmem [thread:$0]  %s600, 16, %s602, [#allocation3]
          %s605 = sld [smem:[#allocation5 + $0x1e]]
          %s606 = scalar_lea.hbm %s2, %s605
          %s607 = scalar_lea.vmem [#allocation2], 51
          // Predicated region
          $region149: #{tpu_custom_call.1} parent=27 // pred_check
            _
          $region150: #{tpu_custom_call.1} parent=27 // pred_check_branch
            %609 = sbr.rel target = $region152
          $region151: #{tpu_custom_call.1} parent=27 // pred_region
            %610 = sst [smem:[#allocation10]] [#allocation71]
            %611 = sst [smem:[#allocation11]] [#allocation70]
          $region152: #{tpu_custom_call.1} parent=27 // pred_fallthru
            _
          %613 = shalt.err (0)
          %s615 = sshll.u32 %s606, 4
          %s616 = int_to_ptr.hbm [resolvable:$true] %s615
          %s617 = sshll.u32 %s607, 4
          %s618 = int_to_ptr.vmem [resolvable:$true] %s617
          %620 = dma.hbm_to_vmem [thread:$0]  %s616, 16, %s618, [#allocation3]
          %s621 = sld [smem:[#allocation5 + $0x1f]]
          %s622 = scalar_lea.hbm %s2, %s621
          %s623 = scalar_lea.vmem [#allocation2], 59
          // Predicated region
          $region153: #{tpu_custom_call.1} parent=27 // pred_check
            _
          $region154: #{tpu_custom_call.1} parent=27 // pred_check_branch
            %625 = sbr.rel target = $region156
          $region155: #{tpu_custom_call.1} parent=27 // pred_region
            %626 = sst [smem:[#allocation10]] [#allocation73]
            %627 = sst [smem:[#allocation11]] [#allocation72]
          $region156: #{tpu_custom_call.1} parent=27 // pred_fallthru
            _
          %629 = shalt.err (0)
          %s631 = sshll.u32 %s622, 4
          %s632 = int_to_ptr.hbm [resolvable:$true] %s631
          %s633 = sshll.u32 %s623, 4
          %s634 = int_to_ptr.vmem [resolvable:$true] %s633
          %636 = dma.hbm_to_vmem [thread:$0]  %s632, 16, %s634, [#allocation3]
          %s637 = sld [smem:[#allocation5 + $0x20]]
          %s638 = scalar_lea.hbm %s2, %s637
          %s639 = scalar_lea.vmem [#allocation2], 4
          // Predicated region
          $region157: #{tpu_custom_call.1} parent=27 // pred_check
            _
          $region158: #{tpu_custom_call.1} parent=27 // pred_check_branch
            %641 = sbr.rel target = $region160
          $region159: #{tpu_custom_call.1} parent=27 // pred_region
            %642 = sst [smem:[#allocation10]] [#allocation75]
            %643 = sst [smem:[#allocation11]] [#allocation74]
          $region160: #{tpu_custom_call.1} parent=27 // pred_fallthru
            _
          %645 = shalt.err (0)
          %s647 = sshll.u32 %s638, 4
          %s648 = int_to_ptr.hbm [resolvable:$true] %s647
          %s649 = sshll.u32 %s639, 4
          %s650 = int_to_ptr.vmem [resolvable:$true] %s649
          %652 = dma.hbm_to_vmem [thread:$0]  %s648, 16, %s650, [#allocation3]
          %s653 = sld [smem:[#allocation5 + $0x21]]
          %s654 = scalar_lea.hbm %s2, %s653
          %s655 = scalar_lea.vmem [#allocation2], 12
          // Predicated region
          $region161: #{tpu_custom_call.1} parent=27 // pred_check
            _
          $region162: #{tpu_custom_call.1} parent=27 // pred_check_branch
            %657 = sbr.rel target = $region164
          $region163: #{tpu_custom_call.1} parent=27 // pred_region
            %658 = sst [smem:[#allocation10]] [#allocation77]
            %659 = sst [smem:[#allocation11]] [#allocation76]
          $region164: #{tpu_custom_call.1} parent=27 // pred_fallthru
            _
          %661 = shalt.err (0)
          %s663 = sshll.u32 %s654, 4
          %s664 = int_to_ptr.hbm [resolvable:$true] %s663
          %s665 = sshll.u32 %s655, 4
          %s666 = int_to_ptr.vmem [resolvable:$true] %s665
          %668 = dma.hbm_to_vmem [thread:$0]  %s664, 16, %s666, [#allocation3]
          %s669 = sld [smem:[#allocation5 + $0x22]]
          %s670 = scalar_lea.hbm %s2, %s669
          %s671 = scalar_lea.vmem [#allocation2], 20
          // Predicated region
          $region165: #{tpu_custom_call.1} parent=27 // pred_check
            _
          $region166: #{tpu_custom_call.1} parent=27 // pred_check_branch
            %673 = sbr.rel target = $region168
          $region167: #{tpu_custom_call.1} parent=27 // pred_region
            %674 = sst [smem:[#allocation10]] [#allocation79]
            %675 = sst [smem:[#allocation11]] [#allocation78]
          $region168: #{tpu_custom_call.1} parent=27 // pred_fallthru
            _
          %677 = shalt.err (0)
          %s679 = sshll.u32 %s670, 4
          %s680 = int_to_ptr.hbm [resolvable:$true] %s679
          %s681 = sshll.u32 %s671, 4
          %s682 = int_to_ptr.vmem [resolvable:$true] %s681
          %684 = dma.hbm_to_vmem [thread:$0]  %s680, 16, %s682, [#allocation3]
          %s685 = sld [smem:[#allocation5 + $0x23]]
          %s686 = scalar_lea.hbm %s2, %s685
          %s687 = scalar_lea.vmem [#allocation2], 28
          // Predicated region
          $region169: #{tpu_custom_call.1} parent=27 // pred_check
            _
          $region170: #{tpu_custom_call.1} parent=27 // pred_check_branch
            %689 = sbr.rel target = $region172
          $region171: #{tpu_custom_call.1} parent=27 // pred_region
            %690 = sst [smem:[#allocation10]] [#allocation81]
            %691 = sst [smem:[#allocation11]] [#allocation80]
          $region172: #{tpu_custom_call.1} parent=27 // pred_fallthru
            _
          %693 = shalt.err (0)
          %s695 = sshll.u32 %s686, 4
          %s696 = int_to_ptr.hbm [resolvable:$true] %s695
          %s697 = sshll.u32 %s687, 4
          %s698 = int_to_ptr.vmem [resolvable:$true] %s697
          %700 = dma.hbm_to_vmem [thread:$0]  %s696, 16, %s698, [#allocation3]
          %s701 = sld [smem:[#allocation5 + $0x24]]
          %s702 = scalar_lea.hbm %s2, %s701
          %s703 = scalar_lea.vmem [#allocation2], 36
          // Predicated region
          $region173: #{tpu_custom_call.1} parent=27 // pred_check
            _
          $region174: #{tpu_custom_call.1} parent=27 // pred_check_branch
            %705 = sbr.rel target = $region176
          $region175: #{tpu_custom_call.1} parent=27 // pred_region
            %706 = sst [smem:[#allocation10]] [#allocation83]
            %707 = sst [smem:[#allocation11]] [#allocation82]
          $region176: #{tpu_custom_call.1} parent=27 // pred_fallthru
            _
          %709 = shalt.err (0)
          %s711 = sshll.u32 %s702, 4
          %s712 = int_to_ptr.hbm [resolvable:$true] %s711
          %s713 = sshll.u32 %s703, 4
          %s714 = int_to_ptr.vmem [resolvable:$true] %s713
          %716 = dma.hbm_to_vmem [thread:$0]  %s712, 16, %s714, [#allocation3]
          %s717 = sld [smem:[#allocation5 + $0x25]]
          %s718 = scalar_lea.hbm %s2, %s717
          %s719 = scalar_lea.vmem [#allocation2], 44
          // Predicated region
          $region177: #{tpu_custom_call.1} parent=27 // pred_check
            _
          $region178: #{tpu_custom_call.1} parent=27 // pred_check_branch
            %721 = sbr.rel target = $region180
          $region179: #{tpu_custom_call.1} parent=27 // pred_region
            %722 = sst [smem:[#allocation10]] [#allocation85]
            %723 = sst [smem:[#allocation11]] [#allocation84]
          $region180: #{tpu_custom_call.1} parent=27 // pred_fallthru
            _
          %725 = shalt.err (0)
          %s727 = sshll.u32 %s718, 4
          %s728 = int_to_ptr.hbm [resolvable:$true] %s727
          %s729 = sshll.u32 %s719, 4
          %s730 = int_to_ptr.vmem [resolvable:$true] %s729
          %732 = dma.hbm_to_vmem [thread:$0]  %s728, 16, %s730, [#allocation3]
          %s733 = sld [smem:[#allocation5 + $0x26]]
          %s734 = scalar_lea.hbm %s2, %s733
          %s735 = scalar_lea.vmem [#allocation2], 52
          // Predicated region
          $region181: #{tpu_custom_call.1} parent=27 // pred_check
            _
          $region182: #{tpu_custom_call.1} parent=27 // pred_check_branch
            %737 = sbr.rel target = $region184
          $region183: #{tpu_custom_call.1} parent=27 // pred_region
            %738 = sst [smem:[#allocation10]] [#allocation87]
            %739 = sst [smem:[#allocation11]] [#allocation86]
          $region184: #{tpu_custom_call.1} parent=27 // pred_fallthru
            _
          %741 = shalt.err (0)
          %s743 = sshll.u32 %s734, 4
          %s744 = int_to_ptr.hbm [resolvable:$true] %s743
          %s745 = sshll.u32 %s735, 4
          %s746 = int_to_ptr.vmem [resolvable:$true] %s745
          %748 = dma.hbm_to_vmem [thread:$0]  %s744, 16, %s746, [#allocation3]
          %s749 = sld [smem:[#allocation5 + $0x27]]
          %s750 = scalar_lea.hbm %s2, %s749
          %s751 = scalar_lea.vmem [#allocation2], 60
          // Predicated region
          $region185: #{tpu_custom_call.1} parent=27 // pred_check
            _
          $region186: #{tpu_custom_call.1} parent=27 // pred_check_branch
            %753 = sbr.rel target = $region188
          $region187: #{tpu_custom_call.1} parent=27 // pred_region
            %754 = sst [smem:[#allocation10]] [#allocation89]
            %755 = sst [smem:[#allocation11]] [#allocation88]
          $region188: #{tpu_custom_call.1} parent=27 // pred_fallthru
            _
          %757 = shalt.err (0)
          %s759 = sshll.u32 %s750, 4
          %s760 = int_to_ptr.hbm [resolvable:$true] %s759
          %s761 = sshll.u32 %s751, 4
          %s762 = int_to_ptr.vmem [resolvable:$true] %s761
          %764 = dma.hbm_to_vmem [thread:$0]  %s760, 16, %s762, [#allocation3]
          %s765 = sld [smem:[#allocation5 + $0x28]]
          %s766 = scalar_lea.hbm %s2, %s765
          %s767 = scalar_lea.vmem [#allocation2], 5
          // Predicated region
          $region189: #{tpu_custom_call.1} parent=27 // pred_check
            _
          $region190: #{tpu_custom_call.1} parent=27 // pred_check_branch
            %769 = sbr.rel target = $region192
          $region191: #{tpu_custom_call.1} parent=27 // pred_region
            %770 = sst [smem:[#allocation10]] [#allocation91]
            %771 = sst [smem:[#allocation11]] [#allocation90]
          $region192: #{tpu_custom_call.1} parent=27 // pred_fallthru
            _
          %773 = shalt.err (0)
          %s775 = sshll.u32 %s766, 4
          %s776 = int_to_ptr.hbm [resolvable:$true] %s775
          %s777 = sshll.u32 %s767, 4
          %s778 = int_to_ptr.vmem [resolvable:$true] %s777
          %780 = dma.hbm_to_vmem [thread:$0]  %s776, 16, %s778, [#allocation3]
          %s781 = sld [smem:[#allocation5 + $0x29]]
          %s782 = scalar_lea.hbm %s2, %s781
          %s783 = scalar_lea.vmem [#allocation2], 13
          // Predicated region
          $region193: #{tpu_custom_call.1} parent=27 // pred_check
            _
          $region194: #{tpu_custom_call.1} parent=27 // pred_check_branch
            %785 = sbr.rel target = $region196
          $region195: #{tpu_custom_call.1} parent=27 // pred_region
            %786 = sst [smem:[#allocation10]] [#allocation93]
            %787 = sst [smem:[#allocation11]] [#allocation92]
          $region196: #{tpu_custom_call.1} parent=27 // pred_fallthru
            _
          %789 = shalt.err (0)
          %s791 = sshll.u32 %s782, 4
          %s792 = int_to_ptr.hbm [resolvable:$true] %s791
          %s793 = sshll.u32 %s783, 4
          %s794 = int_to_ptr.vmem [resolvable:$true] %s793
          %796 = dma.hbm_to_vmem [thread:$0]  %s792, 16, %s794, [#allocation3]
          %s797 = sld [smem:[#allocation5 + $0x2a]]
          %s798 = scalar_lea.hbm %s2, %s797
          %s799 = scalar_lea.vmem [#allocation2], 21
          // Predicated region
          $region197: #{tpu_custom_call.1} parent=27 // pred_check
            _
          $region198: #{tpu_custom_call.1} parent=27 // pred_check_branch
            %801 = sbr.rel target = $region200
          $region199: #{tpu_custom_call.1} parent=27 // pred_region
            %802 = sst [smem:[#allocation10]] [#allocation95]
            %803 = sst [smem:[#allocation11]] [#allocation94]
          $region200: #{tpu_custom_call.1} parent=27 // pred_fallthru
            _
          %805 = shalt.err (0)
          %s807 = sshll.u32 %s798, 4
          %s808 = int_to_ptr.hbm [resolvable:$true] %s807
          %s809 = sshll.u32 %s799, 4
          %s810 = int_to_ptr.vmem [resolvable:$true] %s809
          %812 = dma.hbm_to_vmem [thread:$0]  %s808, 16, %s810, [#allocation3]
          %s813 = sld [smem:[#allocation5 + $0x2b]]
          %s814 = scalar_lea.hbm %s2, %s813
          %s815 = scalar_lea.vmem [#allocation2], 29
          // Predicated region
          $region201: #{tpu_custom_call.1} parent=27 // pred_check
            _
          $region202: #{tpu_custom_call.1} parent=27 // pred_check_branch
            %817 = sbr.rel target = $region204
          $region203: #{tpu_custom_call.1} parent=27 // pred_region
            %818 = sst [smem:[#allocation10]] [#allocation97]
            %819 = sst [smem:[#allocation11]] [#allocation96]
          $region204: #{tpu_custom_call.1} parent=27 // pred_fallthru
            _
          %821 = shalt.err (0)
          %s823 = sshll.u32 %s814, 4
          %s824 = int_to_ptr.hbm [resolvable:$true] %s823
          %s825 = sshll.u32 %s815, 4
          %s826 = int_to_ptr.vmem [resolvable:$true] %s825
          %828 = dma.hbm_to_vmem [thread:$0]  %s824, 16, %s826, [#allocation3]
          %s829 = sld [smem:[#allocation5 + $0x2c]]
          %s830 = scalar_lea.hbm %s2, %s829
          %s831 = scalar_lea.vmem [#allocation2], 37
          // Predicated region
          $region205: #{tpu_custom_call.1} parent=27 // pred_check
            _
          $region206: #{tpu_custom_call.1} parent=27 // pred_check_branch
            %833 = sbr.rel target = $region208
          $region207: #{tpu_custom_call.1} parent=27 // pred_region
            %834 = sst [smem:[#allocation10]] [#allocation99]
            %835 = sst [smem:[#allocation11]] [#allocation98]
          $region208: #{tpu_custom_call.1} parent=27 // pred_fallthru
            _
          %837 = shalt.err (0)
          %s839 = sshll.u32 %s830, 4
          %s840 = int_to_ptr.hbm [resolvable:$true] %s839
          %s841 = sshll.u32 %s831, 4
          %s842 = int_to_ptr.vmem [resolvable:$true] %s841
          %844 = dma.hbm_to_vmem [thread:$0]  %s840, 16, %s842, [#allocation3]
          %s845 = sld [smem:[#allocation5 + $0x2d]]
          %s846 = scalar_lea.hbm %s2, %s845
          %s847 = scalar_lea.vmem [#allocation2], 45
          // Predicated region
          $region209: #{tpu_custom_call.1} parent=27 // pred_check
            _
          $region210: #{tpu_custom_call.1} parent=27 // pred_check_branch
            %849 = sbr.rel target = $region212
          $region211: #{tpu_custom_call.1} parent=27 // pred_region
            %850 = sst [smem:[#allocation10]] [#allocation101]
            %851 = sst [smem:[#allocation11]] [#allocation100]
          $region212: #{tpu_custom_call.1} parent=27 // pred_fallthru
            _
          %853 = shalt.err (0)
          %s855 = sshll.u32 %s846, 4
          %s856 = int_to_ptr.hbm [resolvable:$true] %s855
          %s857 = sshll.u32 %s847, 4
          %s858 = int_to_ptr.vmem [resolvable:$true] %s857
          %860 = dma.hbm_to_vmem [thread:$0]  %s856, 16, %s858, [#allocation3]
          %s861 = sld [smem:[#allocation5 + $0x2e]]
          %s862 = scalar_lea.hbm %s2, %s861
          %s863 = scalar_lea.vmem [#allocation2], 53
          // Predicated region
          $region213: #{tpu_custom_call.1} parent=27 // pred_check
            _
          $region214: #{tpu_custom_call.1} parent=27 // pred_check_branch
            %865 = sbr.rel target = $region216
          $region215: #{tpu_custom_call.1} parent=27 // pred_region
            %866 = sst [smem:[#allocation10]] [#allocation103]
            %867 = sst [smem:[#allocation11]] [#allocation102]
          $region216: #{tpu_custom_call.1} parent=27 // pred_fallthru
            _
          %869 = shalt.err (0)
          %s871 = sshll.u32 %s862, 4
          %s872 = int_to_ptr.hbm [resolvable:$true] %s871
          %s873 = sshll.u32 %s863, 4
          %s874 = int_to_ptr.vmem [resolvable:$true] %s873
          %876 = dma.hbm_to_vmem [thread:$0]  %s872, 16, %s874, [#allocation3]
          %s877 = sld [smem:[#allocation5 + $0x2f]]
          %s878 = scalar_lea.hbm %s2, %s877
          %s879 = scalar_lea.vmem [#allocation2], 61
          // Predicated region
          $region217: #{tpu_custom_call.1} parent=27 // pred_check
            _
          $region218: #{tpu_custom_call.1} parent=27 // pred_check_branch
            %881 = sbr.rel target = $region220
          $region219: #{tpu_custom_call.1} parent=27 // pred_region
            %882 = sst [smem:[#allocation10]] [#allocation105]
            %883 = sst [smem:[#allocation11]] [#allocation104]
          $region220: #{tpu_custom_call.1} parent=27 // pred_fallthru
            _
          %885 = shalt.err (0)
          %s887 = sshll.u32 %s878, 4
          %s888 = int_to_ptr.hbm [resolvable:$true] %s887
          %s889 = sshll.u32 %s879, 4
          %s890 = int_to_ptr.vmem [resolvable:$true] %s889
          %892 = dma.hbm_to_vmem [thread:$0]  %s888, 16, %s890, [#allocation3]
          %s893 = sld [smem:[#allocation5 + $0x30]]
          %s894 = scalar_lea.hbm %s2, %s893
          %s895 = scalar_lea.vmem [#allocation2], 6
          // Predicated region
          $region221: #{tpu_custom_call.1} parent=27 // pred_check
            _
          $region222: #{tpu_custom_call.1} parent=27 // pred_check_branch
            %897 = sbr.rel target = $region224
          $region223: #{tpu_custom_call.1} parent=27 // pred_region
            %898 = sst [smem:[#allocation10]] [#allocation107]
            %899 = sst [smem:[#allocation11]] [#allocation106]
          $region224: #{tpu_custom_call.1} parent=27 // pred_fallthru
            _
          %901 = shalt.err (0)
          %s903 = sshll.u32 %s894, 4
          %s904 = int_to_ptr.hbm [resolvable:$true] %s903
          %s905 = sshll.u32 %s895, 4
          %s906 = int_to_ptr.vmem [resolvable:$true] %s905
          %908 = dma.hbm_to_vmem [thread:$0]  %s904, 16, %s906, [#allocation3]
          %s909 = sld [smem:[#allocation5 + $0x31]]
          %s910 = scalar_lea.hbm %s2, %s909
          %s911 = scalar_lea.vmem [#allocation2], 14
          // Predicated region
          $region225: #{tpu_custom_call.1} parent=27 // pred_check
            _
          $region226: #{tpu_custom_call.1} parent=27 // pred_check_branch
            %913 = sbr.rel target = $region228
          $region227: #{tpu_custom_call.1} parent=27 // pred_region
            %914 = sst [smem:[#allocation10]] [#allocation109]
            %915 = sst [smem:[#allocation11]] [#allocation108]
          $region228: #{tpu_custom_call.1} parent=27 // pred_fallthru
            _
          %917 = shalt.err (0)
          %s919 = sshll.u32 %s910, 4
          %s920 = int_to_ptr.hbm [resolvable:$true] %s919
          %s921 = sshll.u32 %s911, 4
          %s922 = int_to_ptr.vmem [resolvable:$true] %s921
          %924 = dma.hbm_to_vmem [thread:$0]  %s920, 16, %s922, [#allocation3]
          %s925 = sld [smem:[#allocation5 + $0x32]]
          %s926 = scalar_lea.hbm %s2, %s925
          %s927 = scalar_lea.vmem [#allocation2], 22
          // Predicated region
          $region229: #{tpu_custom_call.1} parent=27 // pred_check
            _
          $region230: #{tpu_custom_call.1} parent=27 // pred_check_branch
            %929 = sbr.rel target = $region232
          $region231: #{tpu_custom_call.1} parent=27 // pred_region
            %930 = sst [smem:[#allocation10]] [#allocation111]
            %931 = sst [smem:[#allocation11]] [#allocation110]
          $region232: #{tpu_custom_call.1} parent=27 // pred_fallthru
            _
          %933 = shalt.err (0)
          %s935 = sshll.u32 %s926, 4
          %s936 = int_to_ptr.hbm [resolvable:$true] %s935
          %s937 = sshll.u32 %s927, 4
          %s938 = int_to_ptr.vmem [resolvable:$true] %s937
          %940 = dma.hbm_to_vmem [thread:$0]  %s936, 16, %s938, [#allocation3]
          %s941 = sld [smem:[#allocation5 + $0x33]]
          %s942 = scalar_lea.hbm %s2, %s941
          %s943 = scalar_lea.vmem [#allocation2], 30
          // Predicated region
          $region233: #{tpu_custom_call.1} parent=27 // pred_check
            _
          $region234: #{tpu_custom_call.1} parent=27 // pred_check_branch
            %945 = sbr.rel target = $region236
          $region235: #{tpu_custom_call.1} parent=27 // pred_region
            %946 = sst [smem:[#allocation10]] [#allocation113]
            %947 = sst [smem:[#allocation11]] [#allocation112]
          $region236: #{tpu_custom_call.1} parent=27 // pred_fallthru
            _
          %949 = shalt.err (0)
          %s951 = sshll.u32 %s942, 4
          %s952 = int_to_ptr.hbm [resolvable:$true] %s951
          %s953 = sshll.u32 %s943, 4
          %s954 = int_to_ptr.vmem [resolvable:$true] %s953
          %956 = dma.hbm_to_vmem [thread:$0]  %s952, 16, %s954, [#allocation3]
          %s957 = sld [smem:[#allocation5 + $0x34]]
          %s958 = scalar_lea.hbm %s2, %s957
          %s959 = scalar_lea.vmem [#allocation2], 38
          // Predicated region
          $region237: #{tpu_custom_call.1} parent=27 // pred_check
            _
          $region238: #{tpu_custom_call.1} parent=27 // pred_check_branch
            %961 = sbr.rel target = $region240
          $region239: #{tpu_custom_call.1} parent=27 // pred_region
            %962 = sst [smem:[#allocation10]] [#allocation115]
            %963 = sst [smem:[#allocation11]] [#allocation114]
          $region240: #{tpu_custom_call.1} parent=27 // pred_fallthru
            _
          %965 = shalt.err (0)
          %s967 = sshll.u32 %s958, 4
          %s968 = int_to_ptr.hbm [resolvable:$true] %s967
          %s969 = sshll.u32 %s959, 4
          %s970 = int_to_ptr.vmem [resolvable:$true] %s969
          %972 = dma.hbm_to_vmem [thread:$0]  %s968, 16, %s970, [#allocation3]
          %s973 = sld [smem:[#allocation5 + $0x35]]
          %s974 = scalar_lea.hbm %s2, %s973
          %s975 = scalar_lea.vmem [#allocation2], 46
          // Predicated region
          $region241: #{tpu_custom_call.1} parent=27 // pred_check
            _
          $region242: #{tpu_custom_call.1} parent=27 // pred_check_branch
            %977 = sbr.rel target = $region244
          $region243: #{tpu_custom_call.1} parent=27 // pred_region
            %978 = sst [smem:[#allocation10]] [#allocation117]
            %979 = sst [smem:[#allocation11]] [#allocation116]
          $region244: #{tpu_custom_call.1} parent=27 // pred_fallthru
            _
          %981 = shalt.err (0)
          %s983 = sshll.u32 %s974, 4
          %s984 = int_to_ptr.hbm [resolvable:$true] %s983
          %s985 = sshll.u32 %s975, 4
          %s986 = int_to_ptr.vmem [resolvable:$true] %s985
          %988 = dma.hbm_to_vmem [thread:$0]  %s984, 16, %s986, [#allocation3]
          %s989 = sld [smem:[#allocation5 + $0x36]]
          %s990 = scalar_lea.hbm %s2, %s989
          %s991 = scalar_lea.vmem [#allocation2], 54
          // Predicated region
          $region245: #{tpu_custom_call.1} parent=27 // pred_check
            _
          $region246: #{tpu_custom_call.1} parent=27 // pred_check_branch
            %993 = sbr.rel target = $region248
          $region247: #{tpu_custom_call.1} parent=27 // pred_region
            %994 = sst [smem:[#allocation10]] [#allocation119]
            %995 = sst [smem:[#allocation11]] [#allocation118]
          $region248: #{tpu_custom_call.1} parent=27 // pred_fallthru
            _
          %997 = shalt.err (0)
          %s999 = sshll.u32 %s990, 4
          %s1000 = int_to_ptr.hbm [resolvable:$true] %s999
          %s1001 = sshll.u32 %s991, 4
          %s1002 = int_to_ptr.vmem [resolvable:$true] %s1001
          %1004 = dma.hbm_to_vmem [thread:$0]  %s1000, 16, %s1002, [#allocation3]
          %s1005 = sld [smem:[#allocation5 + $0x37]]
          %s1006 = scalar_lea.hbm %s2, %s1005
          %s1007 = scalar_lea.vmem [#allocation2], 62
          // Predicated region
          $region249: #{tpu_custom_call.1} parent=27 // pred_check
            _
          $region250: #{tpu_custom_call.1} parent=27 // pred_check_branch
            %1009 = sbr.rel target = $region252
          $region251: #{tpu_custom_call.1} parent=27 // pred_region
            %1010 = sst [smem:[#allocation10]] [#allocation121]
            %1011 = sst [smem:[#allocation11]] [#allocation120]
          $region252: #{tpu_custom_call.1} parent=27 // pred_fallthru
            _
          %1013 = shalt.err (0)
          %s1015 = sshll.u32 %s1006, 4
          %s1016 = int_to_ptr.hbm [resolvable:$true] %s1015
          %s1017 = sshll.u32 %s1007, 4
          %s1018 = int_to_ptr.vmem [resolvable:$true] %s1017
          %1020 = dma.hbm_to_vmem [thread:$0]  %s1016, 16, %s1018, [#allocation3]
          %s1021 = sld [smem:[#allocation5 + $0x38]]
          %s1022 = scalar_lea.hbm %s2, %s1021
          %s1023 = scalar_lea.vmem [#allocation2], 7
          // Predicated region
          $region253: #{tpu_custom_call.1} parent=27 // pred_check
            _
          $region254: #{tpu_custom_call.1} parent=27 // pred_check_branch
            %1025 = sbr.rel target = $region256
          $region255: #{tpu_custom_call.1} parent=27 // pred_region
            %1026 = sst [smem:[#allocation10]] [#allocation123]
            %1027 = sst [smem:[#allocation11]] [#allocation122]
          $region256: #{tpu_custom_call.1} parent=27 // pred_fallthru
            _
          %1029 = shalt.err (0)
          %s1031 = sshll.u32 %s1022, 4
          %s1032 = int_to_ptr.hbm [resolvable:$true] %s1031
          %s1033 = sshll.u32 %s1023, 4
          %s1034 = int_to_ptr.vmem [resolvable:$true] %s1033
          %1036 = dma.hbm_to_vmem [thread:$0]  %s1032, 16, %s1034, [#allocation3]
          %s1037 = sld [smem:[#allocation5 + $0x39]]
          %s1038 = scalar_lea.hbm %s2, %s1037
          %s1039 = scalar_lea.vmem [#allocation2], 15
          // Predicated region
          $region257: #{tpu_custom_call.1} parent=27 // pred_check
            _
          $region258: #{tpu_custom_call.1} parent=27 // pred_check_branch
            %1041 = sbr.rel target = $region260
          $region259: #{tpu_custom_call.1} parent=27 // pred_region
            %1042 = sst [smem:[#allocation10]] [#allocation125]
            %1043 = sst [smem:[#allocation11]] [#allocation124]
          $region260: #{tpu_custom_call.1} parent=27 // pred_fallthru
            _
          %1045 = shalt.err (0)
          %s1047 = sshll.u32 %s1038, 4
          %s1048 = int_to_ptr.hbm [resolvable:$true] %s1047
          %s1049 = sshll.u32 %s1039, 4
          %s1050 = int_to_ptr.vmem [resolvable:$true] %s1049
          %1052 = dma.hbm_to_vmem [thread:$0]  %s1048, 16, %s1050, [#allocation3]
          %s1053 = sld [smem:[#allocation5 + $0x3a]]
          %s1054 = scalar_lea.hbm %s2, %s1053
          %s1055 = scalar_lea.vmem [#allocation2], 23
          // Predicated region
          $region261: #{tpu_custom_call.1} parent=27 // pred_check
            _
          $region262: #{tpu_custom_call.1} parent=27 // pred_check_branch
            %1057 = sbr.rel target = $region264
          $region263: #{tpu_custom_call.1} parent=27 // pred_region
            %1058 = sst [smem:[#allocation10]] [#allocation127]
            %1059 = sst [smem:[#allocation11]] [#allocation126]
          $region264: #{tpu_custom_call.1} parent=27 // pred_fallthru
            _
          %1061 = shalt.err (0)
          %s1063 = sshll.u32 %s1054, 4
          %s1064 = int_to_ptr.hbm [resolvable:$true] %s1063
          %s1065 = sshll.u32 %s1055, 4
          %s1066 = int_to_ptr.vmem [resolvable:$true] %s1065
          %1068 = dma.hbm_to_vmem [thread:$0]  %s1064, 16, %s1066, [#allocation3]
          %s1069 = sld [smem:[#allocation5 + $0x3b]]
          %s1070 = scalar_lea.hbm %s2, %s1069
          %s1071 = scalar_lea.vmem [#allocation2], 31
          // Predicated region
          $region265: #{tpu_custom_call.1} parent=27 // pred_check
            _
          $region266: #{tpu_custom_call.1} parent=27 // pred_check_branch
            %1073 = sbr.rel target = $region268
          $region267: #{tpu_custom_call.1} parent=27 // pred_region
            %1074 = sst [smem:[#allocation10]] [#allocation129]
            %1075 = sst [smem:[#allocation11]] [#allocation128]
          $region268: #{tpu_custom_call.1} parent=27 // pred_fallthru
            _
          %1077 = shalt.err (0)
          %s1079 = sshll.u32 %s1070, 4
          %s1080 = int_to_ptr.hbm [resolvable:$true] %s1079
          %s1081 = sshll.u32 %s1071, 4
          %s1082 = int_to_ptr.vmem [resolvable:$true] %s1081
          %1084 = dma.hbm_to_vmem [thread:$0]  %s1080, 16, %s1082, [#allocation3]
          %s1085 = sld [smem:[#allocation5 + $0x3c]]
          %s1086 = scalar_lea.hbm %s2, %s1085
          %s1087 = scalar_lea.vmem [#allocation2], 39
          // Predicated region
          $region269: #{tpu_custom_call.1} parent=27 // pred_check
            _
          $region270: #{tpu_custom_call.1} parent=27 // pred_check_branch
            %1089 = sbr.rel target = $region272
          $region271: #{tpu_custom_call.1} parent=27 // pred_region
            %1090 = sst [smem:[#allocation10]] [#allocation131]
            %1091 = sst [smem:[#allocation11]] [#allocation130]
          $region272: #{tpu_custom_call.1} parent=27 // pred_fallthru
            _
          %1093 = shalt.err (0)
          %s1095 = sshll.u32 %s1086, 4
          %s1096 = int_to_ptr.hbm [resolvable:$true] %s1095
          %s1097 = sshll.u32 %s1087, 4
          %s1098 = int_to_ptr.vmem [resolvable:$true] %s1097
          %1100 = dma.hbm_to_vmem [thread:$0]  %s1096, 16, %s1098, [#allocation3]
          %s1101 = sld [smem:[#allocation5 + $0x3d]]
          %s1102 = scalar_lea.hbm %s2, %s1101
          %s1103 = scalar_lea.vmem [#allocation2], 47
          // Predicated region
          $region273: #{tpu_custom_call.1} parent=27 // pred_check
            _
          $region274: #{tpu_custom_call.1} parent=27 // pred_check_branch
            %1105 = sbr.rel target = $region276
          $region275: #{tpu_custom_call.1} parent=27 // pred_region
            %1106 = sst [smem:[#allocation10]] [#allocation133]
            %1107 = sst [smem:[#allocation11]] [#allocation132]
          $region276: #{tpu_custom_call.1} parent=27 // pred_fallthru
            _
          %1109 = shalt.err (0)
          %s1111 = sshll.u32 %s1102, 4
          %s1112 = int_to_ptr.hbm [resolvable:$true] %s1111
          %s1113 = sshll.u32 %s1103, 4
          %s1114 = int_to_ptr.vmem [resolvable:$true] %s1113
          %1116 = dma.hbm_to_vmem [thread:$0]  %s1112, 16, %s1114, [#allocation3]
          %s1117 = sld [smem:[#allocation5 + $0x3e]]
          %s1118 = scalar_lea.hbm %s2, %s1117
          %s1119 = scalar_lea.vmem [#allocation2], 55
          // Predicated region
          $region277: #{tpu_custom_call.1} parent=27 // pred_check
            _
          $region278: #{tpu_custom_call.1} parent=27 // pred_check_branch
            %1121 = sbr.rel target = $region280
          $region279: #{tpu_custom_call.1} parent=27 // pred_region
            %1122 = sst [smem:[#allocation10]] [#allocation135]
            %1123 = sst [smem:[#allocation11]] [#allocation134]
          $region280: #{tpu_custom_call.1} parent=27 // pred_fallthru
            _
          %1125 = shalt.err (0)
          %s1127 = sshll.u32 %s1118, 4
          %s1128 = int_to_ptr.hbm [resolvable:$true] %s1127
          %s1129 = sshll.u32 %s1119, 4
          %s1130 = int_to_ptr.vmem [resolvable:$true] %s1129
          %1132 = dma.hbm_to_vmem [thread:$0]  %s1128, 16, %s1130, [#allocation3]
          %s1133 = sld [smem:[#allocation5 + $0x3f]]
          %s1134 = scalar_lea.hbm %s2, %s1133
          %s1135 = scalar_lea.vmem [#allocation2], 63
          // Predicated region
          $region281: #{tpu_custom_call.1} parent=27 // pred_check
            _
          $region282: #{tpu_custom_call.1} parent=27 // pred_check_branch
            %1137 = sbr.rel target = $region284
          $region283: #{tpu_custom_call.1} parent=27 // pred_region
            %1138 = sst [smem:[#allocation10]] [#allocation137]
            %1139 = sst [smem:[#allocation11]] [#allocation136]
          $region284: #{tpu_custom_call.1} parent=27 // pred_fallthru
            _
          %1141 = shalt.err (0)
          %s1143 = sshll.u32 %s1134, 4
          %s1144 = int_to_ptr.hbm [resolvable:$true] %s1143
          %s1145 = sshll.u32 %s1135, 4
          %s1146 = int_to_ptr.vmem [resolvable:$true] %s1145
          %1148 = dma.hbm_to_vmem [thread:$0]  %s1144, 16, %s1146, [#allocation3]
        $region28: #{tpu_custom_call.1} parent=23 // pred_fallthru
          _
        %s1149 = sadd.s32 %s25, 1
        %p1150 = scmp.lt.s32.totalorder %s1149, 2
        // Predicated region
        $region285: #{tpu_custom_call.1} parent=23 // pred_check
          %p1151 = pneg %p1150
        $region286: #{tpu_custom_call.1} parent=23 // pred_check_branch
          %1153 = sbr.rel (%p1151) target = $region288
        $region287: #{tpu_custom_call.1} parent=23 // pred_region
          %p1154 = scmp.lt.s32.totalorder %s1149, 0
          %s1155 = ssub.s32 0, %s1149
          %s1156 = scalar_select %p1154, %s1155, %s1149
          %s1157 = sand.u32 %s1156, 1
          %s1158 = ssub.s32 0, %s1157
          %s1159 = scalar_select %p1154, %s1158, %s1157
          %p1160 = scmp.ne.s32.totalorder %s1159, 0
          %p1161 = scmp.lt.s32.totalorder %s1159, 0
          %p1162 = pnand %p1161, %p1160
          %p1163 = pneg %p1162
          %s1164 = sadd.s32 %s1159, 2
          %s1165 = scalar_select %p1163, %s1164, %s1159
          %s1166 = smul.u32 %s1149, 64
          %s1167 = sld [smem:[#allocation5 + %s1166]]
          %s1168 = scalar_lea.hbm %s2, %s1167
          %s1169 = smul.u32 %s1165, 64
          %s1170 = scalar_lea.vmem [#allocation2], %s1169
          %s1171 = scalar_lea.sflag [#allocation3], %s1165
          // Predicated region
          $region289: #{tpu_custom_call.1} parent=287 // pred_check
            _
          $region290: #{tpu_custom_call.1} parent=287 // pred_check_branch
            %1173 = sbr.rel target = $region292
          $region291: #{tpu_custom_call.1} parent=287 // pred_region
            %1174 = sst [smem:[#allocation10]] [#allocation139]
            %1175 = sst [smem:[#allocation11]] [#allocation138]
          $region292: #{tpu_custom_call.1} parent=287 // pred_fallthru
            _
          %1177 = shalt.err (0)
          %s1179 = sshll.u32 %s1168, 4
          %s1180 = int_to_ptr.hbm [resolvable:$true] %s1179
          %s1181 = sshll.u32 %s1170, 4
          %s1182 = int_to_ptr.vmem [resolvable:$true] %s1181
          %1184 = dma.hbm_to_vmem [thread:$0]  %s1180, 16, %s1182, %s1171
          %s1185 = sadd.s32 %s1166, 1
          %s1186 = sld [smem:[#allocation5 + %s1185]]
          %s1187 = scalar_lea.hbm %s2, %s1186
          %s1188 = sadd.s32 8, %s1169
          %s1189 = scalar_lea.vmem [#allocation2], %s1188
          // Predicated region
          $region293: #{tpu_custom_call.1} parent=287 // pred_check
            _
          $region294: #{tpu_custom_call.1} parent=287 // pred_check_branch
            %1191 = sbr.rel target = $region296
          $region295: #{tpu_custom_call.1} parent=287 // pred_region
            %1192 = sst [smem:[#allocation10]] [#allocation141]
            %1193 = sst [smem:[#allocation11]] [#allocation140]
          $region296: #{tpu_custom_call.1} parent=287 // pred_fallthru
            _
          %1195 = shalt.err (0)
          %s1197 = sshll.u32 %s1187, 4
          %s1198 = int_to_ptr.hbm [resolvable:$true] %s1197
          %s1199 = sshll.u32 %s1189, 4
          %s1200 = int_to_ptr.vmem [resolvable:$true] %s1199
          %1202 = dma.hbm_to_vmem [thread:$0]  %s1198, 16, %s1200, %s1171
          %s1203 = sadd.s32 %s1166, 2
          %s1204 = sld [smem:[#allocation5 + %s1203]]
          %s1205 = scalar_lea.hbm %s2, %s1204
          %s1206 = sadd.s32 16, %s1169
          %s1207 = scalar_lea.vmem [#allocation2], %s1206
          // Predicated region
          $region297: #{tpu_custom_call.1} parent=287 // pred_check
            _
          $region298: #{tpu_custom_call.1} parent=287 // pred_check_branch
            %1209 = sbr.rel target = $region300
          $region299: #{tpu_custom_call.1} parent=287 // pred_region
            %1210 = sst [smem:[#allocation10]] [#allocation143]
            %1211 = sst [smem:[#allocation11]] [#allocation142]
          $region300: #{tpu_custom_call.1} parent=287 // pred_fallthru
            _
          %1213 = shalt.err (0)
          %s1215 = sshll.u32 %s1205, 4
          %s1216 = int_to_ptr.hbm [resolvable:$true] %s1215
          %s1217 = sshll.u32 %s1207, 4
          %s1218 = int_to_ptr.vmem [resolvable:$true] %s1217
          %1220 = dma.hbm_to_vmem [thread:$0]  %s1216, 16, %s1218, %s1171
          %s1221 = sadd.s32 %s1166, 3
          %s1222 = sld [smem:[#allocation5 + %s1221]]
          %s1223 = scalar_lea.hbm %s2, %s1222
          %s1224 = sadd.s32 24, %s1169
          %s1225 = scalar_lea.vmem [#allocation2], %s1224
          // Predicated region
          $region301: #{tpu_custom_call.1} parent=287 // pred_check
            _
          $region302: #{tpu_custom_call.1} parent=287 // pred_check_branch
            %1227 = sbr.rel target = $region304
          $region303: #{tpu_custom_call.1} parent=287 // pred_region
            %1228 = sst [smem:[#allocation10]] [#allocation145]
            %1229 = sst [smem:[#allocation11]] [#allocation144]
          $region304: #{tpu_custom_call.1} parent=287 // pred_fallthru
            _
          %1231 = shalt.err (0)
          %s1233 = sshll.u32 %s1223, 4
          %s1234 = int_to_ptr.hbm [resolvable:$true] %s1233
          %s1235 = sshll.u32 %s1225, 4
          %s1236 = int_to_ptr.vmem [resolvable:$true] %s1235
          %1238 = dma.hbm_to_vmem [thread:$0]  %s1234, 16, %s1236, %s1171
          %s1239 = sadd.s32 %s1166, 4
          %s1240 = sld [smem:[#allocation5 + %s1239]]
          %s1241 = scalar_lea.hbm %s2, %s1240
          %s1242 = sadd.s32 32, %s1169
          %s1243 = scalar_lea.vmem [#allocation2], %s1242
          // Predicated region
          $region305: #{tpu_custom_call.1} parent=287 // pred_check
            _
          $region306: #{tpu_custom_call.1} parent=287 // pred_check_branch
            %1245 = sbr.rel target = $region308
          $region307: #{tpu_custom_call.1} parent=287 // pred_region
            %1246 = sst [smem:[#allocation10]] [#allocation147]
            %1247 = sst [smem:[#allocation11]] [#allocation146]
          $region308: #{tpu_custom_call.1} parent=287 // pred_fallthru
            _
          %1249 = shalt.err (0)
          %s1251 = sshll.u32 %s1241, 4
          %s1252 = int_to_ptr.hbm [resolvable:$true] %s1251
          %s1253 = sshll.u32 %s1243, 4
          %s1254 = int_to_ptr.vmem [resolvable:$true] %s1253
          %1256 = dma.hbm_to_vmem [thread:$0]  %s1252, 16, %s1254, %s1171
          %s1257 = sadd.s32 %s1166, 5
          %s1258 = sld [smem:[#allocation5 + %s1257]]
          %s1259 = scalar_lea.hbm %s2, %s1258
          %s1260 = sadd.s32 40, %s1169
          %s1261 = scalar_lea.vmem [#allocation2], %s1260
          // Predicated region
          $region309: #{tpu_custom_call.1} parent=287 // pred_check
            _
          $region310: #{tpu_custom_call.1} parent=287 // pred_check_branch
            %1263 = sbr.rel target = $region312
          $region311: #{tpu_custom_call.1} parent=287 // pred_region
            %1264 = sst [smem:[#allocation10]] [#allocation149]
            %1265 = sst [smem:[#allocation11]] [#allocation148]
          $region312: #{tpu_custom_call.1} parent=287 // pred_fallthru
            _
          %1267 = shalt.err (0)
          %s1269 = sshll.u32 %s1259, 4
          %s1270 = int_to_ptr.hbm [resolvable:$true] %s1269
          %s1271 = sshll.u32 %s1261, 4
          %s1272 = int_to_ptr.vmem [resolvable:$true] %s1271
          %1274 = dma.hbm_to_vmem [thread:$0]  %s1270, 16, %s1272, %s1171
          %s1275 = sadd.s32 %s1166, 6
          %s1276 = sld [smem:[#allocation5 + %s1275]]
          %s1277 = scalar_lea.hbm %s2, %s1276
          %s1278 = sadd.s32 48, %s1169
          %s1279 = scalar_lea.vmem [#allocation2], %s1278
          // Predicated region
          $region313: #{tpu_custom_call.1} parent=287 // pred_check
            _
          $region314: #{tpu_custom_call.1} parent=287 // pred_check_branch
            %1281 = sbr.rel target = $region316
          $region315: #{tpu_custom_call.1} parent=287 // pred_region
            %1282 = sst [smem:[#allocation10]] [#allocation151]
            %1283 = sst [smem:[#allocation11]] [#allocation150]
          $region316: #{tpu_custom_call.1} parent=287 // pred_fallthru
            _
          %1285 = shalt.err (0)
          %s1287 = sshll.u32 %s1277, 4
          %s1288 = int_to_ptr.hbm [resolvable:$true] %s1287
          %s1289 = sshll.u32 %s1279, 4
          %s1290 = int_to_ptr.vmem [resolvable:$true] %s1289
          %1292 = dma.hbm_to_vmem [thread:$0]  %s1288, 16, %s1290, %s1171
          %s1293 = sadd.s32 %s1166, 7
          %s1294 = sld [smem:[#allocation5 + %s1293]]
          %s1295 = scalar_lea.hbm %s2, %s1294
          %s1296 = sadd.s32 56, %s1169
          %s1297 = scalar_lea.vmem [#allocation2], %s1296
          // Predicated region
          $region317: #{tpu_custom_call.1} parent=287 // pred_check
            _
          $region318: #{tpu_custom_call.1} parent=287 // pred_check_branch
            %1299 = sbr.rel target = $region320
          $region319: #{tpu_custom_call.1} parent=287 // pred_region
            %1300 = sst [smem:[#allocation10]] [#allocation153]
            %1301 = sst [smem:[#allocation11]] [#allocation152]
          $region320: #{tpu_custom_call.1} parent=287 // pred_fallthru
            _
          %1303 = shalt.err (0)
          %s1305 = sshll.u32 %s1295, 4
          %s1306 = int_to_ptr.hbm [resolvable:$true] %s1305
          %s1307 = sshll.u32 %s1297, 4
          %s1308 = int_to_ptr.vmem [resolvable:$true] %s1307
          %1310 = dma.hbm_to_vmem [thread:$0]  %s1306, 16, %s1308, %s1171
          %s1311 = sadd.s32 %s1166, 8
          %s1312 = sld [smem:[#allocation5 + %s1311]]
          %s1313 = scalar_lea.hbm %s2, %s1312
          %s1314 = sadd.s32 1, %s1169
          %s1315 = scalar_lea.vmem [#allocation2], %s1314
          // Predicated region
          $region321: #{tpu_custom_call.1} parent=287 // pred_check
            _
          $region322: #{tpu_custom_call.1} parent=287 // pred_check_branch
            %1317 = sbr.rel target = $region324
          $region323: #{tpu_custom_call.1} parent=287 // pred_region
            %1318 = sst [smem:[#allocation10]] [#allocation155]
            %1319 = sst [smem:[#allocation11]] [#allocation154]
          $region324: #{tpu_custom_call.1} parent=287 // pred_fallthru
            _
          %1321 = shalt.err (0)
          %s1323 = sshll.u32 %s1313, 4
          %s1324 = int_to_ptr.hbm [resolvable:$true] %s1323
          %s1325 = sshll.u32 %s1315, 4
          %s1326 = int_to_ptr.vmem [resolvable:$true] %s1325
          %1328 = dma.hbm_to_vmem [thread:$0]  %s1324, 16, %s1326, %s1171
          %s1329 = sadd.s32 %s1166, 9
          %s1330 = sld [smem:[#allocation5 + %s1329]]
          %s1331 = scalar_lea.hbm %s2, %s1330
          %s1332 = sadd.s32 9, %s1169
          %s1333 = scalar_lea.vmem [#allocation2], %s1332
          // Predicated region
          $region325: #{tpu_custom_call.1} parent=287 // pred_check
            _
          $region326: #{tpu_custom_call.1} parent=287 // pred_check_branch
            %1335 = sbr.rel target = $region328
          $region327: #{tpu_custom_call.1} parent=287 // pred_region
            %1336 = sst [smem:[#allocation10]] [#allocation157]
            %1337 = sst [smem:[#allocation11]] [#allocation156]
          $region328: #{tpu_custom_call.1} parent=287 // pred_fallthru
            _
          %1339 = shalt.err (0)
          %s1341 = sshll.u32 %s1331, 4
          %s1342 = int_to_ptr.hbm [resolvable:$true] %s1341
          %s1343 = sshll.u32 %s1333, 4
          %s1344 = int_to_ptr.vmem [resolvable:$true] %s1343
          %1346 = dma.hbm_to_vmem [thread:$0]  %s1342, 16, %s1344, %s1171
          %s1347 = sadd.s32 %s1166, 10
          %s1348 = sld [smem:[#allocation5 + %s1347]]
          %s1349 = scalar_lea.hbm %s2, %s1348
          %s1350 = sadd.s32 17, %s1169
          %s1351 = scalar_lea.vmem [#allocation2], %s1350
          // Predicated region
          $region329: #{tpu_custom_call.1} parent=287 // pred_check
            _
          $region330: #{tpu_custom_call.1} parent=287 // pred_check_branch
            %1353 = sbr.rel target = $region332
          $region331: #{tpu_custom_call.1} parent=287 // pred_region
            %1354 = sst [smem:[#allocation10]] [#allocation159]
            %1355 = sst [smem:[#allocation11]] [#allocation158]
          $region332: #{tpu_custom_call.1} parent=287 // pred_fallthru
            _
          %1357 = shalt.err (0)
          %s1359 = sshll.u32 %s1349, 4
          %s1360 = int_to_ptr.hbm [resolvable:$true] %s1359
          %s1361 = sshll.u32 %s1351, 4
          %s1362 = int_to_ptr.vmem [resolvable:$true] %s1361
          %1364 = dma.hbm_to_vmem [thread:$0]  %s1360, 16, %s1362, %s1171
          %s1365 = sadd.s32 %s1166, 11
          %s1366 = sld [smem:[#allocation5 + %s1365]]
          %s1367 = scalar_lea.hbm %s2, %s1366
          %s1368 = sadd.s32 25, %s1169
          %s1369 = scalar_lea.vmem [#allocation2], %s1368
          // Predicated region
          $region333: #{tpu_custom_call.1} parent=287 // pred_check
            _
          $region334: #{tpu_custom_call.1} parent=287 // pred_check_branch
            %1371 = sbr.rel target = $region336
          $region335: #{tpu_custom_call.1} parent=287 // pred_region
            %1372 = sst [smem:[#allocation10]] [#allocation161]
            %1373 = sst [smem:[#allocation11]] [#allocation160]
          $region336: #{tpu_custom_call.1} parent=287 // pred_fallthru
            _
          %1375 = shalt.err (0)
          %s1377 = sshll.u32 %s1367, 4
          %s1378 = int_to_ptr.hbm [resolvable:$true] %s1377
          %s1379 = sshll.u32 %s1369, 4
          %s1380 = int_to_ptr.vmem [resolvable:$true] %s1379
          %1382 = dma.hbm_to_vmem [thread:$0]  %s1378, 16, %s1380, %s1171
          %s1383 = sadd.s32 %s1166, 12
          %s1384 = sld [smem:[#allocation5 + %s1383]]
          %s1385 = scalar_lea.hbm %s2, %s1384
          %s1386 = sadd.s32 33, %s1169
          %s1387 = scalar_lea.vmem [#allocation2], %s1386
          // Predicated region
          $region337: #{tpu_custom_call.1} parent=287 // pred_check
            _
          $region338: #{tpu_custom_call.1} parent=287 // pred_check_branch
            %1389 = sbr.rel target = $region340
          $region339: #{tpu_custom_call.1} parent=287 // pred_region
            %1390 = sst [smem:[#allocation10]] [#allocation163]
            %1391 = sst [smem:[#allocation11]] [#allocation162]
          $region340: #{tpu_custom_call.1} parent=287 // pred_fallthru
            _
          %1393 = shalt.err (0)
          %s1395 = sshll.u32 %s1385, 4
          %s1396 = int_to_ptr.hbm [resolvable:$true] %s1395
          %s1397 = sshll.u32 %s1387, 4
          %s1398 = int_to_ptr.vmem [resolvable:$true] %s1397
          %1400 = dma.hbm_to_vmem [thread:$0]  %s1396, 16, %s1398, %s1171
          %s1401 = sadd.s32 %s1166, 13
          %s1402 = sld [smem:[#allocation5 + %s1401]]
          %s1403 = scalar_lea.hbm %s2, %s1402
          %s1404 = sadd.s32 41, %s1169
          %s1405 = scalar_lea.vmem [#allocation2], %s1404
          // Predicated region
          $region341: #{tpu_custom_call.1} parent=287 // pred_check
            _
          $region342: #{tpu_custom_call.1} parent=287 // pred_check_branch
            %1407 = sbr.rel target = $region344
          $region343: #{tpu_custom_call.1} parent=287 // pred_region
            %1408 = sst [smem:[#allocation10]] [#allocation165]
            %1409 = sst [smem:[#allocation11]] [#allocation164]
          $region344: #{tpu_custom_call.1} parent=287 // pred_fallthru
            _
          %1411 = shalt.err (0)
          %s1413 = sshll.u32 %s1403, 4
          %s1414 = int_to_ptr.hbm [resolvable:$true] %s1413
          %s1415 = sshll.u32 %s1405, 4
          %s1416 = int_to_ptr.vmem [resolvable:$true] %s1415
          %1418 = dma.hbm_to_vmem [thread:$0]  %s1414, 16, %s1416, %s1171
          %s1419 = sadd.s32 %s1166, 14
          %s1420 = sld [smem:[#allocation5 + %s1419]]
          %s1421 = scalar_lea.hbm %s2, %s1420
          %s1422 = sadd.s32 49, %s1169
          %s1423 = scalar_lea.vmem [#allocation2], %s1422
          // Predicated region
          $region345: #{tpu_custom_call.1} parent=287 // pred_check
            _
          $region346: #{tpu_custom_call.1} parent=287 // pred_check_branch
            %1425 = sbr.rel target = $region348
          $region347: #{tpu_custom_call.1} parent=287 // pred_region
            %1426 = sst [smem:[#allocation10]] [#allocation167]
            %1427 = sst [smem:[#allocation11]] [#allocation166]
          $region348: #{tpu_custom_call.1} parent=287 // pred_fallthru
            _
          %1429 = shalt.err (0)
          %s1431 = sshll.u32 %s1421, 4
          %s1432 = int_to_ptr.hbm [resolvable:$true] %s1431
          %s1433 = sshll.u32 %s1423, 4
          %s1434 = int_to_ptr.vmem [resolvable:$true] %s1433
          %1436 = dma.hbm_to_vmem [thread:$0]  %s1432, 16, %s1434, %s1171
          %s1437 = sadd.s32 %s1166, 15
          %s1438 = sld [smem:[#allocation5 + %s1437]]
          %s1439 = scalar_lea.hbm %s2, %s1438
          %s1440 = sadd.s32 57, %s1169
          %s1441 = scalar_lea.vmem [#allocation2], %s1440
          // Predicated region
          $region349: #{tpu_custom_call.1} parent=287 // pred_check
            _
          $region350: #{tpu_custom_call.1} parent=287 // pred_check_branch
            %1443 = sbr.rel target = $region352
          $region351: #{tpu_custom_call.1} parent=287 // pred_region
            %1444 = sst [smem:[#allocation10]] [#allocation169]
            %1445 = sst [smem:[#allocation11]] [#allocation168]
          $region352: #{tpu_custom_call.1} parent=287 // pred_fallthru
            _
          %1447 = shalt.err (0)
          %s1449 = sshll.u32 %s1439, 4
          %s1450 = int_to_ptr.hbm [resolvable:$true] %s1449
          %s1451 = sshll.u32 %s1441, 4
          %s1452 = int_to_ptr.vmem [resolvable:$true] %s1451
          %1454 = dma.hbm_to_vmem [thread:$0]  %s1450, 16, %s1452, %s1171
          %s1455 = sadd.s32 %s1166, 16
          %s1456 = sld [smem:[#allocation5 + %s1455]]
          %s1457 = scalar_lea.hbm %s2, %s1456
          %s1458 = sadd.s32 2, %s1169
          %s1459 = scalar_lea.vmem [#allocation2], %s1458
          // Predicated region
          $region353: #{tpu_custom_call.1} parent=287 // pred_check
            _
          $region354: #{tpu_custom_call.1} parent=287 // pred_check_branch
            %1461 = sbr.rel target = $region356
          $region355: #{tpu_custom_call.1} parent=287 // pred_region
            %1462 = sst [smem:[#allocation10]] [#allocation171]
            %1463 = sst [smem:[#allocation11]] [#allocation170]
          $region356: #{tpu_custom_call.1} parent=287 // pred_fallthru
            _
          %1465 = shalt.err (0)
          %s1467 = sshll.u32 %s1457, 4
          %s1468 = int_to_ptr.hbm [resolvable:$true] %s1467
          %s1469 = sshll.u32 %s1459, 4
          %s1470 = int_to_ptr.vmem [resolvable:$true] %s1469
          %1472 = dma.hbm_to_vmem [thread:$0]  %s1468, 16, %s1470, %s1171
          %s1473 = sadd.s32 %s1166, 17
          %s1474 = sld [smem:[#allocation5 + %s1473]]
          %s1475 = scalar_lea.hbm %s2, %s1474
          %s1476 = sadd.s32 10, %s1169
          %s1477 = scalar_lea.vmem [#allocation2], %s1476
          // Predicated region
          $region357: #{tpu_custom_call.1} parent=287 // pred_check
            _
          $region358: #{tpu_custom_call.1} parent=287 // pred_check_branch
            %1479 = sbr.rel target = $region360
          $region359: #{tpu_custom_call.1} parent=287 // pred_region
            %1480 = sst [smem:[#allocation10]] [#allocation173]
            %1481 = sst [smem:[#allocation11]] [#allocation172]
          $region360: #{tpu_custom_call.1} parent=287 // pred_fallthru
            _
          %1483 = shalt.err (0)
          %s1485 = sshll.u32 %s1475, 4
          %s1486 = int_to_ptr.hbm [resolvable:$true] %s1485
          %s1487 = sshll.u32 %s1477, 4
          %s1488 = int_to_ptr.vmem [resolvable:$true] %s1487
          %1490 = dma.hbm_to_vmem [thread:$0]  %s1486, 16, %s1488, %s1171
          %s1491 = sadd.s32 %s1166, 18
          %s1492 = sld [smem:[#allocation5 + %s1491]]
          %s1493 = scalar_lea.hbm %s2, %s1492
          %s1494 = sadd.s32 18, %s1169
          %s1495 = scalar_lea.vmem [#allocation2], %s1494
          // Predicated region
          $region361: #{tpu_custom_call.1} parent=287 // pred_check
            _
          $region362: #{tpu_custom_call.1} parent=287 // pred_check_branch
            %1497 = sbr.rel target = $region364
          $region363: #{tpu_custom_call.1} parent=287 // pred_region
            %1498 = sst [smem:[#allocation10]] [#allocation175]
            %1499 = sst [smem:[#allocation11]] [#allocation174]
          $region364: #{tpu_custom_call.1} parent=287 // pred_fallthru
            _
          %1501 = shalt.err (0)
          %s1503 = sshll.u32 %s1493, 4
          %s1504 = int_to_ptr.hbm [resolvable:$true] %s1503
          %s1505 = sshll.u32 %s1495, 4
          %s1506 = int_to_ptr.vmem [resolvable:$true] %s1505
          %1508 = dma.hbm_to_vmem [thread:$0]  %s1504, 16, %s1506, %s1171
          %s1509 = sadd.s32 %s1166, 19
          %s1510 = sld [smem:[#allocation5 + %s1509]]
          %s1511 = scalar_lea.hbm %s2, %s1510
          %s1512 = sadd.s32 26, %s1169
          %s1513 = scalar_lea.vmem [#allocation2], %s1512
          // Predicated region
          $region365: #{tpu_custom_call.1} parent=287 // pred_check
            _
          $region366: #{tpu_custom_call.1} parent=287 // pred_check_branch
            %1515 = sbr.rel target = $region368
          $region367: #{tpu_custom_call.1} parent=287 // pred_region
            %1516 = sst [smem:[#allocation10]] [#allocation177]
            %1517 = sst [smem:[#allocation11]] [#allocation176]
          $region368: #{tpu_custom_call.1} parent=287 // pred_fallthru
            _
          %1519 = shalt.err (0)
          %s1521 = sshll.u32 %s1511, 4
          %s1522 = int_to_ptr.hbm [resolvable:$true] %s1521
          %s1523 = sshll.u32 %s1513, 4
          %s1524 = int_to_ptr.vmem [resolvable:$true] %s1523
          %1526 = dma.hbm_to_vmem [thread:$0]  %s1522, 16, %s1524, %s1171
          %s1527 = sadd.s32 %s1166, 20
          %s1528 = sld [smem:[#allocation5 + %s1527]]
          %s1529 = scalar_lea.hbm %s2, %s1528
          %s1530 = sadd.s32 34, %s1169
          %s1531 = scalar_lea.vmem [#allocation2], %s1530
          // Predicated region
          $region369: #{tpu_custom_call.1} parent=287 // pred_check
            _
          $region370: #{tpu_custom_call.1} parent=287 // pred_check_branch
            %1533 = sbr.rel target = $region372
          $region371: #{tpu_custom_call.1} parent=287 // pred_region
            %1534 = sst [smem:[#allocation10]] [#allocation179]
            %1535 = sst [smem:[#allocation11]] [#allocation178]
          $region372: #{tpu_custom_call.1} parent=287 // pred_fallthru
            _
          %1537 = shalt.err (0)
          %s1539 = sshll.u32 %s1529, 4
          %s1540 = int_to_ptr.hbm [resolvable:$true] %s1539
          %s1541 = sshll.u32 %s1531, 4
          %s1542 = int_to_ptr.vmem [resolvable:$true] %s1541
          %1544 = dma.hbm_to_vmem [thread:$0]  %s1540, 16, %s1542, %s1171
          %s1545 = sadd.s32 %s1166, 21
          %s1546 = sld [smem:[#allocation5 + %s1545]]
          %s1547 = scalar_lea.hbm %s2, %s1546
          %s1548 = sadd.s32 42, %s1169
          %s1549 = scalar_lea.vmem [#allocation2], %s1548
          // Predicated region
          $region373: #{tpu_custom_call.1} parent=287 // pred_check
            _
          $region374: #{tpu_custom_call.1} parent=287 // pred_check_branch
            %1551 = sbr.rel target = $region376
          $region375: #{tpu_custom_call.1} parent=287 // pred_region
            %1552 = sst [smem:[#allocation10]] [#allocation181]
            %1553 = sst [smem:[#allocation11]] [#allocation180]
          $region376: #{tpu_custom_call.1} parent=287 // pred_fallthru
            _
          %1555 = shalt.err (0)
          %s1557 = sshll.u32 %s1547, 4
          %s1558 = int_to_ptr.hbm [resolvable:$true] %s1557
          %s1559 = sshll.u32 %s1549, 4
          %s1560 = int_to_ptr.vmem [resolvable:$true] %s1559
          %1562 = dma.hbm_to_vmem [thread:$0]  %s1558, 16, %s1560, %s1171
          %s1563 = sadd.s32 %s1166, 22
          %s1564 = sld [smem:[#allocation5 + %s1563]]
          %s1565 = scalar_lea.hbm %s2, %s1564
          %s1566 = sadd.s32 50, %s1169
          %s1567 = scalar_lea.vmem [#allocation2], %s1566
          // Predicated region
          $region377: #{tpu_custom_call.1} parent=287 // pred_check
            _
          $region378: #{tpu_custom_call.1} parent=287 // pred_check_branch
            %1569 = sbr.rel target = $region380
          $region379: #{tpu_custom_call.1} parent=287 // pred_region
            %1570 = sst [smem:[#allocation10]] [#allocation183]
            %1571 = sst [smem:[#allocation11]] [#allocation182]
          $region380: #{tpu_custom_call.1} parent=287 // pred_fallthru
            _
          %1573 = shalt.err (0)
          %s1575 = sshll.u32 %s1565, 4
          %s1576 = int_to_ptr.hbm [resolvable:$true] %s1575
          %s1577 = sshll.u32 %s1567, 4
          %s1578 = int_to_ptr.vmem [resolvable:$true] %s1577
          %1580 = dma.hbm_to_vmem [thread:$0]  %s1576, 16, %s1578, %s1171
          %s1581 = sadd.s32 %s1166, 23
          %s1582 = sld [smem:[#allocation5 + %s1581]]
          %s1583 = scalar_lea.hbm %s2, %s1582
          %s1584 = sadd.s32 58, %s1169
          %s1585 = scalar_lea.vmem [#allocation2], %s1584
          // Predicated region
          $region381: #{tpu_custom_call.1} parent=287 // pred_check
            _
          $region382: #{tpu_custom_call.1} parent=287 // pred_check_branch
            %1587 = sbr.rel target = $region384
          $region383: #{tpu_custom_call.1} parent=287 // pred_region
            %1588 = sst [smem:[#allocation10]] [#allocation185]
            %1589 = sst [smem:[#allocation11]] [#allocation184]
          $region384: #{tpu_custom_call.1} parent=287 // pred_fallthru
            _
          %1591 = shalt.err (0)
          %s1593 = sshll.u32 %s1583, 4
          %s1594 = int_to_ptr.hbm [resolvable:$true] %s1593
          %s1595 = sshll.u32 %s1585, 4
          %s1596 = int_to_ptr.vmem [resolvable:$true] %s1595
          %1598 = dma.hbm_to_vmem [thread:$0]  %s1594, 16, %s1596, %s1171
          %s1599 = sadd.s32 %s1166, 24
          %s1600 = sld [smem:[#allocation5 + %s1599]]
          %s1601 = scalar_lea.hbm %s2, %s1600
          %s1602 = sadd.s32 3, %s1169
          %s1603 = scalar_lea.vmem [#allocation2], %s1602
          // Predicated region
          $region385: #{tpu_custom_call.1} parent=287 // pred_check
            _
          $region386: #{tpu_custom_call.1} parent=287 // pred_check_branch
            %1605 = sbr.rel target = $region388
          $region387: #{tpu_custom_call.1} parent=287 // pred_region
            %1606 = sst [smem:[#allocation10]] [#allocation187]
            %1607 = sst [smem:[#allocation11]] [#allocation186]
          $region388: #{tpu_custom_call.1} parent=287 // pred_fallthru
            _
          %1609 = shalt.err (0)
          %s1611 = sshll.u32 %s1601, 4
          %s1612 = int_to_ptr.hbm [resolvable:$true] %s1611
          %s1613 = sshll.u32 %s1603, 4
          %s1614 = int_to_ptr.vmem [resolvable:$true] %s1613
          %1616 = dma.hbm_to_vmem [thread:$0]  %s1612, 16, %s1614, %s1171
          %s1617 = sadd.s32 %s1166, 25
          %s1618 = sld [smem:[#allocation5 + %s1617]]
          %s1619 = scalar_lea.hbm %s2, %s1618
          %s1620 = sadd.s32 11, %s1169
          %s1621 = scalar_lea.vmem [#allocation2], %s1620
          // Predicated region
          $region389: #{tpu_custom_call.1} parent=287 // pred_check
            _
          $region390: #{tpu_custom_call.1} parent=287 // pred_check_branch
            %1623 = sbr.rel target = $region392
          $region391: #{tpu_custom_call.1} parent=287 // pred_region
            %1624 = sst [smem:[#allocation10]] [#allocation189]
            %1625 = sst [smem:[#allocation11]] [#allocation188]
          $region392: #{tpu_custom_call.1} parent=287 // pred_fallthru
            _
          %1627 = shalt.err (0)
          %s1629 = sshll.u32 %s1619, 4
          %s1630 = int_to_ptr.hbm [resolvable:$true] %s1629
          %s1631 = sshll.u32 %s1621, 4
          %s1632 = int_to_ptr.vmem [resolvable:$true] %s1631
          %1634 = dma.hbm_to_vmem [thread:$0]  %s1630, 16, %s1632, %s1171
          %s1635 = sadd.s32 %s1166, 26
          %s1636 = sld [smem:[#allocation5 + %s1635]]
          %s1637 = scalar_lea.hbm %s2, %s1636
          %s1638 = sadd.s32 19, %s1169
          %s1639 = scalar_lea.vmem [#allocation2], %s1638
          // Predicated region
          $region393: #{tpu_custom_call.1} parent=287 // pred_check
            _
          $region394: #{tpu_custom_call.1} parent=287 // pred_check_branch
            %1641 = sbr.rel target = $region396
          $region395: #{tpu_custom_call.1} parent=287 // pred_region
            %1642 = sst [smem:[#allocation10]] [#allocation191]
            %1643 = sst [smem:[#allocation11]] [#allocation190]
          $region396: #{tpu_custom_call.1} parent=287 // pred_fallthru
            _
          %1645 = shalt.err (0)
          %s1647 = sshll.u32 %s1637, 4
          %s1648 = int_to_ptr.hbm [resolvable:$true] %s1647
          %s1649 = sshll.u32 %s1639, 4
          %s1650 = int_to_ptr.vmem [resolvable:$true] %s1649
          %1652 = dma.hbm_to_vmem [thread:$0]  %s1648, 16, %s1650, %s1171
          %s1653 = sadd.s32 %s1166, 27
          %s1654 = sld [smem:[#allocation5 + %s1653]]
          %s1655 = scalar_lea.hbm %s2, %s1654
          %s1656 = sadd.s32 27, %s1169
          %s1657 = scalar_lea.vmem [#allocation2], %s1656
          // Predicated region
          $region397: #{tpu_custom_call.1} parent=287 // pred_check
            _
          $region398: #{tpu_custom_call.1} parent=287 // pred_check_branch
            %1659 = sbr.rel target = $region400
          $region399: #{tpu_custom_call.1} parent=287 // pred_region
            %1660 = sst [smem:[#allocation10]] [#allocation193]
            %1661 = sst [smem:[#allocation11]] [#allocation192]
          $region400: #{tpu_custom_call.1} parent=287 // pred_fallthru
            _
          %1663 = shalt.err (0)
          %s1665 = sshll.u32 %s1655, 4
          %s1666 = int_to_ptr.hbm [resolvable:$true] %s1665
          %s1667 = sshll.u32 %s1657, 4
          %s1668 = int_to_ptr.vmem [resolvable:$true] %s1667
          %1670 = dma.hbm_to_vmem [thread:$0]  %s1666, 16, %s1668, %s1171
          %s1671 = sadd.s32 %s1166, 28
          %s1672 = sld [smem:[#allocation5 + %s1671]]
          %s1673 = scalar_lea.hbm %s2, %s1672
          %s1674 = sadd.s32 35, %s1169
          %s1675 = scalar_lea.vmem [#allocation2], %s1674
          // Predicated region
          $region401: #{tpu_custom_call.1} parent=287 // pred_check
            _
          $region402: #{tpu_custom_call.1} parent=287 // pred_check_branch
            %1677 = sbr.rel target = $region404
          $region403: #{tpu_custom_call.1} parent=287 // pred_region
            %1678 = sst [smem:[#allocation10]] [#allocation195]
            %1679 = sst [smem:[#allocation11]] [#allocation194]
          $region404: #{tpu_custom_call.1} parent=287 // pred_fallthru
            _
          %1681 = shalt.err (0)
          %s1683 = sshll.u32 %s1673, 4
          %s1684 = int_to_ptr.hbm [resolvable:$true] %s1683
          %s1685 = sshll.u32 %s1675, 4
          %s1686 = int_to_ptr.vmem [resolvable:$true] %s1685
          %1688 = dma.hbm_to_vmem [thread:$0]  %s1684, 16, %s1686, %s1171
          %s1689 = sadd.s32 %s1166, 29
          %s1690 = sld [smem:[#allocation5 + %s1689]]
          %s1691 = scalar_lea.hbm %s2, %s1690
          %s1692 = sadd.s32 43, %s1169
          %s1693 = scalar_lea.vmem [#allocation2], %s1692
          // Predicated region
          $region405: #{tpu_custom_call.1} parent=287 // pred_check
            _
          $region406: #{tpu_custom_call.1} parent=287 // pred_check_branch
            %1695 = sbr.rel target = $region408
          $region407: #{tpu_custom_call.1} parent=287 // pred_region
            %1696 = sst [smem:[#allocation10]] [#allocation197]
            %1697 = sst [smem:[#allocation11]] [#allocation196]
          $region408: #{tpu_custom_call.1} parent=287 // pred_fallthru
            _
          %1699 = shalt.err (0)
          %s1701 = sshll.u32 %s1691, 4
          %s1702 = int_to_ptr.hbm [resolvable:$true] %s1701
          %s1703 = sshll.u32 %s1693, 4
          %s1704 = int_to_ptr.vmem [resolvable:$true] %s1703
          %1706 = dma.hbm_to_vmem [thread:$0]  %s1702, 16, %s1704, %s1171
          %s1707 = sadd.s32 %s1166, 30
          %s1708 = sld [smem:[#allocation5 + %s1707]]
          %s1709 = scalar_lea.hbm %s2, %s1708
          %s1710 = sadd.s32 51, %s1169
          %s1711 = scalar_lea.vmem [#allocation2], %s1710
          // Predicated region
          $region409: #{tpu_custom_call.1} parent=287 // pred_check
            _
          $region410: #{tpu_custom_call.1} parent=287 // pred_check_branch
            %1713 = sbr.rel target = $region412
          $region411: #{tpu_custom_call.1} parent=287 // pred_region
            %1714 = sst [smem:[#allocation10]] [#allocation199]
            %1715 = sst [smem:[#allocation11]] [#allocation198]
          $region412: #{tpu_custom_call.1} parent=287 // pred_fallthru
            _
          %1717 = shalt.err (0)
          %s1719 = sshll.u32 %s1709, 4
          %s1720 = int_to_ptr.hbm [resolvable:$true] %s1719
          %s1721 = sshll.u32 %s1711, 4
          %s1722 = int_to_ptr.vmem [resolvable:$true] %s1721
          %1724 = dma.hbm_to_vmem [thread:$0]  %s1720, 16, %s1722, %s1171
          %s1725 = sadd.s32 %s1166, 31
          %s1726 = sld [smem:[#allocation5 + %s1725]]
          %s1727 = scalar_lea.hbm %s2, %s1726
          %s1728 = sadd.s32 59, %s1169
          %s1729 = scalar_lea.vmem [#allocation2], %s1728
          // Predicated region
          $region413: #{tpu_custom_call.1} parent=287 // pred_check
            _
          $region414: #{tpu_custom_call.1} parent=287 // pred_check_branch
            %1731 = sbr.rel target = $region416
          $region415: #{tpu_custom_call.1} parent=287 // pred_region
            %1732 = sst [smem:[#allocation10]] [#allocation201]
            %1733 = sst [smem:[#allocation11]] [#allocation200]
          $region416: #{tpu_custom_call.1} parent=287 // pred_fallthru
            _
          %1735 = shalt.err (0)
          %s1737 = sshll.u32 %s1727, 4
          %s1738 = int_to_ptr.hbm [resolvable:$true] %s1737
          %s1739 = sshll.u32 %s1729, 4
          %s1740 = int_to_ptr.vmem [resolvable:$true] %s1739
          %1742 = dma.hbm_to_vmem [thread:$0]  %s1738, 16, %s1740, %s1171
          %s1743 = sadd.s32 %s1166, 32
          %s1744 = sld [smem:[#allocation5 + %s1743]]
          %s1745 = scalar_lea.hbm %s2, %s1744
          %s1746 = sadd.s32 4, %s1169
          %s1747 = scalar_lea.vmem [#allocation2], %s1746
          // Predicated region
          $region417: #{tpu_custom_call.1} parent=287 // pred_check
            _
          $region418: #{tpu_custom_call.1} parent=287 // pred_check_branch
            %1749 = sbr.rel target = $region420
          $region419: #{tpu_custom_call.1} parent=287 // pred_region
            %1750 = sst [smem:[#allocation10]] [#allocation203]
            %1751 = sst [smem:[#allocation11]] [#allocation202]
          $region420: #{tpu_custom_call.1} parent=287 // pred_fallthru
            _
          %1753 = shalt.err (0)
          %s1755 = sshll.u32 %s1745, 4
          %s1756 = int_to_ptr.hbm [resolvable:$true] %s1755
          %s1757 = sshll.u32 %s1747, 4
          %s1758 = int_to_ptr.vmem [resolvable:$true] %s1757
          %1760 = dma.hbm_to_vmem [thread:$0]  %s1756, 16, %s1758, %s1171
          %s1761 = sadd.s32 %s1166, 33
          %s1762 = sld [smem:[#allocation5 + %s1761]]
          %s1763 = scalar_lea.hbm %s2, %s1762
          %s1764 = sadd.s32 12, %s1169
          %s1765 = scalar_lea.vmem [#allocation2], %s1764
          // Predicated region
          $region421: #{tpu_custom_call.1} parent=287 // pred_check
            _
          $region422: #{tpu_custom_call.1} parent=287 // pred_check_branch
            %1767 = sbr.rel target = $region424
          $region423: #{tpu_custom_call.1} parent=287 // pred_region
            %1768 = sst [smem:[#allocation10]] [#allocation205]
            %1769 = sst [smem:[#allocation11]] [#allocation204]
          $region424: #{tpu_custom_call.1} parent=287 // pred_fallthru
            _
          %1771 = shalt.err (0)
          %s1773 = sshll.u32 %s1763, 4
          %s1774 = int_to_ptr.hbm [resolvable:$true] %s1773
          %s1775 = sshll.u32 %s1765, 4
          %s1776 = int_to_ptr.vmem [resolvable:$true] %s1775
          %1778 = dma.hbm_to_vmem [thread:$0]  %s1774, 16, %s1776, %s1171
          %s1779 = sadd.s32 %s1166, 34
          %s1780 = sld [smem:[#allocation5 + %s1779]]
          %s1781 = scalar_lea.hbm %s2, %s1780
          %s1782 = sadd.s32 20, %s1169
          %s1783 = scalar_lea.vmem [#allocation2], %s1782
          // Predicated region
          $region425: #{tpu_custom_call.1} parent=287 // pred_check
            _
          $region426: #{tpu_custom_call.1} parent=287 // pred_check_branch
            %1785 = sbr.rel target = $region428
          $region427: #{tpu_custom_call.1} parent=287 // pred_region
            %1786 = sst [smem:[#allocation10]] [#allocation207]
            %1787 = sst [smem:[#allocation11]] [#allocation206]
          $region428: #{tpu_custom_call.1} parent=287 // pred_fallthru
            _
          %1789 = shalt.err (0)
          %s1791 = sshll.u32 %s1781, 4
          %s1792 = int_to_ptr.hbm [resolvable:$true] %s1791
          %s1793 = sshll.u32 %s1783, 4
          %s1794 = int_to_ptr.vmem [resolvable:$true] %s1793
          %1796 = dma.hbm_to_vmem [thread:$0]  %s1792, 16, %s1794, %s1171
          %s1797 = sadd.s32 %s1166, 35
          %s1798 = sld [smem:[#allocation5 + %s1797]]
          %s1799 = scalar_lea.hbm %s2, %s1798
          %s1800 = sadd.s32 28, %s1169
          %s1801 = scalar_lea.vmem [#allocation2], %s1800
          // Predicated region
          $region429: #{tpu_custom_call.1} parent=287 // pred_check
            _
          $region430: #{tpu_custom_call.1} parent=287 // pred_check_branch
            %1803 = sbr.rel target = $region432
          $region431: #{tpu_custom_call.1} parent=287 // pred_region
            %1804 = sst [smem:[#allocation10]] [#allocation209]
            %1805 = sst [smem:[#allocation11]] [#allocation208]
          $region432: #{tpu_custom_call.1} parent=287 // pred_fallthru
            _
          %1807 = shalt.err (0)
          %s1809 = sshll.u32 %s1799, 4
          %s1810 = int_to_ptr.hbm [resolvable:$true] %s1809
          %s1811 = sshll.u32 %s1801, 4
          %s1812 = int_to_ptr.vmem [resolvable:$true] %s1811
          %1814 = dma.hbm_to_vmem [thread:$0]  %s1810, 16, %s1812, %s1171
          %s1815 = sadd.s32 %s1166, 36
          %s1816 = sld [smem:[#allocation5 + %s1815]]
          %s1817 = scalar_lea.hbm %s2, %s1816
          %s1818 = sadd.s32 36, %s1169
          %s1819 = scalar_lea.vmem [#allocation2], %s1818
          // Predicated region
          $region433: #{tpu_custom_call.1} parent=287 // pred_check
            _
          $region434: #{tpu_custom_call.1} parent=287 // pred_check_branch
            %1821 = sbr.rel target = $region436
          $region435: #{tpu_custom_call.1} parent=287 // pred_region
            %1822 = sst [smem:[#allocation10]] [#allocation211]
            %1823 = sst [smem:[#allocation11]] [#allocation210]
          $region436: #{tpu_custom_call.1} parent=287 // pred_fallthru
            _
          %1825 = shalt.err (0)
          %s1827 = sshll.u32 %s1817, 4
          %s1828 = int_to_ptr.hbm [resolvable:$true] %s1827
          %s1829 = sshll.u32 %s1819, 4
          %s1830 = int_to_ptr.vmem [resolvable:$true] %s1829
          %1832 = dma.hbm_to_vmem [thread:$0]  %s1828, 16, %s1830, %s1171
          %s1833 = sadd.s32 %s1166, 37
          %s1834 = sld [smem:[#allocation5 + %s1833]]
          %s1835 = scalar_lea.hbm %s2, %s1834
          %s1836 = sadd.s32 44, %s1169
          %s1837 = scalar_lea.vmem [#allocation2], %s1836
          // Predicated region
          $region437: #{tpu_custom_call.1} parent=287 // pred_check
            _
          $region438: #{tpu_custom_call.1} parent=287 // pred_check_branch
            %1839 = sbr.rel target = $region440
          $region439: #{tpu_custom_call.1} parent=287 // pred_region
            %1840 = sst [smem:[#allocation10]] [#allocation213]
            %1841 = sst [smem:[#allocation11]] [#allocation212]
          $region440: #{tpu_custom_call.1} parent=287 // pred_fallthru
            _
          %1843 = shalt.err (0)
          %s1845 = sshll.u32 %s1835, 4
          %s1846 = int_to_ptr.hbm [resolvable:$true] %s1845
          %s1847 = sshll.u32 %s1837, 4
          %s1848 = int_to_ptr.vmem [resolvable:$true] %s1847
          %1850 = dma.hbm_to_vmem [thread:$0]  %s1846, 16, %s1848, %s1171
          %s1851 = sadd.s32 %s1166, 38
          %s1852 = sld [smem:[#allocation5 + %s1851]]
          %s1853 = scalar_lea.hbm %s2, %s1852
          %s1854 = sadd.s32 52, %s1169
          %s1855 = scalar_lea.vmem [#allocation2], %s1854
          // Predicated region
          $region441: #{tpu_custom_call.1} parent=287 // pred_check
            _
          $region442: #{tpu_custom_call.1} parent=287 // pred_check_branch
            %1857 = sbr.rel target = $region444
          $region443: #{tpu_custom_call.1} parent=287 // pred_region
            %1858 = sst [smem:[#allocation10]] [#allocation215]
            %1859 = sst [smem:[#allocation11]] [#allocation214]
          $region444: #{tpu_custom_call.1} parent=287 // pred_fallthru
            _
          %1861 = shalt.err (0)
          %s1863 = sshll.u32 %s1853, 4
          %s1864 = int_to_ptr.hbm [resolvable:$true] %s1863
          %s1865 = sshll.u32 %s1855, 4
          %s1866 = int_to_ptr.vmem [resolvable:$true] %s1865
          %1868 = dma.hbm_to_vmem [thread:$0]  %s1864, 16, %s1866, %s1171
          %s1869 = sadd.s32 %s1166, 39
          %s1870 = sld [smem:[#allocation5 + %s1869]]
          %s1871 = scalar_lea.hbm %s2, %s1870
          %s1872 = sadd.s32 60, %s1169
          %s1873 = scalar_lea.vmem [#allocation2], %s1872
          // Predicated region
          $region445: #{tpu_custom_call.1} parent=287 // pred_check
            _
          $region446: #{tpu_custom_call.1} parent=287 // pred_check_branch
            %1875 = sbr.rel target = $region448
          $region447: #{tpu_custom_call.1} parent=287 // pred_region
            %1876 = sst [smem:[#allocation10]] [#allocation217]
            %1877 = sst [smem:[#allocation11]] [#allocation216]
          $region448: #{tpu_custom_call.1} parent=287 // pred_fallthru
            _
          %1879 = shalt.err (0)
          %s1881 = sshll.u32 %s1871, 4
          %s1882 = int_to_ptr.hbm [resolvable:$true] %s1881
          %s1883 = sshll.u32 %s1873, 4
          %s1884 = int_to_ptr.vmem [resolvable:$true] %s1883
          %1886 = dma.hbm_to_vmem [thread:$0]  %s1882, 16, %s1884, %s1171
          %s1887 = sadd.s32 %s1166, 40
          %s1888 = sld [smem:[#allocation5 + %s1887]]
          %s1889 = scalar_lea.hbm %s2, %s1888
          %s1890 = sadd.s32 5, %s1169
          %s1891 = scalar_lea.vmem [#allocation2], %s1890
          // Predicated region
          $region449: #{tpu_custom_call.1} parent=287 // pred_check
            _
          $region450: #{tpu_custom_call.1} parent=287 // pred_check_branch
            %1893 = sbr.rel target = $region452
          $region451: #{tpu_custom_call.1} parent=287 // pred_region
            %1894 = sst [smem:[#allocation10]] [#allocation219]
            %1895 = sst [smem:[#allocation11]] [#allocation218]
          $region452: #{tpu_custom_call.1} parent=287 // pred_fallthru
            _
          %1897 = shalt.err (0)
          %s1899 = sshll.u32 %s1889, 4
          %s1900 = int_to_ptr.hbm [resolvable:$true] %s1899
          %s1901 = sshll.u32 %s1891, 4
          %s1902 = int_to_ptr.vmem [resolvable:$true] %s1901
          %1904 = dma.hbm_to_vmem [thread:$0]  %s1900, 16, %s1902, %s1171
          %s1905 = sadd.s32 %s1166, 41
          %s1906 = sld [smem:[#allocation5 + %s1905]]
          %s1907 = scalar_lea.hbm %s2, %s1906
          %s1908 = sadd.s32 13, %s1169
          %s1909 = scalar_lea.vmem [#allocation2], %s1908
          // Predicated region
          $region453: #{tpu_custom_call.1} parent=287 // pred_check
            _
          $region454: #{tpu_custom_call.1} parent=287 // pred_check_branch
            %1911 = sbr.rel target = $region456
          $region455: #{tpu_custom_call.1} parent=287 // pred_region
            %1912 = sst [smem:[#allocation10]] [#allocation221]
            %1913 = sst [smem:[#allocation11]] [#allocation220]
          $region456: #{tpu_custom_call.1} parent=287 // pred_fallthru
            _
          %1915 = shalt.err (0)
          %s1917 = sshll.u32 %s1907, 4
          %s1918 = int_to_ptr.hbm [resolvable:$true] %s1917
          %s1919 = sshll.u32 %s1909, 4
          %s1920 = int_to_ptr.vmem [resolvable:$true] %s1919
          %1922 = dma.hbm_to_vmem [thread:$0]  %s1918, 16, %s1920, %s1171
          %s1923 = sadd.s32 %s1166, 42
          %s1924 = sld [smem:[#allocation5 + %s1923]]
          %s1925 = scalar_lea.hbm %s2, %s1924
          %s1926 = sadd.s32 21, %s1169
          %s1927 = scalar_lea.vmem [#allocation2], %s1926
          // Predicated region
          $region457: #{tpu_custom_call.1} parent=287 // pred_check
            _
          $region458: #{tpu_custom_call.1} parent=287 // pred_check_branch
            %1929 = sbr.rel target = $region460
          $region459: #{tpu_custom_call.1} parent=287 // pred_region
            %1930 = sst [smem:[#allocation10]] [#allocation223]
            %1931 = sst [smem:[#allocation11]] [#allocation222]
          $region460: #{tpu_custom_call.1} parent=287 // pred_fallthru
            _
          %1933 = shalt.err (0)
          %s1935 = sshll.u32 %s1925, 4
          %s1936 = int_to_ptr.hbm [resolvable:$true] %s1935
          %s1937 = sshll.u32 %s1927, 4
          %s1938 = int_to_ptr.vmem [resolvable:$true] %s1937
          %1940 = dma.hbm_to_vmem [thread:$0]  %s1936, 16, %s1938, %s1171
          %s1941 = sadd.s32 %s1166, 43
          %s1942 = sld [smem:[#allocation5 + %s1941]]
          %s1943 = scalar_lea.hbm %s2, %s1942
          %s1944 = sadd.s32 29, %s1169
          %s1945 = scalar_lea.vmem [#allocation2], %s1944
          // Predicated region
          $region461: #{tpu_custom_call.1} parent=287 // pred_check
            _
          $region462: #{tpu_custom_call.1} parent=287 // pred_check_branch
            %1947 = sbr.rel target = $region464
          $region463: #{tpu_custom_call.1} parent=287 // pred_region
            %1948 = sst [smem:[#allocation10]] [#allocation225]
            %1949 = sst [smem:[#allocation11]] [#allocation224]
          $region464: #{tpu_custom_call.1} parent=287 // pred_fallthru
            _
          %1951 = shalt.err (0)
          %s1953 = sshll.u32 %s1943, 4
          %s1954 = int_to_ptr.hbm [resolvable:$true] %s1953
          %s1955 = sshll.u32 %s1945, 4
          %s1956 = int_to_ptr.vmem [resolvable:$true] %s1955
          %1958 = dma.hbm_to_vmem [thread:$0]  %s1954, 16, %s1956, %s1171
          %s1959 = sadd.s32 %s1166, 44
          %s1960 = sld [smem:[#allocation5 + %s1959]]
          %s1961 = scalar_lea.hbm %s2, %s1960
          %s1962 = sadd.s32 37, %s1169
          %s1963 = scalar_lea.vmem [#allocation2], %s1962
          // Predicated region
          $region465: #{tpu_custom_call.1} parent=287 // pred_check
            _
          $region466: #{tpu_custom_call.1} parent=287 // pred_check_branch
            %1965 = sbr.rel target = $region468
          $region467: #{tpu_custom_call.1} parent=287 // pred_region
            %1966 = sst [smem:[#allocation10]] [#allocation227]
            %1967 = sst [smem:[#allocation11]] [#allocation226]
          $region468: #{tpu_custom_call.1} parent=287 // pred_fallthru
            _
          %1969 = shalt.err (0)
          %s1971 = sshll.u32 %s1961, 4
          %s1972 = int_to_ptr.hbm [resolvable:$true] %s1971
          %s1973 = sshll.u32 %s1963, 4
          %s1974 = int_to_ptr.vmem [resolvable:$true] %s1973
          %1976 = dma.hbm_to_vmem [thread:$0]  %s1972, 16, %s1974, %s1171
          %s1977 = sadd.s32 %s1166, 45
          %s1978 = sld [smem:[#allocation5 + %s1977]]
          %s1979 = scalar_lea.hbm %s2, %s1978
          %s1980 = sadd.s32 45, %s1169
          %s1981 = scalar_lea.vmem [#allocation2], %s1980
          // Predicated region
          $region469: #{tpu_custom_call.1} parent=287 // pred_check
            _
          $region470: #{tpu_custom_call.1} parent=287 // pred_check_branch
            %1983 = sbr.rel target = $region472
          $region471: #{tpu_custom_call.1} parent=287 // pred_region
            %1984 = sst [smem:[#allocation10]] [#allocation229]
            %1985 = sst [smem:[#allocation11]] [#allocation228]
          $region472: #{tpu_custom_call.1} parent=287 // pred_fallthru
            _
          %1987 = shalt.err (0)
          %s1989 = sshll.u32 %s1979, 4
          %s1990 = int_to_ptr.hbm [resolvable:$true] %s1989
          %s1991 = sshll.u32 %s1981, 4
          %s1992 = int_to_ptr.vmem [resolvable:$true] %s1991
          %1994 = dma.hbm_to_vmem [thread:$0]  %s1990, 16, %s1992, %s1171
          %s1995 = sadd.s32 %s1166, 46
          %s1996 = sld [smem:[#allocation5 + %s1995]]
          %s1997 = scalar_lea.hbm %s2, %s1996
          %s1998 = sadd.s32 53, %s1169
          %s1999 = scalar_lea.vmem [#allocation2], %s1998
          // Predicated region
          $region473: #{tpu_custom_call.1} parent=287 // pred_check
            _
          $region474: #{tpu_custom_call.1} parent=287 // pred_check_branch
            %2001 = sbr.rel target = $region476
          $region475: #{tpu_custom_call.1} parent=287 // pred_region
            %2002 = sst [smem:[#allocation10]] [#allocation231]
            %2003 = sst [smem:[#allocation11]] [#allocation230]
          $region476: #{tpu_custom_call.1} parent=287 // pred_fallthru
            _
          %2005 = shalt.err (0)
          %s2007 = sshll.u32 %s1997, 4
          %s2008 = int_to_ptr.hbm [resolvable:$true] %s2007
          %s2009 = sshll.u32 %s1999, 4
          %s2010 = int_to_ptr.vmem [resolvable:$true] %s2009
          %2012 = dma.hbm_to_vmem [thread:$0]  %s2008, 16, %s2010, %s1171
          %s2013 = sadd.s32 %s1166, 47
          %s2014 = sld [smem:[#allocation5 + %s2013]]
          %s2015 = scalar_lea.hbm %s2, %s2014
          %s2016 = sadd.s32 61, %s1169
          %s2017 = scalar_lea.vmem [#allocation2], %s2016
          // Predicated region
          $region477: #{tpu_custom_call.1} parent=287 // pred_check
            _
          $region478: #{tpu_custom_call.1} parent=287 // pred_check_branch
            %2019 = sbr.rel target = $region480
          $region479: #{tpu_custom_call.1} parent=287 // pred_region
            %2020 = sst [smem:[#allocation10]] [#allocation233]
            %2021 = sst [smem:[#allocation11]] [#allocation232]
          $region480: #{tpu_custom_call.1} parent=287 // pred_fallthru
            _
          %2023 = shalt.err (0)
          %s2025 = sshll.u32 %s2015, 4
          %s2026 = int_to_ptr.hbm [resolvable:$true] %s2025
          %s2027 = sshll.u32 %s2017, 4
          %s2028 = int_to_ptr.vmem [resolvable:$true] %s2027
          %2030 = dma.hbm_to_vmem [thread:$0]  %s2026, 16, %s2028, %s1171
          %s2031 = sadd.s32 %s1166, 48
          %s2032 = sld [smem:[#allocation5 + %s2031]]
          %s2033 = scalar_lea.hbm %s2, %s2032
          %s2034 = sadd.s32 6, %s1169
          %s2035 = scalar_lea.vmem [#allocation2], %s2034
          // Predicated region
          $region481: #{tpu_custom_call.1} parent=287 // pred_check
            _
          $region482: #{tpu_custom_call.1} parent=287 // pred_check_branch
            %2037 = sbr.rel target = $region484
          $region483: #{tpu_custom_call.1} parent=287 // pred_region
            %2038 = sst [smem:[#allocation10]] [#allocation235]
            %2039 = sst [smem:[#allocation11]] [#allocation234]
          $region484: #{tpu_custom_call.1} parent=287 // pred_fallthru
            _
          %2041 = shalt.err (0)
          %s2043 = sshll.u32 %s2033, 4
          %s2044 = int_to_ptr.hbm [resolvable:$true] %s2043
          %s2045 = sshll.u32 %s2035, 4
          %s2046 = int_to_ptr.vmem [resolvable:$true] %s2045
          %2048 = dma.hbm_to_vmem [thread:$0]  %s2044, 16, %s2046, %s1171
          %s2049 = sadd.s32 %s1166, 49
          %s2050 = sld [smem:[#allocation5 + %s2049]]
          %s2051 = scalar_lea.hbm %s2, %s2050
          %s2052 = sadd.s32 14, %s1169
          %s2053 = scalar_lea.vmem [#allocation2], %s2052
          // Predicated region
          $region485: #{tpu_custom_call.1} parent=287 // pred_check
            _
          $region486: #{tpu_custom_call.1} parent=287 // pred_check_branch
            %2055 = sbr.rel target = $region488
          $region487: #{tpu_custom_call.1} parent=287 // pred_region
            %2056 = sst [smem:[#allocation10]] [#allocation237]
            %2057 = sst [smem:[#allocation11]] [#allocation236]
          $region488: #{tpu_custom_call.1} parent=287 // pred_fallthru
            _
          %2059 = shalt.err (0)
          %s2061 = sshll.u32 %s2051, 4
          %s2062 = int_to_ptr.hbm [resolvable:$true] %s2061
          %s2063 = sshll.u32 %s2053, 4
          %s2064 = int_to_ptr.vmem [resolvable:$true] %s2063
          %2066 = dma.hbm_to_vmem [thread:$0]  %s2062, 16, %s2064, %s1171
          %s2067 = sadd.s32 %s1166, 50
          %s2068 = sld [smem:[#allocation5 + %s2067]]
          %s2069 = scalar_lea.hbm %s2, %s2068
          %s2070 = sadd.s32 22, %s1169
          %s2071 = scalar_lea.vmem [#allocation2], %s2070
          // Predicated region
          $region489: #{tpu_custom_call.1} parent=287 // pred_check
            _
          $region490: #{tpu_custom_call.1} parent=287 // pred_check_branch
            %2073 = sbr.rel target = $region492
          $region491: #{tpu_custom_call.1} parent=287 // pred_region
            %2074 = sst [smem:[#allocation10]] [#allocation239]
            %2075 = sst [smem:[#allocation11]] [#allocation238]
          $region492: #{tpu_custom_call.1} parent=287 // pred_fallthru
            _
          %2077 = shalt.err (0)
          %s2079 = sshll.u32 %s2069, 4
          %s2080 = int_to_ptr.hbm [resolvable:$true] %s2079
          %s2081 = sshll.u32 %s2071, 4
          %s2082 = int_to_ptr.vmem [resolvable:$true] %s2081
          %2084 = dma.hbm_to_vmem [thread:$0]  %s2080, 16, %s2082, %s1171
          %s2085 = sadd.s32 %s1166, 51
          %s2086 = sld [smem:[#allocation5 + %s2085]]
          %s2087 = scalar_lea.hbm %s2, %s2086
          %s2088 = sadd.s32 30, %s1169
          %s2089 = scalar_lea.vmem [#allocation2], %s2088
          // Predicated region
          $region493: #{tpu_custom_call.1} parent=287 // pred_check
            _
          $region494: #{tpu_custom_call.1} parent=287 // pred_check_branch
            %2091 = sbr.rel target = $region496
          $region495: #{tpu_custom_call.1} parent=287 // pred_region
            %2092 = sst [smem:[#allocation10]] [#allocation241]
            %2093 = sst [smem:[#allocation11]] [#allocation240]
          $region496: #{tpu_custom_call.1} parent=287 // pred_fallthru
            _
          %2095 = shalt.err (0)
          %s2097 = sshll.u32 %s2087, 4
          %s2098 = int_to_ptr.hbm [resolvable:$true] %s2097
          %s2099 = sshll.u32 %s2089, 4
          %s2100 = int_to_ptr.vmem [resolvable:$true] %s2099
          %2102 = dma.hbm_to_vmem [thread:$0]  %s2098, 16, %s2100, %s1171
          %s2103 = sadd.s32 %s1166, 52
          %s2104 = sld [smem:[#allocation5 + %s2103]]
          %s2105 = scalar_lea.hbm %s2, %s2104
          %s2106 = sadd.s32 38, %s1169
          %s2107 = scalar_lea.vmem [#allocation2], %s2106
          // Predicated region
          $region497: #{tpu_custom_call.1} parent=287 // pred_check
            _
          $region498: #{tpu_custom_call.1} parent=287 // pred_check_branch
            %2109 = sbr.rel target = $region500
          $region499: #{tpu_custom_call.1} parent=287 // pred_region
            %2110 = sst [smem:[#allocation10]] [#allocation243]
            %2111 = sst [smem:[#allocation11]] [#allocation242]
          $region500: #{tpu_custom_call.1} parent=287 // pred_fallthru
            _
          %2113 = shalt.err (0)
          %s2115 = sshll.u32 %s2105, 4
          %s2116 = int_to_ptr.hbm [resolvable:$true] %s2115
          %s2117 = sshll.u32 %s2107, 4
          %s2118 = int_to_ptr.vmem [resolvable:$true] %s2117
          %2120 = dma.hbm_to_vmem [thread:$0]  %s2116, 16, %s2118, %s1171
          %s2121 = sadd.s32 %s1166, 53
          %s2122 = sld [smem:[#allocation5 + %s2121]]
          %s2123 = scalar_lea.hbm %s2, %s2122
          %s2124 = sadd.s32 46, %s1169
          %s2125 = scalar_lea.vmem [#allocation2], %s2124
          // Predicated region
          $region501: #{tpu_custom_call.1} parent=287 // pred_check
            _
          $region502: #{tpu_custom_call.1} parent=287 // pred_check_branch
            %2127 = sbr.rel target = $region504
          $region503: #{tpu_custom_call.1} parent=287 // pred_region
            %2128 = sst [smem:[#allocation10]] [#allocation245]
            %2129 = sst [smem:[#allocation11]] [#allocation244]
          $region504: #{tpu_custom_call.1} parent=287 // pred_fallthru
            _
          %2131 = shalt.err (0)
          %s2133 = sshll.u32 %s2123, 4
          %s2134 = int_to_ptr.hbm [resolvable:$true] %s2133
          %s2135 = sshll.u32 %s2125, 4
          %s2136 = int_to_ptr.vmem [resolvable:$true] %s2135
          %2138 = dma.hbm_to_vmem [thread:$0]  %s2134, 16, %s2136, %s1171
          %s2139 = sadd.s32 %s1166, 54
          %s2140 = sld [smem:[#allocation5 + %s2139]]
          %s2141 = scalar_lea.hbm %s2, %s2140
          %s2142 = sadd.s32 54, %s1169
          %s2143 = scalar_lea.vmem [#allocation2], %s2142
          // Predicated region
          $region505: #{tpu_custom_call.1} parent=287 // pred_check
            _
          $region506: #{tpu_custom_call.1} parent=287 // pred_check_branch
            %2145 = sbr.rel target = $region508
          $region507: #{tpu_custom_call.1} parent=287 // pred_region
            %2146 = sst [smem:[#allocation10]] [#allocation247]
            %2147 = sst [smem:[#allocation11]] [#allocation246]
          $region508: #{tpu_custom_call.1} parent=287 // pred_fallthru
            _
          %2149 = shalt.err (0)
          %s2151 = sshll.u32 %s2141, 4
          %s2152 = int_to_ptr.hbm [resolvable:$true] %s2151
          %s2153 = sshll.u32 %s2143, 4
          %s2154 = int_to_ptr.vmem [resolvable:$true] %s2153
          %2156 = dma.hbm_to_vmem [thread:$0]  %s2152, 16, %s2154, %s1171
          %s2157 = sadd.s32 %s1166, 55
          %s2158 = sld [smem:[#allocation5 + %s2157]]
          %s2159 = scalar_lea.hbm %s2, %s2158
          %s2160 = sadd.s32 62, %s1169
          %s2161 = scalar_lea.vmem [#allocation2], %s2160
          // Predicated region
          $region509: #{tpu_custom_call.1} parent=287 // pred_check
            _
          $region510: #{tpu_custom_call.1} parent=287 // pred_check_branch
            %2163 = sbr.rel target = $region512
          $region511: #{tpu_custom_call.1} parent=287 // pred_region
            %2164 = sst [smem:[#allocation10]] [#allocation249]
            %2165 = sst [smem:[#allocation11]] [#allocation248]
          $region512: #{tpu_custom_call.1} parent=287 // pred_fallthru
            _
          %2167 = shalt.err (0)
          %s2169 = sshll.u32 %s2159, 4
          %s2170 = int_to_ptr.hbm [resolvable:$true] %s2169
          %s2171 = sshll.u32 %s2161, 4
          %s2172 = int_to_ptr.vmem [resolvable:$true] %s2171
          %2174 = dma.hbm_to_vmem [thread:$0]  %s2170, 16, %s2172, %s1171
          %s2175 = sadd.s32 %s1166, 56
          %s2176 = sld [smem:[#allocation5 + %s2175]]
          %s2177 = scalar_lea.hbm %s2, %s2176
          %s2178 = sadd.s32 7, %s1169
          %s2179 = scalar_lea.vmem [#allocation2], %s2178
          // Predicated region
          $region513: #{tpu_custom_call.1} parent=287 // pred_check
            _
          $region514: #{tpu_custom_call.1} parent=287 // pred_check_branch
            %2181 = sbr.rel target = $region516
          $region515: #{tpu_custom_call.1} parent=287 // pred_region
            %2182 = sst [smem:[#allocation10]] [#allocation251]
            %2183 = sst [smem:[#allocation11]] [#allocation250]
          $region516: #{tpu_custom_call.1} parent=287 // pred_fallthru
            _
          %2185 = shalt.err (0)
          %s2187 = sshll.u32 %s2177, 4
          %s2188 = int_to_ptr.hbm [resolvable:$true] %s2187
          %s2189 = sshll.u32 %s2179, 4
          %s2190 = int_to_ptr.vmem [resolvable:$true] %s2189
          %2192 = dma.hbm_to_vmem [thread:$0]  %s2188, 16, %s2190, %s1171
          %s2193 = sadd.s32 %s1166, 57
          %s2194 = sld [smem:[#allocation5 + %s2193]]
          %s2195 = scalar_lea.hbm %s2, %s2194
          %s2196 = sadd.s32 15, %s1169
          %s2197 = scalar_lea.vmem [#allocation2], %s2196
          // Predicated region
          $region517: #{tpu_custom_call.1} parent=287 // pred_check
            _
          $region518: #{tpu_custom_call.1} parent=287 // pred_check_branch
            %2199 = sbr.rel target = $region520
          $region519: #{tpu_custom_call.1} parent=287 // pred_region
            %2200 = sst [smem:[#allocation10]] [#allocation253]
            %2201 = sst [smem:[#allocation11]] [#allocation252]
          $region520: #{tpu_custom_call.1} parent=287 // pred_fallthru
            _
          %2203 = shalt.err (0)
          %s2205 = sshll.u32 %s2195, 4
          %s2206 = int_to_ptr.hbm [resolvable:$true] %s2205
          %s2207 = sshll.u32 %s2197, 4
          %s2208 = int_to_ptr.vmem [resolvable:$true] %s2207
          %2210 = dma.hbm_to_vmem [thread:$0]  %s2206, 16, %s2208, %s1171
          %s2211 = sadd.s32 %s1166, 58
          %s2212 = sld [smem:[#allocation5 + %s2211]]
          %s2213 = scalar_lea.hbm %s2, %s2212
          %s2214 = sadd.s32 23, %s1169
          %s2215 = scalar_lea.vmem [#allocation2], %s2214
          // Predicated region
          $region521: #{tpu_custom_call.1} parent=287 // pred_check
            _
          $region522: #{tpu_custom_call.1} parent=287 // pred_check_branch
            %2217 = sbr.rel target = $region524
          $region523: #{tpu_custom_call.1} parent=287 // pred_region
            %2218 = sst [smem:[#allocation10]] [#allocation255]
            %2219 = sst [smem:[#allocation11]] [#allocation254]
          $region524: #{tpu_custom_call.1} parent=287 // pred_fallthru
            _
          %2221 = shalt.err (0)
          %s2223 = sshll.u32 %s2213, 4
          %s2224 = int_to_ptr.hbm [resolvable:$true] %s2223
          %s2225 = sshll.u32 %s2215, 4
          %s2226 = int_to_ptr.vmem [resolvable:$true] %s2225
          %2228 = dma.hbm_to_vmem [thread:$0]  %s2224, 16, %s2226, %s1171
          %s2229 = sadd.s32 %s1166, 59
          %s2230 = sld [smem:[#allocation5 + %s2229]]
          %s2231 = scalar_lea.hbm %s2, %s2230
          %s2232 = sadd.s32 31, %s1169
          %s2233 = scalar_lea.vmem [#allocation2], %s2232
          // Predicated region
          $region525: #{tpu_custom_call.1} parent=287 // pred_check
            _
          $region526: #{tpu_custom_call.1} parent=287 // pred_check_branch
            %2235 = sbr.rel target = $region528
          $region527: #{tpu_custom_call.1} parent=287 // pred_region
            %2236 = sst [smem:[#allocation10]] [#allocation257]
            %2237 = sst [smem:[#allocation11]] [#allocation256]
          $region528: #{tpu_custom_call.1} parent=287 // pred_fallthru
            _
          %2239 = shalt.err (0)
          %s2241 = sshll.u32 %s2231, 4
          %s2242 = int_to_ptr.hbm [resolvable:$true] %s2241
          %s2243 = sshll.u32 %s2233, 4
          %s2244 = int_to_ptr.vmem [resolvable:$true] %s2243
          %2246 = dma.hbm_to_vmem [thread:$0]  %s2242, 16, %s2244, %s1171
          %s2247 = sadd.s32 %s1166, 60
          %s2248 = sld [smem:[#allocation5 + %s2247]]
          %s2249 = scalar_lea.hbm %s2, %s2248
          %s2250 = sadd.s32 39, %s1169
          %s2251 = scalar_lea.vmem [#allocation2], %s2250
          // Predicated region
          $region529: #{tpu_custom_call.1} parent=287 // pred_check
            _
          $region530: #{tpu_custom_call.1} parent=287 // pred_check_branch
            %2253 = sbr.rel target = $region532
          $region531: #{tpu_custom_call.1} parent=287 // pred_region
            %2254 = sst [smem:[#allocation10]] [#allocation259]
            %2255 = sst [smem:[#allocation11]] [#allocation258]
          $region532: #{tpu_custom_call.1} parent=287 // pred_fallthru
            _
          %2257 = shalt.err (0)
          %s2259 = sshll.u32 %s2249, 4
          %s2260 = int_to_ptr.hbm [resolvable:$true] %s2259
          %s2261 = sshll.u32 %s2251, 4
          %s2262 = int_to_ptr.vmem [resolvable:$true] %s2261
          %2264 = dma.hbm_to_vmem [thread:$0]  %s2260, 16, %s2262, %s1171
          %s2265 = sadd.s32 %s1166, 61
          %s2266 = sld [smem:[#allocation5 + %s2265]]
          %s2267 = scalar_lea.hbm %s2, %s2266
          %s2268 = sadd.s32 47, %s1169
          %s2269 = scalar_lea.vmem [#allocation2], %s2268
          // Predicated region
          $region533: #{tpu_custom_call.1} parent=287 // pred_check
            _
          $region534: #{tpu_custom_call.1} parent=287 // pred_check_branch
            %2271 = sbr.rel target = $region536
          $region535: #{tpu_custom_call.1} parent=287 // pred_region
            %2272 = sst [smem:[#allocation10]] [#allocation261]
            %2273 = sst [smem:[#allocation11]] [#allocation260]
          $region536: #{tpu_custom_call.1} parent=287 // pred_fallthru
            _
          %2275 = shalt.err (0)
          %s2277 = sshll.u32 %s2267, 4
          %s2278 = int_to_ptr.hbm [resolvable:$true] %s2277
          %s2279 = sshll.u32 %s2269, 4
          %s2280 = int_to_ptr.vmem [resolvable:$true] %s2279
          %2282 = dma.hbm_to_vmem [thread:$0]  %s2278, 16, %s2280, %s1171
          %s2283 = sadd.s32 %s1166, 62
          %s2284 = sld [smem:[#allocation5 + %s2283]]
          %s2285 = scalar_lea.hbm %s2, %s2284
          %s2286 = sadd.s32 55, %s1169
          %s2287 = scalar_lea.vmem [#allocation2], %s2286
          // Predicated region
          $region537: #{tpu_custom_call.1} parent=287 // pred_check
            _
          $region538: #{tpu_custom_call.1} parent=287 // pred_check_branch
            %2289 = sbr.rel target = $region540
          $region539: #{tpu_custom_call.1} parent=287 // pred_region
            %2290 = sst [smem:[#allocation10]] [#allocation263]
            %2291 = sst [smem:[#allocation11]] [#allocation262]
          $region540: #{tpu_custom_call.1} parent=287 // pred_fallthru
            _
          %2293 = shalt.err (0)
          %s2295 = sshll.u32 %s2285, 4
          %s2296 = int_to_ptr.hbm [resolvable:$true] %s2295
          %s2297 = sshll.u32 %s2287, 4
          %s2298 = int_to_ptr.vmem [resolvable:$true] %s2297
          %2300 = dma.hbm_to_vmem [thread:$0]  %s2296, 16, %s2298, %s1171
          %s2301 = sadd.s32 %s1166, 63
          %s2302 = sld [smem:[#allocation5 + %s2301]]
          %s2303 = scalar_lea.hbm %s2, %s2302
          %s2304 = sadd.s32 63, %s1169
          %s2305 = scalar_lea.vmem [#allocation2], %s2304
          // Predicated region
          $region541: #{tpu_custom_call.1} parent=287 // pred_check
            _
          $region542: #{tpu_custom_call.1} parent=287 // pred_check_branch
            %2307 = sbr.rel target = $region544
          $region543: #{tpu_custom_call.1} parent=287 // pred_region
            %2308 = sst [smem:[#allocation10]] [#allocation265]
            %2309 = sst [smem:[#allocation11]] [#allocation264]
          $region544: #{tpu_custom_call.1} parent=287 // pred_fallthru
            _
          %2311 = shalt.err (0)
          %s2313 = sshll.u32 %s2303, 4
          %s2314 = int_to_ptr.hbm [resolvable:$true] %s2313
          %s2315 = sshll.u32 %s2305, 4
          %s2316 = int_to_ptr.vmem [resolvable:$true] %s2315
          %2318 = dma.hbm_to_vmem [thread:$0]  %s2314, 16, %s2316, %s1171
        $region288: #{tpu_custom_call.1} parent=23 // pred_fallthru
          _
        %p2319 = scmp.lt.s32.totalorder %s25, 0
        %s2320 = ssub.s32 0, %s25
        %s2321 = scalar_select %p2319, %s2320, %s25
        %s2322 = sand.u32 %s2321, 1
        %s2323 = ssub.s32 0, %s2322
        %s2324 = scalar_select %p2319, %s2323, %s2322
        %p2325 = scmp.ne.s32.totalorder %s2324, 0
        %p2326 = scmp.lt.s32.totalorder %s2324, 0
        %p2327 = pnand %p2326, %p2325
        %p2328 = pneg %p2327
        %s2329 = sadd.s32 %s2324, 2
        %s2330 = scalar_select %p2328, %s2329, %s2324
        %s2331 = scalar_lea.sflag [#allocation3], %s2330
        %s2332 = smul.u32 8, 8
        %s2333 = smul.u32 %s2332, 1
        %s2334 = sshll.u32 %s2333, 4
        %2335 = dma.done %s2331, %s2334
        %v2336 = vld [vmem:[%s121] sm:$0xff]
        %s2337 = smul.u32 %s2330, 64
        %s2338 = scalar_lea.vmem [#allocation2], %s2337
        %v2339 = vld [vmem:[%s2338] sm:$0xff]
        %2341 = vset.pattern.permute.xlu0 0
        %2342 = vperm.xlu0 %2341, %v2336
        %v2343 = vpop.permute.xlu0 %2342
        %v2345 = vmul.f32 %v2339, %v2343
        %s2346 = sadd.s32 8, %s2337
        %s2347 = scalar_lea.vmem [#allocation2], %s2346
        %v2348 = vld [vmem:[%s2347] sm:$0xff]
        %2349 = vset.pattern.permute.xlu0 1
        %2350 = vperm.xlu0 %2349, %v2336
        %v2351 = vpop.permute.xlu0 %2350
        %v2353 = vmul.f32 %v2348, %v2351
        %v2354 = vadd.f32 %v2345, %v2353
        %s2355 = sadd.s32 16, %s2337
        %s2356 = scalar_lea.vmem [#allocation2], %s2355
        %v2357 = vld [vmem:[%s2356] sm:$0xff]
        %2358 = vset.pattern.permute.xlu0 2
        %2359 = vperm.xlu0 %2358, %v2336
        %v2360 = vpop.permute.xlu0 %2359
        %v2362 = vmul.f32 %v2357, %v2360
        %v2363 = vadd.f32 %v2354, %v2362
        %s2364 = sadd.s32 24, %s2337
        %s2365 = scalar_lea.vmem [#allocation2], %s2364
        %v2366 = vld [vmem:[%s2365] sm:$0xff]
        %2367 = vset.pattern.permute.xlu0 3
        %2368 = vperm.xlu0 %2367, %v2336
        %v2369 = vpop.permute.xlu0 %2368
        %v2371 = vmul.f32 %v2366, %v2369
        %v2372 = vadd.f32 %v2363, %v2371
        %s2373 = sadd.s32 32, %s2337
        %s2374 = scalar_lea.vmem [#allocation2], %s2373
        %v2375 = vld [vmem:[%s2374] sm:$0xff]
        %2376 = vset.pattern.permute.xlu0 4
        %2377 = vperm.xlu0 %2376, %v2336
        %v2378 = vpop.permute.xlu0 %2377
        %v2380 = vmul.f32 %v2375, %v2378
        %v2381 = vadd.f32 %v2372, %v2380
        %s2382 = sadd.s32 40, %s2337
        %s2383 = scalar_lea.vmem [#allocation2], %s2382
        %v2384 = vld [vmem:[%s2383] sm:$0xff]
        %2385 = vset.pattern.permute.xlu0 5
        %2386 = vperm.xlu0 %2385, %v2336
        %v2387 = vpop.permute.xlu0 %2386
        %v2389 = vmul.f32 %v2384, %v2387
        %v2390 = vadd.f32 %v2381, %v2389
        %s2391 = sadd.s32 48, %s2337
        %s2392 = scalar_lea.vmem [#allocation2], %s2391
        %v2393 = vld [vmem:[%s2392] sm:$0xff]
        %2394 = vset.pattern.permute.xlu0 6
        %2395 = vperm.xlu0 %2394, %v2336
        %v2396 = vpop.permute.xlu0 %2395
        %v2398 = vmul.f32 %v2393, %v2396
        %v2399 = vadd.f32 %v2390, %v2398
        %s2400 = sadd.s32 56, %s2337
        %s2401 = scalar_lea.vmem [#allocation2], %s2400
        %v2402 = vld [vmem:[%s2401] sm:$0xff]
        %2403 = vset.pattern.permute.xlu0 7
        %2404 = vperm.xlu0 %2403, %v2336
        %v2405 = vpop.permute.xlu0 %2404
        %v2407 = vmul.f32 %v2402, %v2405
        %v2408 = vadd.f32 %v2399, %v2407
        %2409 = vst [vmem:[%s117] sm:$0xff] %v2408
        %s2410 = sand.u32 %s59, 1
        %s2411 = scalar_lea.sflag [#allocation7], %s2410
        %s2412 = sand.u32 %s59, 1
        %s2413 = smul.addr %s2412, 8
        %s2414 = scalar_lea.vmem [#allocation6], %s2413
        // Predicated region
        $region545: #{tpu_custom_call.1} parent=23 // pred_check
          %p2415 = pneg %p69
        $region546: #{tpu_custom_call.1} parent=23 // pred_check_branch
          %2417 = sbr.rel (%p2415) target = $region548
        $region547: #{tpu_custom_call.1} parent=23 // pred_region
          %2419 = vsyncadd %s2411, 0
          %s2420 = smul.addr %s25, 8
          %s2421 = scalar_lea.hbm %s3, %s2420
          %s2423 = sshll.u32 %s2414, 4
          %s2424 = int_to_ptr.vmem [resolvable:$true] %s2423
          %s2425 = sshll.u32 %s2421, 4
          %s2426 = int_to_ptr.hbm [resolvable:$true] %s2425
          %2428 = dma.vmem_to_hbm [thread:$0]  %s2424, 128, %s2426, %s2411
        $region548: #{tpu_custom_call.1} parent=23 // pred_fallthru
          _
      $region24: #{tpu_custom_call.1} parent=5 // pred_fallthru
        _
      %p2429 = scmp.le.s32.totalorder 2, %s20
      // Predicated region
      $region549: #{tpu_custom_call.1} parent=5 // pred_check
        %p2430 = pneg %p2429
      $region550: #{tpu_custom_call.1} parent=5 // pred_check_branch
        %2432 = sbr.rel (%p2430) target = $region552
      $region551: #{tpu_custom_call.1} parent=5 // pred_region
        %s2433 = ssub.s32 %s20, 2
        // Predicated region
        $region553: #{tpu_custom_call.1} parent=551 // pred_check
          %p2434 = pneg %p75
        $region554: #{tpu_custom_call.1} parent=551 // pred_check_branch
          %2436 = sbr.rel (%p2434) target = $region556
        $region555: #{tpu_custom_call.1} parent=551 // pred_region
          %s2437 = sand.u32 %s60, 1
          %s2438 = scalar_lea.sflag [#allocation7], %s2437
          %s2439 = sand.u32 %s60, 1
          %s2440 = smul.addr %s2439, 8
          %s2441 = scalar_lea.vmem [#allocation6], %s2440
          %2443 = dma.done %s2438, 128
        $region556: #{tpu_custom_call.1} parent=551 // pred_fallthru
          _
      $region552: #{tpu_custom_call.1} parent=5 // pred_fallthru
        _
    $region6: #{tpu_custom_call.1} parent=1 // loop_footer
      %s24 = sadd.s32 1, %s20
    $region7: #{tpu_custom_call.1} parent=1 // loop_footer_branch
      %19 = sbr.rel target = $region3
    $region8: #{tpu_custom_call.1} parent=1 // loop_exit
      _
    %2444 = vsyncpa [#allocation7], 1
    %s2445 = scalar_lea.sflag [#allocation7], 1
    %2446 = vsyncpa %s2445, 1
  %2447 = vsyncmov [#allocation3]
  %s2448 = vpop.sfrf %2447
  %p2449 = scmp.eq.s32.totalorder %s2448, 0
  %p2450 = pneg %p2449
  %2452 = shalt.err (%p2450)
  %s2453 = scalar_lea.sflag [#allocation3], 1
  %2454 = vsyncmov %s2453
  %s2455 = vpop.sfrf %2454
  %p2456 = scmp.eq.s32.totalorder %s2455, 0
  %p2457 = pneg %p2456
  %2459 = shalt.err (%p2457)

</llo_original>
